<compile_context>
chip_gen: v6e
topology: v6e:2x2x1
jax: 0.10.0
libtpu: 0.0.40
codegen_flags: <defaults>
</compile_context>

<pallas_src>
import functools
import math

import jax
import jax.numpy as jnp
from jax.experimental import pallas as pl
from jax.experimental.pallas import tpu as pltpu


# ----------------------------------------------------------------------------
# In-kernel helpers
# ----------------------------------------------------------------------------
def _relu_bn(y, sc_ref, sh_ref):
    """Training-mode BatchNorm (pre-reduced to y*scale+shift) followed by ReLU."""
    return jnp.maximum(y * sc_ref[...] + sh_ref[...], 0.0)


def _group_max(a, groups, width):
    """Per-row max over `groups` lane-groups of `width` lanes -> (rows, width).

    a.shape[-1] == groups*width, so the wrap-around of the lane roll stays
    group-aligned; log2(groups) XLU rotations + one offset-0 slice.
    """
    m = a
    shift = width
    covered = 1
    while covered < groups:
        m = jnp.maximum(m, pltpu.roll(m, shift=shift, axis=1))
        covered *= 2
        shift *= 2
    return m[:, :width]


def _packed_layers12(xp, w1_ref, sc1_ref, sh1_ref, w2a_ref, w2r_ref, m2_ref,
                     groups, u1):
    """Recompute VFE-1 and the layer-2 pre-BN output in the packed lane layout.

    xp: (tv, CP) packed [point features | occupancy mask] rows, one per voxel.
    Returns y2 (tv, groups*u2) == out1 @ W2 row-wise (bias-free), where out1 is
    the (masked) VFE-1 output of the reference module.
    """
    y1 = jnp.dot(xp, w1_ref[...], preferred_element_type=jnp.float32)
    pw1 = _relu_bn(y1, sc1_ref, sh1_ref)                    # (tv, groups*u1)
    agg1 = _group_max(pw1, groups, u1)                      # (tv, u1) per-voxel max
    y2 = jnp.dot(pw1, w2a_ref[...], preferred_element_type=jnp.float32)
    y2 = y2 + jnp.dot(agg1, w2r_ref[...], preferred_element_type=jnp.float32)
    # occupancy mask replicated over each point's u2-wide output group (exact
    # 0/1 selection done on the MXU, so no lane-relayout is needed).
    y2 = y2 * jnp.dot(xp, m2_ref[...], preferred_element_type=jnp.float32)
    return y2


def _write_stats(stats_ref, s1, s2):
    stats_ref[...] = jnp.concatenate([s1, s2], axis=0).reshape(1, 2, s1.shape[-1])


# ----------------------------------------------------------------------------
# Pallas kernels (one per BN-synchronisation pass)
# ----------------------------------------------------------------------------
def _stats1_kernel(xp_ref, w1_ref, stats_ref):
    """Partial BN statistics of the layer-1 pre-activations y1 = x @ W1."""
    y1 = jnp.dot(xp_ref[...], w1_ref[...], preferred_element_type=jnp.float32)
    _write_stats(stats_ref,
                 jnp.sum(y1, axis=0, keepdims=True),
                 jnp.sum(y1 * y1, axis=0, keepdims=True))


def _stats2_kernel(xp_ref, w1_ref, sc1_ref, sh1_ref, w2a_ref, w2r_ref, m2_ref,
                   stats_ref, *, groups, u1):
    """Recompute VFE-1, emit partial BN statistics of y2 = out1 @ W2."""
    y2 = _packed_layers12(xp_ref[...], w1_ref, sc1_ref, sh1_ref,
                          w2a_ref, w2r_ref, m2_ref, groups, u1)
    _write_stats(stats_ref,
                 jnp.sum(y2, axis=0, keepdims=True),
                 jnp.sum(y2 * y2, axis=0, keepdims=True))


def _stats3_kernel(xp_ref, w1_ref, sc1_ref, sh1_ref, w2a_ref, w2r_ref, m2_ref,
                   sc2_ref, sh2_ref, w3a_ref, w3b_ref, m3_ref,
                   stats_ref, *, groups, u1, u2, c3):
    """Recompute VFE-1/VFE-2, emit partial BN statistics of y3 = out2 @ W3."""
    xp = xp_ref[...]
    y2 = _packed_layers12(xp, w1_ref, sc1_ref, sh1_ref,
                          w2a_ref, w2r_ref, m2_ref, groups, u1)
    pw2 = _relu_bn(y2, sc2_ref, sh2_ref)                    # (tv, groups*u2)
    agg2 = _group_max(pw2, groups, u2)                      # (tv, u2)
    w3a = w3a_ref[...]
    yagg = jnp.dot(agg2, w3b_ref[...], preferred_element_type=jnp.float32)
    mrep = jnp.dot(xp, m3_ref[...], preferred_element_type=jnp.float32)
    s1 = jnp.zeros((1, c3), jnp.float32)
    s2 = jnp.zeros((1, c3), jnp.float32)
    for p in range(groups):                                 # unrolled, dense layer 3
        y3 = jnp.dot(pw2[:, p * u2:(p + 1) * u2], w3a,
                     preferred_element_type=jnp.float32) + yagg
        y3 = y3 * mrep[:, p * c3:(p + 1) * c3]
        s1 = s1 + jnp.sum(y3, axis=0, keepdims=True)
        s2 = s2 + jnp.sum(y3 * y3, axis=0, keepdims=True)
    _write_stats(stats_ref, s1, s2)


def _final_kernel(xp_ref, w1_ref, sc1_ref, sh1_ref, w2a_ref, w2r_ref, m2_ref,
                  sc2_ref, sh2_ref, w3a_ref, w3b_ref, m3_ref, sc3_ref, sh3_ref,
                  out_ref, *, groups, u1, u2, c3):
    """Recompute everything and emit the per-voxel features (lane-dense (tv, c3))."""
    xp = xp_ref[...]
    y2 = _packed_layers12(xp, w1_ref, sc1_ref, sh1_ref,
                          w2a_ref, w2r_ref, m2_ref, groups, u1)
    pw2 = _relu_bn(y2, sc2_ref, sh2_ref)
    agg2 = _group_max(pw2, groups, u2)
    w3a = w3a_ref[...]
    yagg = jnp.dot(agg2, w3b_ref[...], preferred_element_type=jnp.float32)
    mrep = jnp.dot(xp, m3_ref[...], preferred_element_type=jnp.float32)
    acc = None
    for p in range(groups):
        y3 = jnp.dot(pw2[:, p * u2:(p + 1) * u2], w3a,
                     preferred_element_type=jnp.float32) + yagg
        y3 = y3 * mrep[:, p * c3:(p + 1) * c3]
        z = _relu_bn(y3, sc3_ref, sh3_ref)
        acc = z if acc is None else jnp.maximum(acc, z)
    out_ref[...] = acc


# ----------------------------------------------------------------------------
# Glue helpers
# ----------------------------------------------------------------------------
def _bn_scale_shift(partial, groups, m_true, gamma, beta, eps, tile_to):
    """Reduce per-tile packed BN sums -> per-channel (scale, shift), lane-tiled."""
    c = gamma.shape[0]
    s = jnp.sum(partial, axis=0).reshape(2, groups, c).sum(axis=1)   # (2, C)
    mean = s[0] / m_true
    var = jnp.maximum(s[1] / m_true - mean * mean, 0.0)              # biased (training BN)
    scale = gamma * jax.lax.rsqrt(var + eps)
    shift = beta - mean * scale
    return (jnp.tile(scale, tile_to).reshape(1, tile_to * c),
            jnp.tile(shift, tile_to).reshape(1, tile_to * c))


def _padded_bytes(shape, itemsize=4):
    """f32 VMEM footprint of a block after (8,128) tiling."""
    s = list(shape)
    if len(s) >= 1:
        s[-1] = -(-s[-1] // 128) * 128
    if len(s) >= 2:
        s[-2] = -(-s[-2] // 8) * 8
    return int(math.prod(s)) * itemsize


def _cparams(block_shapes, temp_shapes=()):
    """1-D 'parallel' grid + VMEM limit from *padded* tile sizes (double-buffered
    pipeline blocks + in-kernel temporaries + headroom), capped below the v7x
    64 MiB physical VMEM.  Increase pipeline depth (pl.Buffered) only if a
    profile shows exposed DMA."""
    blocks = sum(_padded_bytes(s) for s in block_shapes)
    temps = sum(_padded_bytes(s) for s in temp_shapes)
    limit = 2 * blocks + temps + (6 << 20)
    return pltpu.CompilerParams(
        dimension_semantics=("parallel",),
        vmem_limit_bytes=int(min(limit, 48 << 20)))


# ----------------------------------------------------------------------------
# SVFE forward
# ----------------------------------------------------------------------------
def svfe_forward(x, params, *, eps=1e-5, block_voxels=1024):
    """x: [num_voxels, max_pts, 7] float32 -> [num_voxels, 128] float32."""
    V, T, cin = x.shape
    f32 = jnp.float32
    # PyTorch Linear weights are [out, in]; kernels use [in, out].
    w1, w2, w3 = params["w1"].T, params["w2"].T, params["w3"].T
    # GUARD: params["b1"/"b2"/"b3"] are intentionally unused.  With BatchNorm in
    # training mode (batch statistics) a per-channel Linear bias shifts every row
    # of the pre-BN activations equally and is removed exactly by the mean
    # subtraction; dropping it also keeps all-zero (padded / empty-point) rows
    # exactly zero through the bias-free matmuls, which the BN-stat divisor and
    # the occupancy-mask logic rely on.  Do NOT re-add the biases or switch to
    # eval-mode BN without revisiting both assumptions.
    g1, be1 = params["g1"], params["be1"]
    g2, be2 = params["g2"], params["be2"]
    g3, be3 = params["g3"], params["be3"]
    u1, u2, c3 = w1.shape[1], w2.shape[1], w3.shape[1]      # 16, 64, 128
    cp = T * cin + T                                        # packed row width
    n1, n2 = T * u1, T * u2

    # ---- voxel tiling ---------------------------------------------------------
    # Cap the tile at ceil(V/2) so the grid has >=2 parallel steps (keeps both
    # v7x TensorCores busy); round to a sublane multiple of 8.
    tv = min(block_voxels, (-(-V // 2)) if V > 8 else V)
    tv = max(8, -(-tv // 8) * 8)
    n_tiles = -(-V // tv)
    v_pad = n_tiles * tv
    m_true = float(V * T)                                   # BN stats over real rows only

    # ---- host prep: lane-dense packed input [features | occupancy mask] -------
    # One cheap relayout pass: (V, T, 7) in tiled HBM layout pads 7 -> 128 lanes
    # (~18x amplification), so reading it once here and emitting a (V, T*7+T)
    # slab (one 128-lane tile per voxel) makes every later pass ~8x cheaper.
    # Padded voxel rows are exact zeros -> mask lanes 0 -> numerically inert.
    maskf = (jnp.max(x, axis=2) != 0).astype(f32)           # true occupancy (V, T)
    xp = jnp.concatenate([x.reshape(V, T * cin), maskf], axis=1)
    if v_pad != V:
        xp = jnp.pad(xp, ((0, v_pad - V), (0, 0)))

    # ---- packed / block-diagonal parameter matrices (tiny, built on host) -----
    eye_t = jnp.eye(T, dtype=f32)
    w1bd = jnp.concatenate(
        [jnp.kron(eye_t, w1), jnp.zeros((T, n1), f32)], axis=0)            # (cp, n1)
    w2a_bd = jnp.kron(eye_t, w2[:u1])                                      # (n1, n2)
    w2b_rep = jnp.dot(w2[u1:], jnp.kron(jnp.ones((1, T), f32),
                                        jnp.eye(u2, dtype=f32)))           # (u1, n2)
    msel2 = jnp.concatenate(
        [jnp.zeros((T * cin, n2), f32),
         jnp.kron(eye_t, jnp.ones((1, u2), f32))], axis=0)                 # (cp, n2)
    w3a = w3[:u2]                                                          # (u2, c3)
    w3b = w3[u2:]                                                          # (u2, c3)
    msel3 = jnp.concatenate(
        [jnp.zeros((T * cin, T * c3), f32),
         jnp.kron(eye_t, jnp.ones((1, c3), f32))], axis=0)                 # (cp, T*c3)

    xp_spec = pl.BlockSpec((tv, cp), lambda i: (i, 0))
    base_specs = [
        xp_spec,
        pl.BlockSpec((cp, n1), lambda i: (0, 0)),        # w1 block-diag
        pl.BlockSpec((1, n1), lambda i: (0, 0)),         # scale1 (lane-tiled)
        pl.BlockSpec((1, n1), lambda i: (0, 0)),         # shift1 (lane-tiled)
        pl.BlockSpec((n1, n2), lambda i: (0, 0)),        # w2a block-diag
        pl.BlockSpec((u1, n2), lambda i: (0, 0)),        # w2b @ replicate
        pl.BlockSpec((cp, n2), lambda i: (0, 0)),        # mask -> per-group select
    ]
    l3_specs = [
        pl.BlockSpec((1, n2), lambda i: (0, 0)),         # scale2 (lane-tiled)
        pl.BlockSpec((1, n2), lambda i: (0, 0)),         # shift2 (lane-tiled)
        pl.BlockSpec((u2, c3), lambda i: (0, 0)),        # w3a (dense)
        pl.BlockSpec((u2, c3), lambda i: (0, 0)),        # w3b (dense)
        pl.BlockSpec((cp, T * c3), lambda i: (0, 0)),    # mask -> per-point select
    ]
    base_blocks = [(tv, cp), (cp, n1), (1, n1), (1, n1), (n1, n2), (u1, n2),
                   (cp, n2)]
    l3_blocks = [(1, n2), (1, n2), (u2, c3), (u2, c3), (cp, T * c3)]

    # ---- pass 1: layer-1 BN statistics ----------------------------------------
    stats1 = pl.pallas_call(
        _stats1_kernel,
        out_shape=jax.ShapeDtypeStruct((n_tiles, 2, n1), f32),
        grid=(n_tiles,),
        in_specs=base_specs[:2],
        out_specs=pl.BlockSpec((1, 2, n1), lambda i: (i, 0, 0)),
        compiler_params=_cparams(base_blocks[:2] + [(1, 2, n1)],
                                 [(tv, n1)]),
    )(xp, w1bd)
    sc1, sh1 = _bn_scale_shift(stats1, T, m_true, g1, be1, eps, T)
    base_args = (xp, w1bd, sc1, sh1, w2a_bd, w2b_rep, msel2)

    # ---- pass 2: recompute VFE-1, layer-2 BN statistics ------------------------
    stats2 = pl.pallas_call(
        functools.partial(_stats2_kernel, groups=T, u1=u1),
        out_shape=jax.ShapeDtypeStruct((n_tiles, 2, n2), f32),
        grid=(n_tiles,),
        in_specs=list(base_specs),
        out_specs=pl.BlockSpec((1, 2, n2), lambda i: (i, 0, 0)),
        compiler_params=_cparams(base_blocks + [(1, 2, n2)],
                                 [(tv, n1)] * 2 + [(tv, n2)] * 3),
    )(*base_args)
    sc2, sh2 = _bn_scale_shift(stats2, T, m_true, g2, be2, eps, T)

    # ---- pass 3: recompute VFE-1/2, layer-3 BN statistics ----------------------
    stats3 = pl.pallas_call(
        functools.partial(_stats3_kernel, groups=T, u1=u1, u2=u2, c3=c3),
        out_shape=jax.ShapeDtypeStruct((n_tiles, 2, c3), f32),
        grid=(n_tiles,),
        in_specs=list(base_specs) + list(l3_specs),
        out_specs=pl.BlockSpec((1, 2, c3), lambda i: (i, 0, 0)),
        compiler_params=_cparams(base_blocks + l3_blocks + [(1, 2, c3)],
                                 [(tv, n1)] * 2 + [(tv, n2)] * 3
                                 + [(tv, T * c3)] + [(tv, c3)] * 3),
    )(*base_args, sc2, sh2, w3a, w3b, msel3)
    sc3, sh3 = _bn_scale_shift(stats3, 1, m_true, g3, be3, eps, 1)

    # ---- pass 4: full recompute + final FCN + per-voxel max --------------------
    out3 = pl.pallas_call(
        functools.partial(_final_kernel, groups=T, u1=u1, u2=u2, c3=c3),
        out_shape=jax.ShapeDtypeStruct((v_pad, c3), f32),
        grid=(n_tiles,),
        in_specs=list(base_specs) + list(l3_specs)
                 + [pl.BlockSpec((1, c3), lambda i: (0, 0)),
                    pl.BlockSpec((1, c3), lambda i: (0, 0))],
        out_specs=pl.BlockSpec((tv, c3), lambda i: (i, 0)),
        compiler_params=_cparams(base_blocks + l3_blocks
                                 + [(1, c3), (1, c3), (tv, c3)],
                                 [(tv, n1)] * 2 + [(tv, n2)] * 3
                                 + [(tv, T * c3)] + [(tv, c3)] * 4),
    )(*base_args, sc2, sh2, w3a, w3b, msel3, sc3, sh3)

    return out3[:V]


# ----------------------------------------------------------------------------
# Pure-JAX reference mirroring the PyTorch module (with linear biases)
# ----------------------------------------------------------------------------
def _fcn_ref(x2, w, b, gamma, beta, eps):
    y = x2 @ w.T + b
    mean = jnp.mean(y, axis=0)
    var = jnp.mean((y - mean) ** 2, axis=0)          # biased, training-mode BN
    return jnp.maximum((y - mean) * jax.lax.rsqrt(var + eps) * gamma + beta, 0.0)


def _vfe_ref(x3, mask, w, b, gamma, beta, eps):
    V, T, C = x3.shape
    pw = _fcn_ref(x3.reshape(V * T, C), w, b, gamma, beta, eps).reshape(V, T, -1)
    agg = jnp.max(pw, axis=1, keepdims=True)
    cat = jnp.concatenate([pw, jnp.broadcast_to(agg, pw.shape)], axis=-1)
    return cat * mask.astype(jnp.float32)


def svfe_reference(x, params, eps=1e-5):
    mask = jnp.max(x, axis=2, keepdims=True) != 0
    h = _vfe_ref(x, mask, params["w1"], params["b1"], params["g1"], params["be1"], eps)
    h = _vfe_ref(h, mask, params["w2"], params["b2"], params["g2"], params["be2"], eps)
    V, T, _ = h.shape
    h = _fcn_ref(h.reshape(V * T, -1), params["w3"], params["b3"],
                 params["g3"], params["be3"], eps).reshape(V, T, -1)
    return jnp.max(h, axis=1)


# ----------------------------------------------------------------------------
# Main
# ----------------------------------------------------------------------------
if __name__ == "__main__":
    key = jax.random.PRNGKey(0)
    keys = jax.random.split(key, 16)

    V, T, C_IN = 52, 8, 7          # num_voxels, max_pts_per_voxel, point features
    U1, U2, C3 = 16, 64, 128       # VFE(7,32)->16 units, VFE(32,128)->64, FCN 128

    x = jax.random.normal(keys[0], (V, T, C_IN), dtype=jnp.float32)
    # Variable number of "empty" (all-zero) points per voxel -> exercises the mask.
    npts = jax.random.randint(keys[1], (V, 1, 1), minval=1, maxval=T + 1)
    x = jnp.where(jnp.arange(T).reshape(1, T, 1) < npts, x, 0.0)

    def _w(k, o, i, s):
        return s * jax.random.normal(k, (o, i), dtype=jnp.float32)

    params = {
        "w1": _w(keys[2], U1, C_IN, 0.3),
        "b1": 0.1 * jax.random.normal(keys[3], (U1,), dtype=jnp.float32),
        "g1": 1.0 + 0.1 * jax.random.normal(keys[4], (U1,), dtype=jnp.float32),
        "be1": 0.1 * jax.random.normal(keys[5], (U1,), dtype=jnp.float32),
        "w2": _w(keys[6], U2, 2 * U1, 0.2),
        "b2": 0.1 * jax.random.normal(keys[7], (U2,), dtype=jnp.float32),
        "g2": 1.0 + 0.1 * jax.random.normal(keys[8], (U2,), dtype=jnp.float32),
        "be2": 0.1 * jax.random.normal(keys[9], (U2,), dtype=jnp.float32),
        "w3": _w(keys[10], C3, 2 * U2, 0.1),
        "b3": 0.1 * jax.random.normal(keys[11], (C3,), dtype=jnp.float32),
        "g3": 1.0 + 0.1 * jax.random.normal(keys[12], (C3,), dtype=jnp.float32),
        "be3": 0.1 * jax.random.normal(keys[13], (C3,), dtype=jnp.float32),
    }

    # Small block_voxels so the test exercises a multi-tile grid plus voxel
    # padding; the default (1024 voxels = 8192 rows per tile) is the perf setting
    # for v5e/v6e, and its padded VMEM footprint (~22 MiB) also fits v7x.
    fwd = jax.jit(functools.partial(svfe_forward, block_voxels=16))
    out = jax.block_until_ready(fwd(x, params))

    ref = svfe_reference(x, params)
    assert out.shape == (V, C3), out.shape
    max_err = float(jnp.max(jnp.abs(out - ref)))
    assert jnp.allclose(out, ref, atol=1e-3, rtol=1e-3), \
        f"mismatch vs reference (max_err={max_err})"

    print("KERNEL_OK")
</pallas_src>

<mosaic_0001>
module attributes {stable_mosaic.version = 11 : i64} {
  func.func @_stats1_kernel(%arg0: i32, %arg1: memref<16x64xf32, #tpu.memory_space<vmem>>, %arg2: memref<64x128xf32, #tpu.memory_space<vmem>>, %arg3: memref<1x2x128xf32, #tpu.memory_space<vmem>>) attributes {dimension_semantics = [#tpu.dimension_semantics<parallel>], iteration_bounds = array<i64: 4>, scalar_prefetch = 0 : i64, scratch_operands = 0 : i64, tpu.core_type = #tpu.core_type<tc>, window_params = [{transform_indices = @transform_0, window_bounds = array<i64: 16, 64>}, {pipeline_mode = #tpu.pipeline_mode<synchronous>, transform_indices = @transform_1, window_bounds = array<i64: 64, 128>}, {transform_indices = @transform_2, window_bounds = array<i64: 1, 2, 128>}]} {
    %c0 = arith.constant 0 : index
    %c0_0 = arith.constant 0 : index
    %0 = vector.load %arg1[%c0, %c0_0] : memref<16x64xf32, #tpu.memory_space<vmem>>, vector<16x64xf32>
    %c0_1 = arith.constant 0 : index
    %c0_2 = arith.constant 0 : index
    %1 = vector.load %arg2[%c0_1, %c0_2] : memref<64x128xf32, #tpu.memory_space<vmem>>, vector<64x128xf32>
    %cst = arith.constant dense<0.000000e+00> : vector<16x128xf32>
    %2 = tpu.matmul %0, %1, %cst {dimension_numbers = #tpu.dot_dimension_numbers<[1], [0], [0], [1], [0, 0, 1, 1], [], []>} : vector<16x64xf32>, vector<64x128xf32>, vector<16x128xf32> -> vector<16x128xf32>
    %cst_3 = arith.constant dense<0.000000e+00> : vector<128xf32>
    %3 = vector.multi_reduction <add>, %2, %cst_3 [0] : vector<16x128xf32> to vector<128xf32>
    %4 = vector.shape_cast %3 : vector<128xf32> to vector<1x128xf32>
    %5 = arith.mulf %2, %2 : vector<16x128xf32>
    %cst_4 = arith.constant dense<0.000000e+00> : vector<128xf32>
    %6 = vector.multi_reduction <add>, %5, %cst_4 [0] : vector<16x128xf32> to vector<128xf32>
    %7 = vector.shape_cast %6 : vector<128xf32> to vector<1x128xf32>
    %8 = tpu.concatenate %4, %7 in 0 : vector<1x128xf32>, vector<1x128xf32> -> vector<2x128xf32>
    %9 = vector.shape_cast %8 : vector<2x128xf32> to vector<1x2x128xf32>
    %c0_5 = arith.constant 0 : index
    %c0_6 = arith.constant 0 : index
    %c0_7 = arith.constant 0 : index
    %10 = vector.load %arg3[%c0_5, %c0_6, %c0_7] : memref<1x2x128xf32, #tpu.memory_space<vmem>>, vector<1x2x128xf32>
    tpu.vector_store %arg3[%c0_5, %c0_6, %c0_7], %9 {strides = array<i32>} : memref<1x2x128xf32, #tpu.memory_space<vmem>>, vector<1x2x128xf32>,
    return
  }
  func.func @transform_0(%arg0: i32) -> (i32, i32) {
    %c0_i32 = arith.constant 0 : i32
    %c0_i32_0 = arith.constant 0 : i32
    return %arg0, %c0_i32 : i32, i32
  }
  func.func @transform_1(%arg0: i32) -> (i32, i32) {
    %c0_i32 = arith.constant 0 : i32
    %c0_i32_0 = arith.constant 0 : i32
    %c0_i32_1 = arith.constant 0 : i32
    return %c0_i32, %c0_i32_0 : i32, i32
  }
  func.func @transform_2(%arg0: i32) -> (i32, i32, i32) {
    %c0_i32 = arith.constant 0 : i32
    %c0_i32_0 = arith.constant 0 : i32
    %c0_i32_1 = arith.constant 0 : i32
    return %arg0, %c0_i32, %c0_i32_0 : i32, i32, i32
  }
}

module attributes {stable_mosaic.version = 11 : i64} {
  func.func @_stats2_kernel(%arg0: i32, %arg1: memref<16x64xf32, #tpu.memory_space<vmem>>, %arg2: memref<64x128xf32, #tpu.memory_space<vmem>>, %arg3: memref<1x128xf32, #tpu.memory_space<vmem>>, %arg4: memref<1x128xf32, #tpu.memory_space<vmem>>, %arg5: memref<128x512xf32, #tpu.memory_space<vmem>>, %arg6: memref<16x512xf32, #tpu.memory_space<vmem>>, %arg7: memref<64x512xf32, #tpu.memory_space<vmem>>, %arg8: memref<1x2x512xf32, #tpu.memory_space<vmem>>) attributes {dimension_semantics = [#tpu.dimension_semantics<parallel>], iteration_bounds = array<i64: 4>, scalar_prefetch = 0 : i64, scratch_operands = 0 : i64, tpu.core_type = #tpu.core_type<tc>, window_params = [{transform_indices = @transform_0, window_bounds = array<i64: 16, 64>}, {pipeline_mode = #tpu.pipeline_mode<synchronous>, transform_indices = @transform_1, window_bounds = array<i64: 64, 128>}, {pipeline_mode = #tpu.pipeline_mode<synchronous>, transform_indices = @transform_2, window_bounds = array<i64: 1, 128>}, {pipeline_mode = #tpu.pipeline_mode<synchronous>, transform_indices = @transform_3, window_bounds = array<i64: 1, 128>}, {pipeline_mode = #tpu.pipeline_mode<synchronous>, transform_indices = @transform_4, window_bounds = array<i64: 128, 512>}, {pipeline_mode = #tpu.pipeline_mode<synchronous>, transform_indices = @transform_5, window_bounds = array<i64: 16, 512>}, {pipeline_mode = #tpu.pipeline_mode<synchronous>, transform_indices = @transform_6, window_bounds = array<i64: 64, 512>}, {transform_indices = @transform_7, window_bounds = array<i64: 1, 2, 512>}]} {
    %c0 = arith.constant 0 : index
    %c0_0 = arith.constant 0 : index
    %0 = vector.load %arg1[%c0, %c0_0] : memref<16x64xf32, #tpu.memory_space<vmem>>, vector<16x64xf32>
    %c0_1 = arith.constant 0 : index
    %c0_2 = arith.constant 0 : index
    %1 = vector.load %arg2[%c0_1, %c0_2] : memref<64x128xf32, #tpu.memory_space<vmem>>, vector<64x128xf32>
    %cst = arith.constant dense<0.000000e+00> : vector<16x128xf32>
    %2 = tpu.matmul %0, %1, %cst {dimension_numbers = #tpu.dot_dimension_numbers<[1], [0], [0], [1], [0, 0, 1, 1], [], []>} : vector<16x64xf32>, vector<64x128xf32>, vector<16x128xf32> -> vector<16x128xf32>
    %c0_3 = arith.constant 0 : index
    %c0_4 = arith.constant 0 : index
    %3 = vector.load %arg3[%c0_3, %c0_4] : memref<1x128xf32, #tpu.memory_space<vmem>>, vector<1x128xf32>
    %4 = vector.broadcast %3 : vector<1x128xf32> to vector<16x128xf32>
    %5 = arith.mulf %2, %4 : vector<16x128xf32>
    %c0_5 = arith.constant 0 : index
    %c0_6 = arith.constant 0 : index
    %6 = vector.load %arg4[%c0_5, %c0_6] : memref<1x128xf32, #tpu.memory_space<vmem>>, vector<1x128xf32>
    %7 = vector.broadcast %6 : vector<1x128xf32> to vector<16x128xf32>
    %8 = arith.addf %5, %7 : vector<16x128xf32>
    %cst_7 = arith.constant 0.000000e+00 : f32
    %9 = vector.broadcast %cst_7 : f32 to vector<16x128xf32>
    %10 = arith.maximumf %8, %9 : vector<16x128xf32>
    %c16_i32 = arith.constant 16 : i32
    %11 = tpu.dynamic_rotate %10 by %c16_i32 dim 1 : vector<16x128xf32>, i32 -> vector<16x128xf32>
    %12 = arith.maximumf %10, %11 : vector<16x128xf32>
    %c32_i32 = arith.constant 32 : i32
    %13 = tpu.dynamic_rotate %12 by %c32_i32 dim 1 : vector<16x128xf32>, i32 -> vector<16x128xf32>
    %14 = arith.maximumf %12, %13 : vector<16x128xf32>
    %c64_i32 = arith.constant 64 : i32
    %15 = tpu.dynamic_rotate %14 by %c64_i32 dim 1 : vector<16x128xf32>, i32 -> vector<16x128xf32>
    %16 = arith.maximumf %14, %15 : vector<16x128xf32>
    %17 = vector.extract_strided_slice %16 {offsets = [0, 0], sizes = [16, 16], strides = [1, 1]} : vector<16x128xf32> to vector<16x16xf32>
    %c0_8 = arith.constant 0 : index
    %c0_9 = arith.constant 0 : index
    %18 = vector.load %arg5[%c0_8, %c0_9] : memref<128x512xf32, #tpu.memory_space<vmem>>, vector<128x512xf32>
    %cst_10 = arith.constant dense<0.000000e+00> : vector<16x512xf32>
    %19 = tpu.matmul %10, %18, %cst_10 {dimension_numbers = #tpu.dot_dimension_numbers<[1], [0], [0], [1], [0, 0, 1, 1], [], []>} : vector<16x128xf32>, vector<128x512xf32>, vector<16x512xf32> -> vector<16x512xf32>
    %c0_11 = arith.constant 0 : index
    %c0_12 = arith.constant 0 : index
    %20 = vector.load %arg6[%c0_11, %c0_12] : memref<16x512xf32, #tpu.memory_space<vmem>>, vector<16x512xf32>
    %cst_13 = arith.constant dense<0.000000e+00> : vector<16x512xf32>
    %21 = tpu.matmul %17, %20, %cst_13 {dimension_numbers = #tpu.dot_dimension_numbers<[1], [0], [0], [1], [0, 0, 1, 1], [], []>} : vector<16x16xf32>, vector<16x512xf32>, vector<16x512xf32> -> vector<16x512xf32>
    %22 = arith.addf %19, %21 : vector<16x512xf32>
    %c0_14 = arith.constant 0 : index
    %c0_15 = arith.constant 0 : index
    %23 = vector.load %arg7[%c0_14, %c0_15] : memref<64x512xf32, #tpu.memory_space<vmem>>, vector<64x512xf32>
    %cst_16 = arith.constant dense<0.000000e+00> : vector<16x512xf32>
    %24 = tpu.matmul %0, %23, %cst_16 {dimension_numbers = #tpu.dot_dimension_numbers<[1], [0], [0], [1], [0, 0, 1, 1], [], []>} : vector<16x64xf32>, vector<64x512xf32>, vector<16x512xf32> -> vector<16x512xf32>
    %25 = arith.mulf %22, %24 : vector<16x512xf32>
    %cst_17 = arith.constant dense<0.000000e+00> : vector<512xf32>
    %26 = vector.multi_reduction <add>, %25, %cst_17 [0] : vector<16x512xf32> to vector<512xf32>
    %27 = vector.shape_cast %26 : vector<512xf32> to vector<1x512xf32>
    %28 = arith.mulf %25, %25 : vector<16x512xf32>
    %cst_18 = arith.constant dense<0.000000e+00> : vector<512xf32>
    %29 = vector.multi_reduction <add>, %28, %cst_18 [0] : vector<16x512xf32> to vector<512xf32>
    %30 = vector.shape_cast %29 : vector<512xf32> to vector<1x512xf32>
    %31 = tpu.concatenate %27, %30 in 0 : vector<1x512xf32>, vector<1x512xf32> -> vector<2x512xf32>
    %32 = vector.shape_cast %31 : vector<2x512xf32> to vector<1x2x512xf32>
    %c0_19 = arith.constant 0 : index
    %c0_20 = arith.constant 0 : index
    %c0_21 = arith.constant 0 : index
    %33 = vector.load %arg8[%c0_19, %c0_20, %c0_21] : memref<1x2x512xf32, #tpu.memory_space<vmem>>, vector<1x2x512xf32>
    tpu.vector_store %arg8[%c0_19, %c0_20, %c0_21], %32 {strides = array<i32>} : memref<1x2x512xf32, #tpu.memory_space<vmem>>, vector<1x2x512xf32>,
    return
  }
  func.func @transform_0(%arg0: i32) -> (i32, i32) {
    %c0_i32 = arith.constant 0 : i32
    %c0_i32_0 = arith.constant 0 : i32
    return %arg0, %c0_i32 : i32, i32
  }
  func.func @transform_1(%arg0: i32) -> (i32, i32) {
    %c0_i32 = arith.constant 0 : i32
    %c0_i32_0 = arith.constant 0 : i32
    %c0_i32_1 = arith.constant 0 : i32
    return %c0_i32, %c0_i32_0 : i32, i32
  }
  func.func @transform_2(%arg0: i32) -> (i32, i32) {
    %c0_i32 = arith.constant 0 : i32
    %c0_i32_0 = arith.constant 0 : i32
    %c0_i32_1 = arith.constant 0 : i32
    return %c0_i32, %c0_i32_0 : i32, i32
  }
  func.func @transform_3(%arg0: i32) -> (i32, i32) {
    %c0_i32 = arith.constant 0 : i32
    %c0_i32_0 = arith.constant 0 : i32
    %c0_i32_1 = arith.constant 0 : i32
    return %c0_i32, %c0_i32_0 : i32, i32
  }
  func.func @transform_4(%arg0: i32) -> (i32, i32) {
    %c0_i32 = arith.constant 0 : i32
    %c0_i32_0 = arith.constant 0 : i32
    %c0_i32_1 = arith.constant 0 : i32
    return %c0_i32, %c0_i32_0 : i32, i32
  }
  func.func @transform_5(%arg0: i32) -> (i32, i32) {
    %c0_i32 = arith.constant 0 : i32
    %c0_i32_0 = arith.constant 0 : i32
    %c0_i32_1 = arith.constant 0 : i32
    return %c0_i32, %c0_i32_0 : i32, i32
  }
  func.func @transform_6(%arg0: i32) -> (i32, i32) {
    %c0_i32 = arith.constant 0 : i32
    %c0_i32_0 = arith.constant 0 : i32
    %c0_i32_1 = arith.constant 0 : i32
    return %c0_i32, %c0_i32_0 : i32, i32
  }
  func.func @transform_7(%arg0: i32) -> (i32, i32, i32) {
    %c0_i32 = arith.constant 0 : i32
    %c0_i32_0 = arith.constant 0 : i32
    %c0_i32_1 = arith.constant 0 : i32
    return %arg0, %c0_i32, %c0_i32_0 : i32, i32, i32
  }
}

module attributes {stable_mosaic.version = 11 : i64} {
  func.func @_stats3_kernel(%arg0: i32, %arg1: memref<16x64xf32, #tpu.memory_space<vmem>>, %arg2: memref<64x128xf32, #tpu.memory_space<vmem>>, %arg3: memref<1x128xf32, #tpu.memory_space<vmem>>, %arg4: memref<1x128xf32, #tpu.memory_space<vmem>>, %arg5: memref<128x512xf32, #tpu.memory_space<vmem>>, %arg6: memref<16x512xf32, #tpu.memory_space<vmem>>, %arg7: memref<64x512xf32, #tpu.memory_space<vmem>>, %arg8: memref<1x512xf32, #tpu.memory_space<vmem>>, %arg9: memref<1x512xf32, #tpu.memory_space<vmem>>, %arg10: memref<64x128xf32, #tpu.memory_space<vmem>>, %arg11: memref<64x128xf32, #tpu.memory_space<vmem>>, %arg12: memref<64x1024xf32, #tpu.memory_space<vmem>>, %arg13: memref<1x2x128xf32, #tpu.memory_space<vmem>>) attributes {dimension_semantics = [#tpu.dimension_semantics<parallel>], iteration_bounds = array<i64: 4>, scalar_prefetch = 0 : i64, scratch_operands = 0 : i64, tpu.core_type = #tpu.core_type<tc>, window_params = [{transform_indices = @transform_0, window_bounds = array<i64: 16, 64>}, {pipeline_mode = #tpu.pipeline_mode<synchronous>, transform_indices = @transform_1, window_bounds = array<i64: 64, 128>}, {pipeline_mode = #tpu.pipeline_mode<synchronous>, transform_indices = @transform_2, window_bounds = array<i64: 1, 128>}, {pipeline_mode = #tpu.pipeline_mode<synchronous>, transform_indices = @transform_3, window_bounds = array<i64: 1, 128>}, {pipeline_mode = #tpu.pipeline_mode<synchronous>, transform_indices = @transform_4, window_bounds = array<i64: 128, 512>}, {pipeline_mode = #tpu.pipeline_mode<synchronous>, transform_indices = @transform_5, window_bounds = array<i64: 16, 512>}, {pipeline_mode = #tpu.pipeline_mode<synchronous>, transform_indices = @transform_6, window_bounds = array<i64: 64, 512>}, {pipeline_mode = #tpu.pipeline_mode<synchronous>, transform_indices = @transform_7, window_bounds = array<i64: 1, 512>}, {pipeline_mode = #tpu.pipeline_mode<synchronous>, transform_indices = @transform_8, window_bounds = array<i64: 1, 512>}, {pipeline_mode = #tpu.pipeline_mode<synchronous>, transform_indices = @transform_9, window_bounds = array<i64: 64, 128>}, {pipeline_mode = #tpu.pipeline_mode<synchronous>, transform_indices = @transform_10, window_bounds = array<i64: 64, 128>}, {pipeline_mode = #tpu.pipeline_mode<synchronous>, transform_indices = @transform_11, window_bounds = array<i64: 64, 1024>}, {transform_indices = @transform_12, window_bounds = array<i64: 1, 2, 128>}]} {
    %c0 = arith.constant 0 : index
    %c0_0 = arith.constant 0 : index
    %0 = vector.load %arg1[%c0, %c0_0] : memref<16x64xf32, #tpu.memory_space<vmem>>, vector<16x64xf32>
    %c0_1 = arith.constant 0 : index
    %c0_2 = arith.constant 0 : index
    %1 = vector.load %arg2[%c0_1, %c0_2] : memref<64x128xf32, #tpu.memory_space<vmem>>, vector<64x128xf32>
    %cst = arith.constant dense<0.000000e+00> : vector<16x128xf32>
    %2 = tpu.matmul %0, %1, %cst {dimension_numbers = #tpu.dot_dimension_numbers<[1], [0], [0], [1], [0, 0, 1, 1], [], []>} : vector<16x64xf32>, vector<64x128xf32>, vector<16x128xf32> -> vector<16x128xf32>
    %c0_3 = arith.constant 0 : index
    %c0_4 = arith.constant 0 : index
    %3 = vector.load %arg3[%c0_3, %c0_4] : memref<1x128xf32, #tpu.memory_space<vmem>>, vector<1x128xf32>
    %4 = vector.broadcast %3 : vector<1x128xf32> to vector<16x128xf32>
    %5 = arith.mulf %2, %4 : vector<16x128xf32>
    %c0_5 = arith.constant 0 : index
    %c0_6 = arith.constant 0 : index
    %6 = vector.load %arg4[%c0_5, %c0_6] : memref<1x128xf32, #tpu.memory_space<vmem>>, vector<1x128xf32>
    %7 = vector.broadcast %6 : vector<1x128xf32> to vector<16x128xf32>
    %8 = arith.addf %5, %7 : vector<16x128xf32>
    %cst_7 = arith.constant 0.000000e+00 : f32
    %9 = vector.broadcast %cst_7 : f32 to vector<16x128xf32>
    %10 = arith.maximumf %8, %9 : vector<16x128xf32>
    %c16_i32 = arith.constant 16 : i32
    %11 = tpu.dynamic_rotate %10 by %c16_i32 dim 1 : vector<16x128xf32>, i32 -> vector<16x128xf32>
    %12 = arith.maximumf %10, %11 : vector<16x128xf32>
    %c32_i32 = arith.constant 32 : i32
    %13 = tpu.dynamic_rotate %12 by %c32_i32 dim 1 : vector<16x128xf32>, i32 -> vector<16x128xf32>
    %14 = arith.maximumf %12, %13 : vector<16x128xf32>
    %c64_i32 = arith.constant 64 : i32
    %15 = tpu.dynamic_rotate %14 by %c64_i32 dim 1 : vector<16x128xf32>, i32 -> vector<16x128xf32>
    %16 = arith.maximumf %14, %15 : vector<16x128xf32>
    %17 = vector.extract_strided_slice %16 {offsets = [0, 0], sizes = [16, 16], strides = [1, 1]} : vector<16x128xf32> to vector<16x16xf32>
    %c0_8 = arith.constant 0 : index
    %c0_9 = arith.constant 0 : index
    %18 = vector.load %arg5[%c0_8, %c0_9] : memref<128x512xf32, #tpu.memory_space<vmem>>, vector<128x512xf32>
    %cst_10 = arith.constant dense<0.000000e+00> : vector<16x512xf32>
    %19 = tpu.matmul %10, %18, %cst_10 {dimension_numbers = #tpu.dot_dimension_numbers<[1], [0], [0], [1], [0, 0, 1, 1], [], []>} : vector<16x128xf32>, vector<128x512xf32>, vector<16x512xf32> -> vector<16x512xf32>
    %c0_11 = arith.constant 0 : index
    %c0_12 = arith.constant 0 : index
    %20 = vector.load %arg6[%c0_11, %c0_12] : memref<16x512xf32, #tpu.memory_space<vmem>>, vector<16x512xf32>
    %cst_13 = arith.constant dense<0.000000e+00> : vector<16x512xf32>
    %21 = tpu.matmul %17, %20, %cst_13 {dimension_numbers = #tpu.dot_dimension_numbers<[1], [0], [0], [1], [0, 0, 1, 1], [], []>} : vector<16x16xf32>, vector<16x512xf32>, vector<16x512xf32> -> vector<16x512xf32>
    %22 = arith.addf %19, %21 : vector<16x512xf32>
    %c0_14 = arith.constant 0 : index
    %c0_15 = arith.constant 0 : index
    %23 = vector.load %arg7[%c0_14, %c0_15] : memref<64x512xf32, #tpu.memory_space<vmem>>, vector<64x512xf32>
    %cst_16 = arith.constant dense<0.000000e+00> : vector<16x512xf32>
    %24 = tpu.matmul %0, %23, %cst_16 {dimension_numbers = #tpu.dot_dimension_numbers<[1], [0], [0], [1], [0, 0, 1, 1], [], []>} : vector<16x64xf32>, vector<64x512xf32>, vector<16x512xf32> -> vector<16x512xf32>
    %25 = arith.mulf %22, %24 : vector<16x512xf32>
    %c0_17 = arith.constant 0 : index
    %c0_18 = arith.constant 0 : index
    %26 = vector.load %arg8[%c0_17, %c0_18] : memref<1x512xf32, #tpu.memory_space<vmem>>, vector<1x512xf32>
    %27 = vector.broadcast %26 : vector<1x512xf32> to vector<16x512xf32>
    %28 = arith.mulf %25, %27 : vector<16x512xf32>
    %c0_19 = arith.constant 0 : index
    %c0_20 = arith.constant 0 : index
    %29 = vector.load %arg9[%c0_19, %c0_20] : memref<1x512xf32, #tpu.memory_space<vmem>>, vector<1x512xf32>
    %30 = vector.broadcast %29 : vector<1x512xf32> to vector<16x512xf32>
    %31 = arith.addf %28, %30 : vector<16x512xf32>
    %cst_21 = arith.constant 0.000000e+00 : f32
    %32 = vector.broadcast %cst_21 : f32 to vector<16x512xf32>
    %33 = arith.maximumf %31, %32 : vector<16x512xf32>
    %c64_i32_22 = arith.constant 64 : i32
    %34 = tpu.dynamic_rotate %33 by %c64_i32_22 dim 1 : vector<16x512xf32>, i32 -> vector<16x512xf32>
    %35 = arith.maximumf %33, %34 : vector<16x512xf32>
    %c128_i32 = arith.constant 128 : i32
    %36 = tpu.dynamic_rotate %35 by %c128_i32 dim 1 : vector<16x512xf32>, i32 -> vector<16x512xf32>
    %37 = arith.maximumf %35, %36 : vector<16x512xf32>
    %c256_i32 = arith.constant 256 : i32
    %38 = tpu.dynamic_rotate %37 by %c256_i32 dim 1 : vector<16x512xf32>, i32 -> vector<16x512xf32>
    %39 = arith.maximumf %37, %38 : vector<16x512xf32>
    %40 = vector.extract_strided_slice %39 {offsets = [0, 0], sizes = [16, 64], strides = [1, 1]} : vector<16x512xf32> to vector<16x64xf32>
    %c0_23 = arith.constant 0 : index
    %c0_24 = arith.constant 0 : index
    %41 = vector.load %arg10[%c0_23, %c0_24] : memref<64x128xf32, #tpu.memory_space<vmem>>, vector<64x128xf32>
    %c0_25 = arith.constant 0 : index
    %c0_26 = arith.constant 0 : index
    %42 = vector.load %arg11[%c0_25, %c0_26] : memref<64x128xf32, #tpu.memory_space<vmem>>, vector<64x128xf32>
    %cst_27 = arith.constant dense<0.000000e+00> : vector<16x128xf32>
    %43 = tpu.matmul %40, %42, %cst_27 {dimension_numbers = #tpu.dot_dimension_numbers<[1], [0], [0], [1], [0, 0, 1, 1], [], []>} : vector<16x64xf32>, vector<64x128xf32>, vector<16x128xf32> -> vector<16x128xf32>
    %c0_28 = arith.constant 0 : index
    %c0_29 = arith.constant 0 : index
    %44 = vector.load %arg12[%c0_28, %c0_29] : memref<64x1024xf32, #tpu.memory_space<vmem>>, vector<64x1024xf32>
    %cst_30 = arith.constant dense<0.000000e+00> : vector<16x1024xf32>
    %45 = tpu.matmul %0, %44, %cst_30 {dimension_numbers = #tpu.dot_dimension_numbers<[1], [0], [0], [1], [0, 0, 1, 1], [], []>} : vector<16x64xf32>, vector<64x1024xf32>, vector<16x1024xf32> -> vector<16x1024xf32>
    %cst_31 = arith.constant 0.000000e+00 : f32
    %46 = vector.broadcast %cst_31 : f32 to vector<1x128xf32>
    %cst_32 = arith.constant 0.000000e+00 : f32
    %47 = vector.broadcast %cst_32 : f32 to vector<1x128xf32>
    %48 = vector.extract_strided_slice %33 {offsets = [0, 0], sizes = [16, 64], strides = [1, 1]} : vector<16x512xf32> to vector<16x64xf32>
    %cst_33 = arith.constant dense<0.000000e+00> : vector<16x128xf32>
    %49 = tpu.matmul %48, %41, %cst_33 {dimension_numbers = #tpu.dot_dimension_numbers<[1], [0], [0], [1], [0, 0, 1, 1], [], []>} : vector<16x64xf32>, vector<64x128xf32>, vector<16x128xf32> -> vector<16x128xf32>
    %50 = arith.addf %49, %43 : vector<16x128xf32>
    %51 = vector.extract_strided_slice %45 {offsets = [0, 0], sizes = [16, 128], strides = [1, 1]} : vector<16x1024xf32> to vector<16x128xf32>
    %52 = arith.mulf %50, %51 : vector<16x128xf32>
    %cst_34 = arith.constant dense<0.000000e+00> : vector<128xf32>
    %53 = vector.multi_reduction <add>, %52, %cst_34 [0] : vector<16x128xf32> to vector<128xf32>
    %54 = vector.shape_cast %53 : vector<128xf32> to vector<1x128xf32>
    %55 = arith.addf %46, %54 : vector<1x128xf32>
    %56 = arith.mulf %52, %52 : vector<16x128xf32>
    %cst_35 = arith.constant dense<0.000000e+00> : vector<128xf32>
    %57 = vector.multi_reduction <add>, %56, %cst_35 [0] : vector<16x128xf32> to vector<128xf32>
    %58 = vector.shape_cast %57 : vector<128xf32> to vector<1x128xf32>
    %59 = arith.addf %47, %58 : vector<1x128xf32>
    %60 = vector.extract_strided_slice %33 {offsets = [0, 64], sizes = [16, 64], strides = [1, 1]} : vector<16x512xf32> to vector<16x64xf32>
    %cst_36 = arith.constant dense<0.000000e+00> : vector<16x128xf32>
    %61 = tpu.matmul %60, %41, %cst_36 {dimension_numbers = #tpu.dot_dimension_numbers<[1], [0], [0], [1], [0, 0, 1, 1], [], []>} : vector<16x64xf32>, vector<64x128xf32>, vector<16x128xf32> -> vector<16x128xf32>
    %62 = arith.addf %61, %43 : vector<16x128xf32>
    %63 = vector.extract_strided_slice %45 {offsets = [0, 128], sizes = [16, 128], strides = [1, 1]} : vector<16x1024xf32> to vector<16x128xf32>
    %64 = arith.mulf %62, %63 : vector<16x128xf32>
    %cst_37 = arith.constant dense<0.000000e+00> : vector<128xf32>
    %65 = vector.multi_reduction <add>, %64, %cst_37 [0] : vector<16x128xf32> to vector<128xf32>
    %66 = vector.shape_cast %65 : vector<128xf32> to vector<1x128xf32>
    %67 = arith.addf %55, %66 : vector<1x128xf32>
    %68 = arith.mulf %64, %64 : vector<16x128xf32>
    %cst_38 = arith.constant dense<0.000000e+00> : vector<128xf32>
    %69 = vector.multi_reduction <add>, %68, %cst_38 [0] : vector<16x128xf32> to vector<128xf32>
    %70 = vector.shape_cast %69 : vector<128xf32> to vector<1x128xf32>
    %71 = arith.addf %59, %70 : vector<1x128xf32>
    %72 = vector.extract_strided_slice %33 {offsets = [0, 128], sizes = [16, 64], strides = [1, 1]} : vector<16x512xf32> to vector<16x64xf32>
    %cst_39 = arith.constant dense<0.000000e+00> : vector<16x128xf32>
    %73 = tpu.matmul %72, %41, %cst_39 {dimension_numbers = #tpu.dot_dimension_numbers<[1], [0], [0], [1], [0, 0, 1, 1], [], []>} : vector<16x64xf32>, vector<64x128xf32>, vector<16x128xf32> -> vector<16x128xf32>
    %74 = arith.addf %73, %43 : vector<16x128xf32>
    %75 = vector.extract_strided_slice %45 {offsets = [0, 256], sizes = [16, 128], strides = [1, 1]} : vector<16x1024xf32> to vector<16x128xf32>
    %76 = arith.mulf %74, %75 : vector<16x128xf32>
    %cst_40 = arith.constant dense<0.000000e+00> : vector<128xf32>
    %77 = vector.multi_reduction <add>, %76, %cst_40 [0] : vector<16x128xf32> to vector<128xf32>
    %78 = vector.shape_cast %77 : vector<128xf32> to vector<1x128xf32>
    %79 = arith.addf %67, %78 : vector<1x128xf32>
    %80 = arith.mulf %76, %76 : vector<16x128xf32>
    %cst_41 = arith.constant dense<0.000000e+00> : vector<128xf32>
    %81 = vector.multi_reduction <add>, %80, %cst_41 [0] : vector<16x128xf32> to vector<128xf32>
    %82 = vector.shape_cast %81 : vector<128xf32> to vector<1x128xf32>
    %83 = arith.addf %71, %82 : vector<1x128xf32>
    %84 = vector.extract_strided_slice %33 {offsets = [0, 192], sizes = [16, 64], strides = [1, 1]} : vector<16x512xf32> to vector<16x64xf32>
    %cst_42 = arith.constant dense<0.000000e+00> : vector<16x128xf32>
    %85 = tpu.matmul %84, %41, %cst_42 {dimension_numbers = #tpu.dot_dimension_numbers<[1], [0], [0], [1], [0, 0, 1, 1], [], []>} : vector<16x64xf32>, vector<64x128xf32>, vector<16x128xf32> -> vector<16x128xf32>
    %86 = arith.addf %85, %43 : vector<16x128xf32>
    %87 = vector.extract_strided_slice %45 {offsets = [0, 384], sizes = [16, 128], strides = [1, 1]} : vector<16x1024xf32> to vector<16x128xf32>
    %88 = arith.mulf %86, %87 : vector<16x128xf32>
    %cst_43 = arith.constant dense<0.000000e+00> : vector<128xf32>
    %89 = vector.multi_reduction <add>, %88, %cst_43 [0] : vector<16x128xf32> to vector<128xf32>
    %90 = vector.shape_cast %89 : vector<128xf32> to vector<1x128xf32>
    %91 = arith.addf %79, %90 : vector<1x128xf32>
    %92 = arith.mulf %88, %88 : vector<16x128xf32>
    %cst_44 = arith.constant dense<0.000000e+00> : vector<128xf32>
    %93 = vector.multi_reduction <add>, %92, %cst_44 [0] : vector<16x128xf32> to vector<128xf32>
    %94 = vector.shape_cast %93 : vector<128xf32> to vector<1x128xf32>
    %95 = arith.addf %83, %94 : vector<1x128xf32>
    %96 = vector.extract_strided_slice %33 {offsets = [0, 256], sizes = [16, 64], strides = [1, 1]} : vector<16x512xf32> to vector<16x64xf32>
    %cst_45 = arith.constant dense<0.000000e+00> : vector<16x128xf32>
    %97 = tpu.matmul %96, %41, %cst_45 {dimension_numbers = #tpu.dot_dimension_numbers<[1], [0], [0], [1], [0, 0, 1, 1], [], []>} : vector<16x64xf32>, vector<64x128xf32>, vector<16x128xf32> -> vector<16x128xf32>
    %98 = arith.addf %97, %43 : vector<16x128xf32>
    %99 = vector.extract_strided_slice %45 {offsets = [0, 512], sizes = [16, 128], strides = [1, 1]} : vector<16x1024xf32> to vector<16x128xf32>
    %100 = arith.mulf %98, %99 : vector<16x128xf32>
    %cst_46 = arith.constant dense<0.000000e+00> : vector<128xf32>
    %101 = vector.multi_reduction <add>, %100, %cst_46 [0] : vector<16x128xf32> to vector<128xf32>
    %102 = vector.shape_cast %101 : vector<128xf32> to vector<1x128xf32>
    %103 = arith.addf %91, %102 : vector<1x128xf32>
    %104 = arith.mulf %100, %100 : vector<16x128xf32>
    %cst_47 = arith.constant dense<0.000000e+00> : vector<128xf32>
    %105 = vector.multi_reduction <add>, %104, %cst_47 [0] : vector<16x128xf32> to vector<128xf32>
    %106 = vector.shape_cast %105 : vector<128xf32> to vector<1x128xf32>
    %107 = arith.addf %95, %106 : vector<1x128xf32>
    %108 = vector.extract_strided_slice %33 {offsets = [0, 320], sizes = [16, 64], strides = [1, 1]} : vector<16x512xf32> to vector<16x64xf32>
    %cst_48 = arith.constant dense<0.000000e+00> : vector<16x128xf32>
    %109 = tpu.matmul %108, %41, %cst_48 {dimension_numbers = #tpu.dot_dimension_numbers<[1], [0], [0], [1], [0, 0, 1, 1], [], []>} : vector<16x64xf32>, vector<64x128xf32>, vector<16x128xf32> -> vector<16x128xf32>
    %110 = arith.addf %109, %43 : vector<16x128xf32>
    %111 = vector.extract_strided_slice %45 {offsets = [0, 640], sizes = [16, 128], strides = [1, 1]} : vector<16x1024xf32> to vector<16x128xf32>
    %112 = arith.mulf %110, %111 : vector<16x128xf32>
    %cst_49 = arith.constant dense<0.000000e+00> : vector<128xf32>
    %113 = vector.multi_reduction <add>, %112, %cst_49 [0] : vector<16x128xf32> to vector<128xf32>
    %114 = vector.shape_cast %113 : vector<128xf32> to vector<1x128xf32>
    %115 = arith.addf %103, %114 : vector<1x128xf32>
    %116 = arith.mulf %112, %112 : vector<16x128xf32>
    %cst_50 = arith.constant dense<0.000000e+00> : vector<128xf32>
    %117 = vector.multi_reduction <add>, %116, %cst_50 [0] : vector<16x128xf32> to vector<128xf32>
    %118 = vector.shape_cast %117 : vector<128xf32> to vector<1x128xf32>
    %119 = arith.addf %107, %118 : vector<1x128xf32>
    %120 = vector.extract_strided_slice %33 {offsets = [0, 384], sizes = [16, 64], strides = [1, 1]} : vector<16x512xf32> to vector<16x64xf32>
    %cst_51 = arith.constant dense<0.000000e+00> : vector<16x128xf32>
    %121 = tpu.matmul %120, %41, %cst_51 {dimension_numbers = #tpu.dot_dimension_numbers<[1], [0], [0], [1], [0, 0, 1, 1], [], []>} : vector<16x64xf32>, vector<64x128xf32>, vector<16x128xf32> -> vector<16x128xf32>
    %122 = arith.addf %121, %43 : vector<16x128xf32>
    %123 = vector.extract_strided_slice %45 {offsets = [0, 768], sizes = [16, 128], strides = [1, 1]} : vector<16x1024xf32> to vector<16x128xf32>
    %124 = arith.mulf %122, %123 : vector<16x128xf32>
    %cst_52 = arith.constant dense<0.000000e+00> : vector<128xf32>
    %125 = vector.multi_reduction <add>, %124, %cst_52 [0] : vector<16x128xf32> to vector<128xf32>
    %126 = vector.shape_cast %125 : vector<128xf32> to vector<1x128xf32>
    %127 = arith.addf %115, %126 : vector<1x128xf32>
    %128 = arith.mulf %124, %124 : vector<16x128xf32>
    %cst_53 = arith.constant dense<0.000000e+00> : vector<128xf32>
    %129 = vector.multi_reduction <add>, %128, %cst_53 [0] : vector<16x128xf32> to vector<128xf32>
    %130 = vector.shape_cast %129 : vector<128xf32> to vector<1x128xf32>
    %131 = arith.addf %119, %130 : vector<1x128xf32>
    %132 = vector.extract_strided_slice %33 {offsets = [0, 448], sizes = [16, 64], strides = [1, 1]} : vector<16x512xf32> to vector<16x64xf32>
    %cst_54 = arith.constant dense<0.000000e+00> : vector<16x128xf32>
    %133 = tpu.matmul %132, %41, %cst_54 {dimension_numbers = #tpu.dot_dimension_numbers<[1], [0], [0], [1], [0, 0, 1, 1], [], []>} : vector<16x64xf32>, vector<64x128xf32>, vector<16x128xf32> -> vector<16x128xf32>
    %134 = arith.addf %133, %43 : vector<16x128xf32>
    %135 = vector.extract_strided_slice %45 {offsets = [0, 896], sizes = [16, 128], strides = [1, 1]} : vector<16x1024xf32> to vector<16x128xf32>
    %136 = arith.mulf %134, %135 : vector<16x128xf32>
    %cst_55 = arith.constant dense<0.000000e+00> : vector<128xf32>
    %137 = vector.multi_reduction <add>, %136, %cst_55 [0] : vector<16x128xf32> to vector<128xf32>
    %138 = vector.shape_cast %137 : vector<128xf32> to vector<1x128xf32>
    %139 = arith.addf %127, %138 : vector<1x128xf32>
    %140 = arith.mulf %136, %136 : vector<16x128xf32>
    %cst_56 = arith.constant dense<0.000000e+00> : vector<128xf32>
    %141 = vector.multi_reduction <add>, %140, %cst_56 [0] : vector<16x128xf32> to vector<128xf32>
    %142 = vector.shape_cast %141 : vector<128xf32> to vector<1x128xf32>
    %143 = arith.addf %131, %142 : vector<1x128xf32>
    %144 = tpu.concatenate %139, %143 in 0 : vector<1x128xf32>, vector<1x128xf32> -> vector<2x128xf32>
    %145 = vector.shape_cast %144 : vector<2x128xf32> to vector<1x2x128xf32>
    %c0_57 = arith.constant 0 : index
    %c0_58 = arith.constant 0 : index
    %c0_59 = arith.constant 0 : index
    %146 = vector.load %arg13[%c0_57, %c0_58, %c0_59] : memref<1x2x128xf32, #tpu.memory_space<vmem>>, vector<1x2x128xf32>
    tpu.vector_store %arg13[%c0_57, %c0_58, %c0_59], %145 {strides = array<i32>} : memref<1x2x128xf32, #tpu.memory_space<vmem>>, vector<1x2x128xf32>,
    return
  }
  func.func @transform_0(%arg0: i32) -> (i32, i32) {
    %c0_i32 = arith.constant 0 : i32
    %c0_i32_0 = arith.constant 0 : i32
    return %arg0, %c0_i32 : i32, i32
  }
  func.func @transform_1(%arg0: i32) -> (i32, i32) {
    %c0_i32 = arith.constant 0 : i32
    %c0_i32_0 = arith.constant 0 : i32
    %c0_i32_1 = arith.constant 0 : i32
    return %c0_i32, %c0_i32_0 : i32, i32
  }
  func.func @transform_2(%arg0: i32) -> (i32, i32) {
    %c0_i32 = arith.constant 0 : i32
    %c0_i32_0 = arith.constant 0 : i32
    %c0_i32_1 = arith.constant 0 : i32
    return %c0_i32, %c0_i32_0 : i32, i32
  }
  func.func @transform_3(%arg0: i32) -> (i32, i32) {
    %c0_i32 = arith.constant 0 : i32
    %c0_i32_0 = arith.constant 0 : i32
    %c0_i32_1 = arith.constant 0 : i32
    return %c0_i32, %c0_i32_0 : i32, i32
  }
  func.func @transform_4(%arg0: i32) -> (i32, i32) {
    %c0_i32 = arith.constant 0 : i32
    %c0_i32_0 = arith.constant 0 : i32
    %c0_i32_1 = arith.constant 0 : i32
    return %c0_i32, %c0_i32_0 : i32, i32
  }
  func.func @transform_5(%arg0: i32) -> (i32, i32) {
    %c0_i32 = arith.constant 0 : i32
    %c0_i32_0 = arith.constant 0 : i32
    %c0_i32_1 = arith.constant 0 : i32
    return %c0_i32, %c0_i32_0 : i32, i32
  }
  func.func @transform_6(%arg0: i32) -> (i32, i32) {
    %c0_i32 = arith.constant 0 : i32
    %c0_i32_0 = arith.constant 0 : i32
    %c0_i32_1 = arith.constant 0 : i32
    return %c0_i32, %c0_i32_0 : i32, i32
  }
  func.func @transform_7(%arg0: i32) -> (i32, i32) {
    %c0_i32 = arith.constant 0 : i32
    %c0_i32_0 = arith.constant 0 : i32
    %c0_i32_1 = arith.constant 0 : i32
    return %c0_i32, %c0_i32_0 : i32, i32
  }
  func.func @transform_8(%arg0: i32) -> (i32, i32) {
    %c0_i32 = arith.constant 0 : i32
    %c0_i32_0 = arith.constant 0 : i32
    %c0_i32_1 = arith.constant 0 : i32
    return %c0_i32, %c0_i32_0 : i32, i32
  }
  func.func @transform_9(%arg0: i32) -> (i32, i32) {
    %c0_i32 = arith.constant 0 : i32
    %c0_i32_0 = arith.constant 0 : i32
    %c0_i32_1 = arith.constant 0 : i32
    return %c0_i32, %c0_i32_0 : i32, i32
  }
  func.func @transform_10(%arg0: i32) -> (i32, i32) {
    %c0_i32 = arith.constant 0 : i32
    %c0_i32_0 = arith.constant 0 : i32
    %c0_i32_1 = arith.constant 0 : i32
    return %c0_i32, %c0_i32_0 : i32, i32
  }
  func.func @transform_11(%arg0: i32) -> (i32, i32) {
    %c0_i32 = arith.constant 0 : i32
    %c0_i32_0 = arith.constant 0 : i32
    %c0_i32_1 = arith.constant 0 : i32
    return %c0_i32, %c0_i32_0 : i32, i32
  }
  func.func @transform_12(%arg0: i32) -> (i32, i32, i32) {
    %c0_i32 = arith.constant 0 : i32
    %c0_i32_0 = arith.constant 0 : i32
    %c0_i32_1 = arith.constant 0 : i32
    return %arg0, %c0_i32, %c0_i32_0 : i32, i32, i32
  }
}

module attributes {stable_mosaic.version = 11 : i64} {
  func.func @_final_kernel(%arg0: i32, %arg1: memref<16x64xf32, #tpu.memory_space<vmem>>, %arg2: memref<64x128xf32, #tpu.memory_space<vmem>>, %arg3: memref<1x128xf32, #tpu.memory_space<vmem>>, %arg4: memref<1x128xf32, #tpu.memory_space<vmem>>, %arg5: memref<128x512xf32, #tpu.memory_space<vmem>>, %arg6: memref<16x512xf32, #tpu.memory_space<vmem>>, %arg7: memref<64x512xf32, #tpu.memory_space<vmem>>, %arg8: memref<1x512xf32, #tpu.memory_space<vmem>>, %arg9: memref<1x512xf32, #tpu.memory_space<vmem>>, %arg10: memref<64x128xf32, #tpu.memory_space<vmem>>, %arg11: memref<64x128xf32, #tpu.memory_space<vmem>>, %arg12: memref<64x1024xf32, #tpu.memory_space<vmem>>, %arg13: memref<1x128xf32, #tpu.memory_space<vmem>>, %arg14: memref<1x128xf32, #tpu.memory_space<vmem>>, %arg15: memref<16x128xf32, #tpu.memory_space<vmem>>) attributes {dimension_semantics = [#tpu.dimension_semantics<parallel>], iteration_bounds = array<i64: 4>, scalar_prefetch = 0 : i64, scratch_operands = 0 : i64, tpu.core_type = #tpu.core_type<tc>, window_params = [{transform_indices = @transform_0, window_bounds = array<i64: 16, 64>}, {pipeline_mode = #tpu.pipeline_mode<synchronous>, transform_indices = @transform_1, window_bounds = array<i64: 64, 128>}, {pipeline_mode = #tpu.pipeline_mode<synchronous>, transform_indices = @transform_2, window_bounds = array<i64: 1, 128>}, {pipeline_mode = #tpu.pipeline_mode<synchronous>, transform_indices = @transform_3, window_bounds = array<i64: 1, 128>}, {pipeline_mode = #tpu.pipeline_mode<synchronous>, transform_indices = @transform_4, window_bounds = array<i64: 128, 512>}, {pipeline_mode = #tpu.pipeline_mode<synchronous>, transform_indices = @transform_5, window_bounds = array<i64: 16, 512>}, {pipeline_mode = #tpu.pipeline_mode<synchronous>, transform_indices = @transform_6, window_bounds = array<i64: 64, 512>}, {pipeline_mode = #tpu.pipeline_mode<synchronous>, transform_indices = @transform_7, window_bounds = array<i64: 1, 512>}, {pipeline_mode = #tpu.pipeline_mode<synchronous>, transform_indices = @transform_8, window_bounds = array<i64: 1, 512>}, {pipeline_mode = #tpu.pipeline_mode<synchronous>, transform_indices = @transform_9, window_bounds = array<i64: 64, 128>}, {pipeline_mode = #tpu.pipeline_mode<synchronous>, transform_indices = @transform_10, window_bounds = array<i64: 64, 128>}, {pipeline_mode = #tpu.pipeline_mode<synchronous>, transform_indices = @transform_11, window_bounds = array<i64: 64, 1024>}, {pipeline_mode = #tpu.pipeline_mode<synchronous>, transform_indices = @transform_12, window_bounds = array<i64: 1, 128>}, {pipeline_mode = #tpu.pipeline_mode<synchronous>, transform_indices = @transform_13, window_bounds = array<i64: 1, 128>}, {transform_indices = @transform_14, window_bounds = array<i64: 16, 128>}]} {
    %c0 = arith.constant 0 : index
    %c0_0 = arith.constant 0 : index
    %0 = vector.load %arg1[%c0, %c0_0] : memref<16x64xf32, #tpu.memory_space<vmem>>, vector<16x64xf32>
    %c0_1 = arith.constant 0 : index
    %c0_2 = arith.constant 0 : index
    %1 = vector.load %arg2[%c0_1, %c0_2] : memref<64x128xf32, #tpu.memory_space<vmem>>, vector<64x128xf32>
    %cst = arith.constant dense<0.000000e+00> : vector<16x128xf32>
    %2 = tpu.matmul %0, %1, %cst {dimension_numbers = #tpu.dot_dimension_numbers<[1], [0], [0], [1], [0, 0, 1, 1], [], []>} : vector<16x64xf32>, vector<64x128xf32>, vector<16x128xf32> -> vector<16x128xf32>
    %c0_3 = arith.constant 0 : index
    %c0_4 = arith.constant 0 : index
    %3 = vector.load %arg3[%c0_3, %c0_4] : memref<1x128xf32, #tpu.memory_space<vmem>>, vector<1x128xf32>
    %4 = vector.broadcast %3 : vector<1x128xf32> to vector<16x128xf32>
    %5 = arith.mulf %2, %4 : vector<16x128xf32>
    %c0_5 = arith.constant 0 : index
    %c0_6 = arith.constant 0 : index
    %6 = vector.load %arg4[%c0_5, %c0_6] : memref<1x128xf32, #tpu.memory_space<vmem>>, vector<1x128xf32>
    %7 = vector.broadcast %6 : vector<1x128xf32> to vector<16x128xf32>
    %8 = arith.addf %5, %7 : vector<16x128xf32>
    %cst_7 = arith.constant 0.000000e+00 : f32
    %9 = vector.broadcast %cst_7 : f32 to vector<16x128xf32>
    %10 = arith.maximumf %8, %9 : vector<16x128xf32>
    %c16_i32 = arith.constant 16 : i32
    %11 = tpu.dynamic_rotate %10 by %c16_i32 dim 1 : vector<16x128xf32>, i32 -> vector<16x128xf32>
    %12 = arith.maximumf %10, %11 : vector<16x128xf32>
    %c32_i32 = arith.constant 32 : i32
    %13 = tpu.dynamic_rotate %12 by %c32_i32 dim 1 : vector<16x128xf32>, i32 -> vector<16x128xf32>
    %14 = arith.maximumf %12, %13 : vector<16x128xf32>
    %c64_i32 = arith.constant 64 : i32
    %15 = tpu.dynamic_rotate %14 by %c64_i32 dim 1 : vector<16x128xf32>, i32 -> vector<16x128xf32>
    %16 = arith.maximumf %14, %15 : vector<16x128xf32>
    %17 = vector.extract_strided_slice %16 {offsets = [0, 0], sizes = [16, 16], strides = [1, 1]} : vector<16x128xf32> to vector<16x16xf32>
    %c0_8 = arith.constant 0 : index
    %c0_9 = arith.constant 0 : index
    %18 = vector.load %arg5[%c0_8, %c0_9] : memref<128x512xf32, #tpu.memory_space<vmem>>, vector<128x512xf32>
    %cst_10 = arith.constant dense<0.000000e+00> : vector<16x512xf32>
    %19 = tpu.matmul %10, %18, %cst_10 {dimension_numbers = #tpu.dot_dimension_numbers<[1], [0], [0], [1], [0, 0, 1, 1], [], []>} : vector<16x128xf32>, vector<128x512xf32>, vector<16x512xf32> -> vector<16x512xf32>
    %c0_11 = arith.constant 0 : index
    %c0_12 = arith.constant 0 : index
    %20 = vector.load %arg6[%c0_11, %c0_12] : memref<16x512xf32, #tpu.memory_space<vmem>>, vector<16x512xf32>
    %cst_13 = arith.constant dense<0.000000e+00> : vector<16x512xf32>
    %21 = tpu.matmul %17, %20, %cst_13 {dimension_numbers = #tpu.dot_dimension_numbers<[1], [0], [0], [1], [0, 0, 1, 1], [], []>} : vector<16x16xf32>, vector<16x512xf32>, vector<16x512xf32> -> vector<16x512xf32>
    %22 = arith.addf %19, %21 : vector<16x512xf32>
    %c0_14 = arith.constant 0 : index
    %c0_15 = arith.constant 0 : index
    %23 = vector.load %arg7[%c0_14, %c0_15] : memref<64x512xf32, #tpu.memory_space<vmem>>, vector<64x512xf32>
    %cst_16 = arith.constant dense<0.000000e+00> : vector<16x512xf32>
    %24 = tpu.matmul %0, %23, %cst_16 {dimension_numbers = #tpu.dot_dimension_numbers<[1], [0], [0], [1], [0, 0, 1, 1], [], []>} : vector<16x64xf32>, vector<64x512xf32>, vector<16x512xf32> -> vector<16x512xf32>
    %25 = arith.mulf %22, %24 : vector<16x512xf32>
    %c0_17 = arith.constant 0 : index
    %c0_18 = arith.constant 0 : index
    %26 = vector.load %arg8[%c0_17, %c0_18] : memref<1x512xf32, #tpu.memory_space<vmem>>, vector<1x512xf32>
    %27 = vector.broadcast %26 : vector<1x512xf32> to vector<16x512xf32>
    %28 = arith.mulf %25, %27 : vector<16x512xf32>
    %c0_19 = arith.constant 0 : index
    %c0_20 = arith.constant 0 : index
    %29 = vector.load %arg9[%c0_19, %c0_20] : memref<1x512xf32, #tpu.memory_space<vmem>>, vector<1x512xf32>
    %30 = vector.broadcast %29 : vector<1x512xf32> to vector<16x512xf32>
    %31 = arith.addf %28, %30 : vector<16x512xf32>
    %cst_21 = arith.constant 0.000000e+00 : f32
    %32 = vector.broadcast %cst_21 : f32 to vector<16x512xf32>
    %33 = arith.maximumf %31, %32 : vector<16x512xf32>
    %c64_i32_22 = arith.constant 64 : i32
    %34 = tpu.dynamic_rotate %33 by %c64_i32_22 dim 1 : vector<16x512xf32>, i32 -> vector<16x512xf32>
    %35 = arith.maximumf %33, %34 : vector<16x512xf32>
    %c128_i32 = arith.constant 128 : i32
    %36 = tpu.dynamic_rotate %35 by %c128_i32 dim 1 : vector<16x512xf32>, i32 -> vector<16x512xf32>
    %37 = arith.maximumf %35, %36 : vector<16x512xf32>
    %c256_i32 = arith.constant 256 : i32
    %38 = tpu.dynamic_rotate %37 by %c256_i32 dim 1 : vector<16x512xf32>, i32 -> vector<16x512xf32>
    %39 = arith.maximumf %37, %38 : vector<16x512xf32>
    %40 = vector.extract_strided_slice %39 {offsets = [0, 0], sizes = [16, 64], strides = [1, 1]} : vector<16x512xf32> to vector<16x64xf32>
    %c0_23 = arith.constant 0 : index
    %c0_24 = arith.constant 0 : index
    %41 = vector.load %arg10[%c0_23, %c0_24] : memref<64x128xf32, #tpu.memory_space<vmem>>, vector<64x128xf32>
    %c0_25 = arith.constant 0 : index
    %c0_26 = arith.constant 0 : index
    %42 = vector.load %arg11[%c0_25, %c0_26] : memref<64x128xf32, #tpu.memory_space<vmem>>, vector<64x128xf32>
    %cst_27 = arith.constant dense<0.000000e+00> : vector<16x128xf32>
    %43 = tpu.matmul %40, %42, %cst_27 {dimension_numbers = #tpu.dot_dimension_numbers<[1], [0], [0], [1], [0, 0, 1, 1], [], []>} : vector<16x64xf32>, vector<64x128xf32>, vector<16x128xf32> -> vector<16x128xf32>
    %c0_28 = arith.constant 0 : index
    %c0_29 = arith.constant 0 : index
    %44 = vector.load %arg12[%c0_28, %c0_29] : memref<64x1024xf32, #tpu.memory_space<vmem>>, vector<64x1024xf32>
    %cst_30 = arith.constant dense<0.000000e+00> : vector<16x1024xf32>
    %45 = tpu.matmul %0, %44, %cst_30 {dimension_numbers = #tpu.dot_dimension_numbers<[1], [0], [0], [1], [0, 0, 1, 1], [], []>} : vector<16x64xf32>, vector<64x1024xf32>, vector<16x1024xf32> -> vector<16x1024xf32>
    %46 = vector.extract_strided_slice %33 {offsets = [0, 0], sizes = [16, 64], strides = [1, 1]} : vector<16x512xf32> to vector<16x64xf32>
    %cst_31 = arith.constant dense<0.000000e+00> : vector<16x128xf32>
    %47 = tpu.matmul %46, %41, %cst_31 {dimension_numbers = #tpu.dot_dimension_numbers<[1], [0], [0], [1], [0, 0, 1, 1], [], []>} : vector<16x64xf32>, vector<64x128xf32>, vector<16x128xf32> -> vector<16x128xf32>
    %48 = arith.addf %47, %43 : vector<16x128xf32>
    %49 = vector.extract_strided_slice %45 {offsets = [0, 0], sizes = [16, 128], strides = [1, 1]} : vector<16x1024xf32> to vector<16x128xf32>
    %50 = arith.mulf %48, %49 : vector<16x128xf32>
    %c0_32 = arith.constant 0 : index
    %c0_33 = arith.constant 0 : index
    %51 = vector.load %arg13[%c0_32, %c0_33] : memref<1x128xf32, #tpu.memory_space<vmem>>, vector<1x128xf32>
    %52 = vector.broadcast %51 : vector<1x128xf32> to vector<16x128xf32>
    %53 = arith.mulf %50, %52 : vector<16x128xf32>
    %c0_34 = arith.constant 0 : index
    %c0_35 = arith.constant 0 : index
    %54 = vector.load %arg14[%c0_34, %c0_35] : memref<1x128xf32, #tpu.memory_space<vmem>>, vector<1x128xf32>
    %55 = vector.broadcast %54 : vector<1x128xf32> to vector<16x128xf32>
    %56 = arith.addf %53, %55 : vector<16x128xf32>
    %cst_36 = arith.constant 0.000000e+00 : f32
    %57 = vector.broadcast %cst_36 : f32 to vector<16x128xf32>
    %58 = arith.maximumf %56, %57 : vector<16x128xf32>
    %59 = vector.extract_strided_slice %33 {offsets = [0, 64], sizes = [16, 64], strides = [1, 1]} : vector<16x512xf32> to vector<16x64xf32>
    %cst_37 = arith.constant dense<0.000000e+00> : vector<16x128xf32>
    %60 = tpu.matmul %59, %41, %cst_37 {dimension_numbers = #tpu.dot_dimension_numbers<[1], [0], [0], [1], [0, 0, 1, 1], [], []>} : vector<16x64xf32>, vector<64x128xf32>, vector<16x128xf32> -> vector<16x128xf32>
    %61 = arith.addf %60, %43 : vector<16x128xf32>
    %62 = vector.extract_strided_slice %45 {offsets = [0, 128], sizes = [16, 128], strides = [1, 1]} : vector<16x1024xf32> to vector<16x128xf32>
    %63 = arith.mulf %61, %62 : vector<16x128xf32>
    %c0_38 = arith.constant 0 : index
    %c0_39 = arith.constant 0 : index
    %64 = vector.load %arg13[%c0_38, %c0_39] : memref<1x128xf32, #tpu.memory_space<vmem>>, vector<1x128xf32>
    %65 = vector.broadcast %64 : vector<1x128xf32> to vector<16x128xf32>
    %66 = arith.mulf %63, %65 : vector<16x128xf32>
    %c0_40 = arith.constant 0 : index
    %c0_41 = arith.constant 0 : index
    %67 = vector.load %arg14[%c0_40, %c0_41] : memref<1x128xf32, #tpu.memory_space<vmem>>, vector<1x128xf32>
    %68 = vector.broadcast %67 : vector<1x128xf32> to vector<16x128xf32>
    %69 = arith.addf %66, %68 : vector<16x128xf32>
    %cst_42 = arith.constant 0.000000e+00 : f32
    %70 = vector.broadcast %cst_42 : f32 to vector<16x128xf32>
    %71 = arith.maximumf %69, %70 : vector<16x128xf32>
    %72 = arith.maximumf %58, %71 : vector<16x128xf32>
    %73 = vector.extract_strided_slice %33 {offsets = [0, 128], sizes = [16, 64], strides = [1, 1]} : vector<16x512xf32> to vector<16x64xf32>
    %cst_43 = arith.constant dense<0.000000e+00> : vector<16x128xf32>
    %74 = tpu.matmul %73, %41, %cst_43 {dimension_numbers = #tpu.dot_dimension_numbers<[1], [0], [0], [1], [0, 0, 1, 1], [], []>} : vector<16x64xf32>, vector<64x128xf32>, vector<16x128xf32> -> vector<16x128xf32>
    %75 = arith.addf %74, %43 : vector<16x128xf32>
    %76 = vector.extract_strided_slice %45 {offsets = [0, 256], sizes = [16, 128], strides = [1, 1]} : vector<16x1024xf32> to vector<16x128xf32>
    %77 = arith.mulf %75, %76 : vector<16x128xf32>
    %c0_44 = arith.constant 0 : index
    %c0_45 = arith.constant 0 : index
    %78 = vector.load %arg13[%c0_44, %c0_45] : memref<1x128xf32, #tpu.memory_space<vmem>>, vector<1x128xf32>
    %79 = vector.broadcast %78 : vector<1x128xf32> to vector<16x128xf32>
    %80 = arith.mulf %77, %79 : vector<16x128xf32>
    %c0_46 = arith.constant 0 : index
    %c0_47 = arith.constant 0 : index
    %81 = vector.load %arg14[%c0_46, %c0_47] : memref<1x128xf32, #tpu.memory_space<vmem>>, vector<1x128xf32>
    %82 = vector.broadcast %81 : vector<1x128xf32> to vector<16x128xf32>
    %83 = arith.addf %80, %82 : vector<16x128xf32>
    %cst_48 = arith.constant 0.000000e+00 : f32
    %84 = vector.broadcast %cst_48 : f32 to vector<16x128xf32>
    %85 = arith.maximumf %83, %84 : vector<16x128xf32>
    %86 = arith.maximumf %72, %85 : vector<16x128xf32>
    %87 = vector.extract_strided_slice %33 {offsets = [0, 192], sizes = [16, 64], strides = [1, 1]} : vector<16x512xf32> to vector<16x64xf32>
    %cst_49 = arith.constant dense<0.000000e+00> : vector<16x128xf32>
    %88 = tpu.matmul %87, %41, %cst_49 {dimension_numbers = #tpu.dot_dimension_numbers<[1], [0], [0], [1], [0, 0, 1, 1], [], []>} : vector<16x64xf32>, vector<64x128xf32>, vector<16x128xf32> -> vector<16x128xf32>
    %89 = arith.addf %88, %43 : vector<16x128xf32>
    %90 = vector.extract_strided_slice %45 {offsets = [0, 384], sizes = [16, 128], strides = [1, 1]} : vector<16x1024xf32> to vector<16x128xf32>
    %91 = arith.mulf %89, %90 : vector<16x128xf32>
    %c0_50 = arith.constant 0 : index
    %c0_51 = arith.constant 0 : index
    %92 = vector.load %arg13[%c0_50, %c0_51] : memref<1x128xf32, #tpu.memory_space<vmem>>, vector<1x128xf32>
    %93 = vector.broadcast %92 : vector<1x128xf32> to vector<16x128xf32>
    %94 = arith.mulf %91, %93 : vector<16x128xf32>
    %c0_52 = arith.constant 0 : index
    %c0_53 = arith.constant 0 : index
    %95 = vector.load %arg14[%c0_52, %c0_53] : memref<1x128xf32, #tpu.memory_space<vmem>>, vector<1x128xf32>
    %96 = vector.broadcast %95 : vector<1x128xf32> to vector<16x128xf32>
    %97 = arith.addf %94, %96 : vector<16x128xf32>
    %cst_54 = arith.constant 0.000000e+00 : f32
    %98 = vector.broadcast %cst_54 : f32 to vector<16x128xf32>
    %99 = arith.maximumf %97, %98 : vector<16x128xf32>
    %100 = arith.maximumf %86, %99 : vector<16x128xf32>
    %101 = vector.extract_strided_slice %33 {offsets = [0, 256], sizes = [16, 64], strides = [1, 1]} : vector<16x512xf32> to vector<16x64xf32>
    %cst_55 = arith.constant dense<0.000000e+00> : vector<16x128xf32>
    %102 = tpu.matmul %101, %41, %cst_55 {dimension_numbers = #tpu.dot_dimension_numbers<[1], [0], [0], [1], [0, 0, 1, 1], [], []>} : vector<16x64xf32>, vector<64x128xf32>, vector<16x128xf32> -> vector<16x128xf32>
    %103 = arith.addf %102, %43 : vector<16x128xf32>
    %104 = vector.extract_strided_slice %45 {offsets = [0, 512], sizes = [16, 128], strides = [1, 1]} : vector<16x1024xf32> to vector<16x128xf32>
    %105 = arith.mulf %103, %104 : vector<16x128xf32>
    %c0_56 = arith.constant 0 : index
    %c0_57 = arith.constant 0 : index
    %106 = vector.load %arg13[%c0_56, %c0_57] : memref<1x128xf32, #tpu.memory_space<vmem>>, vector<1x128xf32>
    %107 = vector.broadcast %106 : vector<1x128xf32> to vector<16x128xf32>
    %108 = arith.mulf %105, %107 : vector<16x128xf32>
    %c0_58 = arith.constant 0 : index
    %c0_59 = arith.constant 0 : index
    %109 = vector.load %arg14[%c0_58, %c0_59] : memref<1x128xf32, #tpu.memory_space<vmem>>, vector<1x128xf32>
    %110 = vector.broadcast %109 : vector<1x128xf32> to vector<16x128xf32>
    %111 = arith.addf %108, %110 : vector<16x128xf32>
    %cst_60 = arith.constant 0.000000e+00 : f32
    %112 = vector.broadcast %cst_60 : f32 to vector<16x128xf32>
    %113 = arith.maximumf %111, %112 : vector<16x128xf32>
    %114 = arith.maximumf %100, %113 : vector<16x128xf32>
    %115 = vector.extract_strided_slice %33 {offsets = [0, 320], sizes = [16, 64], strides = [1, 1]} : vector<16x512xf32> to vector<16x64xf32>
    %cst_61 = arith.constant dense<0.000000e+00> : vector<16x128xf32>
    %116 = tpu.matmul %115, %41, %cst_61 {dimension_numbers = #tpu.dot_dimension_numbers<[1], [0], [0], [1], [0, 0, 1, 1], [], []>} : vector<16x64xf32>, vector<64x128xf32>, vector<16x128xf32> -> vector<16x128xf32>
    %117 = arith.addf %116, %43 : vector<16x128xf32>
    %118 = vector.extract_strided_slice %45 {offsets = [0, 640], sizes = [16, 128], strides = [1, 1]} : vector<16x1024xf32> to vector<16x128xf32>
    %119 = arith.mulf %117, %118 : vector<16x128xf32>
    %c0_62 = arith.constant 0 : index
    %c0_63 = arith.constant 0 : index
    %120 = vector.load %arg13[%c0_62, %c0_63] : memref<1x128xf32, #tpu.memory_space<vmem>>, vector<1x128xf32>
    %121 = vector.broadcast %120 : vector<1x128xf32> to vector<16x128xf32>
    %122 = arith.mulf %119, %121 : vector<16x128xf32>
    %c0_64 = arith.constant 0 : index
    %c0_65 = arith.constant 0 : index
    %123 = vector.load %arg14[%c0_64, %c0_65] : memref<1x128xf32, #tpu.memory_space<vmem>>, vector<1x128xf32>
    %124 = vector.broadcast %123 : vector<1x128xf32> to vector<16x128xf32>
    %125 = arith.addf %122, %124 : vector<16x128xf32>
    %cst_66 = arith.constant 0.000000e+00 : f32
    %126 = vector.broadcast %cst_66 : f32 to vector<16x128xf32>
    %127 = arith.maximumf %125, %126 : vector<16x128xf32>
    %128 = arith.maximumf %114, %127 : vector<16x128xf32>
    %129 = vector.extract_strided_slice %33 {offsets = [0, 384], sizes = [16, 64], strides = [1, 1]} : vector<16x512xf32> to vector<16x64xf32>
    %cst_67 = arith.constant dense<0.000000e+00> : vector<16x128xf32>
    %130 = tpu.matmul %129, %41, %cst_67 {dimension_numbers = #tpu.dot_dimension_numbers<[1], [0], [0], [1], [0, 0, 1, 1], [], []>} : vector<16x64xf32>, vector<64x128xf32>, vector<16x128xf32> -> vector<16x128xf32>
    %131 = arith.addf %130, %43 : vector<16x128xf32>
    %132 = vector.extract_strided_slice %45 {offsets = [0, 768], sizes = [16, 128], strides = [1, 1]} : vector<16x1024xf32> to vector<16x128xf32>
    %133 = arith.mulf %131, %132 : vector<16x128xf32>
    %c0_68 = arith.constant 0 : index
    %c0_69 = arith.constant 0 : index
    %134 = vector.load %arg13[%c0_68, %c0_69] : memref<1x128xf32, #tpu.memory_space<vmem>>, vector<1x128xf32>
    %135 = vector.broadcast %134 : vector<1x128xf32> to vector<16x128xf32>
    %136 = arith.mulf %133, %135 : vector<16x128xf32>
    %c0_70 = arith.constant 0 : index
    %c0_71 = arith.constant 0 : index
    %137 = vector.load %arg14[%c0_70, %c0_71] : memref<1x128xf32, #tpu.memory_space<vmem>>, vector<1x128xf32>
    %138 = vector.broadcast %137 : vector<1x128xf32> to vector<16x128xf32>
    %139 = arith.addf %136, %138 : vector<16x128xf32>
    %cst_72 = arith.constant 0.000000e+00 : f32
    %140 = vector.broadcast %cst_72 : f32 to vector<16x128xf32>
    %141 = arith.maximumf %139, %140 : vector<16x128xf32>
    %142 = arith.maximumf %128, %141 : vector<16x128xf32>
    %143 = vector.extract_strided_slice %33 {offsets = [0, 448], sizes = [16, 64], strides = [1, 1]} : vector<16x512xf32> to vector<16x64xf32>
    %cst_73 = arith.constant dense<0.000000e+00> : vector<16x128xf32>
    %144 = tpu.matmul %143, %41, %cst_73 {dimension_numbers = #tpu.dot_dimension_numbers<[1], [0], [0], [1], [0, 0, 1, 1], [], []>} : vector<16x64xf32>, vector<64x128xf32>, vector<16x128xf32> -> vector<16x128xf32>
    %145 = arith.addf %144, %43 : vector<16x128xf32>
    %146 = vector.extract_strided_slice %45 {offsets = [0, 896], sizes = [16, 128], strides = [1, 1]} : vector<16x1024xf32> to vector<16x128xf32>
    %147 = arith.mulf %145, %146 : vector<16x128xf32>
    %c0_74 = arith.constant 0 : index
    %c0_75 = arith.constant 0 : index
    %148 = vector.load %arg13[%c0_74, %c0_75] : memref<1x128xf32, #tpu.memory_space<vmem>>, vector<1x128xf32>
    %149 = vector.broadcast %148 : vector<1x128xf32> to vector<16x128xf32>
    %150 = arith.mulf %147, %149 : vector<16x128xf32>
    %c0_76 = arith.constant 0 : index
    %c0_77 = arith.constant 0 : index
    %151 = vector.load %arg14[%c0_76, %c0_77] : memref<1x128xf32, #tpu.memory_space<vmem>>, vector<1x128xf32>
    %152 = vector.broadcast %151 : vector<1x128xf32> to vector<16x128xf32>
    %153 = arith.addf %150, %152 : vector<16x128xf32>
    %cst_78 = arith.constant 0.000000e+00 : f32
    %154 = vector.broadcast %cst_78 : f32 to vector<16x128xf32>
    %155 = arith.maximumf %153, %154 : vector<16x128xf32>
    %156 = arith.maximumf %142, %155 : vector<16x128xf32>
    %c0_79 = arith.constant 0 : index
    %c0_80 = arith.constant 0 : index
    %157 = vector.load %arg15[%c0_79, %c0_80] : memref<16x128xf32, #tpu.memory_space<vmem>>, vector<16x128xf32>
    tpu.vector_store %arg15[%c0_79, %c0_80], %156 {strides = array<i32>} : memref<16x128xf32, #tpu.memory_space<vmem>>, vector<16x128xf32>,
    return
  }
  func.func @transform_0(%arg0: i32) -> (i32, i32) {
    %c0_i32 = arith.constant 0 : i32
    %c0_i32_0 = arith.constant 0 : i32
    return %arg0, %c0_i32 : i32, i32
  }
  func.func @transform_1(%arg0: i32) -> (i32, i32) {
    %c0_i32 = arith.constant 0 : i32
    %c0_i32_0 = arith.constant 0 : i32
    %c0_i32_1 = arith.constant 0 : i32
    return %c0_i32, %c0_i32_0 : i32, i32
  }
  func.func @transform_2(%arg0: i32) -> (i32, i32) {
    %c0_i32 = arith.constant 0 : i32
    %c0_i32_0 = arith.constant 0 : i32
    %c0_i32_1 = arith.constant 0 : i32
    return %c0_i32, %c0_i32_0 : i32, i32
  }
  func.func @transform_3(%arg0: i32) -> (i32, i32) {
    %c0_i32 = arith.constant 0 : i32
    %c0_i32_0 = arith.constant 0 : i32
    %c0_i32_1 = arith.constant 0 : i32
    return %c0_i32, %c0_i32_0 : i32, i32
  }
  func.func @transform_4(%arg0: i32) -> (i32, i32) {
    %c0_i32 = arith.constant 0 : i32
    %c0_i32_0 = arith.constant 0 : i32
    %c0_i32_1 = arith.constant 0 : i32
    return %c0_i32, %c0_i32_0 : i32, i32
  }
  func.func @transform_5(%arg0: i32) -> (i32, i32) {
    %c0_i32 = arith.constant 0 : i32
    %c0_i32_0 = arith.constant 0 : i32
    %c0_i32_1 = arith.constant 0 : i32
    return %c0_i32, %c0_i32_0 : i32, i32
  }
  func.func @transform_6(%arg0: i32) -> (i32, i32) {
    %c0_i32 = arith.constant 0 : i32
    %c0_i32_0 = arith.constant 0 : i32
    %c0_i32_1 = arith.constant 0 : i32
    return %c0_i32, %c0_i32_0 : i32, i32
  }
  func.func @transform_7(%arg0: i32) -> (i32, i32) {
    %c0_i32 = arith.constant 0 : i32
    %c0_i32_0 = arith.constant 0 : i32
    %c0_i32_1 = arith.constant 0 : i32
    return %c0_i32, %c0_i32_0 : i32, i32
  }
  func.func @transform_8(%arg0: i32) -> (i32, i32) {
    %c0_i32 = arith.constant 0 : i32
    %c0_i32_0 = arith.constant 0 : i32
    %c0_i32_1 = arith.constant 0 : i32
    return %c0_i32, %c0_i32_0 : i32, i32
  }
  func.func @transform_9(%arg0: i32) -> (i32, i32) {
    %c0_i32 = arith.constant 0 : i32
    %c0_i32_0 = arith.constant 0 : i32
    %c0_i32_1 = arith.constant 0 : i32
    return %c0_i32, %c0_i32_0 : i32, i32
  }
  func.func @transform_10(%arg0: i32) -> (i32, i32) {
    %c0_i32 = arith.constant 0 : i32
    %c0_i32_0 = arith.constant 0 : i32
    %c0_i32_1 = arith.constant 0 : i32
    return %c0_i32, %c0_i32_0 : i32, i32
  }
  func.func @transform_11(%arg0: i32) -> (i32, i32) {
    %c0_i32 = arith.constant 0 : i32
    %c0_i32_0 = arith.constant 0 : i32
    %c0_i32_1 = arith.constant 0 : i32
    return %c0_i32, %c0_i32_0 : i32, i32
  }
  func.func @transform_12(%arg0: i32) -> (i32, i32) {
    %c0_i32 = arith.constant 0 : i32
    %c0_i32_0 = arith.constant 0 : i32
    %c0_i32_1 = arith.constant 0 : i32
    return %c0_i32, %c0_i32_0 : i32, i32
  }
  func.func @transform_13(%arg0: i32) -> (i32, i32) {
    %c0_i32 = arith.constant 0 : i32
    %c0_i32_0 = arith.constant 0 : i32
    %c0_i32_1 = arith.constant 0 : i32
    return %c0_i32, %c0_i32_0 : i32, i32
  }
  func.func @transform_14(%arg0: i32) -> (i32, i32) {
    %c0_i32 = arith.constant 0 : i32
    %c0_i32_0 = arith.constant 0 : i32
    return %arg0, %c0_i32 : i32, i32
  }
}

</mosaic_0001>

<llo_original>
// kernel: tile.25
$region0: #{tile.25}
  #allocation0 [shape = 's32[1]{0}', space=sflag, size = 0x4, scoped, tag = 'scoped memory for tile.25']
  %s0 = inlined_call_operand.vmem [shape: f32[16], index: 0, kind: input, shape index: {}]
  %s1 = inlined_call_operand.vmem [shape: f32[8,16], index: 1, kind: output, shape index: {}]
  // Predicated region
  $region2: #{tile.25} parent=0 // pred_check
    _
  $region3: #{tile.25} parent=0 // pred_check_branch
    %3 = sbr.rel (0) target = $region5
  $region4: #{tile.25} parent=0 // pred_region
    _
  $region5: #{tile.25} parent=0 // pred_fallthru
    _
  %v4 = vld [vmem:[%s0] ss:$0 sm:$0xff]
  %5 = vst [vmem:[%s1] sm:$0xff] %v4

// kernel: tile.26
$region0: #{tile.26}
  %s0 = inlined_call_operand.vmem [shape: f32[8,16], index: 0, kind: input, shape index: {}]
  %s1 = inlined_call_operand.vmem [shape: f32[1,128], index: 1, kind: output, shape index: {}]
  $region1: #{tile.26} parent=0
    #allocation0 [shape = 'u8[4096]{0}', space=vmem, size = 0x1000, scoped, tag = 'scoped mem for output reshape']
    %v2 = vld [vmem:[%s0] sm:$0x1]
    %vm3 = vcmask 130048
    %4 = vst.msk [vmem:[#allocation0] sm:$0x1] %vm3, %v2
    %s5 = scalar_lea.vmem %s0, 7
    %v6 = vld [vmem:[%s5] sm:$0x1]
    %7 = vrot.lane.b32.xlu0 %v6, 112
    %v8 = vpop.permute.xlu0 %7
    %vm9 = vcmask 1048448
    %10 = vst.msk [vmem:[#allocation0] sm:$0x1] %vm9, %v8
    %s11 = scalar_lea.vmem %s0, 6
    %v12 = vld [vmem:[%s11] sm:$0x1]
    %13 = vrot.lane.b32.xlu0 %v12, 96
    %v14 = vpop.permute.xlu0 %13
    %vm15 = vcmask 917248
    %16 = vst.msk [vmem:[#allocation0] sm:$0x1] %vm15, %v14
    %s17 = scalar_lea.vmem %s0, 5
    %v18 = vld [vmem:[%s17] sm:$0x1]
    %19 = vrot.lane.b32.xlu0 %v18, 80
    %v20 = vpop.permute.xlu0 %19
    %vm21 = vcmask 786048
    %22 = vst.msk [vmem:[#allocation0] sm:$0x1] %vm21, %v20
    %s23 = scalar_lea.vmem %s0, 4
    %v24 = vld [vmem:[%s23] sm:$0x1]
    %25 = vrot.lane.b32.xlu0 %v24, 64
    %v26 = vpop.permute.xlu0 %25
    %vm27 = vcmask 654848
    %28 = vst.msk [vmem:[#allocation0] sm:$0x1] %vm27, %v26
    %s29 = scalar_lea.vmem %s0, 3
    %v30 = vld [vmem:[%s29] sm:$0x1]
    %31 = vrot.lane.b32.xlu0 %v30, 48
    %v32 = vpop.permute.xlu0 %31
    %vm33 = vcmask 523648
    %34 = vst.msk [vmem:[#allocation0] sm:$0x1] %vm33, %v32
    %s35 = scalar_lea.vmem %s0, 2
    %v36 = vld [vmem:[%s35] sm:$0x1]
    %37 = vrot.lane.b32.xlu0 %v36, 32
    %v38 = vpop.permute.xlu0 %37
    %vm39 = vcmask 392448
    %40 = vst.msk [vmem:[#allocation0] sm:$0x1] %vm39, %v38
    %s41 = scalar_lea.vmem %s0, 1
    %v42 = vld [vmem:[%s41] sm:$0x1]
    %43 = vrot.lane.b32.xlu0 %v42, 16
    %v44 = vpop.permute.xlu0 %43
    %vm45 = vcmask 261248
    %46 = vst.msk [vmem:[#allocation0] sm:$0x1] %vm45, %v44
    %s48 = sshll.u32 1, 1
    %s49 = ssub.s32 %s48, 1
    %v51 = vld [vmem:[#allocation0] sm:%s49]
    %s52 = sshll.u32 1, 1
    %s53 = ssub.s32 %s52, 1
    %54 = vst [vmem:[%s1] sm:%s53] %v51

// kernel: svfe_forward.4
$region0: #{svfe_forward.4}
  #allocation0 [shape = 'u32[]', space=smem, size = 0x4, offset = 0x4, fixed_abs, tag = 'smem constant byte address 0x4 - core index']
  #allocation1 [shape = 'u32[144,128]{1,0:T(1,128)}', space=vmem, size = 0x12000, scoped, tag = 'internal scratch']
  %s0 = inlined_call_operand.vmem [shape: f32[64,64], index: 0, kind: input, shape index: {}]
  %s1 = inlined_call_operand.vmem [shape: f32[64,128], index: 1, kind: input, shape index: {}]
  %s2 = inlined_call_operand.vmem [shape: f32[4,2,128], index: 2, kind: output, shape index: {}]
  %s3 = sld [smem:[#allocation0]]
  $region41: #{svfe_forward.4} parent=0
    _
  %s5 = ssub.s32 1, %s3
  %s6 = scalar_select 0, %s5, %s3
  loop: start=0, step=1, limit=6
  $region2: #{svfe_forward.4} parent=0 // loop_pre_header
    _
  $region3: #{svfe_forward.4} parent=0 // loop_header
    %s8 = sphi 0, %s12
    %p9 = scmp.ge.s32.totalorder %s8, 6
    %s18 = sphi 0, %s20
    %s21 = sphi 0, %s18
    %s22 = sphi 0, %s21
    %s38 = sphi 0, %s22
    %s42 = sphi 0, %s42
    %s44 = sphi 0, %s42
    %s45 = sphi 0, %s44
    %s59 = sphi 0, %s45
    %s65 = sphi 0, %s67
    %s68 = sphi 0, %s65
    %s69 = sphi 0, %s68
    %s85 = sphi 0, %s69
  $region4: #{svfe_forward.4} parent=0 // loop_header_branch
    %11 = sbr.rel (%p9) target = $region8
  $region5: #{svfe_forward.4} parent=0 // loop_body
    %s13 = ssub.s32 %s8, 1
    %s14 = ssub.s32 %s8, 2
    %s15 = sadd.s32 %s8, 1
    %s16 = ssub.s32 %s8, %s15
    %p17 = scmp.eq.s32.totalorder %s16, 0
    %s19 = sadd.s32 %s18, 1
    %s20 = scalar_select %p17, %s18, %s19
    %p23 = pneg %p17
    %p24 = scmp.eq.s32.totalorder %s8, 3
    %p25 = por %p23, %p24
    %p26 = scmp.ne.s32.totalorder %s18, %s21
    %p27 = scmp.eq.s32.totalorder %s8, 0
    %p28 = por %p26, %p27
    %p29 = scmp.ne.s32.totalorder %s18, %s21
    %p30 = scmp.eq.s32.totalorder %s13, 3
    %p31 = por %p29, %p30
    %p32 = scmp.ne.s32.totalorder %s21, %s22
    %p33 = scmp.eq.s32.totalorder %s13, 0
    %p34 = por %p32, %p33
    %p35 = scmp.ne.s32.totalorder %s21, %s22
    %p36 = scmp.eq.s32.totalorder %s14, 3
    %p37 = por %p35, %p36
    %p39 = scmp.ne.s32.totalorder %s22, %s38
    %p40 = scmp.eq.s32.totalorder %s14, 0
    %p41 = por %p39, %p40
    %s43 = sadd.s32 %s42, 1
    %p46 = scmp.eq.s32.totalorder %s8, 3
    %p47 = scmp.ne.s32.totalorder %s42, %s44
    %p48 = scmp.eq.s32.totalorder %s8, 0
    %p49 = por %p47, %p48
    %p50 = scmp.ne.s32.totalorder %s42, %s44
    %p51 = scmp.eq.s32.totalorder %s13, 3
    %p52 = por %p50, %p51
    %p53 = scmp.ne.s32.totalorder %s44, %s45
    %p54 = scmp.eq.s32.totalorder %s13, 0
    %p55 = por %p53, %p54
    %p56 = scmp.ne.s32.totalorder %s44, %s45
    %p57 = scmp.eq.s32.totalorder %s14, 3
    %p58 = por %p56, %p57
    %p60 = scmp.ne.s32.totalorder %s45, %s59
    %p61 = scmp.eq.s32.totalorder %s14, 0
    %p62 = por %p60, %p61
    %s63 = ssub.s32 %s8, %s15
    %p64 = scmp.eq.s32.totalorder %s63, 0
    %s66 = sadd.s32 %s65, 1
    %s67 = scalar_select %p64, %s65, %s66
    %p70 = pneg %p64
    %p71 = scmp.eq.s32.totalorder %s8, 3
    %p72 = por %p70, %p71
    %p73 = scmp.ne.s32.totalorder %s65, %s68
    %p74 = scmp.eq.s32.totalorder %s8, 0
    %p75 = por %p73, %p74
    %p76 = scmp.ne.s32.totalorder %s65, %s68
    %p77 = scmp.eq.s32.totalorder %s13, 3
    %p78 = por %p76, %p77
    %p79 = scmp.ne.s32.totalorder %s68, %s69
    %p80 = scmp.eq.s32.totalorder %s13, 0
    %p81 = por %p79, %p80
    %p82 = scmp.ne.s32.totalorder %s68, %s69
    %p83 = scmp.eq.s32.totalorder %s14, 3
    %p84 = por %p82, %p83
    %p86 = scmp.ne.s32.totalorder %s69, %s85
    %p87 = scmp.eq.s32.totalorder %s14, 0
    %p88 = por %p86, %p87
    %p89 = scmp.le.s32.totalorder 1, %s8
    %p90 = scmp.lt.s32.totalorder %s8, 5
    %p91 = pnand %p89, %p90
    %p92 = pneg %p91
    // Predicated region
    $region9: #{svfe_forward.4} parent=5 // pred_check
      _
    $region10: #{svfe_forward.4} parent=5 // pred_check_branch
      %94 = sbr.rel (%p91) target = $region12
    $region11: #{svfe_forward.4} parent=5 // pred_region
      %s95 = ssub.s32 %s8, 1
      // Predicated region
      $region13: #{svfe_forward.4} parent=11 // pred_check
        %p96 = pneg %p55
      $region14: #{svfe_forward.4} parent=11 // pred_check_branch
        %98 = sbr.rel (%p96) target = $region16
      $region15: #{svfe_forward.4} parent=11 // pred_region
        _
      $region16: #{svfe_forward.4} parent=11 // pred_fallthru
        _
    $region12: #{svfe_forward.4} parent=5 // pred_fallthru
      _
    %p99 = scmp.lt.s32.totalorder %s8, 4
    // Predicated region
    $region17: #{svfe_forward.4} parent=5 // pred_check
      %p100 = pneg %p99
    $region18: #{svfe_forward.4} parent=5 // pred_check_branch
      %102 = sbr.rel (%p100) target = $region20
    $region19: #{svfe_forward.4} parent=5 // pred_region
      // Predicated region
      $region21: #{svfe_forward.4} parent=19 // pred_check
        %p103 = pneg %p28
      $region22: #{svfe_forward.4} parent=19 // pred_check_branch
        %105 = sbr.rel (%p103) target = $region24
      $region23: #{svfe_forward.4} parent=19 // pred_region
        %s106 = smul.u32 2, %s8
        %p107 = scmp.lt.s32.totalorder %s106, 7
        %s108 = scalar_select %p107, %s106, 7
        %s109 = smul.addr %s108, 8
        %s110 = scalar_lea.vmem %s0, %s109
        %s111 = smul.u32 2, %s8
      $region24: #{svfe_forward.4} parent=19 // pred_fallthru
        _
    $region20: #{svfe_forward.4} parent=5 // pred_fallthru
      _
    %p112 = scmp.le.s32.totalorder 1, %s8
    %p113 = scmp.lt.s32.totalorder %s8, 5
    %p114 = pnand %p112, %p113
    %p115 = pneg %p114
    // Predicated region
    $region25: #{svfe_forward.4} parent=5 // pred_check
      _
    $region26: #{svfe_forward.4} parent=5 // pred_check_branch
      %117 = sbr.rel (%p114) target = $region28
    $region27: #{svfe_forward.4} parent=5 // pred_region
      %s118 = ssub.s32 %s8, 1
      %s119 = smul.u32 2, %s13
      %p120 = scmp.lt.s32.totalorder %s119, 7
      %s121 = scalar_select %p120, %s119, 7
      %s122 = smul.addr %s121, 8
      %s123 = scalar_lea.vmem %s0, %s122
      %p124 = pneg %p34
      %p125 = pneg %p31
      %p126 = pneg %p55
      %p127 = pneg %p52
      %p128 = pneg %p81
      %p129 = pneg %p78
      %p130 = scmp.lt.s32.totalorder %s13, 3
      %s131 = scalar_select %p130, %s13, 3
      %s132 = smul.addr %s131, 2
      %s133 = scalar_lea.vmem %s2, %s132
      %s134 = smul.u32 2, %s13
      %p135 = scmp.lt.s32.totalorder %s134, 7
      %s136 = scalar_select %p135, %s134, 7
      %s137 = smul.addr %s136, 8
      %s138 = scalar_lea.vmem %s0, %s137
      %s139 = smul.u32 2, %s13
      %p140 = scmp.lt.s32.totalorder %s13, 3
      %s141 = scalar_select %p140, %s13, 3
      %s142 = smul.addr %s141, 2
      %s143 = scalar_lea.vmem %s2, %s142
      %v144 = vld [vmem:[%s138] sm:$0xff]
      %v145 = vld [vmem:[%s138 + $0x8] sm:$0xff]
      %v146 = vld [vmem:[%s1] sm:$0xff]
      %v147 = vld [vmem:[%s1 + $0x8] sm:$0xff]
      %v148 = vld [vmem:[%s1 + $0x10] sm:$0xff]
      %v149 = vld [vmem:[%s1 + $0x18] sm:$0xff]
      %v150 = vld [vmem:[%s1 + $0x20] sm:$0xff]
      %v151 = vld [vmem:[%s1 + $0x28] sm:$0xff]
      %v152 = vld [vmem:[%s1 + $0x30] sm:$0xff]
      %v153 = vld [vmem:[%s1 + $0x38] sm:$0xff]
      %vm154 = vcmask 523264
      %v156 = vsel %vm154, %v144, 0
      %v159 = vsel %vm154, %v145, 0
      %161 = vmatprep.subr.mxu0 0.0
      %162 = vmatpush1.msra.mxu0 0.0
      %163 = vmatprep.subr.mxu0 0.0
      %164 = vmatpush1.msra.mxu0 0.0
      %165 = vmatprep.subr.mxu0 0.0
      %166 = vmatpush1.msra.mxu0 0.0
      %167 = vmatprep.subr.mxu0 0.0
      %168 = vmatpush1.msra.mxu0 0.0
      %169 = vmatprep.subr.mxu0 0.0
      %170 = vmatpush1.msra.mxu0 0.0
      %171 = vmatprep.subr.mxu0 0.0
      %172 = vmatpush1.msra.mxu0 0.0
      %173 = vmatprep.subr.mxu0 0.0
      %174 = vmatpush1.msra.mxu0 0.0
      %175 = vmatprep.subr.mxu0 0.0
      %176 = vmatpush1.msra.mxu0 0.0
      %177 = vmatprep.subr.mxu0 0.0
      %178 = vmatpush1.msra.mxu0 %v153
      %179 = vmatprep.subr.mxu0 0.0
      %180 = vmatpush1.msra.mxu0 %v152
      %181 = vmatprep.subr.mxu0 0.0
      %182 = vmatpush1.msra.mxu0 %v151
      %183 = vmatprep.subr.mxu0 0.0
      %184 = vmatpush1.msra.mxu0 %v150
      %185 = vmatprep.subr.mxu0 0.0
      %186 = vmatpush1.msra.mxu0 %v149
      %187 = vmatprep.subr.mxu0 0.0
      %188 = vmatpush1.msra.mxu0 %v148
      %189 = vmatprep.subr.mxu0 0.0
      %190 = vmatpush1.msra.mxu0 %v147
      %191 = vmatprep.subr.mxu0 0.0
      %192 = vmatpush1.msra.mxu0 %v146
      %193 = vmatprep.subr.mxu0 0.0
      %194 = vmatpush2.msra.mxu0 0.0
      %195 = vmatprep.subr.mxu0 0.0
      %196 = vmatpush2.msra.mxu0 0.0
      %197 = vmatprep.subr.mxu0 0.0
      %198 = vmatpush2.msra.mxu0 0.0
      %199 = vmatprep.subr.mxu0 0.0
      %200 = vmatpush2.msra.mxu0 0.0
      %201 = vmatprep.subr.mxu0 0.0
      %202 = vmatpush2.msra.mxu0 0.0
      %203 = vmatprep.subr.mxu0 0.0
      %204 = vmatpush2.msra.mxu0 0.0
      %205 = vmatprep.subr.mxu0 0.0
      %206 = vmatpush2.msra.mxu0 0.0
      %207 = vmatprep.subr.mxu0 0.0
      %208 = vmatpush2.msra.mxu0 0.0
      %209 = vmatprep.subr.mxu0 0.0
      %210 = vmatpush2.msra.mxu0 0.0
      %211 = vmatprep.subr.mxu0 0.0
      %212 = vmatpush2.msra.mxu0 0.0
      %213 = vmatprep.subr.mxu0 0.0
      %214 = vmatpush2.msra.mxu0 0.0
      %215 = vmatprep.subr.mxu0 0.0
      %216 = vmatpush2.msra.mxu0 0.0
      %217 = vmatprep.subr.mxu0 0.0
      %218 = vmatpush2.msra.mxu0 0.0
      %219 = vmatprep.subr.mxu0 0.0
      %220 = vmatpush2.msra.mxu0 0.0
      %221 = vmatprep.subr.mxu0 0.0
      %222 = vmatpush2.msra.mxu0 0.0
      %223 = vmatprep.subr.mxu0 0.0
      %224 = vmatpush2.msra.mxu0 0.0
      %225 = vmatprep.mubr.f32.mxu0 0.0
      %226 = vmatmul.mubr.f32.gmra.mxu0 %v156
      %v227 = vpop.f32.mrf.mxu0
      %v228 = vadd.f32 0.0, %v227
      %v229 = vpop.f32.mrf.mxu0
      %230 = vmatprep.mubr.f32.mxu0 0.0
      %231 = vmatmul.mubr.f32.gmra.mxu0 %v159
      %v232 = vpop.f32.mrf.mxu0
      %v233 = vadd.f32 0.0, %v232
      %v234 = vpop.f32.mrf.mxu0
      %235 = vdwg.mxu0
      %v236 = vadd.f32 %v228, %v233
      %v237 = vrot.slane %v236, 4
      %v238 = vadd.f32 %v236, %v237
      %v239 = vrot.slane %v238, 2
      %v240 = vadd.f32 %v238, %v239
      %v241 = vrot.slane %v240, 1
      %v242 = vadd.f32 %v240, %v241
      %v243 = vmul.f32 %v228, %v228
      %v244 = vmul.f32 %v233, %v233
      %v245 = vadd.f32 %v243, %v244
      %v246 = vrot.slane %v245, 4
      %v247 = vadd.f32 %v245, %v246
      %v248 = vrot.slane %v247, 2
      %v249 = vadd.f32 %v247, %v248
      %v250 = vrot.slane %v249, 1
      %v251 = vadd.f32 %v249, %v250
      %vm252 = vcmask 1040384
      %v253 = vsel %vm252, %v242, %v251
      %254 = vst [vmem:[%s143] sm:$0x3] %v253
      %p255 = scmp.lt.s32.totalorder %s13, 3
      %s256 = scalar_select %p255, %s13, 3
      %s257 = smul.addr %s256, 2
      %s258 = scalar_lea.vmem %s2, %s257
      // Predicated region
      $region29: #{svfe_forward.4} parent=27 // pred_check
        %p259 = pneg %p78
      $region30: #{svfe_forward.4} parent=27 // pred_check_branch
        %261 = sbr.rel (%p259) target = $region32
      $region31: #{svfe_forward.4} parent=27 // pred_region
        _
      $region32: #{svfe_forward.4} parent=27 // pred_fallthru
        _
    $region28: #{svfe_forward.4} parent=5 // pred_fallthru
      _
    %p262 = scmp.le.s32.totalorder 2, %s8
    // Predicated region
    $region33: #{svfe_forward.4} parent=5 // pred_check
      %p263 = pneg %p262
    $region34: #{svfe_forward.4} parent=5 // pred_check_branch
      %265 = sbr.rel (%p263) target = $region36
    $region35: #{svfe_forward.4} parent=5 // pred_region
      %s266 = ssub.s32 %s8, 2
      // Predicated region
      $region37: #{svfe_forward.4} parent=35 // pred_check
        %p267 = pneg %p84
      $region38: #{svfe_forward.4} parent=35 // pred_check_branch
        %269 = sbr.rel (%p267) target = $region40
      $region39: #{svfe_forward.4} parent=35 // pred_region
        %p270 = scmp.lt.s32.totalorder %s14, 3
        %s271 = scalar_select %p270, %s14, 3
        %s272 = smul.addr %s271, 2
        %s273 = scalar_lea.vmem %s2, %s272
      $region40: #{svfe_forward.4} parent=35 // pred_fallthru
        _
    $region36: #{svfe_forward.4} parent=5 // pred_fallthru
      _
  $region6: #{svfe_forward.4} parent=0 // loop_footer
    %s12 = sadd.s32 1, %s8
  $region7: #{svfe_forward.4} parent=0 // loop_footer_branch
    %7 = sbr.rel target = $region3
  $region8: #{svfe_forward.4} parent=0 // loop_exit
    _

// kernel: tile.35
$region0: #{tile.35}
  #allocation0 [shape = 's32[1]{0}', space=sflag, size = 0x4, scoped, tag = 'scoped memory for tile.35']
  %s0 = inlined_call_operand.vmem [shape: f32[64], index: 0, kind: input, shape index: {}]
  %s1 = inlined_call_operand.vmem [shape: f32[8,64], index: 1, kind: output, shape index: {}]
  // Predicated region
  $region2: #{tile.35} parent=0 // pred_check
    _
  $region3: #{tile.35} parent=0 // pred_check_branch
    %3 = sbr.rel (0) target = $region5
  $region4: #{tile.35} parent=0 // pred_region
    _
  $region5: #{tile.35} parent=0 // pred_fallthru
    _
  %v4 = vld [vmem:[%s0] ss:$0 sm:$0xff]
  %5 = vst [vmem:[%s1] sm:$0xff] %v4

// kernel: tile.36
$region0: #{tile.36}
  %s0 = inlined_call_operand.vmem [shape: f32[8,64], index: 0, kind: input, shape index: {}]
  %s1 = inlined_call_operand.vmem [shape: f32[1,512], index: 1, kind: output, shape index: {}]
  $region1: #{tile.36} parent=0
    #allocation0 [shape = 'u8[16384]{0}', space=vmem, size = 0x4000, scoped, tag = 'scoped mem for output reshape']
    %v2 = vld [vmem:[%s0] ss:$2 sm:$0xf]
    %vm3 = vcmask 523264
    %4 = vst.msk [vmem:[#allocation0] ss:$8 sm:$0xf] %vm3, %v2
    %s5 = scalar_lea.vmem %s0, 1
    %v6 = vld [vmem:[%s5] ss:$2 sm:$0xf]
    %7 = vrot.lane.b32.xlu0 %v6, 64
    %v8 = vpop.permute.xlu0 %7
    %vm9 = vcmask 1048064
    %10 = vst.msk [vmem:[#allocation0] ss:$8 sm:$0xf] %vm9, %v8
    %s12 = sshll.u32 1, 1
    %s13 = ssub.s32 %s12, 1
    %v15 = vld [vmem:[#allocation0] sm:%s13]
    %s16 = sshll.u32 1, 1
    %s17 = ssub.s32 %s16, 1
    %18 = vst [vmem:[%s1] sm:%s17] %v15
    %s19 = scalar_lea.vmem [#allocation0], 8
    %v20 = vld [vmem:[%s19] sm:%s13]
    %s21 = sshll.u32 1, 1
    %s22 = ssub.s32 %s21, 1
    %s23 = scalar_lea.vmem %s1, 1
    %24 = vst [vmem:[%s23] sm:%s22] %v20
    %s25 = scalar_lea.vmem [#allocation0], 16
    %v26 = vld [vmem:[%s25] sm:%s13]
    %s27 = sshll.u32 1, 1
    %s28 = ssub.s32 %s27, 1
    %s29 = smul.addr 1, 2
    %s30 = scalar_lea.vmem %s1, %s29
    %31 = vst [vmem:[%s30] sm:%s28] %v26
    %s32 = scalar_lea.vmem [#allocation0], 24
    %v33 = vld [vmem:[%s32] sm:%s13]
    %s34 = sshll.u32 1, 1
    %s35 = ssub.s32 %s34, 1
    %s36 = smul.addr 1, 3
    %s37 = scalar_lea.vmem %s1, %s36
    %38 = vst [vmem:[%s37] sm:%s35] %v33

// kernel: svfe_forward.5
$region0: #{svfe_forward.5}
  #allocation0 [shape = 'u32[]', space=smem, size = 0x4, offset = 0x4, fixed_abs, tag = 'smem constant byte address 0x4 - core index']
  #allocation1 [shape = 'u32[144,128]{1,0:T(1,128)}', space=vmem, size = 0x12000, scoped, tag = 'internal scratch']
  %s0 = inlined_call_operand.vmem [shape: f32[64,64], index: 0, kind: input, shape index: {}]
  %s1 = inlined_call_operand.vmem [shape: f32[64,128], index: 1, kind: input, shape index: {}]
  %s2 = inlined_call_operand.vmem [shape: f32[1,128], index: 2, kind: input, shape index: {}]
  %s3 = inlined_call_operand.vmem [shape: f32[1,128], index: 3, kind: input, shape index: {}]
  %s4 = inlined_call_operand.vmem [shape: f32[128,512], index: 4, kind: input, shape index: {}]
  %s5 = inlined_call_operand.vmem [shape: f32[16,512], index: 5, kind: input, shape index: {}]
  %s6 = inlined_call_operand.vmem [shape: f32[64,512], index: 6, kind: input, shape index: {}]
  %s7 = inlined_call_operand.vmem [shape: f32[4,2,512], index: 7, kind: output, shape index: {}]
  %s8 = sld [smem:[#allocation0]]
  $region61: #{svfe_forward.5} parent=0
    _
  %s10 = ssub.s32 1, %s8
  %s11 = scalar_select 0, %s10, %s8
  loop: start=0, step=1, limit=6
  $region2: #{svfe_forward.5} parent=0 // loop_pre_header
    _
  $region3: #{svfe_forward.5} parent=0 // loop_header
    %s13 = sphi 0, %s17
    %p14 = scmp.ge.s32.totalorder %s13, 6
    %s23 = sphi 0, %s25
    %s26 = sphi 0, %s23
    %s27 = sphi 0, %s26
    %s43 = sphi 0, %s27
    %s47 = sphi 0, %s47
    %s49 = sphi 0, %s47
    %s50 = sphi 0, %s49
    %s64 = sphi 0, %s50
    %s68 = sphi 0, %s68
    %s70 = sphi 0, %s68
    %s71 = sphi 0, %s70
    %s85 = sphi 0, %s71
    %s89 = sphi 0, %s89
    %s91 = sphi 0, %s89
    %s92 = sphi 0, %s91
    %s106 = sphi 0, %s92
    %s110 = sphi 0, %s110
    %s112 = sphi 0, %s110
    %s113 = sphi 0, %s112
    %s127 = sphi 0, %s113
    %s131 = sphi 0, %s131
    %s133 = sphi 0, %s131
    %s134 = sphi 0, %s133
    %s148 = sphi 0, %s134
    %s152 = sphi 0, %s152
    %s154 = sphi 0, %s152
    %s155 = sphi 0, %s154
    %s169 = sphi 0, %s155
    %s175 = sphi 0, %s177
    %s178 = sphi 0, %s175
    %s179 = sphi 0, %s178
    %s195 = sphi 0, %s179
  $region4: #{svfe_forward.5} parent=0 // loop_header_branch
    %16 = sbr.rel (%p14) target = $region8
  $region5: #{svfe_forward.5} parent=0 // loop_body
    %s18 = ssub.s32 %s13, 1
    %s19 = ssub.s32 %s13, 2
    %s20 = sadd.s32 %s13, 1
    %s21 = ssub.s32 %s13, %s20
    %p22 = scmp.eq.s32.totalorder %s21, 0
    %s24 = sadd.s32 %s23, 1
    %s25 = scalar_select %p22, %s23, %s24
    %p28 = pneg %p22
    %p29 = scmp.eq.s32.totalorder %s13, 3
    %p30 = por %p28, %p29
    %p31 = scmp.ne.s32.totalorder %s23, %s26
    %p32 = scmp.eq.s32.totalorder %s13, 0
    %p33 = por %p31, %p32
    %p34 = scmp.ne.s32.totalorder %s23, %s26
    %p35 = scmp.eq.s32.totalorder %s18, 3
    %p36 = por %p34, %p35
    %p37 = scmp.ne.s32.totalorder %s26, %s27
    %p38 = scmp.eq.s32.totalorder %s18, 0
    %p39 = por %p37, %p38
    %p40 = scmp.ne.s32.totalorder %s26, %s27
    %p41 = scmp.eq.s32.totalorder %s19, 3
    %p42 = por %p40, %p41
    %p44 = scmp.ne.s32.totalorder %s27, %s43
    %p45 = scmp.eq.s32.totalorder %s19, 0
    %p46 = por %p44, %p45
    %s48 = sadd.s32 %s47, 1
    %p51 = scmp.eq.s32.totalorder %s13, 3
    %p52 = scmp.ne.s32.totalorder %s47, %s49
    %p53 = scmp.eq.s32.totalorder %s13, 0
    %p54 = por %p52, %p53
    %p55 = scmp.ne.s32.totalorder %s47, %s49
    %p56 = scmp.eq.s32.totalorder %s18, 3
    %p57 = por %p55, %p56
    %p58 = scmp.ne.s32.totalorder %s49, %s50
    %p59 = scmp.eq.s32.totalorder %s18, 0
    %p60 = por %p58, %p59
    %p61 = scmp.ne.s32.totalorder %s49, %s50
    %p62 = scmp.eq.s32.totalorder %s19, 3
    %p63 = por %p61, %p62
    %p65 = scmp.ne.s32.totalorder %s50, %s64
    %p66 = scmp.eq.s32.totalorder %s19, 0
    %p67 = por %p65, %p66
    %s69 = sadd.s32 %s68, 1
    %p72 = scmp.eq.s32.totalorder %s13, 3
    %p73 = scmp.ne.s32.totalorder %s68, %s70
    %p74 = scmp.eq.s32.totalorder %s13, 0
    %p75 = por %p73, %p74
    %p76 = scmp.ne.s32.totalorder %s68, %s70
    %p77 = scmp.eq.s32.totalorder %s18, 3
    %p78 = por %p76, %p77
    %p79 = scmp.ne.s32.totalorder %s70, %s71
    %p80 = scmp.eq.s32.totalorder %s18, 0
    %p81 = por %p79, %p80
    %p82 = scmp.ne.s32.totalorder %s70, %s71
    %p83 = scmp.eq.s32.totalorder %s19, 3
    %p84 = por %p82, %p83
    %p86 = scmp.ne.s32.totalorder %s71, %s85
    %p87 = scmp.eq.s32.totalorder %s19, 0
    %p88 = por %p86, %p87
    %s90 = sadd.s32 %s89, 1
    %p93 = scmp.eq.s32.totalorder %s13, 3
    %p94 = scmp.ne.s32.totalorder %s89, %s91
    %p95 = scmp.eq.s32.totalorder %s13, 0
    %p96 = por %p94, %p95
    %p97 = scmp.ne.s32.totalorder %s89, %s91
    %p98 = scmp.eq.s32.totalorder %s18, 3
    %p99 = por %p97, %p98
    %p100 = scmp.ne.s32.totalorder %s91, %s92
    %p101 = scmp.eq.s32.totalorder %s18, 0
    %p102 = por %p100, %p101
    %p103 = scmp.ne.s32.totalorder %s91, %s92
    %p104 = scmp.eq.s32.totalorder %s19, 3
    %p105 = por %p103, %p104
    %p107 = scmp.ne.s32.totalorder %s92, %s106
    %p108 = scmp.eq.s32.totalorder %s19, 0
    %p109 = por %p107, %p108
    %s111 = sadd.s32 %s110, 1
    %p114 = scmp.eq.s32.totalorder %s13, 3
    %p115 = scmp.ne.s32.totalorder %s110, %s112
    %p116 = scmp.eq.s32.totalorder %s13, 0
    %p117 = por %p115, %p116
    %p118 = scmp.ne.s32.totalorder %s110, %s112
    %p119 = scmp.eq.s32.totalorder %s18, 3
    %p120 = por %p118, %p119
    %p121 = scmp.ne.s32.totalorder %s112, %s113
    %p122 = scmp.eq.s32.totalorder %s18, 0
    %p123 = por %p121, %p122
    %p124 = scmp.ne.s32.totalorder %s112, %s113
    %p125 = scmp.eq.s32.totalorder %s19, 3
    %p126 = por %p124, %p125
    %p128 = scmp.ne.s32.totalorder %s113, %s127
    %p129 = scmp.eq.s32.totalorder %s19, 0
    %p130 = por %p128, %p129
    %s132 = sadd.s32 %s131, 1
    %p135 = scmp.eq.s32.totalorder %s13, 3
    %p136 = scmp.ne.s32.totalorder %s131, %s133
    %p137 = scmp.eq.s32.totalorder %s13, 0
    %p138 = por %p136, %p137
    %p139 = scmp.ne.s32.totalorder %s131, %s133
    %p140 = scmp.eq.s32.totalorder %s18, 3
    %p141 = por %p139, %p140
    %p142 = scmp.ne.s32.totalorder %s133, %s134
    %p143 = scmp.eq.s32.totalorder %s18, 0
    %p144 = por %p142, %p143
    %p145 = scmp.ne.s32.totalorder %s133, %s134
    %p146 = scmp.eq.s32.totalorder %s19, 3
    %p147 = por %p145, %p146
    %p149 = scmp.ne.s32.totalorder %s134, %s148
    %p150 = scmp.eq.s32.totalorder %s19, 0
    %p151 = por %p149, %p150
    %s153 = sadd.s32 %s152, 1
    %p156 = scmp.eq.s32.totalorder %s13, 3
    %p157 = scmp.ne.s32.totalorder %s152, %s154
    %p158 = scmp.eq.s32.totalorder %s13, 0
    %p159 = por %p157, %p158
    %p160 = scmp.ne.s32.totalorder %s152, %s154
    %p161 = scmp.eq.s32.totalorder %s18, 3
    %p162 = por %p160, %p161
    %p163 = scmp.ne.s32.totalorder %s154, %s155
    %p164 = scmp.eq.s32.totalorder %s18, 0
    %p165 = por %p163, %p164
    %p166 = scmp.ne.s32.totalorder %s154, %s155
    %p167 = scmp.eq.s32.totalorder %s19, 3
    %p168 = por %p166, %p167
    %p170 = scmp.ne.s32.totalorder %s155, %s169
    %p171 = scmp.eq.s32.totalorder %s19, 0
    %p172 = por %p170, %p171
    %s173 = ssub.s32 %s13, %s20
    %p174 = scmp.eq.s32.totalorder %s173, 0
    %s176 = sadd.s32 %s175, 1
    %s177 = scalar_select %p174, %s175, %s176
    %p180 = pneg %p174
    %p181 = scmp.eq.s32.totalorder %s13, 3
    %p182 = por %p180, %p181
    %p183 = scmp.ne.s32.totalorder %s175, %s178
    %p184 = scmp.eq.s32.totalorder %s13, 0
    %p185 = por %p183, %p184
    %p186 = scmp.ne.s32.totalorder %s175, %s178
    %p187 = scmp.eq.s32.totalorder %s18, 3
    %p188 = por %p186, %p187
    %p189 = scmp.ne.s32.totalorder %s178, %s179
    %p190 = scmp.eq.s32.totalorder %s18, 0
    %p191 = por %p189, %p190
    %p192 = scmp.ne.s32.totalorder %s178, %s179
    %p193 = scmp.eq.s32.totalorder %s19, 3
    %p194 = por %p192, %p193
    %p196 = scmp.ne.s32.totalorder %s179, %s195
    %p197 = scmp.eq.s32.totalorder %s19, 0
    %p198 = por %p196, %p197
    %p199 = scmp.le.s32.totalorder 1, %s13
    %p200 = scmp.lt.s32.totalorder %s13, 5
    %p201 = pnand %p199, %p200
    %p202 = pneg %p201
    // Predicated region
    $region9: #{svfe_forward.5} parent=5 // pred_check
      _
    $region10: #{svfe_forward.5} parent=5 // pred_check_branch
      %204 = sbr.rel (%p201) target = $region12
    $region11: #{svfe_forward.5} parent=5 // pred_region
      %s205 = ssub.s32 %s13, 1
      // Predicated region
      $region13: #{svfe_forward.5} parent=11 // pred_check
        %p206 = pneg %p60
      $region14: #{svfe_forward.5} parent=11 // pred_check_branch
        %208 = sbr.rel (%p206) target = $region16
      $region15: #{svfe_forward.5} parent=11 // pred_region
        _
      $region16: #{svfe_forward.5} parent=11 // pred_fallthru
        _
      // Predicated region
      $region17: #{svfe_forward.5} parent=11 // pred_check
        %p209 = pneg %p81
      $region18: #{svfe_forward.5} parent=11 // pred_check_branch
        %211 = sbr.rel (%p209) target = $region20
      $region19: #{svfe_forward.5} parent=11 // pred_region
        _
      $region20: #{svfe_forward.5} parent=11 // pred_fallthru
        _
      // Predicated region
      $region21: #{svfe_forward.5} parent=11 // pred_check
        %p212 = pneg %p102
      $region22: #{svfe_forward.5} parent=11 // pred_check_branch
        %214 = sbr.rel (%p212) target = $region24
      $region23: #{svfe_forward.5} parent=11 // pred_region
        _
      $region24: #{svfe_forward.5} parent=11 // pred_fallthru
        _
      // Predicated region
      $region25: #{svfe_forward.5} parent=11 // pred_check
        %p215 = pneg %p123
      $region26: #{svfe_forward.5} parent=11 // pred_check_branch
        %217 = sbr.rel (%p215) target = $region28
      $region27: #{svfe_forward.5} parent=11 // pred_region
        _
      $region28: #{svfe_forward.5} parent=11 // pred_fallthru
        _
      // Predicated region
      $region29: #{svfe_forward.5} parent=11 // pred_check
        %p218 = pneg %p144
      $region30: #{svfe_forward.5} parent=11 // pred_check_branch
        %220 = sbr.rel (%p218) target = $region32
      $region31: #{svfe_forward.5} parent=11 // pred_region
        _
      $region32: #{svfe_forward.5} parent=11 // pred_fallthru
        _
      // Predicated region
      $region33: #{svfe_forward.5} parent=11 // pred_check
        %p221 = pneg %p165
      $region34: #{svfe_forward.5} parent=11 // pred_check_branch
        %223 = sbr.rel (%p221) target = $region36
      $region35: #{svfe_forward.5} parent=11 // pred_region
        _
      $region36: #{svfe_forward.5} parent=11 // pred_fallthru
        _
    $region12: #{svfe_forward.5} parent=5 // pred_fallthru
      _
    %p224 = scmp.lt.s32.totalorder %s13, 4
    // Predicated region
    $region37: #{svfe_forward.5} parent=5 // pred_check
      %p225 = pneg %p224
    $region38: #{svfe_forward.5} parent=5 // pred_check_branch
      %227 = sbr.rel (%p225) target = $region40
    $region39: #{svfe_forward.5} parent=5 // pred_region
      // Predicated region
      $region41: #{svfe_forward.5} parent=39 // pred_check
        %p228 = pneg %p33
      $region42: #{svfe_forward.5} parent=39 // pred_check_branch
        %230 = sbr.rel (%p228) target = $region44
      $region43: #{svfe_forward.5} parent=39 // pred_region
        %s231 = smul.u32 2, %s13
        %p232 = scmp.lt.s32.totalorder %s231, 7
        %s233 = scalar_select %p232, %s231, 7
        %s234 = smul.addr %s233, 8
        %s235 = scalar_lea.vmem %s0, %s234
        %s236 = smul.u32 2, %s13
      $region44: #{svfe_forward.5} parent=39 // pred_fallthru
        _
    $region40: #{svfe_forward.5} parent=5 // pred_fallthru
      _
    %p237 = scmp.le.s32.totalorder 1, %s13
    %p238 = scmp.lt.s32.totalorder %s13, 5
    %p239 = pnand %p237, %p238
    %p240 = pneg %p239
    // Predicated region
    $region45: #{svfe_forward.5} parent=5 // pred_check
      _
    $region46: #{svfe_forward.5} parent=5 // pred_check_branch
      %242 = sbr.rel (%p239) target = $region48
    $region47: #{svfe_forward.5} parent=5 // pred_region
      %s243 = ssub.s32 %s13, 1
      %s244 = smul.u32 2, %s18
      %p245 = scmp.lt.s32.totalorder %s244, 7
      %s246 = scalar_select %p245, %s244, 7
      %s247 = smul.addr %s246, 8
      %s248 = scalar_lea.vmem %s0, %s247
      %p249 = pneg %p39
      %p250 = pneg %p36
      %p251 = pneg %p60
      %p252 = pneg %p57
      %p253 = pneg %p81
      %p254 = pneg %p78
      %p255 = pneg %p102
      %p256 = pneg %p99
      %p257 = pneg %p123
      %p258 = pneg %p120
      %p259 = pneg %p144
      %p260 = pneg %p141
      %p261 = pneg %p165
      %p262 = pneg %p162
      %p263 = pneg %p191
      %p264 = pneg %p188
      %p265 = scmp.lt.s32.totalorder %s18, 3
      %s266 = scalar_select %p265, %s18, 3
      %s267 = smul.addr %s266, 4
      %s268 = smul.addr %s267, 2
      %s269 = scalar_lea.vmem %s7, %s268
      %s270 = smul.u32 2, %s18
      %p271 = scmp.lt.s32.totalorder %s270, 7
      %s272 = scalar_select %p271, %s270, 7
      %s273 = smul.addr %s272, 8
      %s274 = scalar_lea.vmem %s0, %s273
      %s275 = smul.u32 2, %s18
      %p276 = scmp.lt.s32.totalorder %s18, 3
      %s277 = scalar_select %p276, %s18, 3
      %s278 = smul.addr %s277, 4
      %s279 = smul.addr %s278, 2
      %s280 = scalar_lea.vmem %s7, %s279
      %v281 = vld [vmem:[%s274] sm:$0xff]
      %v282 = vld [vmem:[%s274 + $0x8] sm:$0xff]
      %v283 = vld [vmem:[%s1] sm:$0xff]
      %v284 = vld [vmem:[%s1 + $0x8] sm:$0xff]
      %v285 = vld [vmem:[%s1 + $0x10] sm:$0xff]
      %v286 = vld [vmem:[%s1 + $0x18] sm:$0xff]
      %v287 = vld [vmem:[%s1 + $0x20] sm:$0xff]
      %v288 = vld [vmem:[%s1 + $0x28] sm:$0xff]
      %v289 = vld [vmem:[%s1 + $0x30] sm:$0xff]
      %v290 = vld [vmem:[%s1 + $0x38] sm:$0xff]
      %vm291 = vcmask 523264
      %v293 = vsel %vm291, %v281, 0
      %v296 = vsel %vm291, %v282, 0
      %298 = vmatprep.subr.mxu0 0.0
      %299 = vmatpush1.msra.mxu0 0.0
      %300 = vmatprep.subr.mxu0 0.0
      %301 = vmatpush1.msra.mxu0 0.0
      %302 = vmatprep.subr.mxu0 0.0
      %303 = vmatpush1.msra.mxu0 0.0
      %304 = vmatprep.subr.mxu0 0.0
      %305 = vmatpush1.msra.mxu0 0.0
      %306 = vmatprep.subr.mxu0 0.0
      %307 = vmatpush1.msra.mxu0 0.0
      %308 = vmatprep.subr.mxu0 0.0
      %309 = vmatpush1.msra.mxu0 0.0
      %310 = vmatprep.subr.mxu0 0.0
      %311 = vmatpush1.msra.mxu0 0.0
      %312 = vmatprep.subr.mxu0 0.0
      %313 = vmatpush1.msra.mxu0 0.0
      %314 = vmatprep.subr.mxu0 0.0
      %315 = vmatpush1.msra.mxu0 %v290
      %316 = vmatprep.subr.mxu0 0.0
      %317 = vmatpush1.msra.mxu0 %v289
      %318 = vmatprep.subr.mxu0 0.0
      %319 = vmatpush1.msra.mxu0 %v288
      %320 = vmatprep.subr.mxu0 0.0
      %321 = vmatpush1.msra.mxu0 %v287
      %322 = vmatprep.subr.mxu0 0.0
      %323 = vmatpush1.msra.mxu0 %v286
      %324 = vmatprep.subr.mxu0 0.0
      %325 = vmatpush1.msra.mxu0 %v285
      %326 = vmatprep.subr.mxu0 0.0
      %327 = vmatpush1.msra.mxu0 %v284
      %328 = vmatprep.subr.mxu0 0.0
      %329 = vmatpush1.msra.mxu0 %v283
      %330 = vmatprep.subr.mxu0 0.0
      %331 = vmatpush2.msra.mxu0 0.0
      %332 = vmatprep.subr.mxu0 0.0
      %333 = vmatpush2.msra.mxu0 0.0
      %334 = vmatprep.subr.mxu0 0.0
      %335 = vmatpush2.msra.mxu0 0.0
      %336 = vmatprep.subr.mxu0 0.0
      %337 = vmatpush2.msra.mxu0 0.0
      %338 = vmatprep.subr.mxu0 0.0
      %339 = vmatpush2.msra.mxu0 0.0
      %340 = vmatprep.subr.mxu0 0.0
      %341 = vmatpush2.msra.mxu0 0.0
      %342 = vmatprep.subr.mxu0 0.0
      %343 = vmatpush2.msra.mxu0 0.0
      %344 = vmatprep.subr.mxu0 0.0
      %345 = vmatpush2.msra.mxu0 0.0
      %346 = vmatprep.subr.mxu0 0.0
      %347 = vmatpush2.msra.mxu0 0.0
      %348 = vmatprep.subr.mxu0 0.0
      %349 = vmatpush2.msra.mxu0 0.0
      %350 = vmatprep.subr.mxu0 0.0
      %351 = vmatpush2.msra.mxu0 0.0
      %352 = vmatprep.subr.mxu0 0.0
      %353 = vmatpush2.msra.mxu0 0.0
      %354 = vmatprep.subr.mxu0 0.0
      %355 = vmatpush2.msra.mxu0 0.0
      %356 = vmatprep.subr.mxu0 0.0
      %357 = vmatpush2.msra.mxu0 0.0
      %358 = vmatprep.subr.mxu0 0.0
      %359 = vmatpush2.msra.mxu0 0.0
      %360 = vmatprep.subr.mxu0 0.0
      %361 = vmatpush2.msra.mxu0 0.0
      %362 = vmatprep.mubr.f32.mxu0 0.0
      %363 = vmatmul.mubr.f32.gmra.mxu0 %v293
      %v364 = vpop.f32.mrf.mxu0
      %v365 = vadd.f32 0.0, %v364
      %v366 = vpop.f32.mrf.mxu0
      %367 = vmatprep.mubr.f32.mxu0 0.0
      %368 = vmatmul.mubr.f32.gmra.mxu0 %v296
      %v369 = vpop.f32.mrf.mxu0
      %v370 = vadd.f32 0.0, %v369
      %v371 = vpop.f32.mrf.mxu0
      %372 = vdwg.mxu0
      %v373 = vld [vmem:[%s2] sm:$0x1]
      %v375 = vlaneseq
      %v376 = vshrl.u32 %v375, 7
      %v377 = vsub.s32 0, %v376
      %v378 = vrot.slane %v373, %v377
      %v380 = vmul.f32 %v365, %v378
      %v381 = vmul.f32 %v370, %v378
      %v382 = vld [vmem:[%s3] sm:$0x1]
      %v384 = vlaneseq
      %v385 = vshrl.u32 %v384, 7
      %v386 = vsub.s32 0, %v385
      %v387 = vrot.slane %v382, %v386
      %v389 = vadd.f32 %v380, %v387
      %v390 = vadd.f32 %v381, %v387
      %v391 = vmax.f32 %v389, 0.0
      %v392 = vmax.f32 %v390, 0.0
      %393 = vrot.lane.b32.xlu0 %v391, 16
      %v394 = vpop.permute.xlu0 %393
      %395 = vrot.lane.b32.xlu0 %v392, 16
      %v396 = vpop.permute.xlu0 %395
      %v397 = vmax.f32 %v391, %v394
      %v398 = vmax.f32 %v392, %v396
      %399 = vrot.lane.b32.xlu0 %v397, 32
      %v400 = vpop.permute.xlu0 %399
      %401 = vrot.lane.b32.xlu0 %v398, 32
      %v402 = vpop.permute.xlu0 %401
      %v403 = vmax.f32 %v397, %v400
      %v404 = vmax.f32 %v398, %v402
      %405 = vrot.lane.b32.xlu0 %v403, 64
      %v406 = vpop.permute.xlu0 %405
      %407 = vrot.lane.b32.xlu0 %v404, 64
      %v408 = vpop.permute.xlu0 %407
      %v409 = vmax.f32 %v403, %v406
      %v410 = vmax.f32 %v404, %v408
      %v411 = vld [vmem:[%s4] sm:$0xff]
      %v412 = vld [vmem:[%s4 + $0x8] sm:$0xff]
      %v413 = vld [vmem:[%s4 + $0x10] sm:$0xff]
      %v414 = vld [vmem:[%s4 + $0x18] sm:$0xff]
      %v415 = vld [vmem:[%s4 + $0x20] sm:$0xff]
      %v416 = vld [vmem:[%s4 + $0x28] sm:$0xff]
      %v417 = vld [vmem:[%s4 + $0x30] sm:$0xff]
      %v418 = vld [vmem:[%s4 + $0x38] sm:$0xff]
      %v419 = vld [vmem:[%s4 + $0x40] sm:$0xff]
      %v420 = vld [vmem:[%s4 + $0x48] sm:$0xff]
      %v421 = vld [vmem:[%s4 + $0x50] sm:$0xff]
      %v422 = vld [vmem:[%s4 + $0x58] sm:$0xff]
      %v423 = vld [vmem:[%s4 + $0x60] sm:$0xff]
      %v424 = vld [vmem:[%s4 + $0x68] sm:$0xff]
      %v425 = vld [vmem:[%s4 + $0x70] sm:$0xff]
      %v426 = vld [vmem:[%s4 + $0x78] sm:$0xff]
      %v427 = vld [vmem:[%s4 + $0x80] sm:$0xff]
      %v428 = vld [vmem:[%s4 + $0x88] sm:$0xff]
      %v429 = vld [vmem:[%s4 + $0x90] sm:$0xff]
      %v430 = vld [vmem:[%s4 + $0x98] sm:$0xff]
      %v431 = vld [vmem:[%s4 + $0xa0] sm:$0xff]
      %v432 = vld [vmem:[%s4 + $0xa8] sm:$0xff]
      %v433 = vld [vmem:[%s4 + $0xb0] sm:$0xff]
      %v434 = vld [vmem:[%s4 + $0xb8] sm:$0xff]
      %v435 = vld [vmem:[%s4 + $0xc0] sm:$0xff]
      %v436 = vld [vmem:[%s4 + $0xc8] sm:$0xff]
      %v437 = vld [vmem:[%s4 + $0xd0] sm:$0xff]
      %v438 = vld [vmem:[%s4 + $0xd8] sm:$0xff]
      %v439 = vld [vmem:[%s4 + $0xe0] sm:$0xff]
      %v440 = vld [vmem:[%s4 + $0xe8] sm:$0xff]
      %v441 = vld [vmem:[%s4 + $0xf0] sm:$0xff]
      %v442 = vld [vmem:[%s4 + $0xf8] sm:$0xff]
      %v443 = vld [vmem:[%s4 + $0x100] sm:$0xff]
      %v444 = vld [vmem:[%s4 + $0x108] sm:$0xff]
      %v445 = vld [vmem:[%s4 + $0x110] sm:$0xff]
      %v446 = vld [vmem:[%s4 + $0x118] sm:$0xff]
      %v447 = vld [vmem:[%s4 + $0x120] sm:$0xff]
      %v448 = vld [vmem:[%s4 + $0x128] sm:$0xff]
      %v449 = vld [vmem:[%s4 + $0x130] sm:$0xff]
      %v450 = vld [vmem:[%s4 + $0x138] sm:$0xff]
      %v451 = vld [vmem:[%s4 + $0x140] sm:$0xff]
      %v452 = vld [vmem:[%s4 + $0x148] sm:$0xff]
      %v453 = vld [vmem:[%s4 + $0x150] sm:$0xff]
      %v454 = vld [vmem:[%s4 + $0x158] sm:$0xff]
      %v455 = vld [vmem:[%s4 + $0x160] sm:$0xff]
      %v456 = vld [vmem:[%s4 + $0x168] sm:$0xff]
      %v457 = vld [vmem:[%s4 + $0x170] sm:$0xff]
      %v458 = vld [vmem:[%s4 + $0x178] sm:$0xff]
      %v459 = vld [vmem:[%s4 + $0x180] sm:$0xff]
      %v460 = vld [vmem:[%s4 + $0x188] sm:$0xff]
      %v461 = vld [vmem:[%s4 + $0x190] sm:$0xff]
      %v462 = vld [vmem:[%s4 + $0x198] sm:$0xff]
      %v463 = vld [vmem:[%s4 + $0x1a0] sm:$0xff]
      %v464 = vld [vmem:[%s4 + $0x1a8] sm:$0xff]
      %v465 = vld [vmem:[%s4 + $0x1b0] sm:$0xff]
      %v466 = vld [vmem:[%s4 + $0x1b8] sm:$0xff]
      %v467 = vld [vmem:[%s4 + $0x1c0] sm:$0xff]
      %v468 = vld [vmem:[%s4 + $0x1c8] sm:$0xff]
      %v469 = vld [vmem:[%s4 + $0x1d0] sm:$0xff]
      %v470 = vld [vmem:[%s4 + $0x1d8] sm:$0xff]
      %v471 = vld [vmem:[%s4 + $0x1e0] sm:$0xff]
      %v472 = vld [vmem:[%s4 + $0x1e8] sm:$0xff]
      %v473 = vld [vmem:[%s4 + $0x1f0] sm:$0xff]
      %v474 = vld [vmem:[%s4 + $0x1f8] sm:$0xff]
      %v475 = vld [vmem:[%s5] sm:$0xff]
      %v476 = vld [vmem:[%s5 + $0x8] sm:$0xff]
      %v477 = vld [vmem:[%s5 + $0x10] sm:$0xff]
      %v478 = vld [vmem:[%s5 + $0x18] sm:$0xff]
      %v479 = vld [vmem:[%s5 + $0x20] sm:$0xff]
      %v480 = vld [vmem:[%s5 + $0x28] sm:$0xff]
      %v481 = vld [vmem:[%s5 + $0x30] sm:$0xff]
      %v482 = vld [vmem:[%s5 + $0x38] sm:$0xff]
      %vm483 = vcmask 130048
      %v485 = vsel %vm483, %v409, 0
      %v488 = vsel %vm483, %v410, 0
      %490 = vmatprep.subr.mxu0 0.0
      %491 = vmatpush1.msra.mxu0 0.0
      %492 = vmatprep.subr.mxu0 0.0
      %493 = vmatpush1.msra.mxu0 0.0
      %494 = vmatprep.subr.mxu0 0.0
      %495 = vmatpush1.msra.mxu0 0.0
      %496 = vmatprep.subr.mxu0 0.0
      %497 = vmatpush1.msra.mxu0 0.0
      %498 = vmatprep.subr.mxu0 0.0
      %499 = vmatpush1.msra.mxu0 0.0
      %500 = vmatprep.subr.mxu0 0.0
      %501 = vmatpush1.msra.mxu0 0.0
      %502 = vmatprep.subr.mxu0 0.0
      %503 = vmatpush1.msra.mxu0 0.0
      %504 = vmatprep.subr.mxu0 0.0
      %505 = vmatpush1.msra.mxu0 0.0
      %506 = vmatprep.subr.mxu0 0.0
      %507 = vmatpush1.msra.mxu0 0.0
      %508 = vmatprep.subr.mxu0 0.0
      %509 = vmatpush1.msra.mxu0 0.0
      %510 = vmatprep.subr.mxu0 0.0
      %511 = vmatpush1.msra.mxu0 0.0
      %512 = vmatprep.subr.mxu0 0.0
      %513 = vmatpush1.msra.mxu0 0.0
      %514 = vmatprep.subr.mxu0 0.0
      %515 = vmatpush1.msra.mxu0 0.0
      %516 = vmatprep.subr.mxu0 0.0
      %517 = vmatpush1.msra.mxu0 0.0
      %518 = vmatprep.subr.mxu0 %v480
      %519 = vmatpush1.msra.mxu0 %v479
      %520 = vmatprep.subr.mxu0 %v476
      %521 = vmatpush1.msra.mxu0 %v475
      %522 = vmatprep.subr.mxu0 0.0
      %523 = vmatpush2.msra.mxu0 0.0
      %524 = vmatprep.subr.mxu0 0.0
      %525 = vmatpush2.msra.mxu0 0.0
      %526 = vmatprep.subr.mxu0 0.0
      %527 = vmatpush2.msra.mxu0 0.0
      %528 = vmatprep.subr.mxu0 0.0
      %529 = vmatpush2.msra.mxu0 0.0
      %530 = vmatprep.subr.mxu0 0.0
      %531 = vmatpush2.msra.mxu0 0.0
      %532 = vmatprep.subr.mxu0 0.0
      %533 = vmatpush2.msra.mxu0 0.0
      %534 = vmatprep.subr.mxu0 0.0
      %535 = vmatpush2.msra.mxu0 0.0
      %536 = vmatprep.subr.mxu0 0.0
      %537 = vmatpush2.msra.mxu0 0.0
      %538 = vmatprep.subr.mxu0 0.0
      %539 = vmatpush2.msra.mxu0 0.0
      %540 = vmatprep.subr.mxu0 0.0
      %541 = vmatpush2.msra.mxu0 0.0
      %542 = vmatprep.subr.mxu0 0.0
      %543 = vmatpush2.msra.mxu0 0.0
      %544 = vmatprep.subr.mxu0 0.0
      %545 = vmatpush2.msra.mxu0 0.0
      %546 = vmatprep.subr.mxu0 0.0
      %547 = vmatpush2.msra.mxu0 0.0
      %548 = vmatprep.subr.mxu0 0.0
      %549 = vmatpush2.msra.mxu0 0.0
      %550 = vmatprep.subr.mxu0 0.0
      %551 = vmatpush2.msra.mxu0 0.0
      %552 = vmatprep.subr.mxu0 0.0
      %553 = vmatpush2.msra.mxu0 0.0
      %554 = vmatprep.mubr.f32.mxu0 0.0
      %555 = vmatmul.mubr.f32.gmra.mxu0 %v485
      %v556 = vpop.f32.mrf.mxu0
      %v557 = vadd.f32 0.0, %v556
      %v558 = vpop.f32.mrf.mxu0
      %v559 = vadd.f32 0.0, %v558
      %560 = vmatprep.mubr.f32.mxu0 0.0
      %561 = vmatmul.mubr.f32.gmra.mxu0 %v488
      %v562 = vpop.f32.mrf.mxu0
      %v563 = vadd.f32 0.0, %v562
      %v564 = vpop.f32.mrf.mxu0
      %v565 = vadd.f32 0.0, %v564
      %566 = vdwg.mxu0
      %567 = vmatprep.subr.mxu0 0.0
      %568 = vmatpush1.msra.mxu0 0.0
      %569 = vmatprep.subr.mxu0 0.0
      %570 = vmatpush1.msra.mxu0 0.0
      %571 = vmatprep.subr.mxu0 0.0
      %572 = vmatpush1.msra.mxu0 0.0
      %573 = vmatprep.subr.mxu0 0.0
      %574 = vmatpush1.msra.mxu0 0.0
      %575 = vmatprep.subr.mxu0 0.0
      %576 = vmatpush1.msra.mxu0 0.0
      %577 = vmatprep.subr.mxu0 0.0
      %578 = vmatpush1.msra.mxu0 0.0
      %579 = vmatprep.subr.mxu0 0.0
      %580 = vmatpush1.msra.mxu0 0.0
      %581 = vmatprep.subr.mxu0 0.0
      %582 = vmatpush1.msra.mxu0 0.0
      %583 = vmatprep.subr.mxu0 0.0
      %584 = vmatpush1.msra.mxu0 0.0
      %585 = vmatprep.subr.mxu0 0.0
      %586 = vmatpush1.msra.mxu0 0.0
      %587 = vmatprep.subr.mxu0 0.0
      %588 = vmatpush1.msra.mxu0 0.0
      %589 = vmatprep.subr.mxu0 0.0
      %590 = vmatpush1.msra.mxu0 0.0
      %591 = vmatprep.subr.mxu0 0.0
      %592 = vmatpush1.msra.mxu0 0.0
      %593 = vmatprep.subr.mxu0 0.0
      %594 = vmatpush1.msra.mxu0 0.0
      %595 = vmatprep.subr.mxu0 %v482
      %596 = vmatpush1.msra.mxu0 %v481
      %597 = vmatprep.subr.mxu0 %v478
      %598 = vmatpush1.msra.mxu0 %v477
      %599 = vmatprep.subr.mxu0 0.0
      %600 = vmatpush2.msra.mxu0 0.0
      %601 = vmatprep.subr.mxu0 0.0
      %602 = vmatpush2.msra.mxu0 0.0
      %603 = vmatprep.subr.mxu0 0.0
      %604 = vmatpush2.msra.mxu0 0.0
      %605 = vmatprep.subr.mxu0 0.0
      %606 = vmatpush2.msra.mxu0 0.0
      %607 = vmatprep.subr.mxu0 0.0
      %608 = vmatpush2.msra.mxu0 0.0
      %609 = vmatprep.subr.mxu0 0.0
      %610 = vmatpush2.msra.mxu0 0.0
      %611 = vmatprep.subr.mxu0 0.0
      %612 = vmatpush2.msra.mxu0 0.0
      %613 = vmatprep.subr.mxu0 0.0
      %614 = vmatpush2.msra.mxu0 0.0
      %615 = vmatprep.subr.mxu0 0.0
      %616 = vmatpush2.msra.mxu0 0.0
      %617 = vmatprep.subr.mxu0 0.0
      %618 = vmatpush2.msra.mxu0 0.0
      %619 = vmatprep.subr.mxu0 0.0
      %620 = vmatpush2.msra.mxu0 0.0
      %621 = vmatprep.subr.mxu0 0.0
      %622 = vmatpush2.msra.mxu0 0.0
      %623 = vmatprep.subr.mxu0 0.0
      %624 = vmatpush2.msra.mxu0 0.0
      %625 = vmatprep.subr.mxu0 0.0
      %626 = vmatpush2.msra.mxu0 0.0
      %627 = vmatprep.subr.mxu0 0.0
      %628 = vmatpush2.msra.mxu0 0.0
      %629 = vmatprep.subr.mxu0 0.0
      %630 = vmatpush2.msra.mxu0 0.0
      %631 = vmatprep.mubr.f32.mxu0 0.0
      %632 = vmatmul.mubr.f32.gmra.mxu0 %v485
      %v633 = vpop.f32.mrf.mxu0
      %v634 = vadd.f32 0.0, %v633
      %v635 = vpop.f32.mrf.mxu0
      %v636 = vadd.f32 0.0, %v635
      %637 = vmatprep.mubr.f32.mxu0 0.0
      %638 = vmatmul.mubr.f32.gmra.mxu0 %v488
      %v639 = vpop.f32.mrf.mxu0
      %v640 = vadd.f32 0.0, %v639
      %v641 = vpop.f32.mrf.mxu0
      %v642 = vadd.f32 0.0, %v641
      %643 = vdwg.mxu0
      %644 = vmatprep.subr.mxu0 %v472
      %645 = vmatpush1.msra.mxu0 %v471
      %646 = vmatprep.subr.mxu0 %v468
      %647 = vmatpush1.msra.mxu0 %v467
      %648 = vmatprep.subr.mxu0 %v464
      %649 = vmatpush1.msra.mxu0 %v463
      %650 = vmatprep.subr.mxu0 %v460
      %651 = vmatpush1.msra.mxu0 %v459
      %652 = vmatprep.subr.mxu0 %v456
      %653 = vmatpush1.msra.mxu0 %v455
      %654 = vmatprep.subr.mxu0 %v452
      %655 = vmatpush1.msra.mxu0 %v451
      %656 = vmatprep.subr.mxu0 %v448
      %657 = vmatpush1.msra.mxu0 %v447
      %658 = vmatprep.subr.mxu0 %v444
      %659 = vmatpush1.msra.mxu0 %v443
      %660 = vmatprep.subr.mxu0 %v440
      %661 = vmatpush1.msra.mxu0 %v439
      %662 = vmatprep.subr.mxu0 %v436
      %663 = vmatpush1.msra.mxu0 %v435
      %664 = vmatprep.subr.mxu0 %v432
      %665 = vmatpush1.msra.mxu0 %v431
      %666 = vmatprep.subr.mxu0 %v428
      %667 = vmatpush1.msra.mxu0 %v427
      %668 = vmatprep.subr.mxu0 %v424
      %669 = vmatpush1.msra.mxu0 %v423
      %670 = vmatprep.subr.mxu0 %v420
      %671 = vmatpush1.msra.mxu0 %v419
      %672 = vmatprep.subr.mxu0 %v416
      %673 = vmatpush1.msra.mxu0 %v415
      %674 = vmatprep.subr.mxu0 %v412
      %675 = vmatpush1.msra.mxu0 %v411
      %676 = vmatprep.subr.mxu0 0.0
      %677 = vmatpush2.msra.mxu0 0.0
      %678 = vmatprep.subr.mxu0 0.0
      %679 = vmatpush2.msra.mxu0 0.0
      %680 = vmatprep.subr.mxu0 0.0
      %681 = vmatpush2.msra.mxu0 0.0
      %682 = vmatprep.subr.mxu0 0.0
      %683 = vmatpush2.msra.mxu0 0.0
      %684 = vmatprep.subr.mxu0 0.0
      %685 = vmatpush2.msra.mxu0 0.0
      %686 = vmatprep.subr.mxu0 0.0
      %687 = vmatpush2.msra.mxu0 0.0
      %688 = vmatprep.subr.mxu0 0.0
      %689 = vmatpush2.msra.mxu0 0.0
      %690 = vmatprep.subr.mxu0 0.0
      %691 = vmatpush2.msra.mxu0 0.0
      %692 = vmatprep.subr.mxu0 0.0
      %693 = vmatpush2.msra.mxu0 0.0
      %694 = vmatprep.subr.mxu0 0.0
      %695 = vmatpush2.msra.mxu0 0.0
      %696 = vmatprep.subr.mxu0 0.0
      %697 = vmatpush2.msra.mxu0 0.0
      %698 = vmatprep.subr.mxu0 0.0
      %699 = vmatpush2.msra.mxu0 0.0
      %700 = vmatprep.subr.mxu0 0.0
      %701 = vmatpush2.msra.mxu0 0.0
      %702 = vmatprep.subr.mxu0 0.0
      %703 = vmatpush2.msra.mxu0 0.0
      %704 = vmatprep.subr.mxu0 0.0
      %705 = vmatpush2.msra.mxu0 0.0
      %706 = vmatprep.subr.mxu0 0.0
      %707 = vmatpush2.msra.mxu0 0.0
      %708 = vmatprep.mubr.f32.mxu0 0.0
      %709 = vmatmul.mubr.f32.gmra.mxu0 %v391
      %v710 = vpop.f32.mrf.mxu0
      %v711 = vadd.f32 %v557, %v710
      %v712 = vpop.f32.mrf.mxu0
      %v713 = vadd.f32 %v559, %v712
      %714 = vmatprep.mubr.f32.mxu0 0.0
      %715 = vmatmul.mubr.f32.gmra.mxu0 %v392
      %v716 = vpop.f32.mrf.mxu0
      %v717 = vadd.f32 %v563, %v716
      %v718 = vpop.f32.mrf.mxu0
      %v719 = vadd.f32 %v565, %v718
      %720 = vdwg.mxu0
      %721 = vmatprep.subr.mxu0 %v474
      %722 = vmatpush1.msra.mxu0 %v473
      %723 = vmatprep.subr.mxu0 %v470
      %724 = vmatpush1.msra.mxu0 %v469
      %725 = vmatprep.subr.mxu0 %v466
      %726 = vmatpush1.msra.mxu0 %v465
      %727 = vmatprep.subr.mxu0 %v462
      %728 = vmatpush1.msra.mxu0 %v461
      %729 = vmatprep.subr.mxu0 %v458
      %730 = vmatpush1.msra.mxu0 %v457
      %731 = vmatprep.subr.mxu0 %v454
      %732 = vmatpush1.msra.mxu0 %v453
      %733 = vmatprep.subr.mxu0 %v450
      %734 = vmatpush1.msra.mxu0 %v449
      %735 = vmatprep.subr.mxu0 %v446
      %736 = vmatpush1.msra.mxu0 %v445
      %737 = vmatprep.subr.mxu0 %v442
      %738 = vmatpush1.msra.mxu0 %v441
      %739 = vmatprep.subr.mxu0 %v438
      %740 = vmatpush1.msra.mxu0 %v437
      %741 = vmatprep.subr.mxu0 %v434
      %742 = vmatpush1.msra.mxu0 %v433
      %743 = vmatprep.subr.mxu0 %v430
      %744 = vmatpush1.msra.mxu0 %v429
      %745 = vmatprep.subr.mxu0 %v426
      %746 = vmatpush1.msra.mxu0 %v425
      %747 = vmatprep.subr.mxu0 %v422
      %748 = vmatpush1.msra.mxu0 %v421
      %749 = vmatprep.subr.mxu0 %v418
      %750 = vmatpush1.msra.mxu0 %v417
      %751 = vmatprep.subr.mxu0 %v414
      %752 = vmatpush1.msra.mxu0 %v413
      %753 = vmatprep.subr.mxu0 0.0
      %754 = vmatpush2.msra.mxu0 0.0
      %755 = vmatprep.subr.mxu0 0.0
      %756 = vmatpush2.msra.mxu0 0.0
      %757 = vmatprep.subr.mxu0 0.0
      %758 = vmatpush2.msra.mxu0 0.0
      %759 = vmatprep.subr.mxu0 0.0
      %760 = vmatpush2.msra.mxu0 0.0
      %761 = vmatprep.subr.mxu0 0.0
      %762 = vmatpush2.msra.mxu0 0.0
      %763 = vmatprep.subr.mxu0 0.0
      %764 = vmatpush2.msra.mxu0 0.0
      %765 = vmatprep.subr.mxu0 0.0
      %766 = vmatpush2.msra.mxu0 0.0
      %767 = vmatprep.subr.mxu0 0.0
      %768 = vmatpush2.msra.mxu0 0.0
      %769 = vmatprep.subr.mxu0 0.0
      %770 = vmatpush2.msra.mxu0 0.0
      %771 = vmatprep.subr.mxu0 0.0
      %772 = vmatpush2.msra.mxu0 0.0
      %773 = vmatprep.subr.mxu0 0.0
      %774 = vmatpush2.msra.mxu0 0.0
      %775 = vmatprep.subr.mxu0 0.0
      %776 = vmatpush2.msra.mxu0 0.0
      %777 = vmatprep.subr.mxu0 0.0
      %778 = vmatpush2.msra.mxu0 0.0
      %779 = vmatprep.subr.mxu0 0.0
      %780 = vmatpush2.msra.mxu0 0.0
      %781 = vmatprep.subr.mxu0 0.0
      %782 = vmatpush2.msra.mxu0 0.0
      %783 = vmatprep.subr.mxu0 0.0
      %784 = vmatpush2.msra.mxu0 0.0
      %785 = vmatprep.mubr.f32.mxu0 0.0
      %786 = vmatmul.mubr.f32.gmra.mxu0 %v391
      %v787 = vpop.f32.mrf.mxu0
      %v788 = vadd.f32 %v634, %v787
      %v789 = vpop.f32.mrf.mxu0
      %v790 = vadd.f32 %v636, %v789
      %791 = vmatprep.mubr.f32.mxu0 0.0
      %792 = vmatmul.mubr.f32.gmra.mxu0 %v392
      %v793 = vpop.f32.mrf.mxu0
      %v794 = vadd.f32 %v640, %v793
      %v795 = vpop.f32.mrf.mxu0
      %v796 = vadd.f32 %v642, %v795
      %797 = vdwg.mxu0
      %v798 = vld [vmem:[%s6] sm:$0xff]
      %v799 = vld [vmem:[%s6 + $0x8] sm:$0xff]
      %v800 = vld [vmem:[%s6 + $0x10] sm:$0xff]
      %v801 = vld [vmem:[%s6 + $0x18] sm:$0xff]
      %v802 = vld [vmem:[%s6 + $0x20] sm:$0xff]
      %v803 = vld [vmem:[%s6 + $0x28] sm:$0xff]
      %v804 = vld [vmem:[%s6 + $0x30] sm:$0xff]
      %v805 = vld [vmem:[%s6 + $0x38] sm:$0xff]
      %v806 = vld [vmem:[%s6 + $0x40] sm:$0xff]
      %v807 = vld [vmem:[%s6 + $0x48] sm:$0xff]
      %v808 = vld [vmem:[%s6 + $0x50] sm:$0xff]
      %v809 = vld [vmem:[%s6 + $0x58] sm:$0xff]
      %v810 = vld [vmem:[%s6 + $0x60] sm:$0xff]
      %v811 = vld [vmem:[%s6 + $0x68] sm:$0xff]
      %v812 = vld [vmem:[%s6 + $0x70] sm:$0xff]
      %v813 = vld [vmem:[%s6 + $0x78] sm:$0xff]
      %v814 = vld [vmem:[%s6 + $0x80] sm:$0xff]
      %v815 = vld [vmem:[%s6 + $0x88] sm:$0xff]
      %v816 = vld [vmem:[%s6 + $0x90] sm:$0xff]
      %v817 = vld [vmem:[%s6 + $0x98] sm:$0xff]
      %v818 = vld [vmem:[%s6 + $0xa0] sm:$0xff]
      %v819 = vld [vmem:[%s6 + $0xa8] sm:$0xff]
      %v820 = vld [vmem:[%s6 + $0xb0] sm:$0xff]
      %v821 = vld [vmem:[%s6 + $0xb8] sm:$0xff]
      %v822 = vld [vmem:[%s6 + $0xc0] sm:$0xff]
      %v823 = vld [vmem:[%s6 + $0xc8] sm:$0xff]
      %v824 = vld [vmem:[%s6 + $0xd0] sm:$0xff]
      %v825 = vld [vmem:[%s6 + $0xd8] sm:$0xff]
      %v826 = vld [vmem:[%s6 + $0xe0] sm:$0xff]
      %v827 = vld [vmem:[%s6 + $0xe8] sm:$0xff]
      %v828 = vld [vmem:[%s6 + $0xf0] sm:$0xff]
      %v829 = vld [vmem:[%s6 + $0xf8] sm:$0xff]
      %830 = vmatprep.subr.mxu0 0.0
      %831 = vmatpush1.msra.mxu0 0.0
      %832 = vmatprep.subr.mxu0 0.0
      %833 = vmatpush1.msra.mxu0 0.0
      %834 = vmatprep.subr.mxu0 0.0
      %835 = vmatpush1.msra.mxu0 0.0
      %836 = vmatprep.subr.mxu0 0.0
      %837 = vmatpush1.msra.mxu0 0.0
      %838 = vmatprep.subr.mxu0 0.0
      %839 = vmatpush1.msra.mxu0 0.0
      %840 = vmatprep.subr.mxu0 0.0
      %841 = vmatpush1.msra.mxu0 0.0
      %842 = vmatprep.subr.mxu0 0.0
      %843 = vmatpush1.msra.mxu0 0.0
      %844 = vmatprep.subr.mxu0 0.0
      %845 = vmatpush1.msra.mxu0 0.0
      %846 = vmatprep.subr.mxu0 %v827
      %847 = vmatpush1.msra.mxu0 %v826
      %848 = vmatprep.subr.mxu0 %v823
      %849 = vmatpush1.msra.mxu0 %v822
      %850 = vmatprep.subr.mxu0 %v819
      %851 = vmatpush1.msra.mxu0 %v818
      %852 = vmatprep.subr.mxu0 %v815
      %853 = vmatpush1.msra.mxu0 %v814
      %854 = vmatprep.subr.mxu0 %v811
      %855 = vmatpush1.msra.mxu0 %v810
      %856 = vmatprep.subr.mxu0 %v807
      %857 = vmatpush1.msra.mxu0 %v806
      %858 = vmatprep.subr.mxu0 %v803
      %859 = vmatpush1.msra.mxu0 %v802
      %860 = vmatprep.subr.mxu0 %v799
      %861 = vmatpush1.msra.mxu0 %v798
      %862 = vmatprep.subr.mxu0 0.0
      %863 = vmatpush2.msra.mxu0 0.0
      %864 = vmatprep.subr.mxu0 0.0
      %865 = vmatpush2.msra.mxu0 0.0
      %866 = vmatprep.subr.mxu0 0.0
      %867 = vmatpush2.msra.mxu0 0.0
      %868 = vmatprep.subr.mxu0 0.0
      %869 = vmatpush2.msra.mxu0 0.0
      %870 = vmatprep.subr.mxu0 0.0
      %871 = vmatpush2.msra.mxu0 0.0
      %872 = vmatprep.subr.mxu0 0.0
      %873 = vmatpush2.msra.mxu0 0.0
      %874 = vmatprep.subr.mxu0 0.0
      %875 = vmatpush2.msra.mxu0 0.0
      %876 = vmatprep.subr.mxu0 0.0
      %877 = vmatpush2.msra.mxu0 0.0
      %878 = vmatprep.subr.mxu0 0.0
      %879 = vmatpush2.msra.mxu0 0.0
      %880 = vmatprep.subr.mxu0 0.0
      %881 = vmatpush2.msra.mxu0 0.0
      %882 = vmatprep.subr.mxu0 0.0
      %883 = vmatpush2.msra.mxu0 0.0
      %884 = vmatprep.subr.mxu0 0.0
      %885 = vmatpush2.msra.mxu0 0.0
      %886 = vmatprep.subr.mxu0 0.0
      %887 = vmatpush2.msra.mxu0 0.0
      %888 = vmatprep.subr.mxu0 0.0
      %889 = vmatpush2.msra.mxu0 0.0
      %890 = vmatprep.subr.mxu0 0.0
      %891 = vmatpush2.msra.mxu0 0.0
      %892 = vmatprep.subr.mxu0 0.0
      %893 = vmatpush2.msra.mxu0 0.0
      %894 = vmatprep.mubr.f32.mxu0 0.0
      %895 = vmatmul.mubr.f32.gmra.mxu0 %v293
      %v896 = vpop.f32.mrf.mxu0
      %v897 = vadd.f32 0.0, %v896
      %v898 = vpop.f32.mrf.mxu0
      %v899 = vadd.f32 0.0, %v898
      %900 = vmatprep.mubr.f32.mxu0 0.0
      %901 = vmatmul.mubr.f32.gmra.mxu0 %v296
      %v902 = vpop.f32.mrf.mxu0
      %v903 = vadd.f32 0.0, %v902
      %v904 = vpop.f32.mrf.mxu0
      %v905 = vadd.f32 0.0, %v904
      %906 = vdwg.mxu0
      %907 = vmatprep.subr.mxu0 0.0
      %908 = vmatpush1.msra.mxu0 0.0
      %909 = vmatprep.subr.mxu0 0.0
      %910 = vmatpush1.msra.mxu0 0.0
      %911 = vmatprep.subr.mxu0 0.0
      %912 = vmatpush1.msra.mxu0 0.0
      %913 = vmatprep.subr.mxu0 0.0
      %914 = vmatpush1.msra.mxu0 0.0
      %915 = vmatprep.subr.mxu0 0.0
      %916 = vmatpush1.msra.mxu0 0.0
      %917 = vmatprep.subr.mxu0 0.0
      %918 = vmatpush1.msra.mxu0 0.0
      %919 = vmatprep.subr.mxu0 0.0
      %920 = vmatpush1.msra.mxu0 0.0
      %921 = vmatprep.subr.mxu0 0.0
      %922 = vmatpush1.msra.mxu0 0.0
      %923 = vmatprep.subr.mxu0 %v829
      %924 = vmatpush1.msra.mxu0 %v828
      %925 = vmatprep.subr.mxu0 %v825
      %926 = vmatpush1.msra.mxu0 %v824
      %927 = vmatprep.subr.mxu0 %v821
      %928 = vmatpush1.msra.mxu0 %v820
      %929 = vmatprep.subr.mxu0 %v817
      %930 = vmatpush1.msra.mxu0 %v816
      %931 = vmatprep.subr.mxu0 %v813
      %932 = vmatpush1.msra.mxu0 %v812
      %933 = vmatprep.subr.mxu0 %v809
      %934 = vmatpush1.msra.mxu0 %v808
      %935 = vmatprep.subr.mxu0 %v805
      %936 = vmatpush1.msra.mxu0 %v804
      %937 = vmatprep.subr.mxu0 %v801
      %938 = vmatpush1.msra.mxu0 %v800
      %939 = vmatprep.subr.mxu0 0.0
      %940 = vmatpush2.msra.mxu0 0.0
      %941 = vmatprep.subr.mxu0 0.0
      %942 = vmatpush2.msra.mxu0 0.0
      %943 = vmatprep.subr.mxu0 0.0
      %944 = vmatpush2.msra.mxu0 0.0
      %945 = vmatprep.subr.mxu0 0.0
      %946 = vmatpush2.msra.mxu0 0.0
      %947 = vmatprep.subr.mxu0 0.0
      %948 = vmatpush2.msra.mxu0 0.0
      %949 = vmatprep.subr.mxu0 0.0
      %950 = vmatpush2.msra.mxu0 0.0
      %951 = vmatprep.subr.mxu0 0.0
      %952 = vmatpush2.msra.mxu0 0.0
      %953 = vmatprep.subr.mxu0 0.0
      %954 = vmatpush2.msra.mxu0 0.0
      %955 = vmatprep.subr.mxu0 0.0
      %956 = vmatpush2.msra.mxu0 0.0
      %957 = vmatprep.subr.mxu0 0.0
      %958 = vmatpush2.msra.mxu0 0.0
      %959 = vmatprep.subr.mxu0 0.0
      %960 = vmatpush2.msra.mxu0 0.0
      %961 = vmatprep.subr.mxu0 0.0
      %962 = vmatpush2.msra.mxu0 0.0
      %963 = vmatprep.subr.mxu0 0.0
      %964 = vmatpush2.msra.mxu0 0.0
      %965 = vmatprep.subr.mxu0 0.0
      %966 = vmatpush2.msra.mxu0 0.0
      %967 = vmatprep.subr.mxu0 0.0
      %968 = vmatpush2.msra.mxu0 0.0
      %969 = vmatprep.subr.mxu0 0.0
      %970 = vmatpush2.msra.mxu0 0.0
      %971 = vmatprep.mubr.f32.mxu0 0.0
      %972 = vmatmul.mubr.f32.gmra.mxu0 %v293
      %v973 = vpop.f32.mrf.mxu0
      %v974 = vadd.f32 0.0, %v973
      %v975 = vpop.f32.mrf.mxu0
      %v976 = vadd.f32 0.0, %v975
      %977 = vmatprep.mubr.f32.mxu0 0.0
      %978 = vmatmul.mubr.f32.gmra.mxu0 %v296
      %v979 = vpop.f32.mrf.mxu0
      %v980 = vadd.f32 0.0, %v979
      %v981 = vpop.f32.mrf.mxu0
      %v982 = vadd.f32 0.0, %v981
      %983 = vdwg.mxu0
      %v984 = vmul.f32 %v711, %v897
      %v985 = vmul.f32 %v713, %v899
      %v986 = vmul.f32 %v788, %v974
      %v987 = vmul.f32 %v790, %v976
      %v988 = vmul.f32 %v717, %v903
      %v989 = vmul.f32 %v719, %v905
      %v990 = vmul.f32 %v794, %v980
      %v991 = vmul.f32 %v796, %v982
      %v992 = vadd.f32 %v984, %v988
      %v993 = vrot.slane %v992, 4
      %v994 = vadd.f32 %v992, %v993
      %v995 = vrot.slane %v994, 2
      %v996 = vadd.f32 %v994, %v995
      %v997 = vrot.slane %v996, 1
      %v998 = vadd.f32 %v996, %v997
      %v999 = vadd.f32 %v985, %v989
      %v1000 = vrot.slane %v999, 4
      %v1001 = vadd.f32 %v999, %v1000
      %v1002 = vrot.slane %v1001, 2
      %v1003 = vadd.f32 %v1001, %v1002
      %v1004 = vrot.slane %v1003, 1
      %v1005 = vadd.f32 %v1003, %v1004
      %v1006 = vadd.f32 %v986, %v990
      %v1007 = vrot.slane %v1006, 4
      %v1008 = vadd.f32 %v1006, %v1007
      %v1009 = vrot.slane %v1008, 2
      %v1010 = vadd.f32 %v1008, %v1009
      %v1011 = vrot.slane %v1010, 1
      %v1012 = vadd.f32 %v1010, %v1011
      %v1013 = vadd.f32 %v987, %v991
      %v1014 = vrot.slane %v1013, 4
      %v1015 = vadd.f32 %v1013, %v1014
      %v1016 = vrot.slane %v1015, 2
      %v1017 = vadd.f32 %v1015, %v1016
      %v1018 = vrot.slane %v1017, 1
      %v1019 = vadd.f32 %v1017, %v1018
      %v1020 = vmul.f32 %v984, %v984
      %v1021 = vmul.f32 %v985, %v985
      %v1022 = vmul.f32 %v986, %v986
      %v1023 = vmul.f32 %v987, %v987
      %v1024 = vmul.f32 %v988, %v988
      %v1025 = vmul.f32 %v989, %v989
      %v1026 = vmul.f32 %v990, %v990
      %v1027 = vmul.f32 %v991, %v991
      %v1028 = vadd.f32 %v1020, %v1024
      %v1029 = vrot.slane %v1028, 4
      %v1030 = vadd.f32 %v1028, %v1029
      %v1031 = vrot.slane %v1030, 2
      %v1032 = vadd.f32 %v1030, %v1031
      %v1033 = vrot.slane %v1032, 1
      %v1034 = vadd.f32 %v1032, %v1033
      %v1035 = vadd.f32 %v1021, %v1025
      %v1036 = vrot.slane %v1035, 4
      %v1037 = vadd.f32 %v1035, %v1036
      %v1038 = vrot.slane %v1037, 2
      %v1039 = vadd.f32 %v1037, %v1038
      %v1040 = vrot.slane %v1039, 1
      %v1041 = vadd.f32 %v1039, %v1040
      %v1042 = vadd.f32 %v1022, %v1026
      %v1043 = vrot.slane %v1042, 4
      %v1044 = vadd.f32 %v1042, %v1043
      %v1045 = vrot.slane %v1044, 2
      %v1046 = vadd.f32 %v1044, %v1045
      %v1047 = vrot.slane %v1046, 1
      %v1048 = vadd.f32 %v1046, %v1047
      %v1049 = vadd.f32 %v1023, %v1027
      %v1050 = vrot.slane %v1049, 4
      %v1051 = vadd.f32 %v1049, %v1050
      %v1052 = vrot.slane %v1051, 2
      %v1053 = vadd.f32 %v1051, %v1052
      %v1054 = vrot.slane %v1053, 1
      %v1055 = vadd.f32 %v1053, %v1054
      %vm1056 = vcmask 1040384
      %v1057 = vsel %vm1056, %v998, %v1034
      %v1058 = vsel %vm1056, %v1005, %v1041
      %v1059 = vsel %vm1056, %v1012, %v1048
      %v1060 = vsel %vm1056, %v1019, %v1055
      %v1065 = vcombine.low %v1057, %v1058
      %v1066 = vcombine.low %v1059, %v1060
      %v1068 = vunpack.c.l.s4 1983009808
      %v1069 = vunpack.c.0.s8 %v1068
      %v1070 = vlaneseq
      %v1071 = vshrl.u32 %v1070, 7
      %v1072 = vsub.s32 %v1069, %v1071
      %v1073 = vrot.slane %v1065, %v1072
      %v1075 = vunpack.c.l.s4 1983009808
      %v1076 = vunpack.c.0.s8 %v1075
      %v1077 = vlaneseq
      %v1078 = vshrl.u32 %v1077, 7
      %v1079 = vsub.s32 %v1076, %v1078
      %v1080 = vrot.slane %v1066, %v1079
      %v1081 = vcombine.low %v1073, %v1080
      %1083 = vst [vmem:[%s280] sm:$0xff] %v1081
      %p1084 = scmp.lt.s32.totalorder %s18, 3
      %s1085 = scalar_select %p1084, %s18, 3
      %s1086 = smul.addr %s1085, 4
      %s1087 = smul.addr %s1086, 2
      %s1088 = scalar_lea.vmem %s7, %s1087
      // Predicated region
      $region49: #{svfe_forward.5} parent=47 // pred_check
        %p1089 = pneg %p188
      $region50: #{svfe_forward.5} parent=47 // pred_check_branch
        %1091 = sbr.rel (%p1089) target = $region52
      $region51: #{svfe_forward.5} parent=47 // pred_region
        _
      $region52: #{svfe_forward.5} parent=47 // pred_fallthru
        _
    $region48: #{svfe_forward.5} parent=5 // pred_fallthru
      _
    %p1092 = scmp.le.s32.totalorder 2, %s13
    // Predicated region
    $region53: #{svfe_forward.5} parent=5 // pred_check
      %p1093 = pneg %p1092
    $region54: #{svfe_forward.5} parent=5 // pred_check_branch
      %1095 = sbr.rel (%p1093) target = $region56
    $region55: #{svfe_forward.5} parent=5 // pred_region
      %s1096 = ssub.s32 %s13, 2
      // Predicated region
      $region57: #{svfe_forward.5} parent=55 // pred_check
        %p1097 = pneg %p194
      $region58: #{svfe_forward.5} parent=55 // pred_check_branch
        %1099 = sbr.rel (%p1097) target = $region60
      $region59: #{svfe_forward.5} parent=55 // pred_region
        %p1100 = scmp.lt.s32.totalorder %s19, 3
        %s1101 = scalar_select %p1100, %s19, 3
        %s1102 = smul.addr %s1101, 4
        %s1103 = smul.addr %s1102, 2
        %s1104 = scalar_lea.vmem %s7, %s1103
      $region60: #{svfe_forward.5} parent=55 // pred_fallthru
        _
    $region56: #{svfe_forward.5} parent=5 // pred_fallthru
      _
  $region6: #{svfe_forward.5} parent=0 // loop_footer
    %s17 = sadd.s32 1, %s13
  $region7: #{svfe_forward.5} parent=0 // loop_footer_branch
    %12 = sbr.rel target = $region3
  $region8: #{svfe_forward.5} parent=0 // loop_exit
    _

// kernel: svfe_forward.6
$region0: #{svfe_forward.6}
  #allocation0 [shape = 'u32[]', space=smem, size = 0x4, offset = 0x4, fixed_abs, tag = 'smem constant byte address 0x4 - core index']
  #allocation1 [shape = 'u32[144,128]{1,0:T(1,128)}', space=vmem, size = 0x12000, scoped, tag = 'internal scratch']
  %s0 = inlined_call_operand.vmem [shape: f32[64,64], index: 0, kind: input, shape index: {}]
  %s1 = inlined_call_operand.vmem [shape: f32[64,128], index: 1, kind: input, shape index: {}]
  %s2 = inlined_call_operand.vmem [shape: f32[1,128], index: 2, kind: input, shape index: {}]
  %s3 = inlined_call_operand.vmem [shape: f32[1,128], index: 3, kind: input, shape index: {}]
  %s4 = inlined_call_operand.vmem [shape: f32[128,512], index: 4, kind: input, shape index: {}]
  %s5 = inlined_call_operand.vmem [shape: f32[16,512], index: 5, kind: input, shape index: {}]
  %s6 = inlined_call_operand.vmem [shape: f32[64,512], index: 6, kind: input, shape index: {}]
  %s7 = inlined_call_operand.vmem [shape: f32[1,512], index: 7, kind: input, shape index: {}]
  %s8 = inlined_call_operand.vmem [shape: f32[1,512], index: 8, kind: input, shape index: {}]
  %s9 = inlined_call_operand.vmem [shape: f32[64,128], index: 9, kind: input, shape index: {}]
  %s10 = inlined_call_operand.vmem [shape: f32[64,128], index: 10, kind: input, shape index: {}]
  %s11 = inlined_call_operand.vmem [shape: f32[64,1024], index: 11, kind: input, shape index: {}]
  %s12 = inlined_call_operand.vmem [shape: f32[4,2,128], index: 12, kind: output, shape index: {}]
  %s13 = sld [smem:[#allocation0]]
  $region81: #{svfe_forward.6} parent=0
    _
  %s15 = ssub.s32 1, %s13
  %s16 = scalar_select 0, %s15, %s13
  loop: start=0, step=1, limit=6
  $region2: #{svfe_forward.6} parent=0 // loop_pre_header
    _
  $region3: #{svfe_forward.6} parent=0 // loop_header
    %s18 = sphi 0, %s22
    %p19 = scmp.ge.s32.totalorder %s18, 6
    %s28 = sphi 0, %s30
    %s31 = sphi 0, %s28
    %s32 = sphi 0, %s31
    %s48 = sphi 0, %s32
    %s52 = sphi 0, %s52
    %s54 = sphi 0, %s52
    %s55 = sphi 0, %s54
    %s69 = sphi 0, %s55
    %s73 = sphi 0, %s73
    %s75 = sphi 0, %s73
    %s76 = sphi 0, %s75
    %s90 = sphi 0, %s76
    %s94 = sphi 0, %s94
    %s96 = sphi 0, %s94
    %s97 = sphi 0, %s96
    %s111 = sphi 0, %s97
    %s115 = sphi 0, %s115
    %s117 = sphi 0, %s115
    %s118 = sphi 0, %s117
    %s132 = sphi 0, %s118
    %s136 = sphi 0, %s136
    %s138 = sphi 0, %s136
    %s139 = sphi 0, %s138
    %s153 = sphi 0, %s139
    %s157 = sphi 0, %s157
    %s159 = sphi 0, %s157
    %s160 = sphi 0, %s159
    %s174 = sphi 0, %s160
    %s178 = sphi 0, %s178
    %s180 = sphi 0, %s178
    %s181 = sphi 0, %s180
    %s195 = sphi 0, %s181
    %s199 = sphi 0, %s199
    %s201 = sphi 0, %s199
    %s202 = sphi 0, %s201
    %s216 = sphi 0, %s202
    %s220 = sphi 0, %s220
    %s222 = sphi 0, %s220
    %s223 = sphi 0, %s222
    %s237 = sphi 0, %s223
    %s241 = sphi 0, %s241
    %s243 = sphi 0, %s241
    %s244 = sphi 0, %s243
    %s258 = sphi 0, %s244
    %s262 = sphi 0, %s262
    %s264 = sphi 0, %s262
    %s265 = sphi 0, %s264
    %s279 = sphi 0, %s265
    %s285 = sphi 0, %s287
    %s288 = sphi 0, %s285
    %s289 = sphi 0, %s288
    %s305 = sphi 0, %s289
  $region4: #{svfe_forward.6} parent=0 // loop_header_branch
    %21 = sbr.rel (%p19) target = $region8
  $region5: #{svfe_forward.6} parent=0 // loop_body
    %s23 = ssub.s32 %s18, 1
    %s24 = ssub.s32 %s18, 2
    %s25 = sadd.s32 %s18, 1
    %s26 = ssub.s32 %s18, %s25
    %p27 = scmp.eq.s32.totalorder %s26, 0
    %s29 = sadd.s32 %s28, 1
    %s30 = scalar_select %p27, %s28, %s29
    %p33 = pneg %p27
    %p34 = scmp.eq.s32.totalorder %s18, 3
    %p35 = por %p33, %p34
    %p36 = scmp.ne.s32.totalorder %s28, %s31
    %p37 = scmp.eq.s32.totalorder %s18, 0
    %p38 = por %p36, %p37
    %p39 = scmp.ne.s32.totalorder %s28, %s31
    %p40 = scmp.eq.s32.totalorder %s23, 3
    %p41 = por %p39, %p40
    %p42 = scmp.ne.s32.totalorder %s31, %s32
    %p43 = scmp.eq.s32.totalorder %s23, 0
    %p44 = por %p42, %p43
    %p45 = scmp.ne.s32.totalorder %s31, %s32
    %p46 = scmp.eq.s32.totalorder %s24, 3
    %p47 = por %p45, %p46
    %p49 = scmp.ne.s32.totalorder %s32, %s48
    %p50 = scmp.eq.s32.totalorder %s24, 0
    %p51 = por %p49, %p50
    %s53 = sadd.s32 %s52, 1
    %p56 = scmp.eq.s32.totalorder %s18, 3
    %p57 = scmp.ne.s32.totalorder %s52, %s54
    %p58 = scmp.eq.s32.totalorder %s18, 0
    %p59 = por %p57, %p58
    %p60 = scmp.ne.s32.totalorder %s52, %s54
    %p61 = scmp.eq.s32.totalorder %s23, 3
    %p62 = por %p60, %p61
    %p63 = scmp.ne.s32.totalorder %s54, %s55
    %p64 = scmp.eq.s32.totalorder %s23, 0
    %p65 = por %p63, %p64
    %p66 = scmp.ne.s32.totalorder %s54, %s55
    %p67 = scmp.eq.s32.totalorder %s24, 3
    %p68 = por %p66, %p67
    %p70 = scmp.ne.s32.totalorder %s55, %s69
    %p71 = scmp.eq.s32.totalorder %s24, 0
    %p72 = por %p70, %p71
    %s74 = sadd.s32 %s73, 1
    %p77 = scmp.eq.s32.totalorder %s18, 3
    %p78 = scmp.ne.s32.totalorder %s73, %s75
    %p79 = scmp.eq.s32.totalorder %s18, 0
    %p80 = por %p78, %p79
    %p81 = scmp.ne.s32.totalorder %s73, %s75
    %p82 = scmp.eq.s32.totalorder %s23, 3
    %p83 = por %p81, %p82
    %p84 = scmp.ne.s32.totalorder %s75, %s76
    %p85 = scmp.eq.s32.totalorder %s23, 0
    %p86 = por %p84, %p85
    %p87 = scmp.ne.s32.totalorder %s75, %s76
    %p88 = scmp.eq.s32.totalorder %s24, 3
    %p89 = por %p87, %p88
    %p91 = scmp.ne.s32.totalorder %s76, %s90
    %p92 = scmp.eq.s32.totalorder %s24, 0
    %p93 = por %p91, %p92
    %s95 = sadd.s32 %s94, 1
    %p98 = scmp.eq.s32.totalorder %s18, 3
    %p99 = scmp.ne.s32.totalorder %s94, %s96
    %p100 = scmp.eq.s32.totalorder %s18, 0
    %p101 = por %p99, %p100
    %p102 = scmp.ne.s32.totalorder %s94, %s96
    %p103 = scmp.eq.s32.totalorder %s23, 3
    %p104 = por %p102, %p103
    %p105 = scmp.ne.s32.totalorder %s96, %s97
    %p106 = scmp.eq.s32.totalorder %s23, 0
    %p107 = por %p105, %p106
    %p108 = scmp.ne.s32.totalorder %s96, %s97
    %p109 = scmp.eq.s32.totalorder %s24, 3
    %p110 = por %p108, %p109
    %p112 = scmp.ne.s32.totalorder %s97, %s111
    %p113 = scmp.eq.s32.totalorder %s24, 0
    %p114 = por %p112, %p113
    %s116 = sadd.s32 %s115, 1
    %p119 = scmp.eq.s32.totalorder %s18, 3
    %p120 = scmp.ne.s32.totalorder %s115, %s117
    %p121 = scmp.eq.s32.totalorder %s18, 0
    %p122 = por %p120, %p121
    %p123 = scmp.ne.s32.totalorder %s115, %s117
    %p124 = scmp.eq.s32.totalorder %s23, 3
    %p125 = por %p123, %p124
    %p126 = scmp.ne.s32.totalorder %s117, %s118
    %p127 = scmp.eq.s32.totalorder %s23, 0
    %p128 = por %p126, %p127
    %p129 = scmp.ne.s32.totalorder %s117, %s118
    %p130 = scmp.eq.s32.totalorder %s24, 3
    %p131 = por %p129, %p130
    %p133 = scmp.ne.s32.totalorder %s118, %s132
    %p134 = scmp.eq.s32.totalorder %s24, 0
    %p135 = por %p133, %p134
    %s137 = sadd.s32 %s136, 1
    %p140 = scmp.eq.s32.totalorder %s18, 3
    %p141 = scmp.ne.s32.totalorder %s136, %s138
    %p142 = scmp.eq.s32.totalorder %s18, 0
    %p143 = por %p141, %p142
    %p144 = scmp.ne.s32.totalorder %s136, %s138
    %p145 = scmp.eq.s32.totalorder %s23, 3
    %p146 = por %p144, %p145
    %p147 = scmp.ne.s32.totalorder %s138, %s139
    %p148 = scmp.eq.s32.totalorder %s23, 0
    %p149 = por %p147, %p148
    %p150 = scmp.ne.s32.totalorder %s138, %s139
    %p151 = scmp.eq.s32.totalorder %s24, 3
    %p152 = por %p150, %p151
    %p154 = scmp.ne.s32.totalorder %s139, %s153
    %p155 = scmp.eq.s32.totalorder %s24, 0
    %p156 = por %p154, %p155
    %s158 = sadd.s32 %s157, 1
    %p161 = scmp.eq.s32.totalorder %s18, 3
    %p162 = scmp.ne.s32.totalorder %s157, %s159
    %p163 = scmp.eq.s32.totalorder %s18, 0
    %p164 = por %p162, %p163
    %p165 = scmp.ne.s32.totalorder %s157, %s159
    %p166 = scmp.eq.s32.totalorder %s23, 3
    %p167 = por %p165, %p166
    %p168 = scmp.ne.s32.totalorder %s159, %s160
    %p169 = scmp.eq.s32.totalorder %s23, 0
    %p170 = por %p168, %p169
    %p171 = scmp.ne.s32.totalorder %s159, %s160
    %p172 = scmp.eq.s32.totalorder %s24, 3
    %p173 = por %p171, %p172
    %p175 = scmp.ne.s32.totalorder %s160, %s174
    %p176 = scmp.eq.s32.totalorder %s24, 0
    %p177 = por %p175, %p176
    %s179 = sadd.s32 %s178, 1
    %p182 = scmp.eq.s32.totalorder %s18, 3
    %p183 = scmp.ne.s32.totalorder %s178, %s180
    %p184 = scmp.eq.s32.totalorder %s18, 0
    %p185 = por %p183, %p184
    %p186 = scmp.ne.s32.totalorder %s178, %s180
    %p187 = scmp.eq.s32.totalorder %s23, 3
    %p188 = por %p186, %p187
    %p189 = scmp.ne.s32.totalorder %s180, %s181
    %p190 = scmp.eq.s32.totalorder %s23, 0
    %p191 = por %p189, %p190
    %p192 = scmp.ne.s32.totalorder %s180, %s181
    %p193 = scmp.eq.s32.totalorder %s24, 3
    %p194 = por %p192, %p193
    %p196 = scmp.ne.s32.totalorder %s181, %s195
    %p197 = scmp.eq.s32.totalorder %s24, 0
    %p198 = por %p196, %p197
    %s200 = sadd.s32 %s199, 1
    %p203 = scmp.eq.s32.totalorder %s18, 3
    %p204 = scmp.ne.s32.totalorder %s199, %s201
    %p205 = scmp.eq.s32.totalorder %s18, 0
    %p206 = por %p204, %p205
    %p207 = scmp.ne.s32.totalorder %s199, %s201
    %p208 = scmp.eq.s32.totalorder %s23, 3
    %p209 = por %p207, %p208
    %p210 = scmp.ne.s32.totalorder %s201, %s202
    %p211 = scmp.eq.s32.totalorder %s23, 0
    %p212 = por %p210, %p211
    %p213 = scmp.ne.s32.totalorder %s201, %s202
    %p214 = scmp.eq.s32.totalorder %s24, 3
    %p215 = por %p213, %p214
    %p217 = scmp.ne.s32.totalorder %s202, %s216
    %p218 = scmp.eq.s32.totalorder %s24, 0
    %p219 = por %p217, %p218
    %s221 = sadd.s32 %s220, 1
    %p224 = scmp.eq.s32.totalorder %s18, 3
    %p225 = scmp.ne.s32.totalorder %s220, %s222
    %p226 = scmp.eq.s32.totalorder %s18, 0
    %p227 = por %p225, %p226
    %p228 = scmp.ne.s32.totalorder %s220, %s222
    %p229 = scmp.eq.s32.totalorder %s23, 3
    %p230 = por %p228, %p229
    %p231 = scmp.ne.s32.totalorder %s222, %s223
    %p232 = scmp.eq.s32.totalorder %s23, 0
    %p233 = por %p231, %p232
    %p234 = scmp.ne.s32.totalorder %s222, %s223
    %p235 = scmp.eq.s32.totalorder %s24, 3
    %p236 = por %p234, %p235
    %p238 = scmp.ne.s32.totalorder %s223, %s237
    %p239 = scmp.eq.s32.totalorder %s24, 0
    %p240 = por %p238, %p239
    %s242 = sadd.s32 %s241, 1
    %p245 = scmp.eq.s32.totalorder %s18, 3
    %p246 = scmp.ne.s32.totalorder %s241, %s243
    %p247 = scmp.eq.s32.totalorder %s18, 0
    %p248 = por %p246, %p247
    %p249 = scmp.ne.s32.totalorder %s241, %s243
    %p250 = scmp.eq.s32.totalorder %s23, 3
    %p251 = por %p249, %p250
    %p252 = scmp.ne.s32.totalorder %s243, %s244
    %p253 = scmp.eq.s32.totalorder %s23, 0
    %p254 = por %p252, %p253
    %p255 = scmp.ne.s32.totalorder %s243, %s244
    %p256 = scmp.eq.s32.totalorder %s24, 3
    %p257 = por %p255, %p256
    %p259 = scmp.ne.s32.totalorder %s244, %s258
    %p260 = scmp.eq.s32.totalorder %s24, 0
    %p261 = por %p259, %p260
    %s263 = sadd.s32 %s262, 1
    %p266 = scmp.eq.s32.totalorder %s18, 3
    %p267 = scmp.ne.s32.totalorder %s262, %s264
    %p268 = scmp.eq.s32.totalorder %s18, 0
    %p269 = por %p267, %p268
    %p270 = scmp.ne.s32.totalorder %s262, %s264
    %p271 = scmp.eq.s32.totalorder %s23, 3
    %p272 = por %p270, %p271
    %p273 = scmp.ne.s32.totalorder %s264, %s265
    %p274 = scmp.eq.s32.totalorder %s23, 0
    %p275 = por %p273, %p274
    %p276 = scmp.ne.s32.totalorder %s264, %s265
    %p277 = scmp.eq.s32.totalorder %s24, 3
    %p278 = por %p276, %p277
    %p280 = scmp.ne.s32.totalorder %s265, %s279
    %p281 = scmp.eq.s32.totalorder %s24, 0
    %p282 = por %p280, %p281
    %s283 = ssub.s32 %s18, %s25
    %p284 = scmp.eq.s32.totalorder %s283, 0
    %s286 = sadd.s32 %s285, 1
    %s287 = scalar_select %p284, %s285, %s286
    %p290 = pneg %p284
    %p291 = scmp.eq.s32.totalorder %s18, 3
    %p292 = por %p290, %p291
    %p293 = scmp.ne.s32.totalorder %s285, %s288
    %p294 = scmp.eq.s32.totalorder %s18, 0
    %p295 = por %p293, %p294
    %p296 = scmp.ne.s32.totalorder %s285, %s288
    %p297 = scmp.eq.s32.totalorder %s23, 3
    %p298 = por %p296, %p297
    %p299 = scmp.ne.s32.totalorder %s288, %s289
    %p300 = scmp.eq.s32.totalorder %s23, 0
    %p301 = por %p299, %p300
    %p302 = scmp.ne.s32.totalorder %s288, %s289
    %p303 = scmp.eq.s32.totalorder %s24, 3
    %p304 = por %p302, %p303
    %p306 = scmp.ne.s32.totalorder %s289, %s305
    %p307 = scmp.eq.s32.totalorder %s24, 0
    %p308 = por %p306, %p307
    %p309 = scmp.le.s32.totalorder 1, %s18
    %p310 = scmp.lt.s32.totalorder %s18, 5
    %p311 = pnand %p309, %p310
    %p312 = pneg %p311
    // Predicated region
    $region9: #{svfe_forward.6} parent=5 // pred_check
      _
    $region10: #{svfe_forward.6} parent=5 // pred_check_branch
      %314 = sbr.rel (%p311) target = $region12
    $region11: #{svfe_forward.6} parent=5 // pred_region
      %s315 = ssub.s32 %s18, 1
      // Predicated region
      $region13: #{svfe_forward.6} parent=11 // pred_check
        %p316 = pneg %p65
      $region14: #{svfe_forward.6} parent=11 // pred_check_branch
        %318 = sbr.rel (%p316) target = $region16
      $region15: #{svfe_forward.6} parent=11 // pred_region
        _
      $region16: #{svfe_forward.6} parent=11 // pred_fallthru
        _
      // Predicated region
      $region17: #{svfe_forward.6} parent=11 // pred_check
        %p319 = pneg %p86
      $region18: #{svfe_forward.6} parent=11 // pred_check_branch
        %321 = sbr.rel (%p319) target = $region20
      $region19: #{svfe_forward.6} parent=11 // pred_region
        _
      $region20: #{svfe_forward.6} parent=11 // pred_fallthru
        _
      // Predicated region
      $region21: #{svfe_forward.6} parent=11 // pred_check
        %p322 = pneg %p107
      $region22: #{svfe_forward.6} parent=11 // pred_check_branch
        %324 = sbr.rel (%p322) target = $region24
      $region23: #{svfe_forward.6} parent=11 // pred_region
        _
      $region24: #{svfe_forward.6} parent=11 // pred_fallthru
        _
      // Predicated region
      $region25: #{svfe_forward.6} parent=11 // pred_check
        %p325 = pneg %p128
      $region26: #{svfe_forward.6} parent=11 // pred_check_branch
        %327 = sbr.rel (%p325) target = $region28
      $region27: #{svfe_forward.6} parent=11 // pred_region
        _
      $region28: #{svfe_forward.6} parent=11 // pred_fallthru
        _
      // Predicated region
      $region29: #{svfe_forward.6} parent=11 // pred_check
        %p328 = pneg %p149
      $region30: #{svfe_forward.6} parent=11 // pred_check_branch
        %330 = sbr.rel (%p328) target = $region32
      $region31: #{svfe_forward.6} parent=11 // pred_region
        _
      $region32: #{svfe_forward.6} parent=11 // pred_fallthru
        _
      // Predicated region
      $region33: #{svfe_forward.6} parent=11 // pred_check
        %p331 = pneg %p170
      $region34: #{svfe_forward.6} parent=11 // pred_check_branch
        %333 = sbr.rel (%p331) target = $region36
      $region35: #{svfe_forward.6} parent=11 // pred_region
        _
      $region36: #{svfe_forward.6} parent=11 // pred_fallthru
        _
      // Predicated region
      $region37: #{svfe_forward.6} parent=11 // pred_check
        %p334 = pneg %p191
      $region38: #{svfe_forward.6} parent=11 // pred_check_branch
        %336 = sbr.rel (%p334) target = $region40
      $region39: #{svfe_forward.6} parent=11 // pred_region
        _
      $region40: #{svfe_forward.6} parent=11 // pred_fallthru
        _
      // Predicated region
      $region41: #{svfe_forward.6} parent=11 // pred_check
        %p337 = pneg %p212
      $region42: #{svfe_forward.6} parent=11 // pred_check_branch
        %339 = sbr.rel (%p337) target = $region44
      $region43: #{svfe_forward.6} parent=11 // pred_region
        _
      $region44: #{svfe_forward.6} parent=11 // pred_fallthru
        _
      // Predicated region
      $region45: #{svfe_forward.6} parent=11 // pred_check
        %p340 = pneg %p233
      $region46: #{svfe_forward.6} parent=11 // pred_check_branch
        %342 = sbr.rel (%p340) target = $region48
      $region47: #{svfe_forward.6} parent=11 // pred_region
        _
      $region48: #{svfe_forward.6} parent=11 // pred_fallthru
        _
      // Predicated region
      $region49: #{svfe_forward.6} parent=11 // pred_check
        %p343 = pneg %p254
      $region50: #{svfe_forward.6} parent=11 // pred_check_branch
        %345 = sbr.rel (%p343) target = $region52
      $region51: #{svfe_forward.6} parent=11 // pred_region
        _
      $region52: #{svfe_forward.6} parent=11 // pred_fallthru
        _
      // Predicated region
      $region53: #{svfe_forward.6} parent=11 // pred_check
        %p346 = pneg %p275
      $region54: #{svfe_forward.6} parent=11 // pred_check_branch
        %348 = sbr.rel (%p346) target = $region56
      $region55: #{svfe_forward.6} parent=11 // pred_region
        _
      $region56: #{svfe_forward.6} parent=11 // pred_fallthru
        _
    $region12: #{svfe_forward.6} parent=5 // pred_fallthru
      _
    %p349 = scmp.lt.s32.totalorder %s18, 4
    // Predicated region
    $region57: #{svfe_forward.6} parent=5 // pred_check
      %p350 = pneg %p349
    $region58: #{svfe_forward.6} parent=5 // pred_check_branch
      %352 = sbr.rel (%p350) target = $region60
    $region59: #{svfe_forward.6} parent=5 // pred_region
      // Predicated region
      $region61: #{svfe_forward.6} parent=59 // pred_check
        %p353 = pneg %p38
      $region62: #{svfe_forward.6} parent=59 // pred_check_branch
        %355 = sbr.rel (%p353) target = $region64
      $region63: #{svfe_forward.6} parent=59 // pred_region
        %s356 = smul.u32 2, %s18
        %p357 = scmp.lt.s32.totalorder %s356, 7
        %s358 = scalar_select %p357, %s356, 7
        %s359 = smul.addr %s358, 8
        %s360 = scalar_lea.vmem %s0, %s359
        %s361 = smul.u32 2, %s18
      $region64: #{svfe_forward.6} parent=59 // pred_fallthru
        _
    $region60: #{svfe_forward.6} parent=5 // pred_fallthru
      _
    %p362 = scmp.le.s32.totalorder 1, %s18
    %p363 = scmp.lt.s32.totalorder %s18, 5
    %p364 = pnand %p362, %p363
    %p365 = pneg %p364
    // Predicated region
    $region65: #{svfe_forward.6} parent=5 // pred_check
      _
    $region66: #{svfe_forward.6} parent=5 // pred_check_branch
      %367 = sbr.rel (%p364) target = $region68
    $region67: #{svfe_forward.6} parent=5 // pred_region
      %s368 = ssub.s32 %s18, 1
      %s369 = smul.u32 2, %s23
      %p370 = scmp.lt.s32.totalorder %s369, 7
      %s371 = scalar_select %p370, %s369, 7
      %s372 = smul.addr %s371, 8
      %s373 = scalar_lea.vmem %s0, %s372
      %p374 = pneg %p44
      %p375 = pneg %p41
      %p376 = pneg %p65
      %p377 = pneg %p62
      %p378 = pneg %p86
      %p379 = pneg %p83
      %p380 = pneg %p107
      %p381 = pneg %p104
      %p382 = pneg %p128
      %p383 = pneg %p125
      %p384 = pneg %p149
      %p385 = pneg %p146
      %p386 = pneg %p170
      %p387 = pneg %p167
      %p388 = pneg %p191
      %p389 = pneg %p188
      %p390 = pneg %p212
      %p391 = pneg %p209
      %p392 = pneg %p233
      %p393 = pneg %p230
      %p394 = pneg %p254
      %p395 = pneg %p251
      %p396 = pneg %p275
      %p397 = pneg %p272
      %p398 = pneg %p301
      %p399 = pneg %p298
      %p400 = scmp.lt.s32.totalorder %s23, 3
      %s401 = scalar_select %p400, %s23, 3
      %s402 = smul.addr %s401, 2
      %s403 = scalar_lea.vmem %s12, %s402
      %s404 = smul.u32 2, %s23
      %p405 = scmp.lt.s32.totalorder %s404, 7
      %s406 = scalar_select %p405, %s404, 7
      %s407 = smul.addr %s406, 8
      %s408 = scalar_lea.vmem %s0, %s407
      %s409 = smul.u32 2, %s23
      %p410 = scmp.lt.s32.totalorder %s23, 3
      %s411 = scalar_select %p410, %s23, 3
      %s412 = smul.addr %s411, 2
      %s413 = scalar_lea.vmem %s12, %s412
      %v414 = vld [vmem:[%s408] sm:$0xff]
      %v415 = vld [vmem:[%s408 + $0x8] sm:$0xff]
      %v416 = vld [vmem:[%s1] sm:$0xff]
      %v417 = vld [vmem:[%s1 + $0x8] sm:$0xff]
      %v418 = vld [vmem:[%s1 + $0x10] sm:$0xff]
      %v419 = vld [vmem:[%s1 + $0x18] sm:$0xff]
      %v420 = vld [vmem:[%s1 + $0x20] sm:$0xff]
      %v421 = vld [vmem:[%s1 + $0x28] sm:$0xff]
      %v422 = vld [vmem:[%s1 + $0x30] sm:$0xff]
      %v423 = vld [vmem:[%s1 + $0x38] sm:$0xff]
      %vm424 = vcmask 523264
      %v426 = vsel %vm424, %v414, 0
      %v429 = vsel %vm424, %v415, 0
      %431 = vmatprep.subr.mxu0 0.0
      %432 = vmatpush1.msra.mxu0 0.0
      %433 = vmatprep.subr.mxu0 0.0
      %434 = vmatpush1.msra.mxu0 0.0
      %435 = vmatprep.subr.mxu0 0.0
      %436 = vmatpush1.msra.mxu0 0.0
      %437 = vmatprep.subr.mxu0 0.0
      %438 = vmatpush1.msra.mxu0 0.0
      %439 = vmatprep.subr.mxu0 0.0
      %440 = vmatpush1.msra.mxu0 0.0
      %441 = vmatprep.subr.mxu0 0.0
      %442 = vmatpush1.msra.mxu0 0.0
      %443 = vmatprep.subr.mxu0 0.0
      %444 = vmatpush1.msra.mxu0 0.0
      %445 = vmatprep.subr.mxu0 0.0
      %446 = vmatpush1.msra.mxu0 0.0
      %447 = vmatprep.subr.mxu0 0.0
      %448 = vmatpush1.msra.mxu0 %v423
      %449 = vmatprep.subr.mxu0 0.0
      %450 = vmatpush1.msra.mxu0 %v422
      %451 = vmatprep.subr.mxu0 0.0
      %452 = vmatpush1.msra.mxu0 %v421
      %453 = vmatprep.subr.mxu0 0.0
      %454 = vmatpush1.msra.mxu0 %v420
      %455 = vmatprep.subr.mxu0 0.0
      %456 = vmatpush1.msra.mxu0 %v419
      %457 = vmatprep.subr.mxu0 0.0
      %458 = vmatpush1.msra.mxu0 %v418
      %459 = vmatprep.subr.mxu0 0.0
      %460 = vmatpush1.msra.mxu0 %v417
      %461 = vmatprep.subr.mxu0 0.0
      %462 = vmatpush1.msra.mxu0 %v416
      %463 = vmatprep.subr.mxu0 0.0
      %464 = vmatpush2.msra.mxu0 0.0
      %465 = vmatprep.subr.mxu0 0.0
      %466 = vmatpush2.msra.mxu0 0.0
      %467 = vmatprep.subr.mxu0 0.0
      %468 = vmatpush2.msra.mxu0 0.0
      %469 = vmatprep.subr.mxu0 0.0
      %470 = vmatpush2.msra.mxu0 0.0
      %471 = vmatprep.subr.mxu0 0.0
      %472 = vmatpush2.msra.mxu0 0.0
      %473 = vmatprep.subr.mxu0 0.0
      %474 = vmatpush2.msra.mxu0 0.0
      %475 = vmatprep.subr.mxu0 0.0
      %476 = vmatpush2.msra.mxu0 0.0
      %477 = vmatprep.subr.mxu0 0.0
      %478 = vmatpush2.msra.mxu0 0.0
      %479 = vmatprep.subr.mxu0 0.0
      %480 = vmatpush2.msra.mxu0 0.0
      %481 = vmatprep.subr.mxu0 0.0
      %482 = vmatpush2.msra.mxu0 0.0
      %483 = vmatprep.subr.mxu0 0.0
      %484 = vmatpush2.msra.mxu0 0.0
      %485 = vmatprep.subr.mxu0 0.0
      %486 = vmatpush2.msra.mxu0 0.0
      %487 = vmatprep.subr.mxu0 0.0
      %488 = vmatpush2.msra.mxu0 0.0
      %489 = vmatprep.subr.mxu0 0.0
      %490 = vmatpush2.msra.mxu0 0.0
      %491 = vmatprep.subr.mxu0 0.0
      %492 = vmatpush2.msra.mxu0 0.0
      %493 = vmatprep.subr.mxu0 0.0
      %494 = vmatpush2.msra.mxu0 0.0
      %495 = vmatprep.mubr.f32.mxu0 0.0
      %496 = vmatmul.mubr.f32.gmra.mxu0 %v426
      %v497 = vpop.f32.mrf.mxu0
      %v498 = vadd.f32 0.0, %v497
      %v499 = vpop.f32.mrf.mxu0
      %500 = vmatprep.mubr.f32.mxu0 0.0
      %501 = vmatmul.mubr.f32.gmra.mxu0 %v429
      %v502 = vpop.f32.mrf.mxu0
      %v503 = vadd.f32 0.0, %v502
      %v504 = vpop.f32.mrf.mxu0
      %505 = vdwg.mxu0
      %v506 = vld [vmem:[%s2] sm:$0x1]
      %v508 = vlaneseq
      %v509 = vshrl.u32 %v508, 7
      %v510 = vsub.s32 0, %v509
      %v511 = vrot.slane %v506, %v510
      %v513 = vmul.f32 %v498, %v511
      %v514 = vmul.f32 %v503, %v511
      %v515 = vld [vmem:[%s3] sm:$0x1]
      %v517 = vlaneseq
      %v518 = vshrl.u32 %v517, 7
      %v519 = vsub.s32 0, %v518
      %v520 = vrot.slane %v515, %v519
      %v522 = vadd.f32 %v513, %v520
      %v523 = vadd.f32 %v514, %v520
      %v524 = vmax.f32 %v522, 0.0
      %v525 = vmax.f32 %v523, 0.0
      %526 = vrot.lane.b32.xlu0 %v524, 16
      %v527 = vpop.permute.xlu0 %526
      %528 = vrot.lane.b32.xlu0 %v525, 16
      %v529 = vpop.permute.xlu0 %528
      %v530 = vmax.f32 %v524, %v527
      %v531 = vmax.f32 %v525, %v529
      %532 = vrot.lane.b32.xlu0 %v530, 32
      %v533 = vpop.permute.xlu0 %532
      %534 = vrot.lane.b32.xlu0 %v531, 32
      %v535 = vpop.permute.xlu0 %534
      %v536 = vmax.f32 %v530, %v533
      %v537 = vmax.f32 %v531, %v535
      %538 = vrot.lane.b32.xlu0 %v536, 64
      %v539 = vpop.permute.xlu0 %538
      %540 = vrot.lane.b32.xlu0 %v537, 64
      %v541 = vpop.permute.xlu0 %540
      %v542 = vmax.f32 %v536, %v539
      %v543 = vmax.f32 %v537, %v541
      %v544 = vld [vmem:[%s4] sm:$0xff]
      %v545 = vld [vmem:[%s4 + $0x8] sm:$0xff]
      %v546 = vld [vmem:[%s4 + $0x10] sm:$0xff]
      %v547 = vld [vmem:[%s4 + $0x18] sm:$0xff]
      %v548 = vld [vmem:[%s4 + $0x20] sm:$0xff]
      %v549 = vld [vmem:[%s4 + $0x28] sm:$0xff]
      %v550 = vld [vmem:[%s4 + $0x30] sm:$0xff]
      %v551 = vld [vmem:[%s4 + $0x38] sm:$0xff]
      %v552 = vld [vmem:[%s4 + $0x40] sm:$0xff]
      %v553 = vld [vmem:[%s4 + $0x48] sm:$0xff]
      %v554 = vld [vmem:[%s4 + $0x50] sm:$0xff]
      %v555 = vld [vmem:[%s4 + $0x58] sm:$0xff]
      %v556 = vld [vmem:[%s4 + $0x60] sm:$0xff]
      %v557 = vld [vmem:[%s4 + $0x68] sm:$0xff]
      %v558 = vld [vmem:[%s4 + $0x70] sm:$0xff]
      %v559 = vld [vmem:[%s4 + $0x78] sm:$0xff]
      %v560 = vld [vmem:[%s4 + $0x80] sm:$0xff]
      %v561 = vld [vmem:[%s4 + $0x88] sm:$0xff]
      %v562 = vld [vmem:[%s4 + $0x90] sm:$0xff]
      %v563 = vld [vmem:[%s4 + $0x98] sm:$0xff]
      %v564 = vld [vmem:[%s4 + $0xa0] sm:$0xff]
      %v565 = vld [vmem:[%s4 + $0xa8] sm:$0xff]
      %v566 = vld [vmem:[%s4 + $0xb0] sm:$0xff]
      %v567 = vld [vmem:[%s4 + $0xb8] sm:$0xff]
      %v568 = vld [vmem:[%s4 + $0xc0] sm:$0xff]
      %v569 = vld [vmem:[%s4 + $0xc8] sm:$0xff]
      %v570 = vld [vmem:[%s4 + $0xd0] sm:$0xff]
      %v571 = vld [vmem:[%s4 + $0xd8] sm:$0xff]
      %v572 = vld [vmem:[%s4 + $0xe0] sm:$0xff]
      %v573 = vld [vmem:[%s4 + $0xe8] sm:$0xff]
      %v574 = vld [vmem:[%s4 + $0xf0] sm:$0xff]
      %v575 = vld [vmem:[%s4 + $0xf8] sm:$0xff]
      %v576 = vld [vmem:[%s4 + $0x100] sm:$0xff]
      %v577 = vld [vmem:[%s4 + $0x108] sm:$0xff]
      %v578 = vld [vmem:[%s4 + $0x110] sm:$0xff]
      %v579 = vld [vmem:[%s4 + $0x118] sm:$0xff]
      %v580 = vld [vmem:[%s4 + $0x120] sm:$0xff]
      %v581 = vld [vmem:[%s4 + $0x128] sm:$0xff]
      %v582 = vld [vmem:[%s4 + $0x130] sm:$0xff]
      %v583 = vld [vmem:[%s4 + $0x138] sm:$0xff]
      %v584 = vld [vmem:[%s4 + $0x140] sm:$0xff]
      %v585 = vld [vmem:[%s4 + $0x148] sm:$0xff]
      %v586 = vld [vmem:[%s4 + $0x150] sm:$0xff]
      %v587 = vld [vmem:[%s4 + $0x158] sm:$0xff]
      %v588 = vld [vmem:[%s4 + $0x160] sm:$0xff]
      %v589 = vld [vmem:[%s4 + $0x168] sm:$0xff]
      %v590 = vld [vmem:[%s4 + $0x170] sm:$0xff]
      %v591 = vld [vmem:[%s4 + $0x178] sm:$0xff]
      %v592 = vld [vmem:[%s4 + $0x180] sm:$0xff]
      %v593 = vld [vmem:[%s4 + $0x188] sm:$0xff]
      %v594 = vld [vmem:[%s4 + $0x190] sm:$0xff]
      %v595 = vld [vmem:[%s4 + $0x198] sm:$0xff]
      %v596 = vld [vmem:[%s4 + $0x1a0] sm:$0xff]
      %v597 = vld [vmem:[%s4 + $0x1a8] sm:$0xff]
      %v598 = vld [vmem:[%s4 + $0x1b0] sm:$0xff]
      %v599 = vld [vmem:[%s4 + $0x1b8] sm:$0xff]
      %v600 = vld [vmem:[%s4 + $0x1c0] sm:$0xff]
      %v601 = vld [vmem:[%s4 + $0x1c8] sm:$0xff]
      %v602 = vld [vmem:[%s4 + $0x1d0] sm:$0xff]
      %v603 = vld [vmem:[%s4 + $0x1d8] sm:$0xff]
      %v604 = vld [vmem:[%s4 + $0x1e0] sm:$0xff]
      %v605 = vld [vmem:[%s4 + $0x1e8] sm:$0xff]
      %v606 = vld [vmem:[%s4 + $0x1f0] sm:$0xff]
      %v607 = vld [vmem:[%s4 + $0x1f8] sm:$0xff]
      %v608 = vld [vmem:[%s5] sm:$0xff]
      %v609 = vld [vmem:[%s5 + $0x8] sm:$0xff]
      %v610 = vld [vmem:[%s5 + $0x10] sm:$0xff]
      %v611 = vld [vmem:[%s5 + $0x18] sm:$0xff]
      %v612 = vld [vmem:[%s5 + $0x20] sm:$0xff]
      %v613 = vld [vmem:[%s5 + $0x28] sm:$0xff]
      %v614 = vld [vmem:[%s5 + $0x30] sm:$0xff]
      %v615 = vld [vmem:[%s5 + $0x38] sm:$0xff]
      %vm616 = vcmask 130048
      %v618 = vsel %vm616, %v542, 0
      %v621 = vsel %vm616, %v543, 0
      %623 = vmatprep.subr.mxu0 0.0
      %624 = vmatpush1.msra.mxu0 0.0
      %625 = vmatprep.subr.mxu0 0.0
      %626 = vmatpush1.msra.mxu0 0.0
      %627 = vmatprep.subr.mxu0 0.0
      %628 = vmatpush1.msra.mxu0 0.0
      %629 = vmatprep.subr.mxu0 0.0
      %630 = vmatpush1.msra.mxu0 0.0
      %631 = vmatprep.subr.mxu0 0.0
      %632 = vmatpush1.msra.mxu0 0.0
      %633 = vmatprep.subr.mxu0 0.0
      %634 = vmatpush1.msra.mxu0 0.0
      %635 = vmatprep.subr.mxu0 0.0
      %636 = vmatpush1.msra.mxu0 0.0
      %637 = vmatprep.subr.mxu0 0.0
      %638 = vmatpush1.msra.mxu0 0.0
      %639 = vmatprep.subr.mxu0 0.0
      %640 = vmatpush1.msra.mxu0 0.0
      %641 = vmatprep.subr.mxu0 0.0
      %642 = vmatpush1.msra.mxu0 0.0
      %643 = vmatprep.subr.mxu0 0.0
      %644 = vmatpush1.msra.mxu0 0.0
      %645 = vmatprep.subr.mxu0 0.0
      %646 = vmatpush1.msra.mxu0 0.0
      %647 = vmatprep.subr.mxu0 0.0
      %648 = vmatpush1.msra.mxu0 0.0
      %649 = vmatprep.subr.mxu0 0.0
      %650 = vmatpush1.msra.mxu0 0.0
      %651 = vmatprep.subr.mxu0 %v613
      %652 = vmatpush1.msra.mxu0 %v612
      %653 = vmatprep.subr.mxu0 %v609
      %654 = vmatpush1.msra.mxu0 %v608
      %655 = vmatprep.subr.mxu0 0.0
      %656 = vmatpush2.msra.mxu0 0.0
      %657 = vmatprep.subr.mxu0 0.0
      %658 = vmatpush2.msra.mxu0 0.0
      %659 = vmatprep.subr.mxu0 0.0
      %660 = vmatpush2.msra.mxu0 0.0
      %661 = vmatprep.subr.mxu0 0.0
      %662 = vmatpush2.msra.mxu0 0.0
      %663 = vmatprep.subr.mxu0 0.0
      %664 = vmatpush2.msra.mxu0 0.0
      %665 = vmatprep.subr.mxu0 0.0
      %666 = vmatpush2.msra.mxu0 0.0
      %667 = vmatprep.subr.mxu0 0.0
      %668 = vmatpush2.msra.mxu0 0.0
      %669 = vmatprep.subr.mxu0 0.0
      %670 = vmatpush2.msra.mxu0 0.0
      %671 = vmatprep.subr.mxu0 0.0
      %672 = vmatpush2.msra.mxu0 0.0
      %673 = vmatprep.subr.mxu0 0.0
      %674 = vmatpush2.msra.mxu0 0.0
      %675 = vmatprep.subr.mxu0 0.0
      %676 = vmatpush2.msra.mxu0 0.0
      %677 = vmatprep.subr.mxu0 0.0
      %678 = vmatpush2.msra.mxu0 0.0
      %679 = vmatprep.subr.mxu0 0.0
      %680 = vmatpush2.msra.mxu0 0.0
      %681 = vmatprep.subr.mxu0 0.0
      %682 = vmatpush2.msra.mxu0 0.0
      %683 = vmatprep.subr.mxu0 0.0
      %684 = vmatpush2.msra.mxu0 0.0
      %685 = vmatprep.subr.mxu0 0.0
      %686 = vmatpush2.msra.mxu0 0.0
      %687 = vmatprep.mubr.f32.mxu0 0.0
      %688 = vmatmul.mubr.f32.gmra.mxu0 %v618
      %v689 = vpop.f32.mrf.mxu0
      %v690 = vadd.f32 0.0, %v689
      %v691 = vpop.f32.mrf.mxu0
      %v692 = vadd.f32 0.0, %v691
      %693 = vmatprep.mubr.f32.mxu0 0.0
      %694 = vmatmul.mubr.f32.gmra.mxu0 %v621
      %v695 = vpop.f32.mrf.mxu0
      %v696 = vadd.f32 0.0, %v695
      %v697 = vpop.f32.mrf.mxu0
      %v698 = vadd.f32 0.0, %v697
      %699 = vdwg.mxu0
      %700 = vmatprep.subr.mxu0 0.0
      %701 = vmatpush1.msra.mxu0 0.0
      %702 = vmatprep.subr.mxu0 0.0
      %703 = vmatpush1.msra.mxu0 0.0
      %704 = vmatprep.subr.mxu0 0.0
      %705 = vmatpush1.msra.mxu0 0.0
      %706 = vmatprep.subr.mxu0 0.0
      %707 = vmatpush1.msra.mxu0 0.0
      %708 = vmatprep.subr.mxu0 0.0
      %709 = vmatpush1.msra.mxu0 0.0
      %710 = vmatprep.subr.mxu0 0.0
      %711 = vmatpush1.msra.mxu0 0.0
      %712 = vmatprep.subr.mxu0 0.0
      %713 = vmatpush1.msra.mxu0 0.0
      %714 = vmatprep.subr.mxu0 0.0
      %715 = vmatpush1.msra.mxu0 0.0
      %716 = vmatprep.subr.mxu0 0.0
      %717 = vmatpush1.msra.mxu0 0.0
      %718 = vmatprep.subr.mxu0 0.0
      %719 = vmatpush1.msra.mxu0 0.0
      %720 = vmatprep.subr.mxu0 0.0
      %721 = vmatpush1.msra.mxu0 0.0
      %722 = vmatprep.subr.mxu0 0.0
      %723 = vmatpush1.msra.mxu0 0.0
      %724 = vmatprep.subr.mxu0 0.0
      %725 = vmatpush1.msra.mxu0 0.0
      %726 = vmatprep.subr.mxu0 0.0
      %727 = vmatpush1.msra.mxu0 0.0
      %728 = vmatprep.subr.mxu0 %v615
      %729 = vmatpush1.msra.mxu0 %v614
      %730 = vmatprep.subr.mxu0 %v611
      %731 = vmatpush1.msra.mxu0 %v610
      %732 = vmatprep.subr.mxu0 0.0
      %733 = vmatpush2.msra.mxu0 0.0
      %734 = vmatprep.subr.mxu0 0.0
      %735 = vmatpush2.msra.mxu0 0.0
      %736 = vmatprep.subr.mxu0 0.0
      %737 = vmatpush2.msra.mxu0 0.0
      %738 = vmatprep.subr.mxu0 0.0
      %739 = vmatpush2.msra.mxu0 0.0
      %740 = vmatprep.subr.mxu0 0.0
      %741 = vmatpush2.msra.mxu0 0.0
      %742 = vmatprep.subr.mxu0 0.0
      %743 = vmatpush2.msra.mxu0 0.0
      %744 = vmatprep.subr.mxu0 0.0
      %745 = vmatpush2.msra.mxu0 0.0
      %746 = vmatprep.subr.mxu0 0.0
      %747 = vmatpush2.msra.mxu0 0.0
      %748 = vmatprep.subr.mxu0 0.0
      %749 = vmatpush2.msra.mxu0 0.0
      %750 = vmatprep.subr.mxu0 0.0
      %751 = vmatpush2.msra.mxu0 0.0
      %752 = vmatprep.subr.mxu0 0.0
      %753 = vmatpush2.msra.mxu0 0.0
      %754 = vmatprep.subr.mxu0 0.0
      %755 = vmatpush2.msra.mxu0 0.0
      %756 = vmatprep.subr.mxu0 0.0
      %757 = vmatpush2.msra.mxu0 0.0
      %758 = vmatprep.subr.mxu0 0.0
      %759 = vmatpush2.msra.mxu0 0.0
      %760 = vmatprep.subr.mxu0 0.0
      %761 = vmatpush2.msra.mxu0 0.0
      %762 = vmatprep.subr.mxu0 0.0
      %763 = vmatpush2.msra.mxu0 0.0
      %764 = vmatprep.mubr.f32.mxu0 0.0
      %765 = vmatmul.mubr.f32.gmra.mxu0 %v618
      %v766 = vpop.f32.mrf.mxu0
      %v767 = vadd.f32 0.0, %v766
      %v768 = vpop.f32.mrf.mxu0
      %v769 = vadd.f32 0.0, %v768
      %770 = vmatprep.mubr.f32.mxu0 0.0
      %771 = vmatmul.mubr.f32.gmra.mxu0 %v621
      %v772 = vpop.f32.mrf.mxu0
      %v773 = vadd.f32 0.0, %v772
      %v774 = vpop.f32.mrf.mxu0
      %v775 = vadd.f32 0.0, %v774
      %776 = vdwg.mxu0
      %777 = vmatprep.subr.mxu0 %v605
      %778 = vmatpush1.msra.mxu0 %v604
      %779 = vmatprep.subr.mxu0 %v601
      %780 = vmatpush1.msra.mxu0 %v600
      %781 = vmatprep.subr.mxu0 %v597
      %782 = vmatpush1.msra.mxu0 %v596
      %783 = vmatprep.subr.mxu0 %v593
      %784 = vmatpush1.msra.mxu0 %v592
      %785 = vmatprep.subr.mxu0 %v589
      %786 = vmatpush1.msra.mxu0 %v588
      %787 = vmatprep.subr.mxu0 %v585
      %788 = vmatpush1.msra.mxu0 %v584
      %789 = vmatprep.subr.mxu0 %v581
      %790 = vmatpush1.msra.mxu0 %v580
      %791 = vmatprep.subr.mxu0 %v577
      %792 = vmatpush1.msra.mxu0 %v576
      %793 = vmatprep.subr.mxu0 %v573
      %794 = vmatpush1.msra.mxu0 %v572
      %795 = vmatprep.subr.mxu0 %v569
      %796 = vmatpush1.msra.mxu0 %v568
      %797 = vmatprep.subr.mxu0 %v565
      %798 = vmatpush1.msra.mxu0 %v564
      %799 = vmatprep.subr.mxu0 %v561
      %800 = vmatpush1.msra.mxu0 %v560
      %801 = vmatprep.subr.mxu0 %v557
      %802 = vmatpush1.msra.mxu0 %v556
      %803 = vmatprep.subr.mxu0 %v553
      %804 = vmatpush1.msra.mxu0 %v552
      %805 = vmatprep.subr.mxu0 %v549
      %806 = vmatpush1.msra.mxu0 %v548
      %807 = vmatprep.subr.mxu0 %v545
      %808 = vmatpush1.msra.mxu0 %v544
      %809 = vmatprep.subr.mxu0 0.0
      %810 = vmatpush2.msra.mxu0 0.0
      %811 = vmatprep.subr.mxu0 0.0
      %812 = vmatpush2.msra.mxu0 0.0
      %813 = vmatprep.subr.mxu0 0.0
      %814 = vmatpush2.msra.mxu0 0.0
      %815 = vmatprep.subr.mxu0 0.0
      %816 = vmatpush2.msra.mxu0 0.0
      %817 = vmatprep.subr.mxu0 0.0
      %818 = vmatpush2.msra.mxu0 0.0
      %819 = vmatprep.subr.mxu0 0.0
      %820 = vmatpush2.msra.mxu0 0.0
      %821 = vmatprep.subr.mxu0 0.0
      %822 = vmatpush2.msra.mxu0 0.0
      %823 = vmatprep.subr.mxu0 0.0
      %824 = vmatpush2.msra.mxu0 0.0
      %825 = vmatprep.subr.mxu0 0.0
      %826 = vmatpush2.msra.mxu0 0.0
      %827 = vmatprep.subr.mxu0 0.0
      %828 = vmatpush2.msra.mxu0 0.0
      %829 = vmatprep.subr.mxu0 0.0
      %830 = vmatpush2.msra.mxu0 0.0
      %831 = vmatprep.subr.mxu0 0.0
      %832 = vmatpush2.msra.mxu0 0.0
      %833 = vmatprep.subr.mxu0 0.0
      %834 = vmatpush2.msra.mxu0 0.0
      %835 = vmatprep.subr.mxu0 0.0
      %836 = vmatpush2.msra.mxu0 0.0
      %837 = vmatprep.subr.mxu0 0.0
      %838 = vmatpush2.msra.mxu0 0.0
      %839 = vmatprep.subr.mxu0 0.0
      %840 = vmatpush2.msra.mxu0 0.0
      %841 = vmatprep.mubr.f32.mxu0 0.0
      %842 = vmatmul.mubr.f32.gmra.mxu0 %v524
      %v843 = vpop.f32.mrf.mxu0
      %v844 = vadd.f32 %v690, %v843
      %v845 = vpop.f32.mrf.mxu0
      %v846 = vadd.f32 %v692, %v845
      %847 = vmatprep.mubr.f32.mxu0 0.0
      %848 = vmatmul.mubr.f32.gmra.mxu0 %v525
      %v849 = vpop.f32.mrf.mxu0
      %v850 = vadd.f32 %v696, %v849
      %v851 = vpop.f32.mrf.mxu0
      %v852 = vadd.f32 %v698, %v851
      %853 = vdwg.mxu0
      %854 = vmatprep.subr.mxu0 %v607
      %855 = vmatpush1.msra.mxu0 %v606
      %856 = vmatprep.subr.mxu0 %v603
      %857 = vmatpush1.msra.mxu0 %v602
      %858 = vmatprep.subr.mxu0 %v599
      %859 = vmatpush1.msra.mxu0 %v598
      %860 = vmatprep.subr.mxu0 %v595
      %861 = vmatpush1.msra.mxu0 %v594
      %862 = vmatprep.subr.mxu0 %v591
      %863 = vmatpush1.msra.mxu0 %v590
      %864 = vmatprep.subr.mxu0 %v587
      %865 = vmatpush1.msra.mxu0 %v586
      %866 = vmatprep.subr.mxu0 %v583
      %867 = vmatpush1.msra.mxu0 %v582
      %868 = vmatprep.subr.mxu0 %v579
      %869 = vmatpush1.msra.mxu0 %v578
      %870 = vmatprep.subr.mxu0 %v575
      %871 = vmatpush1.msra.mxu0 %v574
      %872 = vmatprep.subr.mxu0 %v571
      %873 = vmatpush1.msra.mxu0 %v570
      %874 = vmatprep.subr.mxu0 %v567
      %875 = vmatpush1.msra.mxu0 %v566
      %876 = vmatprep.subr.mxu0 %v563
      %877 = vmatpush1.msra.mxu0 %v562
      %878 = vmatprep.subr.mxu0 %v559
      %879 = vmatpush1.msra.mxu0 %v558
      %880 = vmatprep.subr.mxu0 %v555
      %881 = vmatpush1.msra.mxu0 %v554
      %882 = vmatprep.subr.mxu0 %v551
      %883 = vmatpush1.msra.mxu0 %v550
      %884 = vmatprep.subr.mxu0 %v547
      %885 = vmatpush1.msra.mxu0 %v546
      %886 = vmatprep.subr.mxu0 0.0
      %887 = vmatpush2.msra.mxu0 0.0
      %888 = vmatprep.subr.mxu0 0.0
      %889 = vmatpush2.msra.mxu0 0.0
      %890 = vmatprep.subr.mxu0 0.0
      %891 = vmatpush2.msra.mxu0 0.0
      %892 = vmatprep.subr.mxu0 0.0
      %893 = vmatpush2.msra.mxu0 0.0
      %894 = vmatprep.subr.mxu0 0.0
      %895 = vmatpush2.msra.mxu0 0.0
      %896 = vmatprep.subr.mxu0 0.0
      %897 = vmatpush2.msra.mxu0 0.0
      %898 = vmatprep.subr.mxu0 0.0
      %899 = vmatpush2.msra.mxu0 0.0
      %900 = vmatprep.subr.mxu0 0.0
      %901 = vmatpush2.msra.mxu0 0.0
      %902 = vmatprep.subr.mxu0 0.0
      %903 = vmatpush2.msra.mxu0 0.0
      %904 = vmatprep.subr.mxu0 0.0
      %905 = vmatpush2.msra.mxu0 0.0
      %906 = vmatprep.subr.mxu0 0.0
      %907 = vmatpush2.msra.mxu0 0.0
      %908 = vmatprep.subr.mxu0 0.0
      %909 = vmatpush2.msra.mxu0 0.0
      %910 = vmatprep.subr.mxu0 0.0
      %911 = vmatpush2.msra.mxu0 0.0
      %912 = vmatprep.subr.mxu0 0.0
      %913 = vmatpush2.msra.mxu0 0.0
      %914 = vmatprep.subr.mxu0 0.0
      %915 = vmatpush2.msra.mxu0 0.0
      %916 = vmatprep.subr.mxu0 0.0
      %917 = vmatpush2.msra.mxu0 0.0
      %918 = vmatprep.mubr.f32.mxu0 0.0
      %919 = vmatmul.mubr.f32.gmra.mxu0 %v524
      %v920 = vpop.f32.mrf.mxu0
      %v921 = vadd.f32 %v767, %v920
      %v922 = vpop.f32.mrf.mxu0
      %v923 = vadd.f32 %v769, %v922
      %924 = vmatprep.mubr.f32.mxu0 0.0
      %925 = vmatmul.mubr.f32.gmra.mxu0 %v525
      %v926 = vpop.f32.mrf.mxu0
      %v927 = vadd.f32 %v773, %v926
      %v928 = vpop.f32.mrf.mxu0
      %v929 = vadd.f32 %v775, %v928
      %930 = vdwg.mxu0
      %v931 = vld [vmem:[%s6] sm:$0xff]
      %v932 = vld [vmem:[%s6 + $0x8] sm:$0xff]
      %v933 = vld [vmem:[%s6 + $0x10] sm:$0xff]
      %v934 = vld [vmem:[%s6 + $0x18] sm:$0xff]
      %v935 = vld [vmem:[%s6 + $0x20] sm:$0xff]
      %v936 = vld [vmem:[%s6 + $0x28] sm:$0xff]
      %v937 = vld [vmem:[%s6 + $0x30] sm:$0xff]
      %v938 = vld [vmem:[%s6 + $0x38] sm:$0xff]
      %v939 = vld [vmem:[%s6 + $0x40] sm:$0xff]
      %v940 = vld [vmem:[%s6 + $0x48] sm:$0xff]
      %v941 = vld [vmem:[%s6 + $0x50] sm:$0xff]
      %v942 = vld [vmem:[%s6 + $0x58] sm:$0xff]
      %v943 = vld [vmem:[%s6 + $0x60] sm:$0xff]
      %v944 = vld [vmem:[%s6 + $0x68] sm:$0xff]
      %v945 = vld [vmem:[%s6 + $0x70] sm:$0xff]
      %v946 = vld [vmem:[%s6 + $0x78] sm:$0xff]
      %v947 = vld [vmem:[%s6 + $0x80] sm:$0xff]
      %v948 = vld [vmem:[%s6 + $0x88] sm:$0xff]
      %v949 = vld [vmem:[%s6 + $0x90] sm:$0xff]
      %v950 = vld [vmem:[%s6 + $0x98] sm:$0xff]
      %v951 = vld [vmem:[%s6 + $0xa0] sm:$0xff]
      %v952 = vld [vmem:[%s6 + $0xa8] sm:$0xff]
      %v953 = vld [vmem:[%s6 + $0xb0] sm:$0xff]
      %v954 = vld [vmem:[%s6 + $0xb8] sm:$0xff]
      %v955 = vld [vmem:[%s6 + $0xc0] sm:$0xff]
      %v956 = vld [vmem:[%s6 + $0xc8] sm:$0xff]
      %v957 = vld [vmem:[%s6 + $0xd0] sm:$0xff]
      %v958 = vld [vmem:[%s6 + $0xd8] sm:$0xff]
      %v959 = vld [vmem:[%s6 + $0xe0] sm:$0xff]
      %v960 = vld [vmem:[%s6 + $0xe8] sm:$0xff]
      %v961 = vld [vmem:[%s6 + $0xf0] sm:$0xff]
      %v962 = vld [vmem:[%s6 + $0xf8] sm:$0xff]
      %963 = vmatprep.subr.mxu0 0.0
      %964 = vmatpush1.msra.mxu0 0.0
      %965 = vmatprep.subr.mxu0 0.0
      %966 = vmatpush1.msra.mxu0 0.0
      %967 = vmatprep.subr.mxu0 0.0
      %968 = vmatpush1.msra.mxu0 0.0
      %969 = vmatprep.subr.mxu0 0.0
      %970 = vmatpush1.msra.mxu0 0.0
      %971 = vmatprep.subr.mxu0 0.0
      %972 = vmatpush1.msra.mxu0 0.0
      %973 = vmatprep.subr.mxu0 0.0
      %974 = vmatpush1.msra.mxu0 0.0
      %975 = vmatprep.subr.mxu0 0.0
      %976 = vmatpush1.msra.mxu0 0.0
      %977 = vmatprep.subr.mxu0 0.0
      %978 = vmatpush1.msra.mxu0 0.0
      %979 = vmatprep.subr.mxu0 %v960
      %980 = vmatpush1.msra.mxu0 %v959
      %981 = vmatprep.subr.mxu0 %v956
      %982 = vmatpush1.msra.mxu0 %v955
      %983 = vmatprep.subr.mxu0 %v952
      %984 = vmatpush1.msra.mxu0 %v951
      %985 = vmatprep.subr.mxu0 %v948
      %986 = vmatpush1.msra.mxu0 %v947
      %987 = vmatprep.subr.mxu0 %v944
      %988 = vmatpush1.msra.mxu0 %v943
      %989 = vmatprep.subr.mxu0 %v940
      %990 = vmatpush1.msra.mxu0 %v939
      %991 = vmatprep.subr.mxu0 %v936
      %992 = vmatpush1.msra.mxu0 %v935
      %993 = vmatprep.subr.mxu0 %v932
      %994 = vmatpush1.msra.mxu0 %v931
      %995 = vmatprep.subr.mxu0 0.0
      %996 = vmatpush2.msra.mxu0 0.0
      %997 = vmatprep.subr.mxu0 0.0
      %998 = vmatpush2.msra.mxu0 0.0
      %999 = vmatprep.subr.mxu0 0.0
      %1000 = vmatpush2.msra.mxu0 0.0
      %1001 = vmatprep.subr.mxu0 0.0
      %1002 = vmatpush2.msra.mxu0 0.0
      %1003 = vmatprep.subr.mxu0 0.0
      %1004 = vmatpush2.msra.mxu0 0.0
      %1005 = vmatprep.subr.mxu0 0.0
      %1006 = vmatpush2.msra.mxu0 0.0
      %1007 = vmatprep.subr.mxu0 0.0
      %1008 = vmatpush2.msra.mxu0 0.0
      %1009 = vmatprep.subr.mxu0 0.0
      %1010 = vmatpush2.msra.mxu0 0.0
      %1011 = vmatprep.subr.mxu0 0.0
      %1012 = vmatpush2.msra.mxu0 0.0
      %1013 = vmatprep.subr.mxu0 0.0
      %1014 = vmatpush2.msra.mxu0 0.0
      %1015 = vmatprep.subr.mxu0 0.0
      %1016 = vmatpush2.msra.mxu0 0.0
      %1017 = vmatprep.subr.mxu0 0.0
      %1018 = vmatpush2.msra.mxu0 0.0
      %1019 = vmatprep.subr.mxu0 0.0
      %1020 = vmatpush2.msra.mxu0 0.0
      %1021 = vmatprep.subr.mxu0 0.0
      %1022 = vmatpush2.msra.mxu0 0.0
      %1023 = vmatprep.subr.mxu0 0.0
      %1024 = vmatpush2.msra.mxu0 0.0
      %1025 = vmatprep.subr.mxu0 0.0
      %1026 = vmatpush2.msra.mxu0 0.0
      %1027 = vmatprep.mubr.f32.mxu0 0.0
      %1028 = vmatmul.mubr.f32.gmra.mxu0 %v426
      %v1029 = vpop.f32.mrf.mxu0
      %v1030 = vadd.f32 0.0, %v1029
      %v1031 = vpop.f32.mrf.mxu0
      %v1032 = vadd.f32 0.0, %v1031
      %1033 = vmatprep.mubr.f32.mxu0 0.0
      %1034 = vmatmul.mubr.f32.gmra.mxu0 %v429
      %v1035 = vpop.f32.mrf.mxu0
      %v1036 = vadd.f32 0.0, %v1035
      %v1037 = vpop.f32.mrf.mxu0
      %v1038 = vadd.f32 0.0, %v1037
      %1039 = vdwg.mxu0
      %1040 = vmatprep.subr.mxu0 0.0
      %1041 = vmatpush1.msra.mxu0 0.0
      %1042 = vmatprep.subr.mxu0 0.0
      %1043 = vmatpush1.msra.mxu0 0.0
      %1044 = vmatprep.subr.mxu0 0.0
      %1045 = vmatpush1.msra.mxu0 0.0
      %1046 = vmatprep.subr.mxu0 0.0
      %1047 = vmatpush1.msra.mxu0 0.0
      %1048 = vmatprep.subr.mxu0 0.0
      %1049 = vmatpush1.msra.mxu0 0.0
      %1050 = vmatprep.subr.mxu0 0.0
      %1051 = vmatpush1.msra.mxu0 0.0
      %1052 = vmatprep.subr.mxu0 0.0
      %1053 = vmatpush1.msra.mxu0 0.0
      %1054 = vmatprep.subr.mxu0 0.0
      %1055 = vmatpush1.msra.mxu0 0.0
      %1056 = vmatprep.subr.mxu0 %v962
      %1057 = vmatpush1.msra.mxu0 %v961
      %1058 = vmatprep.subr.mxu0 %v958
      %1059 = vmatpush1.msra.mxu0 %v957
      %1060 = vmatprep.subr.mxu0 %v954
      %1061 = vmatpush1.msra.mxu0 %v953
      %1062 = vmatprep.subr.mxu0 %v950
      %1063 = vmatpush1.msra.mxu0 %v949
      %1064 = vmatprep.subr.mxu0 %v946
      %1065 = vmatpush1.msra.mxu0 %v945
      %1066 = vmatprep.subr.mxu0 %v942
      %1067 = vmatpush1.msra.mxu0 %v941
      %1068 = vmatprep.subr.mxu0 %v938
      %1069 = vmatpush1.msra.mxu0 %v937
      %1070 = vmatprep.subr.mxu0 %v934
      %1071 = vmatpush1.msra.mxu0 %v933
      %1072 = vmatprep.subr.mxu0 0.0
      %1073 = vmatpush2.msra.mxu0 0.0
      %1074 = vmatprep.subr.mxu0 0.0
      %1075 = vmatpush2.msra.mxu0 0.0
      %1076 = vmatprep.subr.mxu0 0.0
      %1077 = vmatpush2.msra.mxu0 0.0
      %1078 = vmatprep.subr.mxu0 0.0
      %1079 = vmatpush2.msra.mxu0 0.0
      %1080 = vmatprep.subr.mxu0 0.0
      %1081 = vmatpush2.msra.mxu0 0.0
      %1082 = vmatprep.subr.mxu0 0.0
      %1083 = vmatpush2.msra.mxu0 0.0
      %1084 = vmatprep.subr.mxu0 0.0
      %1085 = vmatpush2.msra.mxu0 0.0
      %1086 = vmatprep.subr.mxu0 0.0
      %1087 = vmatpush2.msra.mxu0 0.0
      %1088 = vmatprep.subr.mxu0 0.0
      %1089 = vmatpush2.msra.mxu0 0.0
      %1090 = vmatprep.subr.mxu0 0.0
      %1091 = vmatpush2.msra.mxu0 0.0
      %1092 = vmatprep.subr.mxu0 0.0
      %1093 = vmatpush2.msra.mxu0 0.0
      %1094 = vmatprep.subr.mxu0 0.0
      %1095 = vmatpush2.msra.mxu0 0.0
      %1096 = vmatprep.subr.mxu0 0.0
      %1097 = vmatpush2.msra.mxu0 0.0
      %1098 = vmatprep.subr.mxu0 0.0
      %1099 = vmatpush2.msra.mxu0 0.0
      %1100 = vmatprep.subr.mxu0 0.0
      %1101 = vmatpush2.msra.mxu0 0.0
      %1102 = vmatprep.subr.mxu0 0.0
      %1103 = vmatpush2.msra.mxu0 0.0
      %1104 = vmatprep.mubr.f32.mxu0 0.0
      %1105 = vmatmul.mubr.f32.gmra.mxu0 %v426
      %v1106 = vpop.f32.mrf.mxu0
      %v1107 = vadd.f32 0.0, %v1106
      %v1108 = vpop.f32.mrf.mxu0
      %v1109 = vadd.f32 0.0, %v1108
      %1110 = vmatprep.mubr.f32.mxu0 0.0
      %1111 = vmatmul.mubr.f32.gmra.mxu0 %v429
      %v1112 = vpop.f32.mrf.mxu0
      %v1113 = vadd.f32 0.0, %v1112
      %v1114 = vpop.f32.mrf.mxu0
      %v1115 = vadd.f32 0.0, %v1114
      %1116 = vdwg.mxu0
      %v1117 = vmul.f32 %v844, %v1030
      %v1118 = vmul.f32 %v846, %v1032
      %v1119 = vmul.f32 %v921, %v1107
      %v1120 = vmul.f32 %v923, %v1109
      %v1121 = vmul.f32 %v850, %v1036
      %v1122 = vmul.f32 %v852, %v1038
      %v1123 = vmul.f32 %v927, %v1113
      %v1124 = vmul.f32 %v929, %v1115
      %v1125 = vld [vmem:[%s7] sm:$0xf]
      %v1127 = vlaneseq
      %v1128 = vshrl.u32 %v1127, 7
      %v1129 = vsub.s32 0, %v1128
      %v1130 = vrot.slane %v1125, %v1129
      %v1131 = vlaneseq
      %v1132 = vshrl.u32 %v1131, 7
      %v1133 = vsub.s32 1, %v1132
      %v1134 = vrot.slane %v1125, %v1133
      %v1135 = vlaneseq
      %v1136 = vshrl.u32 %v1135, 7
      %v1137 = vsub.s32 2, %v1136
      %v1138 = vrot.slane %v1125, %v1137
      %v1139 = vlaneseq
      %v1140 = vshrl.u32 %v1139, 7
      %v1141 = vsub.s32 3, %v1140
      %v1142 = vrot.slane %v1125, %v1141
      %v1147 = vmul.f32 %v1117, %v1130
      %v1148 = vmul.f32 %v1118, %v1134
      %v1149 = vmul.f32 %v1119, %v1138
      %v1150 = vmul.f32 %v1120, %v1142
      %v1151 = vmul.f32 %v1121, %v1130
      %v1152 = vmul.f32 %v1122, %v1134
      %v1153 = vmul.f32 %v1123, %v1138
      %v1154 = vmul.f32 %v1124, %v1142
      %v1155 = vld [vmem:[%s8] sm:$0xf]
      %v1157 = vlaneseq
      %v1158 = vshrl.u32 %v1157, 7
      %v1159 = vsub.s32 0, %v1158
      %v1160 = vrot.slane %v1155, %v1159
      %v1161 = vlaneseq
      %v1162 = vshrl.u32 %v1161, 7
      %v1163 = vsub.s32 1, %v1162
      %v1164 = vrot.slane %v1155, %v1163
      %v1165 = vlaneseq
      %v1166 = vshrl.u32 %v1165, 7
      %v1167 = vsub.s32 2, %v1166
      %v1168 = vrot.slane %v1155, %v1167
      %v1169 = vlaneseq
      %v1170 = vshrl.u32 %v1169, 7
      %v1171 = vsub.s32 3, %v1170
      %v1172 = vrot.slane %v1155, %v1171
      %v1177 = vadd.f32 %v1147, %v1160
      %v1178 = vadd.f32 %v1148, %v1164
      %v1179 = vadd.f32 %v1149, %v1168
      %v1180 = vadd.f32 %v1150, %v1172
      %v1181 = vadd.f32 %v1151, %v1160
      %v1182 = vadd.f32 %v1152, %v1164
      %v1183 = vadd.f32 %v1153, %v1168
      %v1184 = vadd.f32 %v1154, %v1172
      %v1185 = vmax.f32 %v1177, 0.0
      %v1186 = vmax.f32 %v1178, 0.0
      %v1187 = vmax.f32 %v1179, 0.0
      %v1188 = vmax.f32 %v1180, 0.0
      %v1189 = vmax.f32 %v1181, 0.0
      %v1190 = vmax.f32 %v1182, 0.0
      %v1191 = vmax.f32 %v1183, 0.0
      %v1192 = vmax.f32 %v1184, 0.0
      %1193 = vrot.lane.b32.xlu0 %v1185, 64
      %v1194 = vpop.permute.xlu0 %1193
      %1195 = vrot.lane.b32.xlu0 %v1189, 64
      %v1196 = vpop.permute.xlu0 %1195
      %1197 = vrot.lane.b32.xlu0 %v1186, 64
      %v1198 = vpop.permute.xlu0 %1197
      %1199 = vrot.lane.b32.xlu0 %v1190, 64
      %v1200 = vpop.permute.xlu0 %1199
      %1201 = vrot.lane.b32.xlu0 %v1187, 64
      %v1202 = vpop.permute.xlu0 %1201
      %1203 = vrot.lane.b32.xlu0 %v1191, 64
      %v1204 = vpop.permute.xlu0 %1203
      %1205 = vrot.lane.b32.xlu0 %v1188, 64
      %v1206 = vpop.permute.xlu0 %1205
      %1207 = vrot.lane.b32.xlu0 %v1192, 64
      %v1208 = vpop.permute.xlu0 %1207
      %v1209 = vlaneseq
      %v1210 = vand.u32 %v1209, 127
      %vm1211 = vcmp.lt.s32.totalorder %v1210, 64
      %v1212 = vsel %vm1211, %v1202, %v1206
      %v1213 = vsel %vm1211, %v1204, %v1208
      %v1214 = vsel %vm1211, %v1198, %v1202
      %v1215 = vsel %vm1211, %v1200, %v1204
      %v1216 = vsel %vm1211, %v1194, %v1198
      %v1217 = vsel %vm1211, %v1196, %v1200
      %v1218 = vsel %vm1211, %v1206, %v1194
      %v1219 = vsel %vm1211, %v1208, %v1196
      %v1220 = vmax.f32 %v1185, %v1218
      %v1221 = vmax.f32 %v1186, %v1216
      %v1222 = vmax.f32 %v1187, %v1214
      %v1223 = vmax.f32 %v1188, %v1212
      %v1224 = vmax.f32 %v1189, %v1219
      %v1225 = vmax.f32 %v1190, %v1217
      %v1226 = vmax.f32 %v1191, %v1215
      %v1227 = vmax.f32 %v1192, %v1213
      %v1228 = vmax.f32 %v1220, %v1223
      %v1229 = vmax.f32 %v1222, %v1221
      %v1230 = vmax.f32 %v1224, %v1227
      %v1231 = vmax.f32 %v1226, %v1225
      %v1232 = vmax.f32 %v1228, %v1229
      %v1233 = vmax.f32 %v1230, %v1231
      %v1234 = vld [vmem:[%s9] sm:$0xff]
      %v1235 = vld [vmem:[%s9 + $0x8] sm:$0xff]
      %v1236 = vld [vmem:[%s9 + $0x10] sm:$0xff]
      %v1237 = vld [vmem:[%s9 + $0x18] sm:$0xff]
      %v1238 = vld [vmem:[%s9 + $0x20] sm:$0xff]
      %v1239 = vld [vmem:[%s9 + $0x28] sm:$0xff]
      %v1240 = vld [vmem:[%s9 + $0x30] sm:$0xff]
      %v1241 = vld [vmem:[%s9 + $0x38] sm:$0xff]
      %v1242 = vld [vmem:[%s10] sm:$0xff]
      %v1243 = vld [vmem:[%s10 + $0x8] sm:$0xff]
      %v1244 = vld [vmem:[%s10 + $0x10] sm:$0xff]
      %v1245 = vld [vmem:[%s10 + $0x18] sm:$0xff]
      %v1246 = vld [vmem:[%s10 + $0x20] sm:$0xff]
      %v1247 = vld [vmem:[%s10 + $0x28] sm:$0xff]
      %v1248 = vld [vmem:[%s10 + $0x30] sm:$0xff]
      %v1249 = vld [vmem:[%s10 + $0x38] sm:$0xff]
      %v1251 = vsel %vm424, %v1232, 0
      %v1254 = vsel %vm424, %v1233, 0
      %1256 = vmatprep.subr.mxu0 0.0
      %1257 = vmatpush1.msra.mxu0 0.0
      %1258 = vmatprep.subr.mxu0 0.0
      %1259 = vmatpush1.msra.mxu0 0.0
      %1260 = vmatprep.subr.mxu0 0.0
      %1261 = vmatpush1.msra.mxu0 0.0
      %1262 = vmatprep.subr.mxu0 0.0
      %1263 = vmatpush1.msra.mxu0 0.0
      %1264 = vmatprep.subr.mxu0 0.0
      %1265 = vmatpush1.msra.mxu0 0.0
      %1266 = vmatprep.subr.mxu0 0.0
      %1267 = vmatpush1.msra.mxu0 0.0
      %1268 = vmatprep.subr.mxu0 0.0
      %1269 = vmatpush1.msra.mxu0 0.0
      %1270 = vmatprep.subr.mxu0 0.0
      %1271 = vmatpush1.msra.mxu0 0.0
      %1272 = vmatprep.subr.mxu0 0.0
      %1273 = vmatpush1.msra.mxu0 %v1249
      %1274 = vmatprep.subr.mxu0 0.0
      %1275 = vmatpush1.msra.mxu0 %v1248
      %1276 = vmatprep.subr.mxu0 0.0
      %1277 = vmatpush1.msra.mxu0 %v1247
      %1278 = vmatprep.subr.mxu0 0.0
      %1279 = vmatpush1.msra.mxu0 %v1246
      %1280 = vmatprep.subr.mxu0 0.0
      %1281 = vmatpush1.msra.mxu0 %v1245
      %1282 = vmatprep.subr.mxu0 0.0
      %1283 = vmatpush1.msra.mxu0 %v1244
      %1284 = vmatprep.subr.mxu0 0.0
      %1285 = vmatpush1.msra.mxu0 %v1243
      %1286 = vmatprep.subr.mxu0 0.0
      %1287 = vmatpush1.msra.mxu0 %v1242
      %1288 = vmatprep.subr.mxu0 0.0
      %1289 = vmatpush2.msra.mxu0 0.0
      %1290 = vmatprep.subr.mxu0 0.0
      %1291 = vmatpush2.msra.mxu0 0.0
      %1292 = vmatprep.subr.mxu0 0.0
      %1293 = vmatpush2.msra.mxu0 0.0
      %1294 = vmatprep.subr.mxu0 0.0
      %1295 = vmatpush2.msra.mxu0 0.0
      %1296 = vmatprep.subr.mxu0 0.0
      %1297 = vmatpush2.msra.mxu0 0.0
      %1298 = vmatprep.subr.mxu0 0.0
      %1299 = vmatpush2.msra.mxu0 0.0
      %1300 = vmatprep.subr.mxu0 0.0
      %1301 = vmatpush2.msra.mxu0 0.0
      %1302 = vmatprep.subr.mxu0 0.0
      %1303 = vmatpush2.msra.mxu0 0.0
      %1304 = vmatprep.subr.mxu0 0.0
      %1305 = vmatpush2.msra.mxu0 0.0
      %1306 = vmatprep.subr.mxu0 0.0
      %1307 = vmatpush2.msra.mxu0 0.0
      %1308 = vmatprep.subr.mxu0 0.0
      %1309 = vmatpush2.msra.mxu0 0.0
      %1310 = vmatprep.subr.mxu0 0.0
      %1311 = vmatpush2.msra.mxu0 0.0
      %1312 = vmatprep.subr.mxu0 0.0
      %1313 = vmatpush2.msra.mxu0 0.0
      %1314 = vmatprep.subr.mxu0 0.0
      %1315 = vmatpush2.msra.mxu0 0.0
      %1316 = vmatprep.subr.mxu0 0.0
      %1317 = vmatpush2.msra.mxu0 0.0
      %1318 = vmatprep.subr.mxu0 0.0
      %1319 = vmatpush2.msra.mxu0 0.0
      %1320 = vmatprep.mubr.f32.mxu0 0.0
      %1321 = vmatmul.mubr.f32.gmra.mxu0 %v1251
      %v1322 = vpop.f32.mrf.mxu0
      %v1323 = vadd.f32 0.0, %v1322
      %v1324 = vpop.f32.mrf.mxu0
      %1325 = vmatprep.mubr.f32.mxu0 0.0
      %1326 = vmatmul.mubr.f32.gmra.mxu0 %v1254
      %v1327 = vpop.f32.mrf.mxu0
      %v1328 = vadd.f32 0.0, %v1327
      %v1329 = vpop.f32.mrf.mxu0
      %1330 = vdwg.mxu0
      %v1331 = vld [vmem:[%s11] sm:$0xff]
      %v1332 = vld [vmem:[%s11 + $0x8] sm:$0xff]
      %v1333 = vld [vmem:[%s11 + $0x10] sm:$0xff]
      %v1334 = vld [vmem:[%s11 + $0x18] sm:$0xff]
      %v1335 = vld [vmem:[%s11 + $0x20] sm:$0xff]
      %v1336 = vld [vmem:[%s11 + $0x28] sm:$0xff]
      %v1337 = vld [vmem:[%s11 + $0x30] sm:$0xff]
      %v1338 = vld [vmem:[%s11 + $0x38] sm:$0xff]
      %v1339 = vld [vmem:[%s11 + $0x40] sm:$0xff]
      %v1340 = vld [vmem:[%s11 + $0x48] sm:$0xff]
      %v1341 = vld [vmem:[%s11 + $0x50] sm:$0xff]
      %v1342 = vld [vmem:[%s11 + $0x58] sm:$0xff]
      %v1343 = vld [vmem:[%s11 + $0x60] sm:$0xff]
      %v1344 = vld [vmem:[%s11 + $0x68] sm:$0xff]
      %v1345 = vld [vmem:[%s11 + $0x70] sm:$0xff]
      %v1346 = vld [vmem:[%s11 + $0x78] sm:$0xff]
      %v1347 = vld [vmem:[%s11 + $0x80] sm:$0xff]
      %v1348 = vld [vmem:[%s11 + $0x88] sm:$0xff]
      %v1349 = vld [vmem:[%s11 + $0x90] sm:$0xff]
      %v1350 = vld [vmem:[%s11 + $0x98] sm:$0xff]
      %v1351 = vld [vmem:[%s11 + $0xa0] sm:$0xff]
      %v1352 = vld [vmem:[%s11 + $0xa8] sm:$0xff]
      %v1353 = vld [vmem:[%s11 + $0xb0] sm:$0xff]
      %v1354 = vld [vmem:[%s11 + $0xb8] sm:$0xff]
      %v1355 = vld [vmem:[%s11 + $0xc0] sm:$0xff]
      %v1356 = vld [vmem:[%s11 + $0xc8] sm:$0xff]
      %v1357 = vld [vmem:[%s11 + $0xd0] sm:$0xff]
      %v1358 = vld [vmem:[%s11 + $0xd8] sm:$0xff]
      %v1359 = vld [vmem:[%s11 + $0xe0] sm:$0xff]
      %v1360 = vld [vmem:[%s11 + $0xe8] sm:$0xff]
      %v1361 = vld [vmem:[%s11 + $0xf0] sm:$0xff]
      %v1362 = vld [vmem:[%s11 + $0xf8] sm:$0xff]
      %v1363 = vld [vmem:[%s11 + $0x100] sm:$0xff]
      %v1364 = vld [vmem:[%s11 + $0x108] sm:$0xff]
      %v1365 = vld [vmem:[%s11 + $0x110] sm:$0xff]
      %v1366 = vld [vmem:[%s11 + $0x118] sm:$0xff]
      %v1367 = vld [vmem:[%s11 + $0x120] sm:$0xff]
      %v1368 = vld [vmem:[%s11 + $0x128] sm:$0xff]
      %v1369 = vld [vmem:[%s11 + $0x130] sm:$0xff]
      %v1370 = vld [vmem:[%s11 + $0x138] sm:$0xff]
      %v1371 = vld [vmem:[%s11 + $0x140] sm:$0xff]
      %v1372 = vld [vmem:[%s11 + $0x148] sm:$0xff]
      %v1373 = vld [vmem:[%s11 + $0x150] sm:$0xff]
      %v1374 = vld [vmem:[%s11 + $0x158] sm:$0xff]
      %v1375 = vld [vmem:[%s11 + $0x160] sm:$0xff]
      %v1376 = vld [vmem:[%s11 + $0x168] sm:$0xff]
      %v1377 = vld [vmem:[%s11 + $0x170] sm:$0xff]
      %v1378 = vld [vmem:[%s11 + $0x178] sm:$0xff]
      %v1379 = vld [vmem:[%s11 + $0x180] sm:$0xff]
      %v1380 = vld [vmem:[%s11 + $0x188] sm:$0xff]
      %v1381 = vld [vmem:[%s11 + $0x190] sm:$0xff]
      %v1382 = vld [vmem:[%s11 + $0x198] sm:$0xff]
      %v1383 = vld [vmem:[%s11 + $0x1a0] sm:$0xff]
      %v1384 = vld [vmem:[%s11 + $0x1a8] sm:$0xff]
      %v1385 = vld [vmem:[%s11 + $0x1b0] sm:$0xff]
      %v1386 = vld [vmem:[%s11 + $0x1b8] sm:$0xff]
      %v1387 = vld [vmem:[%s11 + $0x1c0] sm:$0xff]
      %v1388 = vld [vmem:[%s11 + $0x1c8] sm:$0xff]
      %v1389 = vld [vmem:[%s11 + $0x1d0] sm:$0xff]
      %v1390 = vld [vmem:[%s11 + $0x1d8] sm:$0xff]
      %v1391 = vld [vmem:[%s11 + $0x1e0] sm:$0xff]
      %v1392 = vld [vmem:[%s11 + $0x1e8] sm:$0xff]
      %v1393 = vld [vmem:[%s11 + $0x1f0] sm:$0xff]
      %v1394 = vld [vmem:[%s11 + $0x1f8] sm:$0xff]
      %1395 = vmatprep.subr.mxu0 0.0
      %1396 = vmatpush1.msra.mxu0 0.0
      %1397 = vmatprep.subr.mxu0 0.0
      %1398 = vmatpush1.msra.mxu0 0.0
      %1399 = vmatprep.subr.mxu0 0.0
      %1400 = vmatpush1.msra.mxu0 0.0
      %1401 = vmatprep.subr.mxu0 0.0
      %1402 = vmatpush1.msra.mxu0 0.0
      %1403 = vmatprep.subr.mxu0 0.0
      %1404 = vmatpush1.msra.mxu0 0.0
      %1405 = vmatprep.subr.mxu0 0.0
      %1406 = vmatpush1.msra.mxu0 0.0
      %1407 = vmatprep.subr.mxu0 0.0
      %1408 = vmatpush1.msra.mxu0 0.0
      %1409 = vmatprep.subr.mxu0 0.0
      %1410 = vmatpush1.msra.mxu0 0.0
      %1411 = vmatprep.subr.mxu0 %v1388
      %1412 = vmatpush1.msra.mxu0 %v1387
      %1413 = vmatprep.subr.mxu0 %v1380
      %1414 = vmatpush1.msra.mxu0 %v1379
      %1415 = vmatprep.subr.mxu0 %v1372
      %1416 = vmatpush1.msra.mxu0 %v1371
      %1417 = vmatprep.subr.mxu0 %v1364
      %1418 = vmatpush1.msra.mxu0 %v1363
      %1419 = vmatprep.subr.mxu0 %v1356
      %1420 = vmatpush1.msra.mxu0 %v1355
      %1421 = vmatprep.subr.mxu0 %v1348
      %1422 = vmatpush1.msra.mxu0 %v1347
      %1423 = vmatprep.subr.mxu0 %v1340
      %1424 = vmatpush1.msra.mxu0 %v1339
      %1425 = vmatprep.subr.mxu0 %v1332
      %1426 = vmatpush1.msra.mxu0 %v1331
      %1427 = vmatprep.subr.mxu0 0.0
      %1428 = vmatpush2.msra.mxu0 0.0
      %1429 = vmatprep.subr.mxu0 0.0
      %1430 = vmatpush2.msra.mxu0 0.0
      %1431 = vmatprep.subr.mxu0 0.0
      %1432 = vmatpush2.msra.mxu0 0.0
      %1433 = vmatprep.subr.mxu0 0.0
      %1434 = vmatpush2.msra.mxu0 0.0
      %1435 = vmatprep.subr.mxu0 0.0
      %1436 = vmatpush2.msra.mxu0 0.0
      %1437 = vmatprep.subr.mxu0 0.0
      %1438 = vmatpush2.msra.mxu0 0.0
      %1439 = vmatprep.subr.mxu0 0.0
      %1440 = vmatpush2.msra.mxu0 0.0
      %1441 = vmatprep.subr.mxu0 0.0
      %1442 = vmatpush2.msra.mxu0 0.0
      %1443 = vmatprep.subr.mxu0 0.0
      %1444 = vmatpush2.msra.mxu0 0.0
      %1445 = vmatprep.subr.mxu0 0.0
      %1446 = vmatpush2.msra.mxu0 0.0
      %1447 = vmatprep.subr.mxu0 0.0
      %1448 = vmatpush2.msra.mxu0 0.0
      %1449 = vmatprep.subr.mxu0 0.0
      %1450 = vmatpush2.msra.mxu0 0.0
      %1451 = vmatprep.subr.mxu0 0.0
      %1452 = vmatpush2.msra.mxu0 0.0
      %1453 = vmatprep.subr.mxu0 0.0
      %1454 = vmatpush2.msra.mxu0 0.0
      %1455 = vmatprep.subr.mxu0 0.0
      %1456 = vmatpush2.msra.mxu0 0.0
      %1457 = vmatprep.subr.mxu0 0.0
      %1458 = vmatpush2.msra.mxu0 0.0
      %1459 = vmatprep.mubr.f32.mxu0 0.0
      %1460 = vmatmul.mubr.f32.gmra.mxu0 %v426
      %v1461 = vpop.f32.mrf.mxu0
      %v1462 = vadd.f32 0.0, %v1461
      %v1463 = vpop.f32.mrf.mxu0
      %v1464 = vadd.f32 0.0, %v1463
      %1465 = vmatprep.mubr.f32.mxu0 0.0
      %1466 = vmatmul.mubr.f32.gmra.mxu0 %v429
      %v1467 = vpop.f32.mrf.mxu0
      %v1468 = vadd.f32 0.0, %v1467
      %v1469 = vpop.f32.mrf.mxu0
      %v1470 = vadd.f32 0.0, %v1469
      %1471 = vdwg.mxu0
      %1472 = vmatprep.subr.mxu0 0.0
      %1473 = vmatpush1.msra.mxu0 0.0
      %1474 = vmatprep.subr.mxu0 0.0
      %1475 = vmatpush1.msra.mxu0 0.0
      %1476 = vmatprep.subr.mxu0 0.0
      %1477 = vmatpush1.msra.mxu0 0.0
      %1478 = vmatprep.subr.mxu0 0.0
      %1479 = vmatpush1.msra.mxu0 0.0
      %1480 = vmatprep.subr.mxu0 0.0
      %1481 = vmatpush1.msra.mxu0 0.0
      %1482 = vmatprep.subr.mxu0 0.0
      %1483 = vmatpush1.msra.mxu0 0.0
      %1484 = vmatprep.subr.mxu0 0.0
      %1485 = vmatpush1.msra.mxu0 0.0
      %1486 = vmatprep.subr.mxu0 0.0
      %1487 = vmatpush1.msra.mxu0 0.0
      %1488 = vmatprep.subr.mxu0 %v1390
      %1489 = vmatpush1.msra.mxu0 %v1389
      %1490 = vmatprep.subr.mxu0 %v1382
      %1491 = vmatpush1.msra.mxu0 %v1381
      %1492 = vmatprep.subr.mxu0 %v1374
      %1493 = vmatpush1.msra.mxu0 %v1373
      %1494 = vmatprep.subr.mxu0 %v1366
      %1495 = vmatpush1.msra.mxu0 %v1365
      %1496 = vmatprep.subr.mxu0 %v1358
      %1497 = vmatpush1.msra.mxu0 %v1357
      %1498 = vmatprep.subr.mxu0 %v1350
      %1499 = vmatpush1.msra.mxu0 %v1349
      %1500 = vmatprep.subr.mxu0 %v1342
      %1501 = vmatpush1.msra.mxu0 %v1341
      %1502 = vmatprep.subr.mxu0 %v1334
      %1503 = vmatpush1.msra.mxu0 %v1333
      %1504 = vmatprep.subr.mxu0 0.0
      %1505 = vmatpush2.msra.mxu0 0.0
      %1506 = vmatprep.subr.mxu0 0.0
      %1507 = vmatpush2.msra.mxu0 0.0
      %1508 = vmatprep.subr.mxu0 0.0
      %1509 = vmatpush2.msra.mxu0 0.0
      %1510 = vmatprep.subr.mxu0 0.0
      %1511 = vmatpush2.msra.mxu0 0.0
      %1512 = vmatprep.subr.mxu0 0.0
      %1513 = vmatpush2.msra.mxu0 0.0
      %1514 = vmatprep.subr.mxu0 0.0
      %1515 = vmatpush2.msra.mxu0 0.0
      %1516 = vmatprep.subr.mxu0 0.0
      %1517 = vmatpush2.msra.mxu0 0.0
      %1518 = vmatprep.subr.mxu0 0.0
      %1519 = vmatpush2.msra.mxu0 0.0
      %1520 = vmatprep.subr.mxu0 0.0
      %1521 = vmatpush2.msra.mxu0 0.0
      %1522 = vmatprep.subr.mxu0 0.0
      %1523 = vmatpush2.msra.mxu0 0.0
      %1524 = vmatprep.subr.mxu0 0.0
      %1525 = vmatpush2.msra.mxu0 0.0
      %1526 = vmatprep.subr.mxu0 0.0
      %1527 = vmatpush2.msra.mxu0 0.0
      %1528 = vmatprep.subr.mxu0 0.0
      %1529 = vmatpush2.msra.mxu0 0.0
      %1530 = vmatprep.subr.mxu0 0.0
      %1531 = vmatpush2.msra.mxu0 0.0
      %1532 = vmatprep.subr.mxu0 0.0
      %1533 = vmatpush2.msra.mxu0 0.0
      %1534 = vmatprep.subr.mxu0 0.0
      %1535 = vmatpush2.msra.mxu0 0.0
      %1536 = vmatprep.mubr.f32.mxu0 0.0
      %1537 = vmatmul.mubr.f32.gmra.mxu0 %v426
      %v1538 = vpop.f32.mrf.mxu0
      %v1539 = vadd.f32 0.0, %v1538
      %v1540 = vpop.f32.mrf.mxu0
      %v1541 = vadd.f32 0.0, %v1540
      %1542 = vmatprep.mubr.f32.mxu0 0.0
      %1543 = vmatmul.mubr.f32.gmra.mxu0 %v429
      %v1544 = vpop.f32.mrf.mxu0
      %v1545 = vadd.f32 0.0, %v1544
      %v1546 = vpop.f32.mrf.mxu0
      %v1547 = vadd.f32 0.0, %v1546
      %1548 = vdwg.mxu0
      %1549 = vmatprep.subr.mxu0 0.0
      %1550 = vmatpush1.msra.mxu0 0.0
      %1551 = vmatprep.subr.mxu0 0.0
      %1552 = vmatpush1.msra.mxu0 0.0
      %1553 = vmatprep.subr.mxu0 0.0
      %1554 = vmatpush1.msra.mxu0 0.0
      %1555 = vmatprep.subr.mxu0 0.0
      %1556 = vmatpush1.msra.mxu0 0.0
      %1557 = vmatprep.subr.mxu0 0.0
      %1558 = vmatpush1.msra.mxu0 0.0
      %1559 = vmatprep.subr.mxu0 0.0
      %1560 = vmatpush1.msra.mxu0 0.0
      %1561 = vmatprep.subr.mxu0 0.0
      %1562 = vmatpush1.msra.mxu0 0.0
      %1563 = vmatprep.subr.mxu0 0.0
      %1564 = vmatpush1.msra.mxu0 0.0
      %1565 = vmatprep.subr.mxu0 %v1392
      %1566 = vmatpush1.msra.mxu0 %v1391
      %1567 = vmatprep.subr.mxu0 %v1384
      %1568 = vmatpush1.msra.mxu0 %v1383
      %1569 = vmatprep.subr.mxu0 %v1376
      %1570 = vmatpush1.msra.mxu0 %v1375
      %1571 = vmatprep.subr.mxu0 %v1368
      %1572 = vmatpush1.msra.mxu0 %v1367
      %1573 = vmatprep.subr.mxu0 %v1360
      %1574 = vmatpush1.msra.mxu0 %v1359
      %1575 = vmatprep.subr.mxu0 %v1352
      %1576 = vmatpush1.msra.mxu0 %v1351
      %1577 = vmatprep.subr.mxu0 %v1344
      %1578 = vmatpush1.msra.mxu0 %v1343
      %1579 = vmatprep.subr.mxu0 %v1336
      %1580 = vmatpush1.msra.mxu0 %v1335
      %1581 = vmatprep.subr.mxu0 0.0
      %1582 = vmatpush2.msra.mxu0 0.0
      %1583 = vmatprep.subr.mxu0 0.0
      %1584 = vmatpush2.msra.mxu0 0.0
      %1585 = vmatprep.subr.mxu0 0.0
      %1586 = vmatpush2.msra.mxu0 0.0
      %1587 = vmatprep.subr.mxu0 0.0
      %1588 = vmatpush2.msra.mxu0 0.0
      %1589 = vmatprep.subr.mxu0 0.0
      %1590 = vmatpush2.msra.mxu0 0.0
      %1591 = vmatprep.subr.mxu0 0.0
      %1592 = vmatpush2.msra.mxu0 0.0
      %1593 = vmatprep.subr.mxu0 0.0
      %1594 = vmatpush2.msra.mxu0 0.0
      %1595 = vmatprep.subr.mxu0 0.0
      %1596 = vmatpush2.msra.mxu0 0.0
      %1597 = vmatprep.subr.mxu0 0.0
      %1598 = vmatpush2.msra.mxu0 0.0
      %1599 = vmatprep.subr.mxu0 0.0
      %1600 = vmatpush2.msra.mxu0 0.0
      %1601 = vmatprep.subr.mxu0 0.0
      %1602 = vmatpush2.msra.mxu0 0.0
      %1603 = vmatprep.subr.mxu0 0.0
      %1604 = vmatpush2.msra.mxu0 0.0
      %1605 = vmatprep.subr.mxu0 0.0
      %1606 = vmatpush2.msra.mxu0 0.0
      %1607 = vmatprep.subr.mxu0 0.0
      %1608 = vmatpush2.msra.mxu0 0.0
      %1609 = vmatprep.subr.mxu0 0.0
      %1610 = vmatpush2.msra.mxu0 0.0
      %1611 = vmatprep.subr.mxu0 0.0
      %1612 = vmatpush2.msra.mxu0 0.0
      %1613 = vmatprep.mubr.f32.mxu0 0.0
      %1614 = vmatmul.mubr.f32.gmra.mxu0 %v426
      %v1615 = vpop.f32.mrf.mxu0
      %v1616 = vadd.f32 0.0, %v1615
      %v1617 = vpop.f32.mrf.mxu0
      %v1618 = vadd.f32 0.0, %v1617
      %1619 = vmatprep.mubr.f32.mxu0 0.0
      %1620 = vmatmul.mubr.f32.gmra.mxu0 %v429
      %v1621 = vpop.f32.mrf.mxu0
      %v1622 = vadd.f32 0.0, %v1621
      %v1623 = vpop.f32.mrf.mxu0
      %v1624 = vadd.f32 0.0, %v1623
      %1625 = vdwg.mxu0
      %1626 = vmatprep.subr.mxu0 0.0
      %1627 = vmatpush1.msra.mxu0 0.0
      %1628 = vmatprep.subr.mxu0 0.0
      %1629 = vmatpush1.msra.mxu0 0.0
      %1630 = vmatprep.subr.mxu0 0.0
      %1631 = vmatpush1.msra.mxu0 0.0
      %1632 = vmatprep.subr.mxu0 0.0
      %1633 = vmatpush1.msra.mxu0 0.0
      %1634 = vmatprep.subr.mxu0 0.0
      %1635 = vmatpush1.msra.mxu0 0.0
      %1636 = vmatprep.subr.mxu0 0.0
      %1637 = vmatpush1.msra.mxu0 0.0
      %1638 = vmatprep.subr.mxu0 0.0
      %1639 = vmatpush1.msra.mxu0 0.0
      %1640 = vmatprep.subr.mxu0 0.0
      %1641 = vmatpush1.msra.mxu0 0.0
      %1642 = vmatprep.subr.mxu0 %v1394
      %1643 = vmatpush1.msra.mxu0 %v1393
      %1644 = vmatprep.subr.mxu0 %v1386
      %1645 = vmatpush1.msra.mxu0 %v1385
      %1646 = vmatprep.subr.mxu0 %v1378
      %1647 = vmatpush1.msra.mxu0 %v1377
      %1648 = vmatprep.subr.mxu0 %v1370
      %1649 = vmatpush1.msra.mxu0 %v1369
      %1650 = vmatprep.subr.mxu0 %v1362
      %1651 = vmatpush1.msra.mxu0 %v1361
      %1652 = vmatprep.subr.mxu0 %v1354
      %1653 = vmatpush1.msra.mxu0 %v1353
      %1654 = vmatprep.subr.mxu0 %v1346
      %1655 = vmatpush1.msra.mxu0 %v1345
      %1656 = vmatprep.subr.mxu0 %v1338
      %1657 = vmatpush1.msra.mxu0 %v1337
      %1658 = vmatprep.subr.mxu0 0.0
      %1659 = vmatpush2.msra.mxu0 0.0
      %1660 = vmatprep.subr.mxu0 0.0
      %1661 = vmatpush2.msra.mxu0 0.0
      %1662 = vmatprep.subr.mxu0 0.0
      %1663 = vmatpush2.msra.mxu0 0.0
      %1664 = vmatprep.subr.mxu0 0.0
      %1665 = vmatpush2.msra.mxu0 0.0
      %1666 = vmatprep.subr.mxu0 0.0
      %1667 = vmatpush2.msra.mxu0 0.0
      %1668 = vmatprep.subr.mxu0 0.0
      %1669 = vmatpush2.msra.mxu0 0.0
      %1670 = vmatprep.subr.mxu0 0.0
      %1671 = vmatpush2.msra.mxu0 0.0
      %1672 = vmatprep.subr.mxu0 0.0
      %1673 = vmatpush2.msra.mxu0 0.0
      %1674 = vmatprep.subr.mxu0 0.0
      %1675 = vmatpush2.msra.mxu0 0.0
      %1676 = vmatprep.subr.mxu0 0.0
      %1677 = vmatpush2.msra.mxu0 0.0
      %1678 = vmatprep.subr.mxu0 0.0
      %1679 = vmatpush2.msra.mxu0 0.0
      %1680 = vmatprep.subr.mxu0 0.0
      %1681 = vmatpush2.msra.mxu0 0.0
      %1682 = vmatprep.subr.mxu0 0.0
      %1683 = vmatpush2.msra.mxu0 0.0
      %1684 = vmatprep.subr.mxu0 0.0
      %1685 = vmatpush2.msra.mxu0 0.0
      %1686 = vmatprep.subr.mxu0 0.0
      %1687 = vmatpush2.msra.mxu0 0.0
      %1688 = vmatprep.subr.mxu0 0.0
      %1689 = vmatpush2.msra.mxu0 0.0
      %1690 = vmatprep.mubr.f32.mxu0 0.0
      %1691 = vmatmul.mubr.f32.gmra.mxu0 %v426
      %v1692 = vpop.f32.mrf.mxu0
      %v1693 = vadd.f32 0.0, %v1692
      %v1694 = vpop.f32.mrf.mxu0
      %v1695 = vadd.f32 0.0, %v1694
      %1696 = vmatprep.mubr.f32.mxu0 0.0
      %1697 = vmatmul.mubr.f32.gmra.mxu0 %v429
      %v1698 = vpop.f32.mrf.mxu0
      %v1699 = vadd.f32 0.0, %v1698
      %v1700 = vpop.f32.mrf.mxu0
      %v1701 = vadd.f32 0.0, %v1700
      %1702 = vdwg.mxu0
      %v1704 = vsel %vm424, %v1185, 0
      %v1707 = vsel %vm424, %v1189, 0
      %1709 = vmatprep.subr.mxu0 0.0
      %1710 = vmatpush1.msra.mxu0 0.0
      %1711 = vmatprep.subr.mxu0 0.0
      %1712 = vmatpush1.msra.mxu0 0.0
      %1713 = vmatprep.subr.mxu0 0.0
      %1714 = vmatpush1.msra.mxu0 0.0
      %1715 = vmatprep.subr.mxu0 0.0
      %1716 = vmatpush1.msra.mxu0 0.0
      %1717 = vmatprep.subr.mxu0 0.0
      %1718 = vmatpush1.msra.mxu0 0.0
      %1719 = vmatprep.subr.mxu0 0.0
      %1720 = vmatpush1.msra.mxu0 0.0
      %1721 = vmatprep.subr.mxu0 0.0
      %1722 = vmatpush1.msra.mxu0 0.0
      %1723 = vmatprep.subr.mxu0 0.0
      %1724 = vmatpush1.msra.mxu0 0.0
      %1725 = vmatprep.subr.mxu0 0.0
      %1726 = vmatpush1.msra.mxu0 %v1241
      %1727 = vmatprep.subr.mxu0 0.0
      %1728 = vmatpush1.msra.mxu0 %v1240
      %1729 = vmatprep.subr.mxu0 0.0
      %1730 = vmatpush1.msra.mxu0 %v1239
      %1731 = vmatprep.subr.mxu0 0.0
      %1732 = vmatpush1.msra.mxu0 %v1238
      %1733 = vmatprep.subr.mxu0 0.0
      %1734 = vmatpush1.msra.mxu0 %v1237
      %1735 = vmatprep.subr.mxu0 0.0
      %1736 = vmatpush1.msra.mxu0 %v1236
      %1737 = vmatprep.subr.mxu0 0.0
      %1738 = vmatpush1.msra.mxu0 %v1235
      %1739 = vmatprep.subr.mxu0 0.0
      %1740 = vmatpush1.msra.mxu0 %v1234
      %1741 = vmatprep.subr.mxu0 0.0
      %1742 = vmatpush2.msra.mxu0 0.0
      %1743 = vmatprep.subr.mxu0 0.0
      %1744 = vmatpush2.msra.mxu0 0.0
      %1745 = vmatprep.subr.mxu0 0.0
      %1746 = vmatpush2.msra.mxu0 0.0
      %1747 = vmatprep.subr.mxu0 0.0
      %1748 = vmatpush2.msra.mxu0 0.0
      %1749 = vmatprep.subr.mxu0 0.0
      %1750 = vmatpush2.msra.mxu0 0.0
      %1751 = vmatprep.subr.mxu0 0.0
      %1752 = vmatpush2.msra.mxu0 0.0
      %1753 = vmatprep.subr.mxu0 0.0
      %1754 = vmatpush2.msra.mxu0 0.0
      %1755 = vmatprep.subr.mxu0 0.0
      %1756 = vmatpush2.msra.mxu0 0.0
      %1757 = vmatprep.subr.mxu0 0.0
      %1758 = vmatpush2.msra.mxu0 0.0
      %1759 = vmatprep.subr.mxu0 0.0
      %1760 = vmatpush2.msra.mxu0 0.0
      %1761 = vmatprep.subr.mxu0 0.0
      %1762 = vmatpush2.msra.mxu0 0.0
      %1763 = vmatprep.subr.mxu0 0.0
      %1764 = vmatpush2.msra.mxu0 0.0
      %1765 = vmatprep.subr.mxu0 0.0
      %1766 = vmatpush2.msra.mxu0 0.0
      %1767 = vmatprep.subr.mxu0 0.0
      %1768 = vmatpush2.msra.mxu0 0.0
      %1769 = vmatprep.subr.mxu0 0.0
      %1770 = vmatpush2.msra.mxu0 0.0
      %1771 = vmatprep.subr.mxu0 0.0
      %1772 = vmatpush2.msra.mxu0 0.0
      %1773 = vmatprep.mubr.f32.mxu0 0.0
      %1774 = vmatmul.mubr.f32.gmra.mxu0 %v1704
      %v1775 = vpop.f32.mrf.mxu0
      %v1776 = vadd.f32 %v1323, %v1775
      %v1777 = vpop.f32.mrf.mxu0
      %1778 = vmatprep.mubr.f32.mxu0 0.0
      %1779 = vmatmul.mubr.f32.gmra.mxu0 %v1707
      %v1780 = vpop.f32.mrf.mxu0
      %v1781 = vadd.f32 %v1328, %v1780
      %v1782 = vpop.f32.mrf.mxu0
      %1783 = vdwg.mxu0
      %v1784 = vmul.f32 %v1776, %v1462
      %v1785 = vmul.f32 %v1781, %v1468
      %v1786 = vadd.f32 %v1784, %v1785
      %v1787 = vrot.slane %v1786, 4
      %v1788 = vadd.f32 %v1786, %v1787
      %v1789 = vrot.slane %v1788, 2
      %v1790 = vadd.f32 %v1788, %v1789
      %v1791 = vrot.slane %v1790, 1
      %v1792 = vadd.f32 %v1790, %v1791
      %v1793 = vadd.f32 %v1792, 0.0
      %v1794 = vmul.f32 %v1784, %v1784
      %v1795 = vmul.f32 %v1785, %v1785
      %v1796 = vadd.f32 %v1794, %v1795
      %v1797 = vrot.slane %v1796, 4
      %v1798 = vadd.f32 %v1796, %v1797
      %v1799 = vrot.slane %v1798, 2
      %v1800 = vadd.f32 %v1798, %v1799
      %v1801 = vrot.slane %v1800, 1
      %v1802 = vadd.f32 %v1800, %v1801
      %v1803 = vadd.f32 %v1802, 0.0
      %1804 = vrot.lane.b32.xlu0 %v1185, 64
      %v1805 = vpop.permute.xlu0 %1804
      %1806 = vrot.lane.b32.xlu0 %v1189, 64
      %v1807 = vpop.permute.xlu0 %1806
      %v1808 = vsel %vm424, %v1805, 0
      %v1810 = vsel %vm424, %v1807, 0
      %1812 = vmatprep.subr.mxu0 0.0
      %1813 = vmatpush1.msra.mxu0 0.0
      %1814 = vmatprep.subr.mxu0 0.0
      %1815 = vmatpush1.msra.mxu0 0.0
      %1816 = vmatprep.subr.mxu0 0.0
      %1817 = vmatpush1.msra.mxu0 0.0
      %1818 = vmatprep.subr.mxu0 0.0
      %1819 = vmatpush1.msra.mxu0 0.0
      %1820 = vmatprep.subr.mxu0 0.0
      %1821 = vmatpush1.msra.mxu0 0.0
      %1822 = vmatprep.subr.mxu0 0.0
      %1823 = vmatpush1.msra.mxu0 0.0
      %1824 = vmatprep.subr.mxu0 0.0
      %1825 = vmatpush1.msra.mxu0 0.0
      %1826 = vmatprep.subr.mxu0 0.0
      %1827 = vmatpush1.msra.mxu0 0.0
      %1828 = vmatprep.subr.mxu0 0.0
      %1829 = vmatpush1.msra.mxu0 %v1241
      %1830 = vmatprep.subr.mxu0 0.0
      %1831 = vmatpush1.msra.mxu0 %v1240
      %1832 = vmatprep.subr.mxu0 0.0
      %1833 = vmatpush1.msra.mxu0 %v1239
      %1834 = vmatprep.subr.mxu0 0.0
      %1835 = vmatpush1.msra.mxu0 %v1238
      %1836 = vmatprep.subr.mxu0 0.0
      %1837 = vmatpush1.msra.mxu0 %v1237
      %1838 = vmatprep.subr.mxu0 0.0
      %1839 = vmatpush1.msra.mxu0 %v1236
      %1840 = vmatprep.subr.mxu0 0.0
      %1841 = vmatpush1.msra.mxu0 %v1235
      %1842 = vmatprep.subr.mxu0 0.0
      %1843 = vmatpush1.msra.mxu0 %v1234
      %1844 = vmatprep.subr.mxu0 0.0
      %1845 = vmatpush2.msra.mxu0 0.0
      %1846 = vmatprep.subr.mxu0 0.0
      %1847 = vmatpush2.msra.mxu0 0.0
      %1848 = vmatprep.subr.mxu0 0.0
      %1849 = vmatpush2.msra.mxu0 0.0
      %1850 = vmatprep.subr.mxu0 0.0
      %1851 = vmatpush2.msra.mxu0 0.0
      %1852 = vmatprep.subr.mxu0 0.0
      %1853 = vmatpush2.msra.mxu0 0.0
      %1854 = vmatprep.subr.mxu0 0.0
      %1855 = vmatpush2.msra.mxu0 0.0
      %1856 = vmatprep.subr.mxu0 0.0
      %1857 = vmatpush2.msra.mxu0 0.0
      %1858 = vmatprep.subr.mxu0 0.0
      %1859 = vmatpush2.msra.mxu0 0.0
      %1860 = vmatprep.subr.mxu0 0.0
      %1861 = vmatpush2.msra.mxu0 0.0
      %1862 = vmatprep.subr.mxu0 0.0
      %1863 = vmatpush2.msra.mxu0 0.0
      %1864 = vmatprep.subr.mxu0 0.0
      %1865 = vmatpush2.msra.mxu0 0.0
      %1866 = vmatprep.subr.mxu0 0.0
      %1867 = vmatpush2.msra.mxu0 0.0
      %1868 = vmatprep.subr.mxu0 0.0
      %1869 = vmatpush2.msra.mxu0 0.0
      %1870 = vmatprep.subr.mxu0 0.0
      %1871 = vmatpush2.msra.mxu0 0.0
      %1872 = vmatprep.subr.mxu0 0.0
      %1873 = vmatpush2.msra.mxu0 0.0
      %1874 = vmatprep.subr.mxu0 0.0
      %1875 = vmatpush2.msra.mxu0 0.0
      %1876 = vmatprep.mubr.f32.mxu0 0.0
      %1877 = vmatmul.mubr.f32.gmra.mxu0 %v1808
      %v1878 = vpop.f32.mrf.mxu0
      %v1879 = vadd.f32 %v1323, %v1878
      %v1880 = vpop.f32.mrf.mxu0
      %1881 = vmatprep.mubr.f32.mxu0 0.0
      %1882 = vmatmul.mubr.f32.gmra.mxu0 %v1810
      %v1883 = vpop.f32.mrf.mxu0
      %v1884 = vadd.f32 %v1328, %v1883
      %v1885 = vpop.f32.mrf.mxu0
      %1886 = vdwg.mxu0
      %v1887 = vmul.f32 %v1879, %v1464
      %v1888 = vmul.f32 %v1884, %v1470
      %v1889 = vadd.f32 %v1887, %v1888
      %v1890 = vrot.slane %v1889, 4
      %v1891 = vadd.f32 %v1889, %v1890
      %v1892 = vrot.slane %v1891, 2
      %v1893 = vadd.f32 %v1891, %v1892
      %v1894 = vrot.slane %v1893, 1
      %v1895 = vadd.f32 %v1893, %v1894
      %v1896 = vadd.f32 %v1793, %v1895
      %v1897 = vmul.f32 %v1887, %v1887
      %v1898 = vmul.f32 %v1888, %v1888
      %v1899 = vadd.f32 %v1897, %v1898
      %v1900 = vrot.slane %v1899, 4
      %v1901 = vadd.f32 %v1899, %v1900
      %v1902 = vrot.slane %v1901, 2
      %v1903 = vadd.f32 %v1901, %v1902
      %v1904 = vrot.slane %v1903, 1
      %v1905 = vadd.f32 %v1903, %v1904
      %v1906 = vadd.f32 %v1803, %v1905
      %v1908 = vsel %vm424, %v1186, 0
      %v1911 = vsel %vm424, %v1190, 0
      %1913 = vmatprep.subr.mxu0 0.0
      %1914 = vmatpush1.msra.mxu0 0.0
      %1915 = vmatprep.subr.mxu0 0.0
      %1916 = vmatpush1.msra.mxu0 0.0
      %1917 = vmatprep.subr.mxu0 0.0
      %1918 = vmatpush1.msra.mxu0 0.0
      %1919 = vmatprep.subr.mxu0 0.0
      %1920 = vmatpush1.msra.mxu0 0.0
      %1921 = vmatprep.subr.mxu0 0.0
      %1922 = vmatpush1.msra.mxu0 0.0
      %1923 = vmatprep.subr.mxu0 0.0
      %1924 = vmatpush1.msra.mxu0 0.0
      %1925 = vmatprep.subr.mxu0 0.0
      %1926 = vmatpush1.msra.mxu0 0.0
      %1927 = vmatprep.subr.mxu0 0.0
      %1928 = vmatpush1.msra.mxu0 0.0
      %1929 = vmatprep.subr.mxu0 0.0
      %1930 = vmatpush1.msra.mxu0 %v1241
      %1931 = vmatprep.subr.mxu0 0.0
      %1932 = vmatpush1.msra.mxu0 %v1240
      %1933 = vmatprep.subr.mxu0 0.0
      %1934 = vmatpush1.msra.mxu0 %v1239
      %1935 = vmatprep.subr.mxu0 0.0
      %1936 = vmatpush1.msra.mxu0 %v1238
      %1937 = vmatprep.subr.mxu0 0.0
      %1938 = vmatpush1.msra.mxu0 %v1237
      %1939 = vmatprep.subr.mxu0 0.0
      %1940 = vmatpush1.msra.mxu0 %v1236
      %1941 = vmatprep.subr.mxu0 0.0
      %1942 = vmatpush1.msra.mxu0 %v1235
      %1943 = vmatprep.subr.mxu0 0.0
      %1944 = vmatpush1.msra.mxu0 %v1234
      %1945 = vmatprep.subr.mxu0 0.0
      %1946 = vmatpush2.msra.mxu0 0.0
      %1947 = vmatprep.subr.mxu0 0.0
      %1948 = vmatpush2.msra.mxu0 0.0
      %1949 = vmatprep.subr.mxu0 0.0
      %1950 = vmatpush2.msra.mxu0 0.0
      %1951 = vmatprep.subr.mxu0 0.0
      %1952 = vmatpush2.msra.mxu0 0.0
      %1953 = vmatprep.subr.mxu0 0.0
      %1954 = vmatpush2.msra.mxu0 0.0
      %1955 = vmatprep.subr.mxu0 0.0
      %1956 = vmatpush2.msra.mxu0 0.0
      %1957 = vmatprep.subr.mxu0 0.0
      %1958 = vmatpush2.msra.mxu0 0.0
      %1959 = vmatprep.subr.mxu0 0.0
      %1960 = vmatpush2.msra.mxu0 0.0
      %1961 = vmatprep.subr.mxu0 0.0
      %1962 = vmatpush2.msra.mxu0 0.0
      %1963 = vmatprep.subr.mxu0 0.0
      %1964 = vmatpush2.msra.mxu0 0.0
      %1965 = vmatprep.subr.mxu0 0.0
      %1966 = vmatpush2.msra.mxu0 0.0
      %1967 = vmatprep.subr.mxu0 0.0
      %1968 = vmatpush2.msra.mxu0 0.0
      %1969 = vmatprep.subr.mxu0 0.0
      %1970 = vmatpush2.msra.mxu0 0.0
      %1971 = vmatprep.subr.mxu0 0.0
      %1972 = vmatpush2.msra.mxu0 0.0
      %1973 = vmatprep.subr.mxu0 0.0
      %1974 = vmatpush2.msra.mxu0 0.0
      %1975 = vmatprep.subr.mxu0 0.0
      %1976 = vmatpush2.msra.mxu0 0.0
      %1977 = vmatprep.mubr.f32.mxu0 0.0
      %1978 = vmatmul.mubr.f32.gmra.mxu0 %v1908
      %v1979 = vpop.f32.mrf.mxu0
      %v1980 = vadd.f32 %v1323, %v1979
      %v1981 = vpop.f32.mrf.mxu0
      %1982 = vmatprep.mubr.f32.mxu0 0.0
      %1983 = vmatmul.mubr.f32.gmra.mxu0 %v1911
      %v1984 = vpop.f32.mrf.mxu0
      %v1985 = vadd.f32 %v1328, %v1984
      %v1986 = vpop.f32.mrf.mxu0
      %1987 = vdwg.mxu0
      %v1988 = vmul.f32 %v1980, %v1539
      %v1989 = vmul.f32 %v1985, %v1545
      %v1990 = vadd.f32 %v1988, %v1989
      %v1991 = vrot.slane %v1990, 4
      %v1992 = vadd.f32 %v1990, %v1991
      %v1993 = vrot.slane %v1992, 2
      %v1994 = vadd.f32 %v1992, %v1993
      %v1995 = vrot.slane %v1994, 1
      %v1996 = vadd.f32 %v1994, %v1995
      %v1997 = vadd.f32 %v1896, %v1996
      %v1998 = vmul.f32 %v1988, %v1988
      %v1999 = vmul.f32 %v1989, %v1989
      %v2000 = vadd.f32 %v1998, %v1999
      %v2001 = vrot.slane %v2000, 4
      %v2002 = vadd.f32 %v2000, %v2001
      %v2003 = vrot.slane %v2002, 2
      %v2004 = vadd.f32 %v2002, %v2003
      %v2005 = vrot.slane %v2004, 1
      %v2006 = vadd.f32 %v2004, %v2005
      %v2007 = vadd.f32 %v1906, %v2006
      %2008 = vrot.lane.b32.xlu0 %v1186, 64
      %v2009 = vpop.permute.xlu0 %2008
      %2010 = vrot.lane.b32.xlu0 %v1190, 64
      %v2011 = vpop.permute.xlu0 %2010
      %v2012 = vsel %vm424, %v2009, 0
      %v2014 = vsel %vm424, %v2011, 0
      %2016 = vmatprep.subr.mxu0 0.0
      %2017 = vmatpush1.msra.mxu0 0.0
      %2018 = vmatprep.subr.mxu0 0.0
      %2019 = vmatpush1.msra.mxu0 0.0
      %2020 = vmatprep.subr.mxu0 0.0
      %2021 = vmatpush1.msra.mxu0 0.0
      %2022 = vmatprep.subr.mxu0 0.0
      %2023 = vmatpush1.msra.mxu0 0.0
      %2024 = vmatprep.subr.mxu0 0.0
      %2025 = vmatpush1.msra.mxu0 0.0
      %2026 = vmatprep.subr.mxu0 0.0
      %2027 = vmatpush1.msra.mxu0 0.0
      %2028 = vmatprep.subr.mxu0 0.0
      %2029 = vmatpush1.msra.mxu0 0.0
      %2030 = vmatprep.subr.mxu0 0.0
      %2031 = vmatpush1.msra.mxu0 0.0
      %2032 = vmatprep.subr.mxu0 0.0
      %2033 = vmatpush1.msra.mxu0 %v1241
      %2034 = vmatprep.subr.mxu0 0.0
      %2035 = vmatpush1.msra.mxu0 %v1240
      %2036 = vmatprep.subr.mxu0 0.0
      %2037 = vmatpush1.msra.mxu0 %v1239
      %2038 = vmatprep.subr.mxu0 0.0
      %2039 = vmatpush1.msra.mxu0 %v1238
      %2040 = vmatprep.subr.mxu0 0.0
      %2041 = vmatpush1.msra.mxu0 %v1237
      %2042 = vmatprep.subr.mxu0 0.0
      %2043 = vmatpush1.msra.mxu0 %v1236
      %2044 = vmatprep.subr.mxu0 0.0
      %2045 = vmatpush1.msra.mxu0 %v1235
      %2046 = vmatprep.subr.mxu0 0.0
      %2047 = vmatpush1.msra.mxu0 %v1234
      %2048 = vmatprep.subr.mxu0 0.0
      %2049 = vmatpush2.msra.mxu0 0.0
      %2050 = vmatprep.subr.mxu0 0.0
      %2051 = vmatpush2.msra.mxu0 0.0
      %2052 = vmatprep.subr.mxu0 0.0
      %2053 = vmatpush2.msra.mxu0 0.0
      %2054 = vmatprep.subr.mxu0 0.0
      %2055 = vmatpush2.msra.mxu0 0.0
      %2056 = vmatprep.subr.mxu0 0.0
      %2057 = vmatpush2.msra.mxu0 0.0
      %2058 = vmatprep.subr.mxu0 0.0
      %2059 = vmatpush2.msra.mxu0 0.0
      %2060 = vmatprep.subr.mxu0 0.0
      %2061 = vmatpush2.msra.mxu0 0.0
      %2062 = vmatprep.subr.mxu0 0.0
      %2063 = vmatpush2.msra.mxu0 0.0
      %2064 = vmatprep.subr.mxu0 0.0
      %2065 = vmatpush2.msra.mxu0 0.0
      %2066 = vmatprep.subr.mxu0 0.0
      %2067 = vmatpush2.msra.mxu0 0.0
      %2068 = vmatprep.subr.mxu0 0.0
      %2069 = vmatpush2.msra.mxu0 0.0
      %2070 = vmatprep.subr.mxu0 0.0
      %2071 = vmatpush2.msra.mxu0 0.0
      %2072 = vmatprep.subr.mxu0 0.0
      %2073 = vmatpush2.msra.mxu0 0.0
      %2074 = vmatprep.subr.mxu0 0.0
      %2075 = vmatpush2.msra.mxu0 0.0
      %2076 = vmatprep.subr.mxu0 0.0
      %2077 = vmatpush2.msra.mxu0 0.0
      %2078 = vmatprep.subr.mxu0 0.0
      %2079 = vmatpush2.msra.mxu0 0.0
      %2080 = vmatprep.mubr.f32.mxu0 0.0
      %2081 = vmatmul.mubr.f32.gmra.mxu0 %v2012
      %v2082 = vpop.f32.mrf.mxu0
      %v2083 = vadd.f32 %v1323, %v2082
      %v2084 = vpop.f32.mrf.mxu0
      %2085 = vmatprep.mubr.f32.mxu0 0.0
      %2086 = vmatmul.mubr.f32.gmra.mxu0 %v2014
      %v2087 = vpop.f32.mrf.mxu0
      %v2088 = vadd.f32 %v1328, %v2087
      %v2089 = vpop.f32.mrf.mxu0
      %2090 = vdwg.mxu0
      %v2091 = vmul.f32 %v2083, %v1541
      %v2092 = vmul.f32 %v2088, %v1547
      %v2093 = vadd.f32 %v2091, %v2092
      %v2094 = vrot.slane %v2093, 4
      %v2095 = vadd.f32 %v2093, %v2094
      %v2096 = vrot.slane %v2095, 2
      %v2097 = vadd.f32 %v2095, %v2096
      %v2098 = vrot.slane %v2097, 1
      %v2099 = vadd.f32 %v2097, %v2098
      %v2100 = vadd.f32 %v1997, %v2099
      %v2101 = vmul.f32 %v2091, %v2091
      %v2102 = vmul.f32 %v2092, %v2092
      %v2103 = vadd.f32 %v2101, %v2102
      %v2104 = vrot.slane %v2103, 4
      %v2105 = vadd.f32 %v2103, %v2104
      %v2106 = vrot.slane %v2105, 2
      %v2107 = vadd.f32 %v2105, %v2106
      %v2108 = vrot.slane %v2107, 1
      %v2109 = vadd.f32 %v2107, %v2108
      %v2110 = vadd.f32 %v2007, %v2109
      %v2112 = vsel %vm424, %v1187, 0
      %v2115 = vsel %vm424, %v1191, 0
      %2117 = vmatprep.subr.mxu0 0.0
      %2118 = vmatpush1.msra.mxu0 0.0
      %2119 = vmatprep.subr.mxu0 0.0
      %2120 = vmatpush1.msra.mxu0 0.0
      %2121 = vmatprep.subr.mxu0 0.0
      %2122 = vmatpush1.msra.mxu0 0.0
      %2123 = vmatprep.subr.mxu0 0.0
      %2124 = vmatpush1.msra.mxu0 0.0
      %2125 = vmatprep.subr.mxu0 0.0
      %2126 = vmatpush1.msra.mxu0 0.0
      %2127 = vmatprep.subr.mxu0 0.0
      %2128 = vmatpush1.msra.mxu0 0.0
      %2129 = vmatprep.subr.mxu0 0.0
      %2130 = vmatpush1.msra.mxu0 0.0
      %2131 = vmatprep.subr.mxu0 0.0
      %2132 = vmatpush1.msra.mxu0 0.0
      %2133 = vmatprep.subr.mxu0 0.0
      %2134 = vmatpush1.msra.mxu0 %v1241
      %2135 = vmatprep.subr.mxu0 0.0
      %2136 = vmatpush1.msra.mxu0 %v1240
      %2137 = vmatprep.subr.mxu0 0.0
      %2138 = vmatpush1.msra.mxu0 %v1239
      %2139 = vmatprep.subr.mxu0 0.0
      %2140 = vmatpush1.msra.mxu0 %v1238
      %2141 = vmatprep.subr.mxu0 0.0
      %2142 = vmatpush1.msra.mxu0 %v1237
      %2143 = vmatprep.subr.mxu0 0.0
      %2144 = vmatpush1.msra.mxu0 %v1236
      %2145 = vmatprep.subr.mxu0 0.0
      %2146 = vmatpush1.msra.mxu0 %v1235
      %2147 = vmatprep.subr.mxu0 0.0
      %2148 = vmatpush1.msra.mxu0 %v1234
      %2149 = vmatprep.subr.mxu0 0.0
      %2150 = vmatpush2.msra.mxu0 0.0
      %2151 = vmatprep.subr.mxu0 0.0
      %2152 = vmatpush2.msra.mxu0 0.0
      %2153 = vmatprep.subr.mxu0 0.0
      %2154 = vmatpush2.msra.mxu0 0.0
      %2155 = vmatprep.subr.mxu0 0.0
      %2156 = vmatpush2.msra.mxu0 0.0
      %2157 = vmatprep.subr.mxu0 0.0
      %2158 = vmatpush2.msra.mxu0 0.0
      %2159 = vmatprep.subr.mxu0 0.0
      %2160 = vmatpush2.msra.mxu0 0.0
      %2161 = vmatprep.subr.mxu0 0.0
      %2162 = vmatpush2.msra.mxu0 0.0
      %2163 = vmatprep.subr.mxu0 0.0
      %2164 = vmatpush2.msra.mxu0 0.0
      %2165 = vmatprep.subr.mxu0 0.0
      %2166 = vmatpush2.msra.mxu0 0.0
      %2167 = vmatprep.subr.mxu0 0.0
      %2168 = vmatpush2.msra.mxu0 0.0
      %2169 = vmatprep.subr.mxu0 0.0
      %2170 = vmatpush2.msra.mxu0 0.0
      %2171 = vmatprep.subr.mxu0 0.0
      %2172 = vmatpush2.msra.mxu0 0.0
      %2173 = vmatprep.subr.mxu0 0.0
      %2174 = vmatpush2.msra.mxu0 0.0
      %2175 = vmatprep.subr.mxu0 0.0
      %2176 = vmatpush2.msra.mxu0 0.0
      %2177 = vmatprep.subr.mxu0 0.0
      %2178 = vmatpush2.msra.mxu0 0.0
      %2179 = vmatprep.subr.mxu0 0.0
      %2180 = vmatpush2.msra.mxu0 0.0
      %2181 = vmatprep.mubr.f32.mxu0 0.0
      %2182 = vmatmul.mubr.f32.gmra.mxu0 %v2112
      %v2183 = vpop.f32.mrf.mxu0
      %v2184 = vadd.f32 %v1323, %v2183
      %v2185 = vpop.f32.mrf.mxu0
      %2186 = vmatprep.mubr.f32.mxu0 0.0
      %2187 = vmatmul.mubr.f32.gmra.mxu0 %v2115
      %v2188 = vpop.f32.mrf.mxu0
      %v2189 = vadd.f32 %v1328, %v2188
      %v2190 = vpop.f32.mrf.mxu0
      %2191 = vdwg.mxu0
      %v2192 = vmul.f32 %v2184, %v1616
      %v2193 = vmul.f32 %v2189, %v1622
      %v2194 = vadd.f32 %v2192, %v2193
      %v2195 = vrot.slane %v2194, 4
      %v2196 = vadd.f32 %v2194, %v2195
      %v2197 = vrot.slane %v2196, 2
      %v2198 = vadd.f32 %v2196, %v2197
      %v2199 = vrot.slane %v2198, 1
      %v2200 = vadd.f32 %v2198, %v2199
      %v2201 = vadd.f32 %v2100, %v2200
      %v2202 = vmul.f32 %v2192, %v2192
      %v2203 = vmul.f32 %v2193, %v2193
      %v2204 = vadd.f32 %v2202, %v2203
      %v2205 = vrot.slane %v2204, 4
      %v2206 = vadd.f32 %v2204, %v2205
      %v2207 = vrot.slane %v2206, 2
      %v2208 = vadd.f32 %v2206, %v2207
      %v2209 = vrot.slane %v2208, 1
      %v2210 = vadd.f32 %v2208, %v2209
      %v2211 = vadd.f32 %v2110, %v2210
      %2212 = vrot.lane.b32.xlu0 %v1187, 64
      %v2213 = vpop.permute.xlu0 %2212
      %2214 = vrot.lane.b32.xlu0 %v1191, 64
      %v2215 = vpop.permute.xlu0 %2214
      %v2216 = vsel %vm424, %v2213, 0
      %v2218 = vsel %vm424, %v2215, 0
      %2220 = vmatprep.subr.mxu0 0.0
      %2221 = vmatpush1.msra.mxu0 0.0
      %2222 = vmatprep.subr.mxu0 0.0
      %2223 = vmatpush1.msra.mxu0 0.0
      %2224 = vmatprep.subr.mxu0 0.0
      %2225 = vmatpush1.msra.mxu0 0.0
      %2226 = vmatprep.subr.mxu0 0.0
      %2227 = vmatpush1.msra.mxu0 0.0
      %2228 = vmatprep.subr.mxu0 0.0
      %2229 = vmatpush1.msra.mxu0 0.0
      %2230 = vmatprep.subr.mxu0 0.0
      %2231 = vmatpush1.msra.mxu0 0.0
      %2232 = vmatprep.subr.mxu0 0.0
      %2233 = vmatpush1.msra.mxu0 0.0
      %2234 = vmatprep.subr.mxu0 0.0
      %2235 = vmatpush1.msra.mxu0 0.0
      %2236 = vmatprep.subr.mxu0 0.0
      %2237 = vmatpush1.msra.mxu0 %v1241
      %2238 = vmatprep.subr.mxu0 0.0
      %2239 = vmatpush1.msra.mxu0 %v1240
      %2240 = vmatprep.subr.mxu0 0.0
      %2241 = vmatpush1.msra.mxu0 %v1239
      %2242 = vmatprep.subr.mxu0 0.0
      %2243 = vmatpush1.msra.mxu0 %v1238
      %2244 = vmatprep.subr.mxu0 0.0
      %2245 = vmatpush1.msra.mxu0 %v1237
      %2246 = vmatprep.subr.mxu0 0.0
      %2247 = vmatpush1.msra.mxu0 %v1236
      %2248 = vmatprep.subr.mxu0 0.0
      %2249 = vmatpush1.msra.mxu0 %v1235
      %2250 = vmatprep.subr.mxu0 0.0
      %2251 = vmatpush1.msra.mxu0 %v1234
      %2252 = vmatprep.subr.mxu0 0.0
      %2253 = vmatpush2.msra.mxu0 0.0
      %2254 = vmatprep.subr.mxu0 0.0
      %2255 = vmatpush2.msra.mxu0 0.0
      %2256 = vmatprep.subr.mxu0 0.0
      %2257 = vmatpush2.msra.mxu0 0.0
      %2258 = vmatprep.subr.mxu0 0.0
      %2259 = vmatpush2.msra.mxu0 0.0
      %2260 = vmatprep.subr.mxu0 0.0
      %2261 = vmatpush2.msra.mxu0 0.0
      %2262 = vmatprep.subr.mxu0 0.0
      %2263 = vmatpush2.msra.mxu0 0.0
      %2264 = vmatprep.subr.mxu0 0.0
      %2265 = vmatpush2.msra.mxu0 0.0
      %2266 = vmatprep.subr.mxu0 0.0
      %2267 = vmatpush2.msra.mxu0 0.0
      %2268 = vmatprep.subr.mxu0 0.0
      %2269 = vmatpush2.msra.mxu0 0.0
      %2270 = vmatprep.subr.mxu0 0.0
      %2271 = vmatpush2.msra.mxu0 0.0
      %2272 = vmatprep.subr.mxu0 0.0
      %2273 = vmatpush2.msra.mxu0 0.0
      %2274 = vmatprep.subr.mxu0 0.0
      %2275 = vmatpush2.msra.mxu0 0.0
      %2276 = vmatprep.subr.mxu0 0.0
      %2277 = vmatpush2.msra.mxu0 0.0
      %2278 = vmatprep.subr.mxu0 0.0
      %2279 = vmatpush2.msra.mxu0 0.0
      %2280 = vmatprep.subr.mxu0 0.0
      %2281 = vmatpush2.msra.mxu0 0.0
      %2282 = vmatprep.subr.mxu0 0.0
      %2283 = vmatpush2.msra.mxu0 0.0
      %2284 = vmatprep.mubr.f32.mxu0 0.0
      %2285 = vmatmul.mubr.f32.gmra.mxu0 %v2216
      %v2286 = vpop.f32.mrf.mxu0
      %v2287 = vadd.f32 %v1323, %v2286
      %v2288 = vpop.f32.mrf.mxu0
      %2289 = vmatprep.mubr.f32.mxu0 0.0
      %2290 = vmatmul.mubr.f32.gmra.mxu0 %v2218
      %v2291 = vpop.f32.mrf.mxu0
      %v2292 = vadd.f32 %v1328, %v2291
      %v2293 = vpop.f32.mrf.mxu0
      %2294 = vdwg.mxu0
      %v2295 = vmul.f32 %v2287, %v1618
      %v2296 = vmul.f32 %v2292, %v1624
      %v2297 = vadd.f32 %v2295, %v2296
      %v2298 = vrot.slane %v2297, 4
      %v2299 = vadd.f32 %v2297, %v2298
      %v2300 = vrot.slane %v2299, 2
      %v2301 = vadd.f32 %v2299, %v2300
      %v2302 = vrot.slane %v2301, 1
      %v2303 = vadd.f32 %v2301, %v2302
      %v2304 = vadd.f32 %v2201, %v2303
      %v2305 = vmul.f32 %v2295, %v2295
      %v2306 = vmul.f32 %v2296, %v2296
      %v2307 = vadd.f32 %v2305, %v2306
      %v2308 = vrot.slane %v2307, 4
      %v2309 = vadd.f32 %v2307, %v2308
      %v2310 = vrot.slane %v2309, 2
      %v2311 = vadd.f32 %v2309, %v2310
      %v2312 = vrot.slane %v2311, 1
      %v2313 = vadd.f32 %v2311, %v2312
      %v2314 = vadd.f32 %v2211, %v2313
      %v2316 = vsel %vm424, %v1188, 0
      %v2319 = vsel %vm424, %v1192, 0
      %2321 = vmatprep.subr.mxu0 0.0
      %2322 = vmatpush1.msra.mxu0 0.0
      %2323 = vmatprep.subr.mxu0 0.0
      %2324 = vmatpush1.msra.mxu0 0.0
      %2325 = vmatprep.subr.mxu0 0.0
      %2326 = vmatpush1.msra.mxu0 0.0
      %2327 = vmatprep.subr.mxu0 0.0
      %2328 = vmatpush1.msra.mxu0 0.0
      %2329 = vmatprep.subr.mxu0 0.0
      %2330 = vmatpush1.msra.mxu0 0.0
      %2331 = vmatprep.subr.mxu0 0.0
      %2332 = vmatpush1.msra.mxu0 0.0
      %2333 = vmatprep.subr.mxu0 0.0
      %2334 = vmatpush1.msra.mxu0 0.0
      %2335 = vmatprep.subr.mxu0 0.0
      %2336 = vmatpush1.msra.mxu0 0.0
      %2337 = vmatprep.subr.mxu0 0.0
      %2338 = vmatpush1.msra.mxu0 %v1241
      %2339 = vmatprep.subr.mxu0 0.0
      %2340 = vmatpush1.msra.mxu0 %v1240
      %2341 = vmatprep.subr.mxu0 0.0
      %2342 = vmatpush1.msra.mxu0 %v1239
      %2343 = vmatprep.subr.mxu0 0.0
      %2344 = vmatpush1.msra.mxu0 %v1238
      %2345 = vmatprep.subr.mxu0 0.0
      %2346 = vmatpush1.msra.mxu0 %v1237
      %2347 = vmatprep.subr.mxu0 0.0
      %2348 = vmatpush1.msra.mxu0 %v1236
      %2349 = vmatprep.subr.mxu0 0.0
      %2350 = vmatpush1.msra.mxu0 %v1235
      %2351 = vmatprep.subr.mxu0 0.0
      %2352 = vmatpush1.msra.mxu0 %v1234
      %2353 = vmatprep.subr.mxu0 0.0
      %2354 = vmatpush2.msra.mxu0 0.0
      %2355 = vmatprep.subr.mxu0 0.0
      %2356 = vmatpush2.msra.mxu0 0.0
      %2357 = vmatprep.subr.mxu0 0.0
      %2358 = vmatpush2.msra.mxu0 0.0
      %2359 = vmatprep.subr.mxu0 0.0
      %2360 = vmatpush2.msra.mxu0 0.0
      %2361 = vmatprep.subr.mxu0 0.0
      %2362 = vmatpush2.msra.mxu0 0.0
      %2363 = vmatprep.subr.mxu0 0.0
      %2364 = vmatpush2.msra.mxu0 0.0
      %2365 = vmatprep.subr.mxu0 0.0
      %2366 = vmatpush2.msra.mxu0 0.0
      %2367 = vmatprep.subr.mxu0 0.0
      %2368 = vmatpush2.msra.mxu0 0.0
      %2369 = vmatprep.subr.mxu0 0.0
      %2370 = vmatpush2.msra.mxu0 0.0
      %2371 = vmatprep.subr.mxu0 0.0
      %2372 = vmatpush2.msra.mxu0 0.0
      %2373 = vmatprep.subr.mxu0 0.0
      %2374 = vmatpush2.msra.mxu0 0.0
      %2375 = vmatprep.subr.mxu0 0.0
      %2376 = vmatpush2.msra.mxu0 0.0
      %2377 = vmatprep.subr.mxu0 0.0
      %2378 = vmatpush2.msra.mxu0 0.0
      %2379 = vmatprep.subr.mxu0 0.0
      %2380 = vmatpush2.msra.mxu0 0.0
      %2381 = vmatprep.subr.mxu0 0.0
      %2382 = vmatpush2.msra.mxu0 0.0
      %2383 = vmatprep.subr.mxu0 0.0
      %2384 = vmatpush2.msra.mxu0 0.0
      %2385 = vmatprep.mubr.f32.mxu0 0.0
      %2386 = vmatmul.mubr.f32.gmra.mxu0 %v2316
      %v2387 = vpop.f32.mrf.mxu0
      %v2388 = vadd.f32 %v1323, %v2387
      %v2389 = vpop.f32.mrf.mxu0
      %2390 = vmatprep.mubr.f32.mxu0 0.0
      %2391 = vmatmul.mubr.f32.gmra.mxu0 %v2319
      %v2392 = vpop.f32.mrf.mxu0
      %v2393 = vadd.f32 %v1328, %v2392
      %v2394 = vpop.f32.mrf.mxu0
      %2395 = vdwg.mxu0
      %v2396 = vmul.f32 %v2388, %v1693
      %v2397 = vmul.f32 %v2393, %v1699
      %v2398 = vadd.f32 %v2396, %v2397
      %v2399 = vrot.slane %v2398, 4
      %v2400 = vadd.f32 %v2398, %v2399
      %v2401 = vrot.slane %v2400, 2
      %v2402 = vadd.f32 %v2400, %v2401
      %v2403 = vrot.slane %v2402, 1
      %v2404 = vadd.f32 %v2402, %v2403
      %v2405 = vadd.f32 %v2304, %v2404
      %v2406 = vmul.f32 %v2396, %v2396
      %v2407 = vmul.f32 %v2397, %v2397
      %v2408 = vadd.f32 %v2406, %v2407
      %v2409 = vrot.slane %v2408, 4
      %v2410 = vadd.f32 %v2408, %v2409
      %v2411 = vrot.slane %v2410, 2
      %v2412 = vadd.f32 %v2410, %v2411
      %v2413 = vrot.slane %v2412, 1
      %v2414 = vadd.f32 %v2412, %v2413
      %v2415 = vadd.f32 %v2314, %v2414
      %2416 = vrot.lane.b32.xlu0 %v1188, 64
      %v2417 = vpop.permute.xlu0 %2416
      %2418 = vrot.lane.b32.xlu0 %v1192, 64
      %v2419 = vpop.permute.xlu0 %2418
      %v2420 = vsel %vm424, %v2417, 0
      %v2422 = vsel %vm424, %v2419, 0
      %2424 = vmatprep.subr.mxu0 0.0
      %2425 = vmatpush1.msra.mxu0 0.0
      %2426 = vmatprep.subr.mxu0 0.0
      %2427 = vmatpush1.msra.mxu0 0.0
      %2428 = vmatprep.subr.mxu0 0.0
      %2429 = vmatpush1.msra.mxu0 0.0
      %2430 = vmatprep.subr.mxu0 0.0
      %2431 = vmatpush1.msra.mxu0 0.0
      %2432 = vmatprep.subr.mxu0 0.0
      %2433 = vmatpush1.msra.mxu0 0.0
      %2434 = vmatprep.subr.mxu0 0.0
      %2435 = vmatpush1.msra.mxu0 0.0
      %2436 = vmatprep.subr.mxu0 0.0
      %2437 = vmatpush1.msra.mxu0 0.0
      %2438 = vmatprep.subr.mxu0 0.0
      %2439 = vmatpush1.msra.mxu0 0.0
      %2440 = vmatprep.subr.mxu0 0.0
      %2441 = vmatpush1.msra.mxu0 %v1241
      %2442 = vmatprep.subr.mxu0 0.0
      %2443 = vmatpush1.msra.mxu0 %v1240
      %2444 = vmatprep.subr.mxu0 0.0
      %2445 = vmatpush1.msra.mxu0 %v1239
      %2446 = vmatprep.subr.mxu0 0.0
      %2447 = vmatpush1.msra.mxu0 %v1238
      %2448 = vmatprep.subr.mxu0 0.0
      %2449 = vmatpush1.msra.mxu0 %v1237
      %2450 = vmatprep.subr.mxu0 0.0
      %2451 = vmatpush1.msra.mxu0 %v1236
      %2452 = vmatprep.subr.mxu0 0.0
      %2453 = vmatpush1.msra.mxu0 %v1235
      %2454 = vmatprep.subr.mxu0 0.0
      %2455 = vmatpush1.msra.mxu0 %v1234
      %2456 = vmatprep.subr.mxu0 0.0
      %2457 = vmatpush2.msra.mxu0 0.0
      %2458 = vmatprep.subr.mxu0 0.0
      %2459 = vmatpush2.msra.mxu0 0.0
      %2460 = vmatprep.subr.mxu0 0.0
      %2461 = vmatpush2.msra.mxu0 0.0
      %2462 = vmatprep.subr.mxu0 0.0
      %2463 = vmatpush2.msra.mxu0 0.0
      %2464 = vmatprep.subr.mxu0 0.0
      %2465 = vmatpush2.msra.mxu0 0.0
      %2466 = vmatprep.subr.mxu0 0.0
      %2467 = vmatpush2.msra.mxu0 0.0
      %2468 = vmatprep.subr.mxu0 0.0
      %2469 = vmatpush2.msra.mxu0 0.0
      %2470 = vmatprep.subr.mxu0 0.0
      %2471 = vmatpush2.msra.mxu0 0.0
      %2472 = vmatprep.subr.mxu0 0.0
      %2473 = vmatpush2.msra.mxu0 0.0
      %2474 = vmatprep.subr.mxu0 0.0
      %2475 = vmatpush2.msra.mxu0 0.0
      %2476 = vmatprep.subr.mxu0 0.0
      %2477 = vmatpush2.msra.mxu0 0.0
      %2478 = vmatprep.subr.mxu0 0.0
      %2479 = vmatpush2.msra.mxu0 0.0
      %2480 = vmatprep.subr.mxu0 0.0
      %2481 = vmatpush2.msra.mxu0 0.0
      %2482 = vmatprep.subr.mxu0 0.0
      %2483 = vmatpush2.msra.mxu0 0.0
      %2484 = vmatprep.subr.mxu0 0.0
      %2485 = vmatpush2.msra.mxu0 0.0
      %2486 = vmatprep.subr.mxu0 0.0
      %2487 = vmatpush2.msra.mxu0 0.0
      %2488 = vmatprep.mubr.f32.mxu0 0.0
      %2489 = vmatmul.mubr.f32.gmra.mxu0 %v2420
      %v2490 = vpop.f32.mrf.mxu0
      %v2491 = vadd.f32 %v1323, %v2490
      %v2492 = vpop.f32.mrf.mxu0
      %2493 = vmatprep.mubr.f32.mxu0 0.0
      %2494 = vmatmul.mubr.f32.gmra.mxu0 %v2422
      %v2495 = vpop.f32.mrf.mxu0
      %v2496 = vadd.f32 %v1328, %v2495
      %v2497 = vpop.f32.mrf.mxu0
      %2498 = vdwg.mxu0
      %v2499 = vmul.f32 %v2491, %v1695
      %v2500 = vmul.f32 %v2496, %v1701
      %v2501 = vadd.f32 %v2499, %v2500
      %v2502 = vrot.slane %v2501, 4
      %v2503 = vadd.f32 %v2501, %v2502
      %v2504 = vrot.slane %v2503, 2
      %v2505 = vadd.f32 %v2503, %v2504
      %v2506 = vrot.slane %v2505, 1
      %v2507 = vadd.f32 %v2505, %v2506
      %v2508 = vadd.f32 %v2405, %v2507
      %v2509 = vmul.f32 %v2499, %v2499
      %v2510 = vmul.f32 %v2500, %v2500
      %v2511 = vadd.f32 %v2509, %v2510
      %v2512 = vrot.slane %v2511, 4
      %v2513 = vadd.f32 %v2511, %v2512
      %v2514 = vrot.slane %v2513, 2
      %v2515 = vadd.f32 %v2513, %v2514
      %v2516 = vrot.slane %v2515, 1
      %v2517 = vadd.f32 %v2515, %v2516
      %v2518 = vadd.f32 %v2415, %v2517
      %vm2519 = vcmask 1040384
      %v2520 = vsel %vm2519, %v2508, %v2518
      %2521 = vst [vmem:[%s413] sm:$0x3] %v2520
      %p2522 = scmp.lt.s32.totalorder %s23, 3
      %s2523 = scalar_select %p2522, %s23, 3
      %s2524 = smul.addr %s2523, 2
      %s2525 = scalar_lea.vmem %s12, %s2524
      // Predicated region
      $region69: #{svfe_forward.6} parent=67 // pred_check
        %p2526 = pneg %p298
      $region70: #{svfe_forward.6} parent=67 // pred_check_branch
        %2528 = sbr.rel (%p2526) target = $region72
      $region71: #{svfe_forward.6} parent=67 // pred_region
        _
      $region72: #{svfe_forward.6} parent=67 // pred_fallthru
        _
    $region68: #{svfe_forward.6} parent=5 // pred_fallthru
      _
    %p2529 = scmp.le.s32.totalorder 2, %s18
    // Predicated region
    $region73: #{svfe_forward.6} parent=5 // pred_check
      %p2530 = pneg %p2529
    $region74: #{svfe_forward.6} parent=5 // pred_check_branch
      %2532 = sbr.rel (%p2530) target = $region76
    $region75: #{svfe_forward.6} parent=5 // pred_region
      %s2533 = ssub.s32 %s18, 2
      // Predicated region
      $region77: #{svfe_forward.6} parent=75 // pred_check
        %p2534 = pneg %p304
      $region78: #{svfe_forward.6} parent=75 // pred_check_branch
        %2536 = sbr.rel (%p2534) target = $region80
      $region79: #{svfe_forward.6} parent=75 // pred_region
        %p2537 = scmp.lt.s32.totalorder %s24, 3
        %s2538 = scalar_select %p2537, %s24, 3
        %s2539 = smul.addr %s2538, 2
        %s2540 = scalar_lea.vmem %s12, %s2539
      $region80: #{svfe_forward.6} parent=75 // pred_fallthru
        _
    $region76: #{svfe_forward.6} parent=5 // pred_fallthru
      _
  $region6: #{svfe_forward.6} parent=0 // loop_footer
    %s22 = sadd.s32 1, %s18
  $region7: #{svfe_forward.6} parent=0 // loop_footer_branch
    %17 = sbr.rel target = $region3
  $region8: #{svfe_forward.6} parent=0 // loop_exit
    _

// kernel: svfe_forward.7
$region0: #{svfe_forward.7}
  #allocation0 [shape = 'u32[]', space=smem, size = 0x4, offset = 0x4, fixed_abs, tag = 'smem constant byte address 0x4 - core index']
  #allocation1 [shape = 'u32[144,128]{1,0:T(1,128)}', space=vmem, size = 0x12000, scoped, tag = 'internal scratch']
  %s0 = inlined_call_operand.vmem [shape: f32[64,64], index: 0, kind: input, shape index: {}]
  %s1 = inlined_call_operand.vmem [shape: f32[64,128], index: 1, kind: input, shape index: {}]
  %s2 = inlined_call_operand.vmem [shape: f32[1,128], index: 2, kind: input, shape index: {}]
  %s3 = inlined_call_operand.vmem [shape: f32[1,128], index: 3, kind: input, shape index: {}]
  %s4 = inlined_call_operand.vmem [shape: f32[128,512], index: 4, kind: input, shape index: {}]
  %s5 = inlined_call_operand.vmem [shape: f32[16,512], index: 5, kind: input, shape index: {}]
  %s6 = inlined_call_operand.vmem [shape: f32[64,512], index: 6, kind: input, shape index: {}]
  %s7 = inlined_call_operand.vmem [shape: f32[1,512], index: 7, kind: input, shape index: {}]
  %s8 = inlined_call_operand.vmem [shape: f32[1,512], index: 8, kind: input, shape index: {}]
  %s9 = inlined_call_operand.vmem [shape: f32[64,128], index: 9, kind: input, shape index: {}]
  %s10 = inlined_call_operand.vmem [shape: f32[64,128], index: 10, kind: input, shape index: {}]
  %s11 = inlined_call_operand.vmem [shape: f32[64,1024], index: 11, kind: input, shape index: {}]
  %s12 = inlined_call_operand.vmem [shape: f32[1,128], index: 12, kind: input, shape index: {}]
  %s13 = inlined_call_operand.vmem [shape: f32[1,128], index: 13, kind: input, shape index: {}]
  %s14 = inlined_call_operand.vmem [shape: f32[64,128], index: 14, kind: output, shape index: {}]
  %s15 = sld [smem:[#allocation0]]
  $region89: #{svfe_forward.7} parent=0
    _
  %s17 = ssub.s32 1, %s15
  %s18 = scalar_select 0, %s17, %s15
  loop: start=0, step=1, limit=6
  $region2: #{svfe_forward.7} parent=0 // loop_pre_header
    _
  $region3: #{svfe_forward.7} parent=0 // loop_header
    %s20 = sphi 0, %s24
    %p21 = scmp.ge.s32.totalorder %s20, 6
    %s30 = sphi 0, %s32
    %s33 = sphi 0, %s30
    %s34 = sphi 0, %s33
    %s50 = sphi 0, %s34
    %s54 = sphi 0, %s54
    %s56 = sphi 0, %s54
    %s57 = sphi 0, %s56
    %s71 = sphi 0, %s57
    %s75 = sphi 0, %s75
    %s77 = sphi 0, %s75
    %s78 = sphi 0, %s77
    %s92 = sphi 0, %s78
    %s96 = sphi 0, %s96
    %s98 = sphi 0, %s96
    %s99 = sphi 0, %s98
    %s113 = sphi 0, %s99
    %s117 = sphi 0, %s117
    %s119 = sphi 0, %s117
    %s120 = sphi 0, %s119
    %s134 = sphi 0, %s120
    %s138 = sphi 0, %s138
    %s140 = sphi 0, %s138
    %s141 = sphi 0, %s140
    %s155 = sphi 0, %s141
    %s159 = sphi 0, %s159
    %s161 = sphi 0, %s159
    %s162 = sphi 0, %s161
    %s176 = sphi 0, %s162
    %s180 = sphi 0, %s180
    %s182 = sphi 0, %s180
    %s183 = sphi 0, %s182
    %s197 = sphi 0, %s183
    %s201 = sphi 0, %s201
    %s203 = sphi 0, %s201
    %s204 = sphi 0, %s203
    %s218 = sphi 0, %s204
    %s222 = sphi 0, %s222
    %s224 = sphi 0, %s222
    %s225 = sphi 0, %s224
    %s239 = sphi 0, %s225
    %s243 = sphi 0, %s243
    %s245 = sphi 0, %s243
    %s246 = sphi 0, %s245
    %s260 = sphi 0, %s246
    %s264 = sphi 0, %s264
    %s266 = sphi 0, %s264
    %s267 = sphi 0, %s266
    %s281 = sphi 0, %s267
    %s285 = sphi 0, %s285
    %s287 = sphi 0, %s285
    %s288 = sphi 0, %s287
    %s302 = sphi 0, %s288
    %s306 = sphi 0, %s306
    %s308 = sphi 0, %s306
    %s309 = sphi 0, %s308
    %s323 = sphi 0, %s309
    %s329 = sphi 0, %s331
    %s332 = sphi 0, %s329
    %s333 = sphi 0, %s332
    %s349 = sphi 0, %s333
  $region4: #{svfe_forward.7} parent=0 // loop_header_branch
    %23 = sbr.rel (%p21) target = $region8
  $region5: #{svfe_forward.7} parent=0 // loop_body
    %s25 = ssub.s32 %s20, 1
    %s26 = ssub.s32 %s20, 2
    %s27 = sadd.s32 %s20, 1
    %s28 = ssub.s32 %s20, %s27
    %p29 = scmp.eq.s32.totalorder %s28, 0
    %s31 = sadd.s32 %s30, 1
    %s32 = scalar_select %p29, %s30, %s31
    %p35 = pneg %p29
    %p36 = scmp.eq.s32.totalorder %s20, 3
    %p37 = por %p35, %p36
    %p38 = scmp.ne.s32.totalorder %s30, %s33
    %p39 = scmp.eq.s32.totalorder %s20, 0
    %p40 = por %p38, %p39
    %p41 = scmp.ne.s32.totalorder %s30, %s33
    %p42 = scmp.eq.s32.totalorder %s25, 3
    %p43 = por %p41, %p42
    %p44 = scmp.ne.s32.totalorder %s33, %s34
    %p45 = scmp.eq.s32.totalorder %s25, 0
    %p46 = por %p44, %p45
    %p47 = scmp.ne.s32.totalorder %s33, %s34
    %p48 = scmp.eq.s32.totalorder %s26, 3
    %p49 = por %p47, %p48
    %p51 = scmp.ne.s32.totalorder %s34, %s50
    %p52 = scmp.eq.s32.totalorder %s26, 0
    %p53 = por %p51, %p52
    %s55 = sadd.s32 %s54, 1
    %p58 = scmp.eq.s32.totalorder %s20, 3
    %p59 = scmp.ne.s32.totalorder %s54, %s56
    %p60 = scmp.eq.s32.totalorder %s20, 0
    %p61 = por %p59, %p60
    %p62 = scmp.ne.s32.totalorder %s54, %s56
    %p63 = scmp.eq.s32.totalorder %s25, 3
    %p64 = por %p62, %p63
    %p65 = scmp.ne.s32.totalorder %s56, %s57
    %p66 = scmp.eq.s32.totalorder %s25, 0
    %p67 = por %p65, %p66
    %p68 = scmp.ne.s32.totalorder %s56, %s57
    %p69 = scmp.eq.s32.totalorder %s26, 3
    %p70 = por %p68, %p69
    %p72 = scmp.ne.s32.totalorder %s57, %s71
    %p73 = scmp.eq.s32.totalorder %s26, 0
    %p74 = por %p72, %p73
    %s76 = sadd.s32 %s75, 1
    %p79 = scmp.eq.s32.totalorder %s20, 3
    %p80 = scmp.ne.s32.totalorder %s75, %s77
    %p81 = scmp.eq.s32.totalorder %s20, 0
    %p82 = por %p80, %p81
    %p83 = scmp.ne.s32.totalorder %s75, %s77
    %p84 = scmp.eq.s32.totalorder %s25, 3
    %p85 = por %p83, %p84
    %p86 = scmp.ne.s32.totalorder %s77, %s78
    %p87 = scmp.eq.s32.totalorder %s25, 0
    %p88 = por %p86, %p87
    %p89 = scmp.ne.s32.totalorder %s77, %s78
    %p90 = scmp.eq.s32.totalorder %s26, 3
    %p91 = por %p89, %p90
    %p93 = scmp.ne.s32.totalorder %s78, %s92
    %p94 = scmp.eq.s32.totalorder %s26, 0
    %p95 = por %p93, %p94
    %s97 = sadd.s32 %s96, 1
    %p100 = scmp.eq.s32.totalorder %s20, 3
    %p101 = scmp.ne.s32.totalorder %s96, %s98
    %p102 = scmp.eq.s32.totalorder %s20, 0
    %p103 = por %p101, %p102
    %p104 = scmp.ne.s32.totalorder %s96, %s98
    %p105 = scmp.eq.s32.totalorder %s25, 3
    %p106 = por %p104, %p105
    %p107 = scmp.ne.s32.totalorder %s98, %s99
    %p108 = scmp.eq.s32.totalorder %s25, 0
    %p109 = por %p107, %p108
    %p110 = scmp.ne.s32.totalorder %s98, %s99
    %p111 = scmp.eq.s32.totalorder %s26, 3
    %p112 = por %p110, %p111
    %p114 = scmp.ne.s32.totalorder %s99, %s113
    %p115 = scmp.eq.s32.totalorder %s26, 0
    %p116 = por %p114, %p115
    %s118 = sadd.s32 %s117, 1
    %p121 = scmp.eq.s32.totalorder %s20, 3
    %p122 = scmp.ne.s32.totalorder %s117, %s119
    %p123 = scmp.eq.s32.totalorder %s20, 0
    %p124 = por %p122, %p123
    %p125 = scmp.ne.s32.totalorder %s117, %s119
    %p126 = scmp.eq.s32.totalorder %s25, 3
    %p127 = por %p125, %p126
    %p128 = scmp.ne.s32.totalorder %s119, %s120
    %p129 = scmp.eq.s32.totalorder %s25, 0
    %p130 = por %p128, %p129
    %p131 = scmp.ne.s32.totalorder %s119, %s120
    %p132 = scmp.eq.s32.totalorder %s26, 3
    %p133 = por %p131, %p132
    %p135 = scmp.ne.s32.totalorder %s120, %s134
    %p136 = scmp.eq.s32.totalorder %s26, 0
    %p137 = por %p135, %p136
    %s139 = sadd.s32 %s138, 1
    %p142 = scmp.eq.s32.totalorder %s20, 3
    %p143 = scmp.ne.s32.totalorder %s138, %s140
    %p144 = scmp.eq.s32.totalorder %s20, 0
    %p145 = por %p143, %p144
    %p146 = scmp.ne.s32.totalorder %s138, %s140
    %p147 = scmp.eq.s32.totalorder %s25, 3
    %p148 = por %p146, %p147
    %p149 = scmp.ne.s32.totalorder %s140, %s141
    %p150 = scmp.eq.s32.totalorder %s25, 0
    %p151 = por %p149, %p150
    %p152 = scmp.ne.s32.totalorder %s140, %s141
    %p153 = scmp.eq.s32.totalorder %s26, 3
    %p154 = por %p152, %p153
    %p156 = scmp.ne.s32.totalorder %s141, %s155
    %p157 = scmp.eq.s32.totalorder %s26, 0
    %p158 = por %p156, %p157
    %s160 = sadd.s32 %s159, 1
    %p163 = scmp.eq.s32.totalorder %s20, 3
    %p164 = scmp.ne.s32.totalorder %s159, %s161
    %p165 = scmp.eq.s32.totalorder %s20, 0
    %p166 = por %p164, %p165
    %p167 = scmp.ne.s32.totalorder %s159, %s161
    %p168 = scmp.eq.s32.totalorder %s25, 3
    %p169 = por %p167, %p168
    %p170 = scmp.ne.s32.totalorder %s161, %s162
    %p171 = scmp.eq.s32.totalorder %s25, 0
    %p172 = por %p170, %p171
    %p173 = scmp.ne.s32.totalorder %s161, %s162
    %p174 = scmp.eq.s32.totalorder %s26, 3
    %p175 = por %p173, %p174
    %p177 = scmp.ne.s32.totalorder %s162, %s176
    %p178 = scmp.eq.s32.totalorder %s26, 0
    %p179 = por %p177, %p178
    %s181 = sadd.s32 %s180, 1
    %p184 = scmp.eq.s32.totalorder %s20, 3
    %p185 = scmp.ne.s32.totalorder %s180, %s182
    %p186 = scmp.eq.s32.totalorder %s20, 0
    %p187 = por %p185, %p186
    %p188 = scmp.ne.s32.totalorder %s180, %s182
    %p189 = scmp.eq.s32.totalorder %s25, 3
    %p190 = por %p188, %p189
    %p191 = scmp.ne.s32.totalorder %s182, %s183
    %p192 = scmp.eq.s32.totalorder %s25, 0
    %p193 = por %p191, %p192
    %p194 = scmp.ne.s32.totalorder %s182, %s183
    %p195 = scmp.eq.s32.totalorder %s26, 3
    %p196 = por %p194, %p195
    %p198 = scmp.ne.s32.totalorder %s183, %s197
    %p199 = scmp.eq.s32.totalorder %s26, 0
    %p200 = por %p198, %p199
    %s202 = sadd.s32 %s201, 1
    %p205 = scmp.eq.s32.totalorder %s20, 3
    %p206 = scmp.ne.s32.totalorder %s201, %s203
    %p207 = scmp.eq.s32.totalorder %s20, 0
    %p208 = por %p206, %p207
    %p209 = scmp.ne.s32.totalorder %s201, %s203
    %p210 = scmp.eq.s32.totalorder %s25, 3
    %p211 = por %p209, %p210
    %p212 = scmp.ne.s32.totalorder %s203, %s204
    %p213 = scmp.eq.s32.totalorder %s25, 0
    %p214 = por %p212, %p213
    %p215 = scmp.ne.s32.totalorder %s203, %s204
    %p216 = scmp.eq.s32.totalorder %s26, 3
    %p217 = por %p215, %p216
    %p219 = scmp.ne.s32.totalorder %s204, %s218
    %p220 = scmp.eq.s32.totalorder %s26, 0
    %p221 = por %p219, %p220
    %s223 = sadd.s32 %s222, 1
    %p226 = scmp.eq.s32.totalorder %s20, 3
    %p227 = scmp.ne.s32.totalorder %s222, %s224
    %p228 = scmp.eq.s32.totalorder %s20, 0
    %p229 = por %p227, %p228
    %p230 = scmp.ne.s32.totalorder %s222, %s224
    %p231 = scmp.eq.s32.totalorder %s25, 3
    %p232 = por %p230, %p231
    %p233 = scmp.ne.s32.totalorder %s224, %s225
    %p234 = scmp.eq.s32.totalorder %s25, 0
    %p235 = por %p233, %p234
    %p236 = scmp.ne.s32.totalorder %s224, %s225
    %p237 = scmp.eq.s32.totalorder %s26, 3
    %p238 = por %p236, %p237
    %p240 = scmp.ne.s32.totalorder %s225, %s239
    %p241 = scmp.eq.s32.totalorder %s26, 0
    %p242 = por %p240, %p241
    %s244 = sadd.s32 %s243, 1
    %p247 = scmp.eq.s32.totalorder %s20, 3
    %p248 = scmp.ne.s32.totalorder %s243, %s245
    %p249 = scmp.eq.s32.totalorder %s20, 0
    %p250 = por %p248, %p249
    %p251 = scmp.ne.s32.totalorder %s243, %s245
    %p252 = scmp.eq.s32.totalorder %s25, 3
    %p253 = por %p251, %p252
    %p254 = scmp.ne.s32.totalorder %s245, %s246
    %p255 = scmp.eq.s32.totalorder %s25, 0
    %p256 = por %p254, %p255
    %p257 = scmp.ne.s32.totalorder %s245, %s246
    %p258 = scmp.eq.s32.totalorder %s26, 3
    %p259 = por %p257, %p258
    %p261 = scmp.ne.s32.totalorder %s246, %s260
    %p262 = scmp.eq.s32.totalorder %s26, 0
    %p263 = por %p261, %p262
    %s265 = sadd.s32 %s264, 1
    %p268 = scmp.eq.s32.totalorder %s20, 3
    %p269 = scmp.ne.s32.totalorder %s264, %s266
    %p270 = scmp.eq.s32.totalorder %s20, 0
    %p271 = por %p269, %p270
    %p272 = scmp.ne.s32.totalorder %s264, %s266
    %p273 = scmp.eq.s32.totalorder %s25, 3
    %p274 = por %p272, %p273
    %p275 = scmp.ne.s32.totalorder %s266, %s267
    %p276 = scmp.eq.s32.totalorder %s25, 0
    %p277 = por %p275, %p276
    %p278 = scmp.ne.s32.totalorder %s266, %s267
    %p279 = scmp.eq.s32.totalorder %s26, 3
    %p280 = por %p278, %p279
    %p282 = scmp.ne.s32.totalorder %s267, %s281
    %p283 = scmp.eq.s32.totalorder %s26, 0
    %p284 = por %p282, %p283
    %s286 = sadd.s32 %s285, 1
    %p289 = scmp.eq.s32.totalorder %s20, 3
    %p290 = scmp.ne.s32.totalorder %s285, %s287
    %p291 = scmp.eq.s32.totalorder %s20, 0
    %p292 = por %p290, %p291
    %p293 = scmp.ne.s32.totalorder %s285, %s287
    %p294 = scmp.eq.s32.totalorder %s25, 3
    %p295 = por %p293, %p294
    %p296 = scmp.ne.s32.totalorder %s287, %s288
    %p297 = scmp.eq.s32.totalorder %s25, 0
    %p298 = por %p296, %p297
    %p299 = scmp.ne.s32.totalorder %s287, %s288
    %p300 = scmp.eq.s32.totalorder %s26, 3
    %p301 = por %p299, %p300
    %p303 = scmp.ne.s32.totalorder %s288, %s302
    %p304 = scmp.eq.s32.totalorder %s26, 0
    %p305 = por %p303, %p304
    %s307 = sadd.s32 %s306, 1
    %p310 = scmp.eq.s32.totalorder %s20, 3
    %p311 = scmp.ne.s32.totalorder %s306, %s308
    %p312 = scmp.eq.s32.totalorder %s20, 0
    %p313 = por %p311, %p312
    %p314 = scmp.ne.s32.totalorder %s306, %s308
    %p315 = scmp.eq.s32.totalorder %s25, 3
    %p316 = por %p314, %p315
    %p317 = scmp.ne.s32.totalorder %s308, %s309
    %p318 = scmp.eq.s32.totalorder %s25, 0
    %p319 = por %p317, %p318
    %p320 = scmp.ne.s32.totalorder %s308, %s309
    %p321 = scmp.eq.s32.totalorder %s26, 3
    %p322 = por %p320, %p321
    %p324 = scmp.ne.s32.totalorder %s309, %s323
    %p325 = scmp.eq.s32.totalorder %s26, 0
    %p326 = por %p324, %p325
    %s327 = ssub.s32 %s20, %s27
    %p328 = scmp.eq.s32.totalorder %s327, 0
    %s330 = sadd.s32 %s329, 1
    %s331 = scalar_select %p328, %s329, %s330
    %p334 = pneg %p328
    %p335 = scmp.eq.s32.totalorder %s20, 3
    %p336 = por %p334, %p335
    %p337 = scmp.ne.s32.totalorder %s329, %s332
    %p338 = scmp.eq.s32.totalorder %s20, 0
    %p339 = por %p337, %p338
    %p340 = scmp.ne.s32.totalorder %s329, %s332
    %p341 = scmp.eq.s32.totalorder %s25, 3
    %p342 = por %p340, %p341
    %p343 = scmp.ne.s32.totalorder %s332, %s333
    %p344 = scmp.eq.s32.totalorder %s25, 0
    %p345 = por %p343, %p344
    %p346 = scmp.ne.s32.totalorder %s332, %s333
    %p347 = scmp.eq.s32.totalorder %s26, 3
    %p348 = por %p346, %p347
    %p350 = scmp.ne.s32.totalorder %s333, %s349
    %p351 = scmp.eq.s32.totalorder %s26, 0
    %p352 = por %p350, %p351
    %p353 = scmp.le.s32.totalorder 1, %s20
    %p354 = scmp.lt.s32.totalorder %s20, 5
    %p355 = pnand %p353, %p354
    %p356 = pneg %p355
    // Predicated region
    $region9: #{svfe_forward.7} parent=5 // pred_check
      _
    $region10: #{svfe_forward.7} parent=5 // pred_check_branch
      %358 = sbr.rel (%p355) target = $region12
    $region11: #{svfe_forward.7} parent=5 // pred_region
      %s359 = ssub.s32 %s20, 1
      // Predicated region
      $region13: #{svfe_forward.7} parent=11 // pred_check
        %p360 = pneg %p67
      $region14: #{svfe_forward.7} parent=11 // pred_check_branch
        %362 = sbr.rel (%p360) target = $region16
      $region15: #{svfe_forward.7} parent=11 // pred_region
        _
      $region16: #{svfe_forward.7} parent=11 // pred_fallthru
        _
      // Predicated region
      $region17: #{svfe_forward.7} parent=11 // pred_check
        %p363 = pneg %p88
      $region18: #{svfe_forward.7} parent=11 // pred_check_branch
        %365 = sbr.rel (%p363) target = $region20
      $region19: #{svfe_forward.7} parent=11 // pred_region
        _
      $region20: #{svfe_forward.7} parent=11 // pred_fallthru
        _
      // Predicated region
      $region21: #{svfe_forward.7} parent=11 // pred_check
        %p366 = pneg %p109
      $region22: #{svfe_forward.7} parent=11 // pred_check_branch
        %368 = sbr.rel (%p366) target = $region24
      $region23: #{svfe_forward.7} parent=11 // pred_region
        _
      $region24: #{svfe_forward.7} parent=11 // pred_fallthru
        _
      // Predicated region
      $region25: #{svfe_forward.7} parent=11 // pred_check
        %p369 = pneg %p130
      $region26: #{svfe_forward.7} parent=11 // pred_check_branch
        %371 = sbr.rel (%p369) target = $region28
      $region27: #{svfe_forward.7} parent=11 // pred_region
        _
      $region28: #{svfe_forward.7} parent=11 // pred_fallthru
        _
      // Predicated region
      $region29: #{svfe_forward.7} parent=11 // pred_check
        %p372 = pneg %p151
      $region30: #{svfe_forward.7} parent=11 // pred_check_branch
        %374 = sbr.rel (%p372) target = $region32
      $region31: #{svfe_forward.7} parent=11 // pred_region
        _
      $region32: #{svfe_forward.7} parent=11 // pred_fallthru
        _
      // Predicated region
      $region33: #{svfe_forward.7} parent=11 // pred_check
        %p375 = pneg %p172
      $region34: #{svfe_forward.7} parent=11 // pred_check_branch
        %377 = sbr.rel (%p375) target = $region36
      $region35: #{svfe_forward.7} parent=11 // pred_region
        _
      $region36: #{svfe_forward.7} parent=11 // pred_fallthru
        _
      // Predicated region
      $region37: #{svfe_forward.7} parent=11 // pred_check
        %p378 = pneg %p193
      $region38: #{svfe_forward.7} parent=11 // pred_check_branch
        %380 = sbr.rel (%p378) target = $region40
      $region39: #{svfe_forward.7} parent=11 // pred_region
        _
      $region40: #{svfe_forward.7} parent=11 // pred_fallthru
        _
      // Predicated region
      $region41: #{svfe_forward.7} parent=11 // pred_check
        %p381 = pneg %p214
      $region42: #{svfe_forward.7} parent=11 // pred_check_branch
        %383 = sbr.rel (%p381) target = $region44
      $region43: #{svfe_forward.7} parent=11 // pred_region
        _
      $region44: #{svfe_forward.7} parent=11 // pred_fallthru
        _
      // Predicated region
      $region45: #{svfe_forward.7} parent=11 // pred_check
        %p384 = pneg %p235
      $region46: #{svfe_forward.7} parent=11 // pred_check_branch
        %386 = sbr.rel (%p384) target = $region48
      $region47: #{svfe_forward.7} parent=11 // pred_region
        _
      $region48: #{svfe_forward.7} parent=11 // pred_fallthru
        _
      // Predicated region
      $region49: #{svfe_forward.7} parent=11 // pred_check
        %p387 = pneg %p256
      $region50: #{svfe_forward.7} parent=11 // pred_check_branch
        %389 = sbr.rel (%p387) target = $region52
      $region51: #{svfe_forward.7} parent=11 // pred_region
        _
      $region52: #{svfe_forward.7} parent=11 // pred_fallthru
        _
      // Predicated region
      $region53: #{svfe_forward.7} parent=11 // pred_check
        %p390 = pneg %p277
      $region54: #{svfe_forward.7} parent=11 // pred_check_branch
        %392 = sbr.rel (%p390) target = $region56
      $region55: #{svfe_forward.7} parent=11 // pred_region
        _
      $region56: #{svfe_forward.7} parent=11 // pred_fallthru
        _
      // Predicated region
      $region57: #{svfe_forward.7} parent=11 // pred_check
        %p393 = pneg %p298
      $region58: #{svfe_forward.7} parent=11 // pred_check_branch
        %395 = sbr.rel (%p393) target = $region60
      $region59: #{svfe_forward.7} parent=11 // pred_region
        _
      $region60: #{svfe_forward.7} parent=11 // pred_fallthru
        _
      // Predicated region
      $region61: #{svfe_forward.7} parent=11 // pred_check
        %p396 = pneg %p319
      $region62: #{svfe_forward.7} parent=11 // pred_check_branch
        %398 = sbr.rel (%p396) target = $region64
      $region63: #{svfe_forward.7} parent=11 // pred_region
        _
      $region64: #{svfe_forward.7} parent=11 // pred_fallthru
        _
    $region12: #{svfe_forward.7} parent=5 // pred_fallthru
      _
    %p399 = scmp.lt.s32.totalorder %s20, 4
    // Predicated region
    $region65: #{svfe_forward.7} parent=5 // pred_check
      %p400 = pneg %p399
    $region66: #{svfe_forward.7} parent=5 // pred_check_branch
      %402 = sbr.rel (%p400) target = $region68
    $region67: #{svfe_forward.7} parent=5 // pred_region
      // Predicated region
      $region69: #{svfe_forward.7} parent=67 // pred_check
        %p403 = pneg %p40
      $region70: #{svfe_forward.7} parent=67 // pred_check_branch
        %405 = sbr.rel (%p403) target = $region72
      $region71: #{svfe_forward.7} parent=67 // pred_region
        %s406 = smul.u32 2, %s20
        %p407 = scmp.lt.s32.totalorder %s406, 7
        %s408 = scalar_select %p407, %s406, 7
        %s409 = smul.addr %s408, 8
        %s410 = scalar_lea.vmem %s0, %s409
        %s411 = smul.u32 2, %s20
      $region72: #{svfe_forward.7} parent=67 // pred_fallthru
        _
    $region68: #{svfe_forward.7} parent=5 // pred_fallthru
      _
    %p412 = scmp.le.s32.totalorder 1, %s20
    %p413 = scmp.lt.s32.totalorder %s20, 5
    %p414 = pnand %p412, %p413
    %p415 = pneg %p414
    // Predicated region
    $region73: #{svfe_forward.7} parent=5 // pred_check
      _
    $region74: #{svfe_forward.7} parent=5 // pred_check_branch
      %417 = sbr.rel (%p414) target = $region76
    $region75: #{svfe_forward.7} parent=5 // pred_region
      %s418 = ssub.s32 %s20, 1
      %s419 = smul.u32 2, %s25
      %p420 = scmp.lt.s32.totalorder %s419, 7
      %s421 = scalar_select %p420, %s419, 7
      %s422 = smul.addr %s421, 8
      %s423 = scalar_lea.vmem %s0, %s422
      %p424 = pneg %p46
      %p425 = pneg %p43
      %p426 = pneg %p67
      %p427 = pneg %p64
      %p428 = pneg %p88
      %p429 = pneg %p85
      %p430 = pneg %p109
      %p431 = pneg %p106
      %p432 = pneg %p130
      %p433 = pneg %p127
      %p434 = pneg %p151
      %p435 = pneg %p148
      %p436 = pneg %p172
      %p437 = pneg %p169
      %p438 = pneg %p193
      %p439 = pneg %p190
      %p440 = pneg %p214
      %p441 = pneg %p211
      %p442 = pneg %p235
      %p443 = pneg %p232
      %p444 = pneg %p256
      %p445 = pneg %p253
      %p446 = pneg %p277
      %p447 = pneg %p274
      %p448 = pneg %p298
      %p449 = pneg %p295
      %p450 = pneg %p319
      %p451 = pneg %p316
      %p452 = pneg %p345
      %p453 = pneg %p342
      %s454 = smul.u32 2, %s25
      %p455 = scmp.lt.s32.totalorder %s454, 7
      %s456 = scalar_select %p455, %s454, 7
      %s457 = smul.addr %s456, 8
      %s458 = scalar_lea.vmem %s14, %s457
      %s459 = smul.u32 2, %s25
      %p460 = scmp.lt.s32.totalorder %s459, 7
      %s461 = scalar_select %p460, %s459, 7
      %s462 = smul.addr %s461, 8
      %s463 = scalar_lea.vmem %s0, %s462
      %s464 = smul.u32 2, %s25
      %s465 = smul.u32 2, %s25
      %p466 = scmp.lt.s32.totalorder %s465, 7
      %s467 = scalar_select %p466, %s465, 7
      %s468 = smul.addr %s467, 8
      %s469 = scalar_lea.vmem %s14, %s468
      %s470 = smul.u32 2, %s25
      %v471 = vld [vmem:[%s463] sm:$0xff]
      %v472 = vld [vmem:[%s463 + $0x8] sm:$0xff]
      %v473 = vld [vmem:[%s1] sm:$0xff]
      %v474 = vld [vmem:[%s1 + $0x8] sm:$0xff]
      %v475 = vld [vmem:[%s1 + $0x10] sm:$0xff]
      %v476 = vld [vmem:[%s1 + $0x18] sm:$0xff]
      %v477 = vld [vmem:[%s1 + $0x20] sm:$0xff]
      %v478 = vld [vmem:[%s1 + $0x28] sm:$0xff]
      %v479 = vld [vmem:[%s1 + $0x30] sm:$0xff]
      %v480 = vld [vmem:[%s1 + $0x38] sm:$0xff]
      %vm481 = vcmask 523264
      %v483 = vsel %vm481, %v471, 0
      %v486 = vsel %vm481, %v472, 0
      %488 = vmatprep.subr.mxu0 0.0
      %489 = vmatpush1.msra.mxu0 0.0
      %490 = vmatprep.subr.mxu0 0.0
      %491 = vmatpush1.msra.mxu0 0.0
      %492 = vmatprep.subr.mxu0 0.0
      %493 = vmatpush1.msra.mxu0 0.0
      %494 = vmatprep.subr.mxu0 0.0
      %495 = vmatpush1.msra.mxu0 0.0
      %496 = vmatprep.subr.mxu0 0.0
      %497 = vmatpush1.msra.mxu0 0.0
      %498 = vmatprep.subr.mxu0 0.0
      %499 = vmatpush1.msra.mxu0 0.0
      %500 = vmatprep.subr.mxu0 0.0
      %501 = vmatpush1.msra.mxu0 0.0
      %502 = vmatprep.subr.mxu0 0.0
      %503 = vmatpush1.msra.mxu0 0.0
      %504 = vmatprep.subr.mxu0 0.0
      %505 = vmatpush1.msra.mxu0 %v480
      %506 = vmatprep.subr.mxu0 0.0
      %507 = vmatpush1.msra.mxu0 %v479
      %508 = vmatprep.subr.mxu0 0.0
      %509 = vmatpush1.msra.mxu0 %v478
      %510 = vmatprep.subr.mxu0 0.0
      %511 = vmatpush1.msra.mxu0 %v477
      %512 = vmatprep.subr.mxu0 0.0
      %513 = vmatpush1.msra.mxu0 %v476
      %514 = vmatprep.subr.mxu0 0.0
      %515 = vmatpush1.msra.mxu0 %v475
      %516 = vmatprep.subr.mxu0 0.0
      %517 = vmatpush1.msra.mxu0 %v474
      %518 = vmatprep.subr.mxu0 0.0
      %519 = vmatpush1.msra.mxu0 %v473
      %520 = vmatprep.subr.mxu0 0.0
      %521 = vmatpush2.msra.mxu0 0.0
      %522 = vmatprep.subr.mxu0 0.0
      %523 = vmatpush2.msra.mxu0 0.0
      %524 = vmatprep.subr.mxu0 0.0
      %525 = vmatpush2.msra.mxu0 0.0
      %526 = vmatprep.subr.mxu0 0.0
      %527 = vmatpush2.msra.mxu0 0.0
      %528 = vmatprep.subr.mxu0 0.0
      %529 = vmatpush2.msra.mxu0 0.0
      %530 = vmatprep.subr.mxu0 0.0
      %531 = vmatpush2.msra.mxu0 0.0
      %532 = vmatprep.subr.mxu0 0.0
      %533 = vmatpush2.msra.mxu0 0.0
      %534 = vmatprep.subr.mxu0 0.0
      %535 = vmatpush2.msra.mxu0 0.0
      %536 = vmatprep.subr.mxu0 0.0
      %537 = vmatpush2.msra.mxu0 0.0
      %538 = vmatprep.subr.mxu0 0.0
      %539 = vmatpush2.msra.mxu0 0.0
      %540 = vmatprep.subr.mxu0 0.0
      %541 = vmatpush2.msra.mxu0 0.0
      %542 = vmatprep.subr.mxu0 0.0
      %543 = vmatpush2.msra.mxu0 0.0
      %544 = vmatprep.subr.mxu0 0.0
      %545 = vmatpush2.msra.mxu0 0.0
      %546 = vmatprep.subr.mxu0 0.0
      %547 = vmatpush2.msra.mxu0 0.0
      %548 = vmatprep.subr.mxu0 0.0
      %549 = vmatpush2.msra.mxu0 0.0
      %550 = vmatprep.subr.mxu0 0.0
      %551 = vmatpush2.msra.mxu0 0.0
      %552 = vmatprep.mubr.f32.mxu0 0.0
      %553 = vmatmul.mubr.f32.gmra.mxu0 %v483
      %v554 = vpop.f32.mrf.mxu0
      %v555 = vadd.f32 0.0, %v554
      %v556 = vpop.f32.mrf.mxu0
      %557 = vmatprep.mubr.f32.mxu0 0.0
      %558 = vmatmul.mubr.f32.gmra.mxu0 %v486
      %v559 = vpop.f32.mrf.mxu0
      %v560 = vadd.f32 0.0, %v559
      %v561 = vpop.f32.mrf.mxu0
      %562 = vdwg.mxu0
      %v563 = vld [vmem:[%s2] sm:$0x1]
      %v565 = vlaneseq
      %v566 = vshrl.u32 %v565, 7
      %v567 = vsub.s32 0, %v566
      %v568 = vrot.slane %v563, %v567
      %v570 = vmul.f32 %v555, %v568
      %v571 = vmul.f32 %v560, %v568
      %v572 = vld [vmem:[%s3] sm:$0x1]
      %v574 = vlaneseq
      %v575 = vshrl.u32 %v574, 7
      %v576 = vsub.s32 0, %v575
      %v577 = vrot.slane %v572, %v576
      %v579 = vadd.f32 %v570, %v577
      %v580 = vadd.f32 %v571, %v577
      %v581 = vmax.f32 %v579, 0.0
      %v582 = vmax.f32 %v580, 0.0
      %583 = vrot.lane.b32.xlu0 %v581, 16
      %v584 = vpop.permute.xlu0 %583
      %585 = vrot.lane.b32.xlu0 %v582, 16
      %v586 = vpop.permute.xlu0 %585
      %v587 = vmax.f32 %v581, %v584
      %v588 = vmax.f32 %v582, %v586
      %589 = vrot.lane.b32.xlu0 %v587, 32
      %v590 = vpop.permute.xlu0 %589
      %591 = vrot.lane.b32.xlu0 %v588, 32
      %v592 = vpop.permute.xlu0 %591
      %v593 = vmax.f32 %v587, %v590
      %v594 = vmax.f32 %v588, %v592
      %595 = vrot.lane.b32.xlu0 %v593, 64
      %v596 = vpop.permute.xlu0 %595
      %597 = vrot.lane.b32.xlu0 %v594, 64
      %v598 = vpop.permute.xlu0 %597
      %v599 = vmax.f32 %v593, %v596
      %v600 = vmax.f32 %v594, %v598
      %v601 = vld [vmem:[%s4] sm:$0xff]
      %v602 = vld [vmem:[%s4 + $0x8] sm:$0xff]
      %v603 = vld [vmem:[%s4 + $0x10] sm:$0xff]
      %v604 = vld [vmem:[%s4 + $0x18] sm:$0xff]
      %v605 = vld [vmem:[%s4 + $0x20] sm:$0xff]
      %v606 = vld [vmem:[%s4 + $0x28] sm:$0xff]
      %v607 = vld [vmem:[%s4 + $0x30] sm:$0xff]
      %v608 = vld [vmem:[%s4 + $0x38] sm:$0xff]
      %v609 = vld [vmem:[%s4 + $0x40] sm:$0xff]
      %v610 = vld [vmem:[%s4 + $0x48] sm:$0xff]
      %v611 = vld [vmem:[%s4 + $0x50] sm:$0xff]
      %v612 = vld [vmem:[%s4 + $0x58] sm:$0xff]
      %v613 = vld [vmem:[%s4 + $0x60] sm:$0xff]
      %v614 = vld [vmem:[%s4 + $0x68] sm:$0xff]
      %v615 = vld [vmem:[%s4 + $0x70] sm:$0xff]
      %v616 = vld [vmem:[%s4 + $0x78] sm:$0xff]
      %v617 = vld [vmem:[%s4 + $0x80] sm:$0xff]
      %v618 = vld [vmem:[%s4 + $0x88] sm:$0xff]
      %v619 = vld [vmem:[%s4 + $0x90] sm:$0xff]
      %v620 = vld [vmem:[%s4 + $0x98] sm:$0xff]
      %v621 = vld [vmem:[%s4 + $0xa0] sm:$0xff]
      %v622 = vld [vmem:[%s4 + $0xa8] sm:$0xff]
      %v623 = vld [vmem:[%s4 + $0xb0] sm:$0xff]
      %v624 = vld [vmem:[%s4 + $0xb8] sm:$0xff]
      %v625 = vld [vmem:[%s4 + $0xc0] sm:$0xff]
      %v626 = vld [vmem:[%s4 + $0xc8] sm:$0xff]
      %v627 = vld [vmem:[%s4 + $0xd0] sm:$0xff]
      %v628 = vld [vmem:[%s4 + $0xd8] sm:$0xff]
      %v629 = vld [vmem:[%s4 + $0xe0] sm:$0xff]
      %v630 = vld [vmem:[%s4 + $0xe8] sm:$0xff]
      %v631 = vld [vmem:[%s4 + $0xf0] sm:$0xff]
      %v632 = vld [vmem:[%s4 + $0xf8] sm:$0xff]
      %v633 = vld [vmem:[%s4 + $0x100] sm:$0xff]
      %v634 = vld [vmem:[%s4 + $0x108] sm:$0xff]
      %v635 = vld [vmem:[%s4 + $0x110] sm:$0xff]
      %v636 = vld [vmem:[%s4 + $0x118] sm:$0xff]
      %v637 = vld [vmem:[%s4 + $0x120] sm:$0xff]
      %v638 = vld [vmem:[%s4 + $0x128] sm:$0xff]
      %v639 = vld [vmem:[%s4 + $0x130] sm:$0xff]
      %v640 = vld [vmem:[%s4 + $0x138] sm:$0xff]
      %v641 = vld [vmem:[%s4 + $0x140] sm:$0xff]
      %v642 = vld [vmem:[%s4 + $0x148] sm:$0xff]
      %v643 = vld [vmem:[%s4 + $0x150] sm:$0xff]
      %v644 = vld [vmem:[%s4 + $0x158] sm:$0xff]
      %v645 = vld [vmem:[%s4 + $0x160] sm:$0xff]
      %v646 = vld [vmem:[%s4 + $0x168] sm:$0xff]
      %v647 = vld [vmem:[%s4 + $0x170] sm:$0xff]
      %v648 = vld [vmem:[%s4 + $0x178] sm:$0xff]
      %v649 = vld [vmem:[%s4 + $0x180] sm:$0xff]
      %v650 = vld [vmem:[%s4 + $0x188] sm:$0xff]
      %v651 = vld [vmem:[%s4 + $0x190] sm:$0xff]
      %v652 = vld [vmem:[%s4 + $0x198] sm:$0xff]
      %v653 = vld [vmem:[%s4 + $0x1a0] sm:$0xff]
      %v654 = vld [vmem:[%s4 + $0x1a8] sm:$0xff]
      %v655 = vld [vmem:[%s4 + $0x1b0] sm:$0xff]
      %v656 = vld [vmem:[%s4 + $0x1b8] sm:$0xff]
      %v657 = vld [vmem:[%s4 + $0x1c0] sm:$0xff]
      %v658 = vld [vmem:[%s4 + $0x1c8] sm:$0xff]
      %v659 = vld [vmem:[%s4 + $0x1d0] sm:$0xff]
      %v660 = vld [vmem:[%s4 + $0x1d8] sm:$0xff]
      %v661 = vld [vmem:[%s4 + $0x1e0] sm:$0xff]
      %v662 = vld [vmem:[%s4 + $0x1e8] sm:$0xff]
      %v663 = vld [vmem:[%s4 + $0x1f0] sm:$0xff]
      %v664 = vld [vmem:[%s4 + $0x1f8] sm:$0xff]
      %v665 = vld [vmem:[%s5] sm:$0xff]
      %v666 = vld [vmem:[%s5 + $0x8] sm:$0xff]
      %v667 = vld [vmem:[%s5 + $0x10] sm:$0xff]
      %v668 = vld [vmem:[%s5 + $0x18] sm:$0xff]
      %v669 = vld [vmem:[%s5 + $0x20] sm:$0xff]
      %v670 = vld [vmem:[%s5 + $0x28] sm:$0xff]
      %v671 = vld [vmem:[%s5 + $0x30] sm:$0xff]
      %v672 = vld [vmem:[%s5 + $0x38] sm:$0xff]
      %vm673 = vcmask 130048
      %v675 = vsel %vm673, %v599, 0
      %v678 = vsel %vm673, %v600, 0
      %680 = vmatprep.subr.mxu0 0.0
      %681 = vmatpush1.msra.mxu0 0.0
      %682 = vmatprep.subr.mxu0 0.0
      %683 = vmatpush1.msra.mxu0 0.0
      %684 = vmatprep.subr.mxu0 0.0
      %685 = vmatpush1.msra.mxu0 0.0
      %686 = vmatprep.subr.mxu0 0.0
      %687 = vmatpush1.msra.mxu0 0.0
      %688 = vmatprep.subr.mxu0 0.0
      %689 = vmatpush1.msra.mxu0 0.0
      %690 = vmatprep.subr.mxu0 0.0
      %691 = vmatpush1.msra.mxu0 0.0
      %692 = vmatprep.subr.mxu0 0.0
      %693 = vmatpush1.msra.mxu0 0.0
      %694 = vmatprep.subr.mxu0 0.0
      %695 = vmatpush1.msra.mxu0 0.0
      %696 = vmatprep.subr.mxu0 0.0
      %697 = vmatpush1.msra.mxu0 0.0
      %698 = vmatprep.subr.mxu0 0.0
      %699 = vmatpush1.msra.mxu0 0.0
      %700 = vmatprep.subr.mxu0 0.0
      %701 = vmatpush1.msra.mxu0 0.0
      %702 = vmatprep.subr.mxu0 0.0
      %703 = vmatpush1.msra.mxu0 0.0
      %704 = vmatprep.subr.mxu0 0.0
      %705 = vmatpush1.msra.mxu0 0.0
      %706 = vmatprep.subr.mxu0 0.0
      %707 = vmatpush1.msra.mxu0 0.0
      %708 = vmatprep.subr.mxu0 %v670
      %709 = vmatpush1.msra.mxu0 %v669
      %710 = vmatprep.subr.mxu0 %v666
      %711 = vmatpush1.msra.mxu0 %v665
      %712 = vmatprep.subr.mxu0 0.0
      %713 = vmatpush2.msra.mxu0 0.0
      %714 = vmatprep.subr.mxu0 0.0
      %715 = vmatpush2.msra.mxu0 0.0
      %716 = vmatprep.subr.mxu0 0.0
      %717 = vmatpush2.msra.mxu0 0.0
      %718 = vmatprep.subr.mxu0 0.0
      %719 = vmatpush2.msra.mxu0 0.0
      %720 = vmatprep.subr.mxu0 0.0
      %721 = vmatpush2.msra.mxu0 0.0
      %722 = vmatprep.subr.mxu0 0.0
      %723 = vmatpush2.msra.mxu0 0.0
      %724 = vmatprep.subr.mxu0 0.0
      %725 = vmatpush2.msra.mxu0 0.0
      %726 = vmatprep.subr.mxu0 0.0
      %727 = vmatpush2.msra.mxu0 0.0
      %728 = vmatprep.subr.mxu0 0.0
      %729 = vmatpush2.msra.mxu0 0.0
      %730 = vmatprep.subr.mxu0 0.0
      %731 = vmatpush2.msra.mxu0 0.0
      %732 = vmatprep.subr.mxu0 0.0
      %733 = vmatpush2.msra.mxu0 0.0
      %734 = vmatprep.subr.mxu0 0.0
      %735 = vmatpush2.msra.mxu0 0.0
      %736 = vmatprep.subr.mxu0 0.0
      %737 = vmatpush2.msra.mxu0 0.0
      %738 = vmatprep.subr.mxu0 0.0
      %739 = vmatpush2.msra.mxu0 0.0
      %740 = vmatprep.subr.mxu0 0.0
      %741 = vmatpush2.msra.mxu0 0.0
      %742 = vmatprep.subr.mxu0 0.0
      %743 = vmatpush2.msra.mxu0 0.0
      %744 = vmatprep.mubr.f32.mxu0 0.0
      %745 = vmatmul.mubr.f32.gmra.mxu0 %v675
      %v746 = vpop.f32.mrf.mxu0
      %v747 = vadd.f32 0.0, %v746
      %v748 = vpop.f32.mrf.mxu0
      %v749 = vadd.f32 0.0, %v748
      %750 = vmatprep.mubr.f32.mxu0 0.0
      %751 = vmatmul.mubr.f32.gmra.mxu0 %v678
      %v752 = vpop.f32.mrf.mxu0
      %v753 = vadd.f32 0.0, %v752
      %v754 = vpop.f32.mrf.mxu0
      %v755 = vadd.f32 0.0, %v754
      %756 = vdwg.mxu0
      %757 = vmatprep.subr.mxu0 0.0
      %758 = vmatpush1.msra.mxu0 0.0
      %759 = vmatprep.subr.mxu0 0.0
      %760 = vmatpush1.msra.mxu0 0.0
      %761 = vmatprep.subr.mxu0 0.0
      %762 = vmatpush1.msra.mxu0 0.0
      %763 = vmatprep.subr.mxu0 0.0
      %764 = vmatpush1.msra.mxu0 0.0
      %765 = vmatprep.subr.mxu0 0.0
      %766 = vmatpush1.msra.mxu0 0.0
      %767 = vmatprep.subr.mxu0 0.0
      %768 = vmatpush1.msra.mxu0 0.0
      %769 = vmatprep.subr.mxu0 0.0
      %770 = vmatpush1.msra.mxu0 0.0
      %771 = vmatprep.subr.mxu0 0.0
      %772 = vmatpush1.msra.mxu0 0.0
      %773 = vmatprep.subr.mxu0 0.0
      %774 = vmatpush1.msra.mxu0 0.0
      %775 = vmatprep.subr.mxu0 0.0
      %776 = vmatpush1.msra.mxu0 0.0
      %777 = vmatprep.subr.mxu0 0.0
      %778 = vmatpush1.msra.mxu0 0.0
      %779 = vmatprep.subr.mxu0 0.0
      %780 = vmatpush1.msra.mxu0 0.0
      %781 = vmatprep.subr.mxu0 0.0
      %782 = vmatpush1.msra.mxu0 0.0
      %783 = vmatprep.subr.mxu0 0.0
      %784 = vmatpush1.msra.mxu0 0.0
      %785 = vmatprep.subr.mxu0 %v672
      %786 = vmatpush1.msra.mxu0 %v671
      %787 = vmatprep.subr.mxu0 %v668
      %788 = vmatpush1.msra.mxu0 %v667
      %789 = vmatprep.subr.mxu0 0.0
      %790 = vmatpush2.msra.mxu0 0.0
      %791 = vmatprep.subr.mxu0 0.0
      %792 = vmatpush2.msra.mxu0 0.0
      %793 = vmatprep.subr.mxu0 0.0
      %794 = vmatpush2.msra.mxu0 0.0
      %795 = vmatprep.subr.mxu0 0.0
      %796 = vmatpush2.msra.mxu0 0.0
      %797 = vmatprep.subr.mxu0 0.0
      %798 = vmatpush2.msra.mxu0 0.0
      %799 = vmatprep.subr.mxu0 0.0
      %800 = vmatpush2.msra.mxu0 0.0
      %801 = vmatprep.subr.mxu0 0.0
      %802 = vmatpush2.msra.mxu0 0.0
      %803 = vmatprep.subr.mxu0 0.0
      %804 = vmatpush2.msra.mxu0 0.0
      %805 = vmatprep.subr.mxu0 0.0
      %806 = vmatpush2.msra.mxu0 0.0
      %807 = vmatprep.subr.mxu0 0.0
      %808 = vmatpush2.msra.mxu0 0.0
      %809 = vmatprep.subr.mxu0 0.0
      %810 = vmatpush2.msra.mxu0 0.0
      %811 = vmatprep.subr.mxu0 0.0
      %812 = vmatpush2.msra.mxu0 0.0
      %813 = vmatprep.subr.mxu0 0.0
      %814 = vmatpush2.msra.mxu0 0.0
      %815 = vmatprep.subr.mxu0 0.0
      %816 = vmatpush2.msra.mxu0 0.0
      %817 = vmatprep.subr.mxu0 0.0
      %818 = vmatpush2.msra.mxu0 0.0
      %819 = vmatprep.subr.mxu0 0.0
      %820 = vmatpush2.msra.mxu0 0.0
      %821 = vmatprep.mubr.f32.mxu0 0.0
      %822 = vmatmul.mubr.f32.gmra.mxu0 %v675
      %v823 = vpop.f32.mrf.mxu0
      %v824 = vadd.f32 0.0, %v823
      %v825 = vpop.f32.mrf.mxu0
      %v826 = vadd.f32 0.0, %v825
      %827 = vmatprep.mubr.f32.mxu0 0.0
      %828 = vmatmul.mubr.f32.gmra.mxu0 %v678
      %v829 = vpop.f32.mrf.mxu0
      %v830 = vadd.f32 0.0, %v829
      %v831 = vpop.f32.mrf.mxu0
      %v832 = vadd.f32 0.0, %v831
      %833 = vdwg.mxu0
      %834 = vmatprep.subr.mxu0 %v662
      %835 = vmatpush1.msra.mxu0 %v661
      %836 = vmatprep.subr.mxu0 %v658
      %837 = vmatpush1.msra.mxu0 %v657
      %838 = vmatprep.subr.mxu0 %v654
      %839 = vmatpush1.msra.mxu0 %v653
      %840 = vmatprep.subr.mxu0 %v650
      %841 = vmatpush1.msra.mxu0 %v649
      %842 = vmatprep.subr.mxu0 %v646
      %843 = vmatpush1.msra.mxu0 %v645
      %844 = vmatprep.subr.mxu0 %v642
      %845 = vmatpush1.msra.mxu0 %v641
      %846 = vmatprep.subr.mxu0 %v638
      %847 = vmatpush1.msra.mxu0 %v637
      %848 = vmatprep.subr.mxu0 %v634
      %849 = vmatpush1.msra.mxu0 %v633
      %850 = vmatprep.subr.mxu0 %v630
      %851 = vmatpush1.msra.mxu0 %v629
      %852 = vmatprep.subr.mxu0 %v626
      %853 = vmatpush1.msra.mxu0 %v625
      %854 = vmatprep.subr.mxu0 %v622
      %855 = vmatpush1.msra.mxu0 %v621
      %856 = vmatprep.subr.mxu0 %v618
      %857 = vmatpush1.msra.mxu0 %v617
      %858 = vmatprep.subr.mxu0 %v614
      %859 = vmatpush1.msra.mxu0 %v613
      %860 = vmatprep.subr.mxu0 %v610
      %861 = vmatpush1.msra.mxu0 %v609
      %862 = vmatprep.subr.mxu0 %v606
      %863 = vmatpush1.msra.mxu0 %v605
      %864 = vmatprep.subr.mxu0 %v602
      %865 = vmatpush1.msra.mxu0 %v601
      %866 = vmatprep.subr.mxu0 0.0
      %867 = vmatpush2.msra.mxu0 0.0
      %868 = vmatprep.subr.mxu0 0.0
      %869 = vmatpush2.msra.mxu0 0.0
      %870 = vmatprep.subr.mxu0 0.0
      %871 = vmatpush2.msra.mxu0 0.0
      %872 = vmatprep.subr.mxu0 0.0
      %873 = vmatpush2.msra.mxu0 0.0
      %874 = vmatprep.subr.mxu0 0.0
      %875 = vmatpush2.msra.mxu0 0.0
      %876 = vmatprep.subr.mxu0 0.0
      %877 = vmatpush2.msra.mxu0 0.0
      %878 = vmatprep.subr.mxu0 0.0
      %879 = vmatpush2.msra.mxu0 0.0
      %880 = vmatprep.subr.mxu0 0.0
      %881 = vmatpush2.msra.mxu0 0.0
      %882 = vmatprep.subr.mxu0 0.0
      %883 = vmatpush2.msra.mxu0 0.0
      %884 = vmatprep.subr.mxu0 0.0
      %885 = vmatpush2.msra.mxu0 0.0
      %886 = vmatprep.subr.mxu0 0.0
      %887 = vmatpush2.msra.mxu0 0.0
      %888 = vmatprep.subr.mxu0 0.0
      %889 = vmatpush2.msra.mxu0 0.0
      %890 = vmatprep.subr.mxu0 0.0
      %891 = vmatpush2.msra.mxu0 0.0
      %892 = vmatprep.subr.mxu0 0.0
      %893 = vmatpush2.msra.mxu0 0.0
      %894 = vmatprep.subr.mxu0 0.0
      %895 = vmatpush2.msra.mxu0 0.0
      %896 = vmatprep.subr.mxu0 0.0
      %897 = vmatpush2.msra.mxu0 0.0
      %898 = vmatprep.mubr.f32.mxu0 0.0
      %899 = vmatmul.mubr.f32.gmra.mxu0 %v581
      %v900 = vpop.f32.mrf.mxu0
      %v901 = vadd.f32 %v747, %v900
      %v902 = vpop.f32.mrf.mxu0
      %v903 = vadd.f32 %v749, %v902
      %904 = vmatprep.mubr.f32.mxu0 0.0
      %905 = vmatmul.mubr.f32.gmra.mxu0 %v582
      %v906 = vpop.f32.mrf.mxu0
      %v907 = vadd.f32 %v753, %v906
      %v908 = vpop.f32.mrf.mxu0
      %v909 = vadd.f32 %v755, %v908
      %910 = vdwg.mxu0
      %911 = vmatprep.subr.mxu0 %v664
      %912 = vmatpush1.msra.mxu0 %v663
      %913 = vmatprep.subr.mxu0 %v660
      %914 = vmatpush1.msra.mxu0 %v659
      %915 = vmatprep.subr.mxu0 %v656
      %916 = vmatpush1.msra.mxu0 %v655
      %917 = vmatprep.subr.mxu0 %v652
      %918 = vmatpush1.msra.mxu0 %v651
      %919 = vmatprep.subr.mxu0 %v648
      %920 = vmatpush1.msra.mxu0 %v647
      %921 = vmatprep.subr.mxu0 %v644
      %922 = vmatpush1.msra.mxu0 %v643
      %923 = vmatprep.subr.mxu0 %v640
      %924 = vmatpush1.msra.mxu0 %v639
      %925 = vmatprep.subr.mxu0 %v636
      %926 = vmatpush1.msra.mxu0 %v635
      %927 = vmatprep.subr.mxu0 %v632
      %928 = vmatpush1.msra.mxu0 %v631
      %929 = vmatprep.subr.mxu0 %v628
      %930 = vmatpush1.msra.mxu0 %v627
      %931 = vmatprep.subr.mxu0 %v624
      %932 = vmatpush1.msra.mxu0 %v623
      %933 = vmatprep.subr.mxu0 %v620
      %934 = vmatpush1.msra.mxu0 %v619
      %935 = vmatprep.subr.mxu0 %v616
      %936 = vmatpush1.msra.mxu0 %v615
      %937 = vmatprep.subr.mxu0 %v612
      %938 = vmatpush1.msra.mxu0 %v611
      %939 = vmatprep.subr.mxu0 %v608
      %940 = vmatpush1.msra.mxu0 %v607
      %941 = vmatprep.subr.mxu0 %v604
      %942 = vmatpush1.msra.mxu0 %v603
      %943 = vmatprep.subr.mxu0 0.0
      %944 = vmatpush2.msra.mxu0 0.0
      %945 = vmatprep.subr.mxu0 0.0
      %946 = vmatpush2.msra.mxu0 0.0
      %947 = vmatprep.subr.mxu0 0.0
      %948 = vmatpush2.msra.mxu0 0.0
      %949 = vmatprep.subr.mxu0 0.0
      %950 = vmatpush2.msra.mxu0 0.0
      %951 = vmatprep.subr.mxu0 0.0
      %952 = vmatpush2.msra.mxu0 0.0
      %953 = vmatprep.subr.mxu0 0.0
      %954 = vmatpush2.msra.mxu0 0.0
      %955 = vmatprep.subr.mxu0 0.0
      %956 = vmatpush2.msra.mxu0 0.0
      %957 = vmatprep.subr.mxu0 0.0
      %958 = vmatpush2.msra.mxu0 0.0
      %959 = vmatprep.subr.mxu0 0.0
      %960 = vmatpush2.msra.mxu0 0.0
      %961 = vmatprep.subr.mxu0 0.0
      %962 = vmatpush2.msra.mxu0 0.0
      %963 = vmatprep.subr.mxu0 0.0
      %964 = vmatpush2.msra.mxu0 0.0
      %965 = vmatprep.subr.mxu0 0.0
      %966 = vmatpush2.msra.mxu0 0.0
      %967 = vmatprep.subr.mxu0 0.0
      %968 = vmatpush2.msra.mxu0 0.0
      %969 = vmatprep.subr.mxu0 0.0
      %970 = vmatpush2.msra.mxu0 0.0
      %971 = vmatprep.subr.mxu0 0.0
      %972 = vmatpush2.msra.mxu0 0.0
      %973 = vmatprep.subr.mxu0 0.0
      %974 = vmatpush2.msra.mxu0 0.0
      %975 = vmatprep.mubr.f32.mxu0 0.0
      %976 = vmatmul.mubr.f32.gmra.mxu0 %v581
      %v977 = vpop.f32.mrf.mxu0
      %v978 = vadd.f32 %v824, %v977
      %v979 = vpop.f32.mrf.mxu0
      %v980 = vadd.f32 %v826, %v979
      %981 = vmatprep.mubr.f32.mxu0 0.0
      %982 = vmatmul.mubr.f32.gmra.mxu0 %v582
      %v983 = vpop.f32.mrf.mxu0
      %v984 = vadd.f32 %v830, %v983
      %v985 = vpop.f32.mrf.mxu0
      %v986 = vadd.f32 %v832, %v985
      %987 = vdwg.mxu0
      %v988 = vld [vmem:[%s6] sm:$0xff]
      %v989 = vld [vmem:[%s6 + $0x8] sm:$0xff]
      %v990 = vld [vmem:[%s6 + $0x10] sm:$0xff]
      %v991 = vld [vmem:[%s6 + $0x18] sm:$0xff]
      %v992 = vld [vmem:[%s6 + $0x20] sm:$0xff]
      %v993 = vld [vmem:[%s6 + $0x28] sm:$0xff]
      %v994 = vld [vmem:[%s6 + $0x30] sm:$0xff]
      %v995 = vld [vmem:[%s6 + $0x38] sm:$0xff]
      %v996 = vld [vmem:[%s6 + $0x40] sm:$0xff]
      %v997 = vld [vmem:[%s6 + $0x48] sm:$0xff]
      %v998 = vld [vmem:[%s6 + $0x50] sm:$0xff]
      %v999 = vld [vmem:[%s6 + $0x58] sm:$0xff]
      %v1000 = vld [vmem:[%s6 + $0x60] sm:$0xff]
      %v1001 = vld [vmem:[%s6 + $0x68] sm:$0xff]
      %v1002 = vld [vmem:[%s6 + $0x70] sm:$0xff]
      %v1003 = vld [vmem:[%s6 + $0x78] sm:$0xff]
      %v1004 = vld [vmem:[%s6 + $0x80] sm:$0xff]
      %v1005 = vld [vmem:[%s6 + $0x88] sm:$0xff]
      %v1006 = vld [vmem:[%s6 + $0x90] sm:$0xff]
      %v1007 = vld [vmem:[%s6 + $0x98] sm:$0xff]
      %v1008 = vld [vmem:[%s6 + $0xa0] sm:$0xff]
      %v1009 = vld [vmem:[%s6 + $0xa8] sm:$0xff]
      %v1010 = vld [vmem:[%s6 + $0xb0] sm:$0xff]
      %v1011 = vld [vmem:[%s6 + $0xb8] sm:$0xff]
      %v1012 = vld [vmem:[%s6 + $0xc0] sm:$0xff]
      %v1013 = vld [vmem:[%s6 + $0xc8] sm:$0xff]
      %v1014 = vld [vmem:[%s6 + $0xd0] sm:$0xff]
      %v1015 = vld [vmem:[%s6 + $0xd8] sm:$0xff]
      %v1016 = vld [vmem:[%s6 + $0xe0] sm:$0xff]
      %v1017 = vld [vmem:[%s6 + $0xe8] sm:$0xff]
      %v1018 = vld [vmem:[%s6 + $0xf0] sm:$0xff]
      %v1019 = vld [vmem:[%s6 + $0xf8] sm:$0xff]
      %1020 = vmatprep.subr.mxu0 0.0
      %1021 = vmatpush1.msra.mxu0 0.0
      %1022 = vmatprep.subr.mxu0 0.0
      %1023 = vmatpush1.msra.mxu0 0.0
      %1024 = vmatprep.subr.mxu0 0.0
      %1025 = vmatpush1.msra.mxu0 0.0
      %1026 = vmatprep.subr.mxu0 0.0
      %1027 = vmatpush1.msra.mxu0 0.0
      %1028 = vmatprep.subr.mxu0 0.0
      %1029 = vmatpush1.msra.mxu0 0.0
      %1030 = vmatprep.subr.mxu0 0.0
      %1031 = vmatpush1.msra.mxu0 0.0
      %1032 = vmatprep.subr.mxu0 0.0
      %1033 = vmatpush1.msra.mxu0 0.0
      %1034 = vmatprep.subr.mxu0 0.0
      %1035 = vmatpush1.msra.mxu0 0.0
      %1036 = vmatprep.subr.mxu0 %v1017
      %1037 = vmatpush1.msra.mxu0 %v1016
      %1038 = vmatprep.subr.mxu0 %v1013
      %1039 = vmatpush1.msra.mxu0 %v1012
      %1040 = vmatprep.subr.mxu0 %v1009
      %1041 = vmatpush1.msra.mxu0 %v1008
      %1042 = vmatprep.subr.mxu0 %v1005
      %1043 = vmatpush1.msra.mxu0 %v1004
      %1044 = vmatprep.subr.mxu0 %v1001
      %1045 = vmatpush1.msra.mxu0 %v1000
      %1046 = vmatprep.subr.mxu0 %v997
      %1047 = vmatpush1.msra.mxu0 %v996
      %1048 = vmatprep.subr.mxu0 %v993
      %1049 = vmatpush1.msra.mxu0 %v992
      %1050 = vmatprep.subr.mxu0 %v989
      %1051 = vmatpush1.msra.mxu0 %v988
      %1052 = vmatprep.subr.mxu0 0.0
      %1053 = vmatpush2.msra.mxu0 0.0
      %1054 = vmatprep.subr.mxu0 0.0
      %1055 = vmatpush2.msra.mxu0 0.0
      %1056 = vmatprep.subr.mxu0 0.0
      %1057 = vmatpush2.msra.mxu0 0.0
      %1058 = vmatprep.subr.mxu0 0.0
      %1059 = vmatpush2.msra.mxu0 0.0
      %1060 = vmatprep.subr.mxu0 0.0
      %1061 = vmatpush2.msra.mxu0 0.0
      %1062 = vmatprep.subr.mxu0 0.0
      %1063 = vmatpush2.msra.mxu0 0.0
      %1064 = vmatprep.subr.mxu0 0.0
      %1065 = vmatpush2.msra.mxu0 0.0
      %1066 = vmatprep.subr.mxu0 0.0
      %1067 = vmatpush2.msra.mxu0 0.0
      %1068 = vmatprep.subr.mxu0 0.0
      %1069 = vmatpush2.msra.mxu0 0.0
      %1070 = vmatprep.subr.mxu0 0.0
      %1071 = vmatpush2.msra.mxu0 0.0
      %1072 = vmatprep.subr.mxu0 0.0
      %1073 = vmatpush2.msra.mxu0 0.0
      %1074 = vmatprep.subr.mxu0 0.0
      %1075 = vmatpush2.msra.mxu0 0.0
      %1076 = vmatprep.subr.mxu0 0.0
      %1077 = vmatpush2.msra.mxu0 0.0
      %1078 = vmatprep.subr.mxu0 0.0
      %1079 = vmatpush2.msra.mxu0 0.0
      %1080 = vmatprep.subr.mxu0 0.0
      %1081 = vmatpush2.msra.mxu0 0.0
      %1082 = vmatprep.subr.mxu0 0.0
      %1083 = vmatpush2.msra.mxu0 0.0
      %1084 = vmatprep.mubr.f32.mxu0 0.0
      %1085 = vmatmul.mubr.f32.gmra.mxu0 %v483
      %v1086 = vpop.f32.mrf.mxu0
      %v1087 = vadd.f32 0.0, %v1086
      %v1088 = vpop.f32.mrf.mxu0
      %v1089 = vadd.f32 0.0, %v1088
      %1090 = vmatprep.mubr.f32.mxu0 0.0
      %1091 = vmatmul.mubr.f32.gmra.mxu0 %v486
      %v1092 = vpop.f32.mrf.mxu0
      %v1093 = vadd.f32 0.0, %v1092
      %v1094 = vpop.f32.mrf.mxu0
      %v1095 = vadd.f32 0.0, %v1094
      %1096 = vdwg.mxu0
      %1097 = vmatprep.subr.mxu0 0.0
      %1098 = vmatpush1.msra.mxu0 0.0
      %1099 = vmatprep.subr.mxu0 0.0
      %1100 = vmatpush1.msra.mxu0 0.0
      %1101 = vmatprep.subr.mxu0 0.0
      %1102 = vmatpush1.msra.mxu0 0.0
      %1103 = vmatprep.subr.mxu0 0.0
      %1104 = vmatpush1.msra.mxu0 0.0
      %1105 = vmatprep.subr.mxu0 0.0
      %1106 = vmatpush1.msra.mxu0 0.0
      %1107 = vmatprep.subr.mxu0 0.0
      %1108 = vmatpush1.msra.mxu0 0.0
      %1109 = vmatprep.subr.mxu0 0.0
      %1110 = vmatpush1.msra.mxu0 0.0
      %1111 = vmatprep.subr.mxu0 0.0
      %1112 = vmatpush1.msra.mxu0 0.0
      %1113 = vmatprep.subr.mxu0 %v1019
      %1114 = vmatpush1.msra.mxu0 %v1018
      %1115 = vmatprep.subr.mxu0 %v1015
      %1116 = vmatpush1.msra.mxu0 %v1014
      %1117 = vmatprep.subr.mxu0 %v1011
      %1118 = vmatpush1.msra.mxu0 %v1010
      %1119 = vmatprep.subr.mxu0 %v1007
      %1120 = vmatpush1.msra.mxu0 %v1006
      %1121 = vmatprep.subr.mxu0 %v1003
      %1122 = vmatpush1.msra.mxu0 %v1002
      %1123 = vmatprep.subr.mxu0 %v999
      %1124 = vmatpush1.msra.mxu0 %v998
      %1125 = vmatprep.subr.mxu0 %v995
      %1126 = vmatpush1.msra.mxu0 %v994
      %1127 = vmatprep.subr.mxu0 %v991
      %1128 = vmatpush1.msra.mxu0 %v990
      %1129 = vmatprep.subr.mxu0 0.0
      %1130 = vmatpush2.msra.mxu0 0.0
      %1131 = vmatprep.subr.mxu0 0.0
      %1132 = vmatpush2.msra.mxu0 0.0
      %1133 = vmatprep.subr.mxu0 0.0
      %1134 = vmatpush2.msra.mxu0 0.0
      %1135 = vmatprep.subr.mxu0 0.0
      %1136 = vmatpush2.msra.mxu0 0.0
      %1137 = vmatprep.subr.mxu0 0.0
      %1138 = vmatpush2.msra.mxu0 0.0
      %1139 = vmatprep.subr.mxu0 0.0
      %1140 = vmatpush2.msra.mxu0 0.0
      %1141 = vmatprep.subr.mxu0 0.0
      %1142 = vmatpush2.msra.mxu0 0.0
      %1143 = vmatprep.subr.mxu0 0.0
      %1144 = vmatpush2.msra.mxu0 0.0
      %1145 = vmatprep.subr.mxu0 0.0
      %1146 = vmatpush2.msra.mxu0 0.0
      %1147 = vmatprep.subr.mxu0 0.0
      %1148 = vmatpush2.msra.mxu0 0.0
      %1149 = vmatprep.subr.mxu0 0.0
      %1150 = vmatpush2.msra.mxu0 0.0
      %1151 = vmatprep.subr.mxu0 0.0
      %1152 = vmatpush2.msra.mxu0 0.0
      %1153 = vmatprep.subr.mxu0 0.0
      %1154 = vmatpush2.msra.mxu0 0.0
      %1155 = vmatprep.subr.mxu0 0.0
      %1156 = vmatpush2.msra.mxu0 0.0
      %1157 = vmatprep.subr.mxu0 0.0
      %1158 = vmatpush2.msra.mxu0 0.0
      %1159 = vmatprep.subr.mxu0 0.0
      %1160 = vmatpush2.msra.mxu0 0.0
      %1161 = vmatprep.mubr.f32.mxu0 0.0
      %1162 = vmatmul.mubr.f32.gmra.mxu0 %v483
      %v1163 = vpop.f32.mrf.mxu0
      %v1164 = vadd.f32 0.0, %v1163
      %v1165 = vpop.f32.mrf.mxu0
      %v1166 = vadd.f32 0.0, %v1165
      %1167 = vmatprep.mubr.f32.mxu0 0.0
      %1168 = vmatmul.mubr.f32.gmra.mxu0 %v486
      %v1169 = vpop.f32.mrf.mxu0
      %v1170 = vadd.f32 0.0, %v1169
      %v1171 = vpop.f32.mrf.mxu0
      %v1172 = vadd.f32 0.0, %v1171
      %1173 = vdwg.mxu0
      %v1174 = vmul.f32 %v901, %v1087
      %v1175 = vmul.f32 %v903, %v1089
      %v1176 = vmul.f32 %v978, %v1164
      %v1177 = vmul.f32 %v980, %v1166
      %v1178 = vmul.f32 %v907, %v1093
      %v1179 = vmul.f32 %v909, %v1095
      %v1180 = vmul.f32 %v984, %v1170
      %v1181 = vmul.f32 %v986, %v1172
      %v1182 = vld [vmem:[%s7] sm:$0xf]
      %v1184 = vlaneseq
      %v1185 = vshrl.u32 %v1184, 7
      %v1186 = vsub.s32 0, %v1185
      %v1187 = vrot.slane %v1182, %v1186
      %v1188 = vlaneseq
      %v1189 = vshrl.u32 %v1188, 7
      %v1190 = vsub.s32 1, %v1189
      %v1191 = vrot.slane %v1182, %v1190
      %v1192 = vlaneseq
      %v1193 = vshrl.u32 %v1192, 7
      %v1194 = vsub.s32 2, %v1193
      %v1195 = vrot.slane %v1182, %v1194
      %v1196 = vlaneseq
      %v1197 = vshrl.u32 %v1196, 7
      %v1198 = vsub.s32 3, %v1197
      %v1199 = vrot.slane %v1182, %v1198
      %v1204 = vmul.f32 %v1174, %v1187
      %v1205 = vmul.f32 %v1175, %v1191
      %v1206 = vmul.f32 %v1176, %v1195
      %v1207 = vmul.f32 %v1177, %v1199
      %v1208 = vmul.f32 %v1178, %v1187
      %v1209 = vmul.f32 %v1179, %v1191
      %v1210 = vmul.f32 %v1180, %v1195
      %v1211 = vmul.f32 %v1181, %v1199
      %v1212 = vld [vmem:[%s8] sm:$0xf]
      %v1214 = vlaneseq
      %v1215 = vshrl.u32 %v1214, 7
      %v1216 = vsub.s32 0, %v1215
      %v1217 = vrot.slane %v1212, %v1216
      %v1218 = vlaneseq
      %v1219 = vshrl.u32 %v1218, 7
      %v1220 = vsub.s32 1, %v1219
      %v1221 = vrot.slane %v1212, %v1220
      %v1222 = vlaneseq
      %v1223 = vshrl.u32 %v1222, 7
      %v1224 = vsub.s32 2, %v1223
      %v1225 = vrot.slane %v1212, %v1224
      %v1226 = vlaneseq
      %v1227 = vshrl.u32 %v1226, 7
      %v1228 = vsub.s32 3, %v1227
      %v1229 = vrot.slane %v1212, %v1228
      %v1234 = vadd.f32 %v1204, %v1217
      %v1235 = vadd.f32 %v1205, %v1221
      %v1236 = vadd.f32 %v1206, %v1225
      %v1237 = vadd.f32 %v1207, %v1229
      %v1238 = vadd.f32 %v1208, %v1217
      %v1239 = vadd.f32 %v1209, %v1221
      %v1240 = vadd.f32 %v1210, %v1225
      %v1241 = vadd.f32 %v1211, %v1229
      %v1242 = vmax.f32 %v1234, 0.0
      %v1243 = vmax.f32 %v1235, 0.0
      %v1244 = vmax.f32 %v1236, 0.0
      %v1245 = vmax.f32 %v1237, 0.0
      %v1246 = vmax.f32 %v1238, 0.0
      %v1247 = vmax.f32 %v1239, 0.0
      %v1248 = vmax.f32 %v1240, 0.0
      %v1249 = vmax.f32 %v1241, 0.0
      %1250 = vrot.lane.b32.xlu0 %v1242, 64
      %v1251 = vpop.permute.xlu0 %1250
      %1252 = vrot.lane.b32.xlu0 %v1246, 64
      %v1253 = vpop.permute.xlu0 %1252
      %1254 = vrot.lane.b32.xlu0 %v1243, 64
      %v1255 = vpop.permute.xlu0 %1254
      %1256 = vrot.lane.b32.xlu0 %v1247, 64
      %v1257 = vpop.permute.xlu0 %1256
      %1258 = vrot.lane.b32.xlu0 %v1244, 64
      %v1259 = vpop.permute.xlu0 %1258
      %1260 = vrot.lane.b32.xlu0 %v1248, 64
      %v1261 = vpop.permute.xlu0 %1260
      %1262 = vrot.lane.b32.xlu0 %v1245, 64
      %v1263 = vpop.permute.xlu0 %1262
      %1264 = vrot.lane.b32.xlu0 %v1249, 64
      %v1265 = vpop.permute.xlu0 %1264
      %v1266 = vlaneseq
      %v1267 = vand.u32 %v1266, 127
      %vm1268 = vcmp.lt.s32.totalorder %v1267, 64
      %v1269 = vsel %vm1268, %v1259, %v1263
      %v1270 = vsel %vm1268, %v1261, %v1265
      %v1271 = vsel %vm1268, %v1255, %v1259
      %v1272 = vsel %vm1268, %v1257, %v1261
      %v1273 = vsel %vm1268, %v1251, %v1255
      %v1274 = vsel %vm1268, %v1253, %v1257
      %v1275 = vsel %vm1268, %v1263, %v1251
      %v1276 = vsel %vm1268, %v1265, %v1253
      %v1277 = vmax.f32 %v1242, %v1275
      %v1278 = vmax.f32 %v1243, %v1273
      %v1279 = vmax.f32 %v1244, %v1271
      %v1280 = vmax.f32 %v1245, %v1269
      %v1281 = vmax.f32 %v1246, %v1276
      %v1282 = vmax.f32 %v1247, %v1274
      %v1283 = vmax.f32 %v1248, %v1272
      %v1284 = vmax.f32 %v1249, %v1270
      %v1285 = vmax.f32 %v1277, %v1280
      %v1286 = vmax.f32 %v1279, %v1278
      %v1287 = vmax.f32 %v1281, %v1284
      %v1288 = vmax.f32 %v1283, %v1282
      %v1289 = vmax.f32 %v1285, %v1286
      %v1290 = vmax.f32 %v1287, %v1288
      %v1291 = vld [vmem:[%s9] sm:$0xff]
      %v1292 = vld [vmem:[%s9 + $0x8] sm:$0xff]
      %v1293 = vld [vmem:[%s9 + $0x10] sm:$0xff]
      %v1294 = vld [vmem:[%s9 + $0x18] sm:$0xff]
      %v1295 = vld [vmem:[%s9 + $0x20] sm:$0xff]
      %v1296 = vld [vmem:[%s9 + $0x28] sm:$0xff]
      %v1297 = vld [vmem:[%s9 + $0x30] sm:$0xff]
      %v1298 = vld [vmem:[%s9 + $0x38] sm:$0xff]
      %v1299 = vld [vmem:[%s10] sm:$0xff]
      %v1300 = vld [vmem:[%s10 + $0x8] sm:$0xff]
      %v1301 = vld [vmem:[%s10 + $0x10] sm:$0xff]
      %v1302 = vld [vmem:[%s10 + $0x18] sm:$0xff]
      %v1303 = vld [vmem:[%s10 + $0x20] sm:$0xff]
      %v1304 = vld [vmem:[%s10 + $0x28] sm:$0xff]
      %v1305 = vld [vmem:[%s10 + $0x30] sm:$0xff]
      %v1306 = vld [vmem:[%s10 + $0x38] sm:$0xff]
      %v1308 = vsel %vm481, %v1289, 0
      %v1311 = vsel %vm481, %v1290, 0
      %1313 = vmatprep.subr.mxu0 0.0
      %1314 = vmatpush1.msra.mxu0 0.0
      %1315 = vmatprep.subr.mxu0 0.0
      %1316 = vmatpush1.msra.mxu0 0.0
      %1317 = vmatprep.subr.mxu0 0.0
      %1318 = vmatpush1.msra.mxu0 0.0
      %1319 = vmatprep.subr.mxu0 0.0
      %1320 = vmatpush1.msra.mxu0 0.0
      %1321 = vmatprep.subr.mxu0 0.0
      %1322 = vmatpush1.msra.mxu0 0.0
      %1323 = vmatprep.subr.mxu0 0.0
      %1324 = vmatpush1.msra.mxu0 0.0
      %1325 = vmatprep.subr.mxu0 0.0
      %1326 = vmatpush1.msra.mxu0 0.0
      %1327 = vmatprep.subr.mxu0 0.0
      %1328 = vmatpush1.msra.mxu0 0.0
      %1329 = vmatprep.subr.mxu0 0.0
      %1330 = vmatpush1.msra.mxu0 %v1306
      %1331 = vmatprep.subr.mxu0 0.0
      %1332 = vmatpush1.msra.mxu0 %v1305
      %1333 = vmatprep.subr.mxu0 0.0
      %1334 = vmatpush1.msra.mxu0 %v1304
      %1335 = vmatprep.subr.mxu0 0.0
      %1336 = vmatpush1.msra.mxu0 %v1303
      %1337 = vmatprep.subr.mxu0 0.0
      %1338 = vmatpush1.msra.mxu0 %v1302
      %1339 = vmatprep.subr.mxu0 0.0
      %1340 = vmatpush1.msra.mxu0 %v1301
      %1341 = vmatprep.subr.mxu0 0.0
      %1342 = vmatpush1.msra.mxu0 %v1300
      %1343 = vmatprep.subr.mxu0 0.0
      %1344 = vmatpush1.msra.mxu0 %v1299
      %1345 = vmatprep.subr.mxu0 0.0
      %1346 = vmatpush2.msra.mxu0 0.0
      %1347 = vmatprep.subr.mxu0 0.0
      %1348 = vmatpush2.msra.mxu0 0.0
      %1349 = vmatprep.subr.mxu0 0.0
      %1350 = vmatpush2.msra.mxu0 0.0
      %1351 = vmatprep.subr.mxu0 0.0
      %1352 = vmatpush2.msra.mxu0 0.0
      %1353 = vmatprep.subr.mxu0 0.0
      %1354 = vmatpush2.msra.mxu0 0.0
      %1355 = vmatprep.subr.mxu0 0.0
      %1356 = vmatpush2.msra.mxu0 0.0
      %1357 = vmatprep.subr.mxu0 0.0
      %1358 = vmatpush2.msra.mxu0 0.0
      %1359 = vmatprep.subr.mxu0 0.0
      %1360 = vmatpush2.msra.mxu0 0.0
      %1361 = vmatprep.subr.mxu0 0.0
      %1362 = vmatpush2.msra.mxu0 0.0
      %1363 = vmatprep.subr.mxu0 0.0
      %1364 = vmatpush2.msra.mxu0 0.0
      %1365 = vmatprep.subr.mxu0 0.0
      %1366 = vmatpush2.msra.mxu0 0.0
      %1367 = vmatprep.subr.mxu0 0.0
      %1368 = vmatpush2.msra.mxu0 0.0
      %1369 = vmatprep.subr.mxu0 0.0
      %1370 = vmatpush2.msra.mxu0 0.0
      %1371 = vmatprep.subr.mxu0 0.0
      %1372 = vmatpush2.msra.mxu0 0.0
      %1373 = vmatprep.subr.mxu0 0.0
      %1374 = vmatpush2.msra.mxu0 0.0
      %1375 = vmatprep.subr.mxu0 0.0
      %1376 = vmatpush2.msra.mxu0 0.0
      %1377 = vmatprep.mubr.f32.mxu0 0.0
      %1378 = vmatmul.mubr.f32.gmra.mxu0 %v1308
      %v1379 = vpop.f32.mrf.mxu0
      %v1380 = vadd.f32 0.0, %v1379
      %v1381 = vpop.f32.mrf.mxu0
      %1382 = vmatprep.mubr.f32.mxu0 0.0
      %1383 = vmatmul.mubr.f32.gmra.mxu0 %v1311
      %v1384 = vpop.f32.mrf.mxu0
      %v1385 = vadd.f32 0.0, %v1384
      %v1386 = vpop.f32.mrf.mxu0
      %1387 = vdwg.mxu0
      %v1388 = vld [vmem:[%s11] sm:$0xff]
      %v1389 = vld [vmem:[%s11 + $0x8] sm:$0xff]
      %v1390 = vld [vmem:[%s11 + $0x10] sm:$0xff]
      %v1391 = vld [vmem:[%s11 + $0x18] sm:$0xff]
      %v1392 = vld [vmem:[%s11 + $0x20] sm:$0xff]
      %v1393 = vld [vmem:[%s11 + $0x28] sm:$0xff]
      %v1394 = vld [vmem:[%s11 + $0x30] sm:$0xff]
      %v1395 = vld [vmem:[%s11 + $0x38] sm:$0xff]
      %v1396 = vld [vmem:[%s11 + $0x40] sm:$0xff]
      %v1397 = vld [vmem:[%s11 + $0x48] sm:$0xff]
      %v1398 = vld [vmem:[%s11 + $0x50] sm:$0xff]
      %v1399 = vld [vmem:[%s11 + $0x58] sm:$0xff]
      %v1400 = vld [vmem:[%s11 + $0x60] sm:$0xff]
      %v1401 = vld [vmem:[%s11 + $0x68] sm:$0xff]
      %v1402 = vld [vmem:[%s11 + $0x70] sm:$0xff]
      %v1403 = vld [vmem:[%s11 + $0x78] sm:$0xff]
      %v1404 = vld [vmem:[%s11 + $0x80] sm:$0xff]
      %v1405 = vld [vmem:[%s11 + $0x88] sm:$0xff]
      %v1406 = vld [vmem:[%s11 + $0x90] sm:$0xff]
      %v1407 = vld [vmem:[%s11 + $0x98] sm:$0xff]
      %v1408 = vld [vmem:[%s11 + $0xa0] sm:$0xff]
      %v1409 = vld [vmem:[%s11 + $0xa8] sm:$0xff]
      %v1410 = vld [vmem:[%s11 + $0xb0] sm:$0xff]
      %v1411 = vld [vmem:[%s11 + $0xb8] sm:$0xff]
      %v1412 = vld [vmem:[%s11 + $0xc0] sm:$0xff]
      %v1413 = vld [vmem:[%s11 + $0xc8] sm:$0xff]
      %v1414 = vld [vmem:[%s11 + $0xd0] sm:$0xff]
      %v1415 = vld [vmem:[%s11 + $0xd8] sm:$0xff]
      %v1416 = vld [vmem:[%s11 + $0xe0] sm:$0xff]
      %v1417 = vld [vmem:[%s11 + $0xe8] sm:$0xff]
      %v1418 = vld [vmem:[%s11 + $0xf0] sm:$0xff]
      %v1419 = vld [vmem:[%s11 + $0xf8] sm:$0xff]
      %v1420 = vld [vmem:[%s11 + $0x100] sm:$0xff]
      %v1421 = vld [vmem:[%s11 + $0x108] sm:$0xff]
      %v1422 = vld [vmem:[%s11 + $0x110] sm:$0xff]
      %v1423 = vld [vmem:[%s11 + $0x118] sm:$0xff]
      %v1424 = vld [vmem:[%s11 + $0x120] sm:$0xff]
      %v1425 = vld [vmem:[%s11 + $0x128] sm:$0xff]
      %v1426 = vld [vmem:[%s11 + $0x130] sm:$0xff]
      %v1427 = vld [vmem:[%s11 + $0x138] sm:$0xff]
      %v1428 = vld [vmem:[%s11 + $0x140] sm:$0xff]
      %v1429 = vld [vmem:[%s11 + $0x148] sm:$0xff]
      %v1430 = vld [vmem:[%s11 + $0x150] sm:$0xff]
      %v1431 = vld [vmem:[%s11 + $0x158] sm:$0xff]
      %v1432 = vld [vmem:[%s11 + $0x160] sm:$0xff]
      %v1433 = vld [vmem:[%s11 + $0x168] sm:$0xff]
      %v1434 = vld [vmem:[%s11 + $0x170] sm:$0xff]
      %v1435 = vld [vmem:[%s11 + $0x178] sm:$0xff]
      %v1436 = vld [vmem:[%s11 + $0x180] sm:$0xff]
      %v1437 = vld [vmem:[%s11 + $0x188] sm:$0xff]
      %v1438 = vld [vmem:[%s11 + $0x190] sm:$0xff]
      %v1439 = vld [vmem:[%s11 + $0x198] sm:$0xff]
      %v1440 = vld [vmem:[%s11 + $0x1a0] sm:$0xff]
      %v1441 = vld [vmem:[%s11 + $0x1a8] sm:$0xff]
      %v1442 = vld [vmem:[%s11 + $0x1b0] sm:$0xff]
      %v1443 = vld [vmem:[%s11 + $0x1b8] sm:$0xff]
      %v1444 = vld [vmem:[%s11 + $0x1c0] sm:$0xff]
      %v1445 = vld [vmem:[%s11 + $0x1c8] sm:$0xff]
      %v1446 = vld [vmem:[%s11 + $0x1d0] sm:$0xff]
      %v1447 = vld [vmem:[%s11 + $0x1d8] sm:$0xff]
      %v1448 = vld [vmem:[%s11 + $0x1e0] sm:$0xff]
      %v1449 = vld [vmem:[%s11 + $0x1e8] sm:$0xff]
      %v1450 = vld [vmem:[%s11 + $0x1f0] sm:$0xff]
      %v1451 = vld [vmem:[%s11 + $0x1f8] sm:$0xff]
      %1452 = vmatprep.subr.mxu0 0.0
      %1453 = vmatpush1.msra.mxu0 0.0
      %1454 = vmatprep.subr.mxu0 0.0
      %1455 = vmatpush1.msra.mxu0 0.0
      %1456 = vmatprep.subr.mxu0 0.0
      %1457 = vmatpush1.msra.mxu0 0.0
      %1458 = vmatprep.subr.mxu0 0.0
      %1459 = vmatpush1.msra.mxu0 0.0
      %1460 = vmatprep.subr.mxu0 0.0
      %1461 = vmatpush1.msra.mxu0 0.0
      %1462 = vmatprep.subr.mxu0 0.0
      %1463 = vmatpush1.msra.mxu0 0.0
      %1464 = vmatprep.subr.mxu0 0.0
      %1465 = vmatpush1.msra.mxu0 0.0
      %1466 = vmatprep.subr.mxu0 0.0
      %1467 = vmatpush1.msra.mxu0 0.0
      %1468 = vmatprep.subr.mxu0 %v1445
      %1469 = vmatpush1.msra.mxu0 %v1444
      %1470 = vmatprep.subr.mxu0 %v1437
      %1471 = vmatpush1.msra.mxu0 %v1436
      %1472 = vmatprep.subr.mxu0 %v1429
      %1473 = vmatpush1.msra.mxu0 %v1428
      %1474 = vmatprep.subr.mxu0 %v1421
      %1475 = vmatpush1.msra.mxu0 %v1420
      %1476 = vmatprep.subr.mxu0 %v1413
      %1477 = vmatpush1.msra.mxu0 %v1412
      %1478 = vmatprep.subr.mxu0 %v1405
      %1479 = vmatpush1.msra.mxu0 %v1404
      %1480 = vmatprep.subr.mxu0 %v1397
      %1481 = vmatpush1.msra.mxu0 %v1396
      %1482 = vmatprep.subr.mxu0 %v1389
      %1483 = vmatpush1.msra.mxu0 %v1388
      %1484 = vmatprep.subr.mxu0 0.0
      %1485 = vmatpush2.msra.mxu0 0.0
      %1486 = vmatprep.subr.mxu0 0.0
      %1487 = vmatpush2.msra.mxu0 0.0
      %1488 = vmatprep.subr.mxu0 0.0
      %1489 = vmatpush2.msra.mxu0 0.0
      %1490 = vmatprep.subr.mxu0 0.0
      %1491 = vmatpush2.msra.mxu0 0.0
      %1492 = vmatprep.subr.mxu0 0.0
      %1493 = vmatpush2.msra.mxu0 0.0
      %1494 = vmatprep.subr.mxu0 0.0
      %1495 = vmatpush2.msra.mxu0 0.0
      %1496 = vmatprep.subr.mxu0 0.0
      %1497 = vmatpush2.msra.mxu0 0.0
      %1498 = vmatprep.subr.mxu0 0.0
      %1499 = vmatpush2.msra.mxu0 0.0
      %1500 = vmatprep.subr.mxu0 0.0
      %1501 = vmatpush2.msra.mxu0 0.0
      %1502 = vmatprep.subr.mxu0 0.0
      %1503 = vmatpush2.msra.mxu0 0.0
      %1504 = vmatprep.subr.mxu0 0.0
      %1505 = vmatpush2.msra.mxu0 0.0
      %1506 = vmatprep.subr.mxu0 0.0
      %1507 = vmatpush2.msra.mxu0 0.0
      %1508 = vmatprep.subr.mxu0 0.0
      %1509 = vmatpush2.msra.mxu0 0.0
      %1510 = vmatprep.subr.mxu0 0.0
      %1511 = vmatpush2.msra.mxu0 0.0
      %1512 = vmatprep.subr.mxu0 0.0
      %1513 = vmatpush2.msra.mxu0 0.0
      %1514 = vmatprep.subr.mxu0 0.0
      %1515 = vmatpush2.msra.mxu0 0.0
      %1516 = vmatprep.mubr.f32.mxu0 0.0
      %1517 = vmatmul.mubr.f32.gmra.mxu0 %v483
      %v1518 = vpop.f32.mrf.mxu0
      %v1519 = vadd.f32 0.0, %v1518
      %v1520 = vpop.f32.mrf.mxu0
      %v1521 = vadd.f32 0.0, %v1520
      %1522 = vmatprep.mubr.f32.mxu0 0.0
      %1523 = vmatmul.mubr.f32.gmra.mxu0 %v486
      %v1524 = vpop.f32.mrf.mxu0
      %v1525 = vadd.f32 0.0, %v1524
      %v1526 = vpop.f32.mrf.mxu0
      %v1527 = vadd.f32 0.0, %v1526
      %1528 = vdwg.mxu0
      %1529 = vmatprep.subr.mxu0 0.0
      %1530 = vmatpush1.msra.mxu0 0.0
      %1531 = vmatprep.subr.mxu0 0.0
      %1532 = vmatpush1.msra.mxu0 0.0
      %1533 = vmatprep.subr.mxu0 0.0
      %1534 = vmatpush1.msra.mxu0 0.0
      %1535 = vmatprep.subr.mxu0 0.0
      %1536 = vmatpush1.msra.mxu0 0.0
      %1537 = vmatprep.subr.mxu0 0.0
      %1538 = vmatpush1.msra.mxu0 0.0
      %1539 = vmatprep.subr.mxu0 0.0
      %1540 = vmatpush1.msra.mxu0 0.0
      %1541 = vmatprep.subr.mxu0 0.0
      %1542 = vmatpush1.msra.mxu0 0.0
      %1543 = vmatprep.subr.mxu0 0.0
      %1544 = vmatpush1.msra.mxu0 0.0
      %1545 = vmatprep.subr.mxu0 %v1447
      %1546 = vmatpush1.msra.mxu0 %v1446
      %1547 = vmatprep.subr.mxu0 %v1439
      %1548 = vmatpush1.msra.mxu0 %v1438
      %1549 = vmatprep.subr.mxu0 %v1431
      %1550 = vmatpush1.msra.mxu0 %v1430
      %1551 = vmatprep.subr.mxu0 %v1423
      %1552 = vmatpush1.msra.mxu0 %v1422
      %1553 = vmatprep.subr.mxu0 %v1415
      %1554 = vmatpush1.msra.mxu0 %v1414
      %1555 = vmatprep.subr.mxu0 %v1407
      %1556 = vmatpush1.msra.mxu0 %v1406
      %1557 = vmatprep.subr.mxu0 %v1399
      %1558 = vmatpush1.msra.mxu0 %v1398
      %1559 = vmatprep.subr.mxu0 %v1391
      %1560 = vmatpush1.msra.mxu0 %v1390
      %1561 = vmatprep.subr.mxu0 0.0
      %1562 = vmatpush2.msra.mxu0 0.0
      %1563 = vmatprep.subr.mxu0 0.0
      %1564 = vmatpush2.msra.mxu0 0.0
      %1565 = vmatprep.subr.mxu0 0.0
      %1566 = vmatpush2.msra.mxu0 0.0
      %1567 = vmatprep.subr.mxu0 0.0
      %1568 = vmatpush2.msra.mxu0 0.0
      %1569 = vmatprep.subr.mxu0 0.0
      %1570 = vmatpush2.msra.mxu0 0.0
      %1571 = vmatprep.subr.mxu0 0.0
      %1572 = vmatpush2.msra.mxu0 0.0
      %1573 = vmatprep.subr.mxu0 0.0
      %1574 = vmatpush2.msra.mxu0 0.0
      %1575 = vmatprep.subr.mxu0 0.0
      %1576 = vmatpush2.msra.mxu0 0.0
      %1577 = vmatprep.subr.mxu0 0.0
      %1578 = vmatpush2.msra.mxu0 0.0
      %1579 = vmatprep.subr.mxu0 0.0
      %1580 = vmatpush2.msra.mxu0 0.0
      %1581 = vmatprep.subr.mxu0 0.0
      %1582 = vmatpush2.msra.mxu0 0.0
      %1583 = vmatprep.subr.mxu0 0.0
      %1584 = vmatpush2.msra.mxu0 0.0
      %1585 = vmatprep.subr.mxu0 0.0
      %1586 = vmatpush2.msra.mxu0 0.0
      %1587 = vmatprep.subr.mxu0 0.0
      %1588 = vmatpush2.msra.mxu0 0.0
      %1589 = vmatprep.subr.mxu0 0.0
      %1590 = vmatpush2.msra.mxu0 0.0
      %1591 = vmatprep.subr.mxu0 0.0
      %1592 = vmatpush2.msra.mxu0 0.0
      %1593 = vmatprep.mubr.f32.mxu0 0.0
      %1594 = vmatmul.mubr.f32.gmra.mxu0 %v483
      %v1595 = vpop.f32.mrf.mxu0
      %v1596 = vadd.f32 0.0, %v1595
      %v1597 = vpop.f32.mrf.mxu0
      %v1598 = vadd.f32 0.0, %v1597
      %1599 = vmatprep.mubr.f32.mxu0 0.0
      %1600 = vmatmul.mubr.f32.gmra.mxu0 %v486
      %v1601 = vpop.f32.mrf.mxu0
      %v1602 = vadd.f32 0.0, %v1601
      %v1603 = vpop.f32.mrf.mxu0
      %v1604 = vadd.f32 0.0, %v1603
      %1605 = vdwg.mxu0
      %1606 = vmatprep.subr.mxu0 0.0
      %1607 = vmatpush1.msra.mxu0 0.0
      %1608 = vmatprep.subr.mxu0 0.0
      %1609 = vmatpush1.msra.mxu0 0.0
      %1610 = vmatprep.subr.mxu0 0.0
      %1611 = vmatpush1.msra.mxu0 0.0
      %1612 = vmatprep.subr.mxu0 0.0
      %1613 = vmatpush1.msra.mxu0 0.0
      %1614 = vmatprep.subr.mxu0 0.0
      %1615 = vmatpush1.msra.mxu0 0.0
      %1616 = vmatprep.subr.mxu0 0.0
      %1617 = vmatpush1.msra.mxu0 0.0
      %1618 = vmatprep.subr.mxu0 0.0
      %1619 = vmatpush1.msra.mxu0 0.0
      %1620 = vmatprep.subr.mxu0 0.0
      %1621 = vmatpush1.msra.mxu0 0.0
      %1622 = vmatprep.subr.mxu0 %v1449
      %1623 = vmatpush1.msra.mxu0 %v1448
      %1624 = vmatprep.subr.mxu0 %v1441
      %1625 = vmatpush1.msra.mxu0 %v1440
      %1626 = vmatprep.subr.mxu0 %v1433
      %1627 = vmatpush1.msra.mxu0 %v1432
      %1628 = vmatprep.subr.mxu0 %v1425
      %1629 = vmatpush1.msra.mxu0 %v1424
      %1630 = vmatprep.subr.mxu0 %v1417
      %1631 = vmatpush1.msra.mxu0 %v1416
      %1632 = vmatprep.subr.mxu0 %v1409
      %1633 = vmatpush1.msra.mxu0 %v1408
      %1634 = vmatprep.subr.mxu0 %v1401
      %1635 = vmatpush1.msra.mxu0 %v1400
      %1636 = vmatprep.subr.mxu0 %v1393
      %1637 = vmatpush1.msra.mxu0 %v1392
      %1638 = vmatprep.subr.mxu0 0.0
      %1639 = vmatpush2.msra.mxu0 0.0
      %1640 = vmatprep.subr.mxu0 0.0
      %1641 = vmatpush2.msra.mxu0 0.0
      %1642 = vmatprep.subr.mxu0 0.0
      %1643 = vmatpush2.msra.mxu0 0.0
      %1644 = vmatprep.subr.mxu0 0.0
      %1645 = vmatpush2.msra.mxu0 0.0
      %1646 = vmatprep.subr.mxu0 0.0
      %1647 = vmatpush2.msra.mxu0 0.0
      %1648 = vmatprep.subr.mxu0 0.0
      %1649 = vmatpush2.msra.mxu0 0.0
      %1650 = vmatprep.subr.mxu0 0.0
      %1651 = vmatpush2.msra.mxu0 0.0
      %1652 = vmatprep.subr.mxu0 0.0
      %1653 = vmatpush2.msra.mxu0 0.0
      %1654 = vmatprep.subr.mxu0 0.0
      %1655 = vmatpush2.msra.mxu0 0.0
      %1656 = vmatprep.subr.mxu0 0.0
      %1657 = vmatpush2.msra.mxu0 0.0
      %1658 = vmatprep.subr.mxu0 0.0
      %1659 = vmatpush2.msra.mxu0 0.0
      %1660 = vmatprep.subr.mxu0 0.0
      %1661 = vmatpush2.msra.mxu0 0.0
      %1662 = vmatprep.subr.mxu0 0.0
      %1663 = vmatpush2.msra.mxu0 0.0
      %1664 = vmatprep.subr.mxu0 0.0
      %1665 = vmatpush2.msra.mxu0 0.0
      %1666 = vmatprep.subr.mxu0 0.0
      %1667 = vmatpush2.msra.mxu0 0.0
      %1668 = vmatprep.subr.mxu0 0.0
      %1669 = vmatpush2.msra.mxu0 0.0
      %1670 = vmatprep.mubr.f32.mxu0 0.0
      %1671 = vmatmul.mubr.f32.gmra.mxu0 %v483
      %v1672 = vpop.f32.mrf.mxu0
      %v1673 = vadd.f32 0.0, %v1672
      %v1674 = vpop.f32.mrf.mxu0
      %v1675 = vadd.f32 0.0, %v1674
      %1676 = vmatprep.mubr.f32.mxu0 0.0
      %1677 = vmatmul.mubr.f32.gmra.mxu0 %v486
      %v1678 = vpop.f32.mrf.mxu0
      %v1679 = vadd.f32 0.0, %v1678
      %v1680 = vpop.f32.mrf.mxu0
      %v1681 = vadd.f32 0.0, %v1680
      %1682 = vdwg.mxu0
      %1683 = vmatprep.subr.mxu0 0.0
      %1684 = vmatpush1.msra.mxu0 0.0
      %1685 = vmatprep.subr.mxu0 0.0
      %1686 = vmatpush1.msra.mxu0 0.0
      %1687 = vmatprep.subr.mxu0 0.0
      %1688 = vmatpush1.msra.mxu0 0.0
      %1689 = vmatprep.subr.mxu0 0.0
      %1690 = vmatpush1.msra.mxu0 0.0
      %1691 = vmatprep.subr.mxu0 0.0
      %1692 = vmatpush1.msra.mxu0 0.0
      %1693 = vmatprep.subr.mxu0 0.0
      %1694 = vmatpush1.msra.mxu0 0.0
      %1695 = vmatprep.subr.mxu0 0.0
      %1696 = vmatpush1.msra.mxu0 0.0
      %1697 = vmatprep.subr.mxu0 0.0
      %1698 = vmatpush1.msra.mxu0 0.0
      %1699 = vmatprep.subr.mxu0 %v1451
      %1700 = vmatpush1.msra.mxu0 %v1450
      %1701 = vmatprep.subr.mxu0 %v1443
      %1702 = vmatpush1.msra.mxu0 %v1442
      %1703 = vmatprep.subr.mxu0 %v1435
      %1704 = vmatpush1.msra.mxu0 %v1434
      %1705 = vmatprep.subr.mxu0 %v1427
      %1706 = vmatpush1.msra.mxu0 %v1426
      %1707 = vmatprep.subr.mxu0 %v1419
      %1708 = vmatpush1.msra.mxu0 %v1418
      %1709 = vmatprep.subr.mxu0 %v1411
      %1710 = vmatpush1.msra.mxu0 %v1410
      %1711 = vmatprep.subr.mxu0 %v1403
      %1712 = vmatpush1.msra.mxu0 %v1402
      %1713 = vmatprep.subr.mxu0 %v1395
      %1714 = vmatpush1.msra.mxu0 %v1394
      %1715 = vmatprep.subr.mxu0 0.0
      %1716 = vmatpush2.msra.mxu0 0.0
      %1717 = vmatprep.subr.mxu0 0.0
      %1718 = vmatpush2.msra.mxu0 0.0
      %1719 = vmatprep.subr.mxu0 0.0
      %1720 = vmatpush2.msra.mxu0 0.0
      %1721 = vmatprep.subr.mxu0 0.0
      %1722 = vmatpush2.msra.mxu0 0.0
      %1723 = vmatprep.subr.mxu0 0.0
      %1724 = vmatpush2.msra.mxu0 0.0
      %1725 = vmatprep.subr.mxu0 0.0
      %1726 = vmatpush2.msra.mxu0 0.0
      %1727 = vmatprep.subr.mxu0 0.0
      %1728 = vmatpush2.msra.mxu0 0.0
      %1729 = vmatprep.subr.mxu0 0.0
      %1730 = vmatpush2.msra.mxu0 0.0
      %1731 = vmatprep.subr.mxu0 0.0
      %1732 = vmatpush2.msra.mxu0 0.0
      %1733 = vmatprep.subr.mxu0 0.0
      %1734 = vmatpush2.msra.mxu0 0.0
      %1735 = vmatprep.subr.mxu0 0.0
      %1736 = vmatpush2.msra.mxu0 0.0
      %1737 = vmatprep.subr.mxu0 0.0
      %1738 = vmatpush2.msra.mxu0 0.0
      %1739 = vmatprep.subr.mxu0 0.0
      %1740 = vmatpush2.msra.mxu0 0.0
      %1741 = vmatprep.subr.mxu0 0.0
      %1742 = vmatpush2.msra.mxu0 0.0
      %1743 = vmatprep.subr.mxu0 0.0
      %1744 = vmatpush2.msra.mxu0 0.0
      %1745 = vmatprep.subr.mxu0 0.0
      %1746 = vmatpush2.msra.mxu0 0.0
      %1747 = vmatprep.mubr.f32.mxu0 0.0
      %1748 = vmatmul.mubr.f32.gmra.mxu0 %v483
      %v1749 = vpop.f32.mrf.mxu0
      %v1750 = vadd.f32 0.0, %v1749
      %v1751 = vpop.f32.mrf.mxu0
      %v1752 = vadd.f32 0.0, %v1751
      %1753 = vmatprep.mubr.f32.mxu0 0.0
      %1754 = vmatmul.mubr.f32.gmra.mxu0 %v486
      %v1755 = vpop.f32.mrf.mxu0
      %v1756 = vadd.f32 0.0, %v1755
      %v1757 = vpop.f32.mrf.mxu0
      %v1758 = vadd.f32 0.0, %v1757
      %1759 = vdwg.mxu0
      %v1761 = vsel %vm481, %v1242, 0
      %v1764 = vsel %vm481, %v1246, 0
      %1766 = vmatprep.subr.mxu0 0.0
      %1767 = vmatpush1.msra.mxu0 0.0
      %1768 = vmatprep.subr.mxu0 0.0
      %1769 = vmatpush1.msra.mxu0 0.0
      %1770 = vmatprep.subr.mxu0 0.0
      %1771 = vmatpush1.msra.mxu0 0.0
      %1772 = vmatprep.subr.mxu0 0.0
      %1773 = vmatpush1.msra.mxu0 0.0
      %1774 = vmatprep.subr.mxu0 0.0
      %1775 = vmatpush1.msra.mxu0 0.0
      %1776 = vmatprep.subr.mxu0 0.0
      %1777 = vmatpush1.msra.mxu0 0.0
      %1778 = vmatprep.subr.mxu0 0.0
      %1779 = vmatpush1.msra.mxu0 0.0
      %1780 = vmatprep.subr.mxu0 0.0
      %1781 = vmatpush1.msra.mxu0 0.0
      %1782 = vmatprep.subr.mxu0 0.0
      %1783 = vmatpush1.msra.mxu0 %v1298
      %1784 = vmatprep.subr.mxu0 0.0
      %1785 = vmatpush1.msra.mxu0 %v1297
      %1786 = vmatprep.subr.mxu0 0.0
      %1787 = vmatpush1.msra.mxu0 %v1296
      %1788 = vmatprep.subr.mxu0 0.0
      %1789 = vmatpush1.msra.mxu0 %v1295
      %1790 = vmatprep.subr.mxu0 0.0
      %1791 = vmatpush1.msra.mxu0 %v1294
      %1792 = vmatprep.subr.mxu0 0.0
      %1793 = vmatpush1.msra.mxu0 %v1293
      %1794 = vmatprep.subr.mxu0 0.0
      %1795 = vmatpush1.msra.mxu0 %v1292
      %1796 = vmatprep.subr.mxu0 0.0
      %1797 = vmatpush1.msra.mxu0 %v1291
      %1798 = vmatprep.subr.mxu0 0.0
      %1799 = vmatpush2.msra.mxu0 0.0
      %1800 = vmatprep.subr.mxu0 0.0
      %1801 = vmatpush2.msra.mxu0 0.0
      %1802 = vmatprep.subr.mxu0 0.0
      %1803 = vmatpush2.msra.mxu0 0.0
      %1804 = vmatprep.subr.mxu0 0.0
      %1805 = vmatpush2.msra.mxu0 0.0
      %1806 = vmatprep.subr.mxu0 0.0
      %1807 = vmatpush2.msra.mxu0 0.0
      %1808 = vmatprep.subr.mxu0 0.0
      %1809 = vmatpush2.msra.mxu0 0.0
      %1810 = vmatprep.subr.mxu0 0.0
      %1811 = vmatpush2.msra.mxu0 0.0
      %1812 = vmatprep.subr.mxu0 0.0
      %1813 = vmatpush2.msra.mxu0 0.0
      %1814 = vmatprep.subr.mxu0 0.0
      %1815 = vmatpush2.msra.mxu0 0.0
      %1816 = vmatprep.subr.mxu0 0.0
      %1817 = vmatpush2.msra.mxu0 0.0
      %1818 = vmatprep.subr.mxu0 0.0
      %1819 = vmatpush2.msra.mxu0 0.0
      %1820 = vmatprep.subr.mxu0 0.0
      %1821 = vmatpush2.msra.mxu0 0.0
      %1822 = vmatprep.subr.mxu0 0.0
      %1823 = vmatpush2.msra.mxu0 0.0
      %1824 = vmatprep.subr.mxu0 0.0
      %1825 = vmatpush2.msra.mxu0 0.0
      %1826 = vmatprep.subr.mxu0 0.0
      %1827 = vmatpush2.msra.mxu0 0.0
      %1828 = vmatprep.subr.mxu0 0.0
      %1829 = vmatpush2.msra.mxu0 0.0
      %1830 = vmatprep.mubr.f32.mxu0 0.0
      %1831 = vmatmul.mubr.f32.gmra.mxu0 %v1761
      %v1832 = vpop.f32.mrf.mxu0
      %v1833 = vadd.f32 %v1380, %v1832
      %v1834 = vpop.f32.mrf.mxu0
      %1835 = vmatprep.mubr.f32.mxu0 0.0
      %1836 = vmatmul.mubr.f32.gmra.mxu0 %v1764
      %v1837 = vpop.f32.mrf.mxu0
      %v1838 = vadd.f32 %v1385, %v1837
      %v1839 = vpop.f32.mrf.mxu0
      %1840 = vdwg.mxu0
      %v1841 = vmul.f32 %v1833, %v1519
      %v1842 = vmul.f32 %v1838, %v1525
      %v1843 = vld [vmem:[%s12] sm:$0x1]
      %v1845 = vlaneseq
      %v1846 = vshrl.u32 %v1845, 7
      %v1847 = vsub.s32 0, %v1846
      %v1848 = vrot.slane %v1843, %v1847
      %v1850 = vmul.f32 %v1841, %v1848
      %v1851 = vmul.f32 %v1842, %v1848
      %v1852 = vld [vmem:[%s13] sm:$0x1]
      %v1854 = vlaneseq
      %v1855 = vshrl.u32 %v1854, 7
      %v1856 = vsub.s32 0, %v1855
      %v1857 = vrot.slane %v1852, %v1856
      %v1859 = vadd.f32 %v1850, %v1857
      %v1860 = vadd.f32 %v1851, %v1857
      %v1861 = vmax.f32 %v1859, 0.0
      %v1862 = vmax.f32 %v1860, 0.0
      %1863 = vrot.lane.b32.xlu0 %v1242, 64
      %v1864 = vpop.permute.xlu0 %1863
      %1865 = vrot.lane.b32.xlu0 %v1246, 64
      %v1866 = vpop.permute.xlu0 %1865
      %v1867 = vsel %vm481, %v1864, 0
      %v1869 = vsel %vm481, %v1866, 0
      %1871 = vmatprep.subr.mxu0 0.0
      %1872 = vmatpush1.msra.mxu0 0.0
      %1873 = vmatprep.subr.mxu0 0.0
      %1874 = vmatpush1.msra.mxu0 0.0
      %1875 = vmatprep.subr.mxu0 0.0
      %1876 = vmatpush1.msra.mxu0 0.0
      %1877 = vmatprep.subr.mxu0 0.0
      %1878 = vmatpush1.msra.mxu0 0.0
      %1879 = vmatprep.subr.mxu0 0.0
      %1880 = vmatpush1.msra.mxu0 0.0
      %1881 = vmatprep.subr.mxu0 0.0
      %1882 = vmatpush1.msra.mxu0 0.0
      %1883 = vmatprep.subr.mxu0 0.0
      %1884 = vmatpush1.msra.mxu0 0.0
      %1885 = vmatprep.subr.mxu0 0.0
      %1886 = vmatpush1.msra.mxu0 0.0
      %1887 = vmatprep.subr.mxu0 0.0
      %1888 = vmatpush1.msra.mxu0 %v1298
      %1889 = vmatprep.subr.mxu0 0.0
      %1890 = vmatpush1.msra.mxu0 %v1297
      %1891 = vmatprep.subr.mxu0 0.0
      %1892 = vmatpush1.msra.mxu0 %v1296
      %1893 = vmatprep.subr.mxu0 0.0
      %1894 = vmatpush1.msra.mxu0 %v1295
      %1895 = vmatprep.subr.mxu0 0.0
      %1896 = vmatpush1.msra.mxu0 %v1294
      %1897 = vmatprep.subr.mxu0 0.0
      %1898 = vmatpush1.msra.mxu0 %v1293
      %1899 = vmatprep.subr.mxu0 0.0
      %1900 = vmatpush1.msra.mxu0 %v1292
      %1901 = vmatprep.subr.mxu0 0.0
      %1902 = vmatpush1.msra.mxu0 %v1291
      %1903 = vmatprep.subr.mxu0 0.0
      %1904 = vmatpush2.msra.mxu0 0.0
      %1905 = vmatprep.subr.mxu0 0.0
      %1906 = vmatpush2.msra.mxu0 0.0
      %1907 = vmatprep.subr.mxu0 0.0
      %1908 = vmatpush2.msra.mxu0 0.0
      %1909 = vmatprep.subr.mxu0 0.0
      %1910 = vmatpush2.msra.mxu0 0.0
      %1911 = vmatprep.subr.mxu0 0.0
      %1912 = vmatpush2.msra.mxu0 0.0
      %1913 = vmatprep.subr.mxu0 0.0
      %1914 = vmatpush2.msra.mxu0 0.0
      %1915 = vmatprep.subr.mxu0 0.0
      %1916 = vmatpush2.msra.mxu0 0.0
      %1917 = vmatprep.subr.mxu0 0.0
      %1918 = vmatpush2.msra.mxu0 0.0
      %1919 = vmatprep.subr.mxu0 0.0
      %1920 = vmatpush2.msra.mxu0 0.0
      %1921 = vmatprep.subr.mxu0 0.0
      %1922 = vmatpush2.msra.mxu0 0.0
      %1923 = vmatprep.subr.mxu0 0.0
      %1924 = vmatpush2.msra.mxu0 0.0
      %1925 = vmatprep.subr.mxu0 0.0
      %1926 = vmatpush2.msra.mxu0 0.0
      %1927 = vmatprep.subr.mxu0 0.0
      %1928 = vmatpush2.msra.mxu0 0.0
      %1929 = vmatprep.subr.mxu0 0.0
      %1930 = vmatpush2.msra.mxu0 0.0
      %1931 = vmatprep.subr.mxu0 0.0
      %1932 = vmatpush2.msra.mxu0 0.0
      %1933 = vmatprep.subr.mxu0 0.0
      %1934 = vmatpush2.msra.mxu0 0.0
      %1935 = vmatprep.mubr.f32.mxu0 0.0
      %1936 = vmatmul.mubr.f32.gmra.mxu0 %v1867
      %v1937 = vpop.f32.mrf.mxu0
      %v1938 = vadd.f32 %v1380, %v1937
      %v1939 = vpop.f32.mrf.mxu0
      %1940 = vmatprep.mubr.f32.mxu0 0.0
      %1941 = vmatmul.mubr.f32.gmra.mxu0 %v1869
      %v1942 = vpop.f32.mrf.mxu0
      %v1943 = vadd.f32 %v1385, %v1942
      %v1944 = vpop.f32.mrf.mxu0
      %1945 = vdwg.mxu0
      %v1946 = vmul.f32 %v1938, %v1521
      %v1947 = vmul.f32 %v1943, %v1527
      %v1948 = vmul.f32 %v1946, %v1848
      %v1949 = vmul.f32 %v1947, %v1848
      %v1950 = vadd.f32 %v1948, %v1857
      %v1951 = vadd.f32 %v1949, %v1857
      %v1952 = vmax.f32 %v1950, 0.0
      %v1953 = vmax.f32 %v1951, 0.0
      %v1954 = vmax.f32 %v1861, %v1952
      %v1955 = vmax.f32 %v1862, %v1953
      %v1957 = vsel %vm481, %v1243, 0
      %v1960 = vsel %vm481, %v1247, 0
      %1962 = vmatprep.subr.mxu0 0.0
      %1963 = vmatpush1.msra.mxu0 0.0
      %1964 = vmatprep.subr.mxu0 0.0
      %1965 = vmatpush1.msra.mxu0 0.0
      %1966 = vmatprep.subr.mxu0 0.0
      %1967 = vmatpush1.msra.mxu0 0.0
      %1968 = vmatprep.subr.mxu0 0.0
      %1969 = vmatpush1.msra.mxu0 0.0
      %1970 = vmatprep.subr.mxu0 0.0
      %1971 = vmatpush1.msra.mxu0 0.0
      %1972 = vmatprep.subr.mxu0 0.0
      %1973 = vmatpush1.msra.mxu0 0.0
      %1974 = vmatprep.subr.mxu0 0.0
      %1975 = vmatpush1.msra.mxu0 0.0
      %1976 = vmatprep.subr.mxu0 0.0
      %1977 = vmatpush1.msra.mxu0 0.0
      %1978 = vmatprep.subr.mxu0 0.0
      %1979 = vmatpush1.msra.mxu0 %v1298
      %1980 = vmatprep.subr.mxu0 0.0
      %1981 = vmatpush1.msra.mxu0 %v1297
      %1982 = vmatprep.subr.mxu0 0.0
      %1983 = vmatpush1.msra.mxu0 %v1296
      %1984 = vmatprep.subr.mxu0 0.0
      %1985 = vmatpush1.msra.mxu0 %v1295
      %1986 = vmatprep.subr.mxu0 0.0
      %1987 = vmatpush1.msra.mxu0 %v1294
      %1988 = vmatprep.subr.mxu0 0.0
      %1989 = vmatpush1.msra.mxu0 %v1293
      %1990 = vmatprep.subr.mxu0 0.0
      %1991 = vmatpush1.msra.mxu0 %v1292
      %1992 = vmatprep.subr.mxu0 0.0
      %1993 = vmatpush1.msra.mxu0 %v1291
      %1994 = vmatprep.subr.mxu0 0.0
      %1995 = vmatpush2.msra.mxu0 0.0
      %1996 = vmatprep.subr.mxu0 0.0
      %1997 = vmatpush2.msra.mxu0 0.0
      %1998 = vmatprep.subr.mxu0 0.0
      %1999 = vmatpush2.msra.mxu0 0.0
      %2000 = vmatprep.subr.mxu0 0.0
      %2001 = vmatpush2.msra.mxu0 0.0
      %2002 = vmatprep.subr.mxu0 0.0
      %2003 = vmatpush2.msra.mxu0 0.0
      %2004 = vmatprep.subr.mxu0 0.0
      %2005 = vmatpush2.msra.mxu0 0.0
      %2006 = vmatprep.subr.mxu0 0.0
      %2007 = vmatpush2.msra.mxu0 0.0
      %2008 = vmatprep.subr.mxu0 0.0
      %2009 = vmatpush2.msra.mxu0 0.0
      %2010 = vmatprep.subr.mxu0 0.0
      %2011 = vmatpush2.msra.mxu0 0.0
      %2012 = vmatprep.subr.mxu0 0.0
      %2013 = vmatpush2.msra.mxu0 0.0
      %2014 = vmatprep.subr.mxu0 0.0
      %2015 = vmatpush2.msra.mxu0 0.0
      %2016 = vmatprep.subr.mxu0 0.0
      %2017 = vmatpush2.msra.mxu0 0.0
      %2018 = vmatprep.subr.mxu0 0.0
      %2019 = vmatpush2.msra.mxu0 0.0
      %2020 = vmatprep.subr.mxu0 0.0
      %2021 = vmatpush2.msra.mxu0 0.0
      %2022 = vmatprep.subr.mxu0 0.0
      %2023 = vmatpush2.msra.mxu0 0.0
      %2024 = vmatprep.subr.mxu0 0.0
      %2025 = vmatpush2.msra.mxu0 0.0
      %2026 = vmatprep.mubr.f32.mxu0 0.0
      %2027 = vmatmul.mubr.f32.gmra.mxu0 %v1957
      %v2028 = vpop.f32.mrf.mxu0
      %v2029 = vadd.f32 %v1380, %v2028
      %v2030 = vpop.f32.mrf.mxu0
      %2031 = vmatprep.mubr.f32.mxu0 0.0
      %2032 = vmatmul.mubr.f32.gmra.mxu0 %v1960
      %v2033 = vpop.f32.mrf.mxu0
      %v2034 = vadd.f32 %v1385, %v2033
      %v2035 = vpop.f32.mrf.mxu0
      %2036 = vdwg.mxu0
      %v2037 = vmul.f32 %v2029, %v1596
      %v2038 = vmul.f32 %v2034, %v1602
      %v2039 = vmul.f32 %v2037, %v1848
      %v2040 = vmul.f32 %v2038, %v1848
      %v2041 = vadd.f32 %v2039, %v1857
      %v2042 = vadd.f32 %v2040, %v1857
      %v2043 = vmax.f32 %v2041, 0.0
      %v2044 = vmax.f32 %v2042, 0.0
      %v2045 = vmax.f32 %v1954, %v2043
      %v2046 = vmax.f32 %v1955, %v2044
      %2047 = vrot.lane.b32.xlu0 %v1243, 64
      %v2048 = vpop.permute.xlu0 %2047
      %2049 = vrot.lane.b32.xlu0 %v1247, 64
      %v2050 = vpop.permute.xlu0 %2049
      %v2051 = vsel %vm481, %v2048, 0
      %v2053 = vsel %vm481, %v2050, 0
      %2055 = vmatprep.subr.mxu0 0.0
      %2056 = vmatpush1.msra.mxu0 0.0
      %2057 = vmatprep.subr.mxu0 0.0
      %2058 = vmatpush1.msra.mxu0 0.0
      %2059 = vmatprep.subr.mxu0 0.0
      %2060 = vmatpush1.msra.mxu0 0.0
      %2061 = vmatprep.subr.mxu0 0.0
      %2062 = vmatpush1.msra.mxu0 0.0
      %2063 = vmatprep.subr.mxu0 0.0
      %2064 = vmatpush1.msra.mxu0 0.0
      %2065 = vmatprep.subr.mxu0 0.0
      %2066 = vmatpush1.msra.mxu0 0.0
      %2067 = vmatprep.subr.mxu0 0.0
      %2068 = vmatpush1.msra.mxu0 0.0
      %2069 = vmatprep.subr.mxu0 0.0
      %2070 = vmatpush1.msra.mxu0 0.0
      %2071 = vmatprep.subr.mxu0 0.0
      %2072 = vmatpush1.msra.mxu0 %v1298
      %2073 = vmatprep.subr.mxu0 0.0
      %2074 = vmatpush1.msra.mxu0 %v1297
      %2075 = vmatprep.subr.mxu0 0.0
      %2076 = vmatpush1.msra.mxu0 %v1296
      %2077 = vmatprep.subr.mxu0 0.0
      %2078 = vmatpush1.msra.mxu0 %v1295
      %2079 = vmatprep.subr.mxu0 0.0
      %2080 = vmatpush1.msra.mxu0 %v1294
      %2081 = vmatprep.subr.mxu0 0.0
      %2082 = vmatpush1.msra.mxu0 %v1293
      %2083 = vmatprep.subr.mxu0 0.0
      %2084 = vmatpush1.msra.mxu0 %v1292
      %2085 = vmatprep.subr.mxu0 0.0
      %2086 = vmatpush1.msra.mxu0 %v1291
      %2087 = vmatprep.subr.mxu0 0.0
      %2088 = vmatpush2.msra.mxu0 0.0
      %2089 = vmatprep.subr.mxu0 0.0
      %2090 = vmatpush2.msra.mxu0 0.0
      %2091 = vmatprep.subr.mxu0 0.0
      %2092 = vmatpush2.msra.mxu0 0.0
      %2093 = vmatprep.subr.mxu0 0.0
      %2094 = vmatpush2.msra.mxu0 0.0
      %2095 = vmatprep.subr.mxu0 0.0
      %2096 = vmatpush2.msra.mxu0 0.0
      %2097 = vmatprep.subr.mxu0 0.0
      %2098 = vmatpush2.msra.mxu0 0.0
      %2099 = vmatprep.subr.mxu0 0.0
      %2100 = vmatpush2.msra.mxu0 0.0
      %2101 = vmatprep.subr.mxu0 0.0
      %2102 = vmatpush2.msra.mxu0 0.0
      %2103 = vmatprep.subr.mxu0 0.0
      %2104 = vmatpush2.msra.mxu0 0.0
      %2105 = vmatprep.subr.mxu0 0.0
      %2106 = vmatpush2.msra.mxu0 0.0
      %2107 = vmatprep.subr.mxu0 0.0
      %2108 = vmatpush2.msra.mxu0 0.0
      %2109 = vmatprep.subr.mxu0 0.0
      %2110 = vmatpush2.msra.mxu0 0.0
      %2111 = vmatprep.subr.mxu0 0.0
      %2112 = vmatpush2.msra.mxu0 0.0
      %2113 = vmatprep.subr.mxu0 0.0
      %2114 = vmatpush2.msra.mxu0 0.0
      %2115 = vmatprep.subr.mxu0 0.0
      %2116 = vmatpush2.msra.mxu0 0.0
      %2117 = vmatprep.subr.mxu0 0.0
      %2118 = vmatpush2.msra.mxu0 0.0
      %2119 = vmatprep.mubr.f32.mxu0 0.0
      %2120 = vmatmul.mubr.f32.gmra.mxu0 %v2051
      %v2121 = vpop.f32.mrf.mxu0
      %v2122 = vadd.f32 %v1380, %v2121
      %v2123 = vpop.f32.mrf.mxu0
      %2124 = vmatprep.mubr.f32.mxu0 0.0
      %2125 = vmatmul.mubr.f32.gmra.mxu0 %v2053
      %v2126 = vpop.f32.mrf.mxu0
      %v2127 = vadd.f32 %v1385, %v2126
      %v2128 = vpop.f32.mrf.mxu0
      %2129 = vdwg.mxu0
      %v2130 = vmul.f32 %v2122, %v1598
      %v2131 = vmul.f32 %v2127, %v1604
      %v2132 = vmul.f32 %v2130, %v1848
      %v2133 = vmul.f32 %v2131, %v1848
      %v2134 = vadd.f32 %v2132, %v1857
      %v2135 = vadd.f32 %v2133, %v1857
      %v2136 = vmax.f32 %v2134, 0.0
      %v2137 = vmax.f32 %v2135, 0.0
      %v2138 = vmax.f32 %v2045, %v2136
      %v2139 = vmax.f32 %v2046, %v2137
      %v2141 = vsel %vm481, %v1244, 0
      %v2144 = vsel %vm481, %v1248, 0
      %2146 = vmatprep.subr.mxu0 0.0
      %2147 = vmatpush1.msra.mxu0 0.0
      %2148 = vmatprep.subr.mxu0 0.0
      %2149 = vmatpush1.msra.mxu0 0.0
      %2150 = vmatprep.subr.mxu0 0.0
      %2151 = vmatpush1.msra.mxu0 0.0
      %2152 = vmatprep.subr.mxu0 0.0
      %2153 = vmatpush1.msra.mxu0 0.0
      %2154 = vmatprep.subr.mxu0 0.0
      %2155 = vmatpush1.msra.mxu0 0.0
      %2156 = vmatprep.subr.mxu0 0.0
      %2157 = vmatpush1.msra.mxu0 0.0
      %2158 = vmatprep.subr.mxu0 0.0
      %2159 = vmatpush1.msra.mxu0 0.0
      %2160 = vmatprep.subr.mxu0 0.0
      %2161 = vmatpush1.msra.mxu0 0.0
      %2162 = vmatprep.subr.mxu0 0.0
      %2163 = vmatpush1.msra.mxu0 %v1298
      %2164 = vmatprep.subr.mxu0 0.0
      %2165 = vmatpush1.msra.mxu0 %v1297
      %2166 = vmatprep.subr.mxu0 0.0
      %2167 = vmatpush1.msra.mxu0 %v1296
      %2168 = vmatprep.subr.mxu0 0.0
      %2169 = vmatpush1.msra.mxu0 %v1295
      %2170 = vmatprep.subr.mxu0 0.0
      %2171 = vmatpush1.msra.mxu0 %v1294
      %2172 = vmatprep.subr.mxu0 0.0
      %2173 = vmatpush1.msra.mxu0 %v1293
      %2174 = vmatprep.subr.mxu0 0.0
      %2175 = vmatpush1.msra.mxu0 %v1292
      %2176 = vmatprep.subr.mxu0 0.0
      %2177 = vmatpush1.msra.mxu0 %v1291
      %2178 = vmatprep.subr.mxu0 0.0
      %2179 = vmatpush2.msra.mxu0 0.0
      %2180 = vmatprep.subr.mxu0 0.0
      %2181 = vmatpush2.msra.mxu0 0.0
      %2182 = vmatprep.subr.mxu0 0.0
      %2183 = vmatpush2.msra.mxu0 0.0
      %2184 = vmatprep.subr.mxu0 0.0
      %2185 = vmatpush2.msra.mxu0 0.0
      %2186 = vmatprep.subr.mxu0 0.0
      %2187 = vmatpush2.msra.mxu0 0.0
      %2188 = vmatprep.subr.mxu0 0.0
      %2189 = vmatpush2.msra.mxu0 0.0
      %2190 = vmatprep.subr.mxu0 0.0
      %2191 = vmatpush2.msra.mxu0 0.0
      %2192 = vmatprep.subr.mxu0 0.0
      %2193 = vmatpush2.msra.mxu0 0.0
      %2194 = vmatprep.subr.mxu0 0.0
      %2195 = vmatpush2.msra.mxu0 0.0
      %2196 = vmatprep.subr.mxu0 0.0
      %2197 = vmatpush2.msra.mxu0 0.0
      %2198 = vmatprep.subr.mxu0 0.0
      %2199 = vmatpush2.msra.mxu0 0.0
      %2200 = vmatprep.subr.mxu0 0.0
      %2201 = vmatpush2.msra.mxu0 0.0
      %2202 = vmatprep.subr.mxu0 0.0
      %2203 = vmatpush2.msra.mxu0 0.0
      %2204 = vmatprep.subr.mxu0 0.0
      %2205 = vmatpush2.msra.mxu0 0.0
      %2206 = vmatprep.subr.mxu0 0.0
      %2207 = vmatpush2.msra.mxu0 0.0
      %2208 = vmatprep.subr.mxu0 0.0
      %2209 = vmatpush2.msra.mxu0 0.0
      %2210 = vmatprep.mubr.f32.mxu0 0.0
      %2211 = vmatmul.mubr.f32.gmra.mxu0 %v2141
      %v2212 = vpop.f32.mrf.mxu0
      %v2213 = vadd.f32 %v1380, %v2212
      %v2214 = vpop.f32.mrf.mxu0
      %2215 = vmatprep.mubr.f32.mxu0 0.0
      %2216 = vmatmul.mubr.f32.gmra.mxu0 %v2144
      %v2217 = vpop.f32.mrf.mxu0
      %v2218 = vadd.f32 %v1385, %v2217
      %v2219 = vpop.f32.mrf.mxu0
      %2220 = vdwg.mxu0
      %v2221 = vmul.f32 %v2213, %v1673
      %v2222 = vmul.f32 %v2218, %v1679
      %v2223 = vmul.f32 %v2221, %v1848
      %v2224 = vmul.f32 %v2222, %v1848
      %v2225 = vadd.f32 %v2223, %v1857
      %v2226 = vadd.f32 %v2224, %v1857
      %v2227 = vmax.f32 %v2225, 0.0
      %v2228 = vmax.f32 %v2226, 0.0
      %v2229 = vmax.f32 %v2138, %v2227
      %v2230 = vmax.f32 %v2139, %v2228
      %2231 = vrot.lane.b32.xlu0 %v1244, 64
      %v2232 = vpop.permute.xlu0 %2231
      %2233 = vrot.lane.b32.xlu0 %v1248, 64
      %v2234 = vpop.permute.xlu0 %2233
      %v2235 = vsel %vm481, %v2232, 0
      %v2237 = vsel %vm481, %v2234, 0
      %2239 = vmatprep.subr.mxu0 0.0
      %2240 = vmatpush1.msra.mxu0 0.0
      %2241 = vmatprep.subr.mxu0 0.0
      %2242 = vmatpush1.msra.mxu0 0.0
      %2243 = vmatprep.subr.mxu0 0.0
      %2244 = vmatpush1.msra.mxu0 0.0
      %2245 = vmatprep.subr.mxu0 0.0
      %2246 = vmatpush1.msra.mxu0 0.0
      %2247 = vmatprep.subr.mxu0 0.0
      %2248 = vmatpush1.msra.mxu0 0.0
      %2249 = vmatprep.subr.mxu0 0.0
      %2250 = vmatpush1.msra.mxu0 0.0
      %2251 = vmatprep.subr.mxu0 0.0
      %2252 = vmatpush1.msra.mxu0 0.0
      %2253 = vmatprep.subr.mxu0 0.0
      %2254 = vmatpush1.msra.mxu0 0.0
      %2255 = vmatprep.subr.mxu0 0.0
      %2256 = vmatpush1.msra.mxu0 %v1298
      %2257 = vmatprep.subr.mxu0 0.0
      %2258 = vmatpush1.msra.mxu0 %v1297
      %2259 = vmatprep.subr.mxu0 0.0
      %2260 = vmatpush1.msra.mxu0 %v1296
      %2261 = vmatprep.subr.mxu0 0.0
      %2262 = vmatpush1.msra.mxu0 %v1295
      %2263 = vmatprep.subr.mxu0 0.0
      %2264 = vmatpush1.msra.mxu0 %v1294
      %2265 = vmatprep.subr.mxu0 0.0
      %2266 = vmatpush1.msra.mxu0 %v1293
      %2267 = vmatprep.subr.mxu0 0.0
      %2268 = vmatpush1.msra.mxu0 %v1292
      %2269 = vmatprep.subr.mxu0 0.0
      %2270 = vmatpush1.msra.mxu0 %v1291
      %2271 = vmatprep.subr.mxu0 0.0
      %2272 = vmatpush2.msra.mxu0 0.0
      %2273 = vmatprep.subr.mxu0 0.0
      %2274 = vmatpush2.msra.mxu0 0.0
      %2275 = vmatprep.subr.mxu0 0.0
      %2276 = vmatpush2.msra.mxu0 0.0
      %2277 = vmatprep.subr.mxu0 0.0
      %2278 = vmatpush2.msra.mxu0 0.0
      %2279 = vmatprep.subr.mxu0 0.0
      %2280 = vmatpush2.msra.mxu0 0.0
      %2281 = vmatprep.subr.mxu0 0.0
      %2282 = vmatpush2.msra.mxu0 0.0
      %2283 = vmatprep.subr.mxu0 0.0
      %2284 = vmatpush2.msra.mxu0 0.0
      %2285 = vmatprep.subr.mxu0 0.0
      %2286 = vmatpush2.msra.mxu0 0.0
      %2287 = vmatprep.subr.mxu0 0.0
      %2288 = vmatpush2.msra.mxu0 0.0
      %2289 = vmatprep.subr.mxu0 0.0
      %2290 = vmatpush2.msra.mxu0 0.0
      %2291 = vmatprep.subr.mxu0 0.0
      %2292 = vmatpush2.msra.mxu0 0.0
      %2293 = vmatprep.subr.mxu0 0.0
      %2294 = vmatpush2.msra.mxu0 0.0
      %2295 = vmatprep.subr.mxu0 0.0
      %2296 = vmatpush2.msra.mxu0 0.0
      %2297 = vmatprep.subr.mxu0 0.0
      %2298 = vmatpush2.msra.mxu0 0.0
      %2299 = vmatprep.subr.mxu0 0.0
      %2300 = vmatpush2.msra.mxu0 0.0
      %2301 = vmatprep.subr.mxu0 0.0
      %2302 = vmatpush2.msra.mxu0 0.0
      %2303 = vmatprep.mubr.f32.mxu0 0.0
      %2304 = vmatmul.mubr.f32.gmra.mxu0 %v2235
      %v2305 = vpop.f32.mrf.mxu0
      %v2306 = vadd.f32 %v1380, %v2305
      %v2307 = vpop.f32.mrf.mxu0
      %2308 = vmatprep.mubr.f32.mxu0 0.0
      %2309 = vmatmul.mubr.f32.gmra.mxu0 %v2237
      %v2310 = vpop.f32.mrf.mxu0
      %v2311 = vadd.f32 %v1385, %v2310
      %v2312 = vpop.f32.mrf.mxu0
      %2313 = vdwg.mxu0
      %v2314 = vmul.f32 %v2306, %v1675
      %v2315 = vmul.f32 %v2311, %v1681
      %v2316 = vmul.f32 %v2314, %v1848
      %v2317 = vmul.f32 %v2315, %v1848
      %v2318 = vadd.f32 %v2316, %v1857
      %v2319 = vadd.f32 %v2317, %v1857
      %v2320 = vmax.f32 %v2318, 0.0
      %v2321 = vmax.f32 %v2319, 0.0
      %v2322 = vmax.f32 %v2229, %v2320
      %v2323 = vmax.f32 %v2230, %v2321
      %v2325 = vsel %vm481, %v1245, 0
      %v2328 = vsel %vm481, %v1249, 0
      %2330 = vmatprep.subr.mxu0 0.0
      %2331 = vmatpush1.msra.mxu0 0.0
      %2332 = vmatprep.subr.mxu0 0.0
      %2333 = vmatpush1.msra.mxu0 0.0
      %2334 = vmatprep.subr.mxu0 0.0
      %2335 = vmatpush1.msra.mxu0 0.0
      %2336 = vmatprep.subr.mxu0 0.0
      %2337 = vmatpush1.msra.mxu0 0.0
      %2338 = vmatprep.subr.mxu0 0.0
      %2339 = vmatpush1.msra.mxu0 0.0
      %2340 = vmatprep.subr.mxu0 0.0
      %2341 = vmatpush1.msra.mxu0 0.0
      %2342 = vmatprep.subr.mxu0 0.0
      %2343 = vmatpush1.msra.mxu0 0.0
      %2344 = vmatprep.subr.mxu0 0.0
      %2345 = vmatpush1.msra.mxu0 0.0
      %2346 = vmatprep.subr.mxu0 0.0
      %2347 = vmatpush1.msra.mxu0 %v1298
      %2348 = vmatprep.subr.mxu0 0.0
      %2349 = vmatpush1.msra.mxu0 %v1297
      %2350 = vmatprep.subr.mxu0 0.0
      %2351 = vmatpush1.msra.mxu0 %v1296
      %2352 = vmatprep.subr.mxu0 0.0
      %2353 = vmatpush1.msra.mxu0 %v1295
      %2354 = vmatprep.subr.mxu0 0.0
      %2355 = vmatpush1.msra.mxu0 %v1294
      %2356 = vmatprep.subr.mxu0 0.0
      %2357 = vmatpush1.msra.mxu0 %v1293
      %2358 = vmatprep.subr.mxu0 0.0
      %2359 = vmatpush1.msra.mxu0 %v1292
      %2360 = vmatprep.subr.mxu0 0.0
      %2361 = vmatpush1.msra.mxu0 %v1291
      %2362 = vmatprep.subr.mxu0 0.0
      %2363 = vmatpush2.msra.mxu0 0.0
      %2364 = vmatprep.subr.mxu0 0.0
      %2365 = vmatpush2.msra.mxu0 0.0
      %2366 = vmatprep.subr.mxu0 0.0
      %2367 = vmatpush2.msra.mxu0 0.0
      %2368 = vmatprep.subr.mxu0 0.0
      %2369 = vmatpush2.msra.mxu0 0.0
      %2370 = vmatprep.subr.mxu0 0.0
      %2371 = vmatpush2.msra.mxu0 0.0
      %2372 = vmatprep.subr.mxu0 0.0
      %2373 = vmatpush2.msra.mxu0 0.0
      %2374 = vmatprep.subr.mxu0 0.0
      %2375 = vmatpush2.msra.mxu0 0.0
      %2376 = vmatprep.subr.mxu0 0.0
      %2377 = vmatpush2.msra.mxu0 0.0
      %2378 = vmatprep.subr.mxu0 0.0
      %2379 = vmatpush2.msra.mxu0 0.0
      %2380 = vmatprep.subr.mxu0 0.0
      %2381 = vmatpush2.msra.mxu0 0.0
      %2382 = vmatprep.subr.mxu0 0.0
      %2383 = vmatpush2.msra.mxu0 0.0
      %2384 = vmatprep.subr.mxu0 0.0
      %2385 = vmatpush2.msra.mxu0 0.0
      %2386 = vmatprep.subr.mxu0 0.0
      %2387 = vmatpush2.msra.mxu0 0.0
      %2388 = vmatprep.subr.mxu0 0.0
      %2389 = vmatpush2.msra.mxu0 0.0
      %2390 = vmatprep.subr.mxu0 0.0
      %2391 = vmatpush2.msra.mxu0 0.0
      %2392 = vmatprep.subr.mxu0 0.0
      %2393 = vmatpush2.msra.mxu0 0.0
      %2394 = vmatprep.mubr.f32.mxu0 0.0
      %2395 = vmatmul.mubr.f32.gmra.mxu0 %v2325
      %v2396 = vpop.f32.mrf.mxu0
      %v2397 = vadd.f32 %v1380, %v2396
      %v2398 = vpop.f32.mrf.mxu0
      %2399 = vmatprep.mubr.f32.mxu0 0.0
      %2400 = vmatmul.mubr.f32.gmra.mxu0 %v2328
      %v2401 = vpop.f32.mrf.mxu0
      %v2402 = vadd.f32 %v1385, %v2401
      %v2403 = vpop.f32.mrf.mxu0
      %2404 = vdwg.mxu0
      %v2405 = vmul.f32 %v2397, %v1750
      %v2406 = vmul.f32 %v2402, %v1756
      %v2407 = vmul.f32 %v2405, %v1848
      %v2408 = vmul.f32 %v2406, %v1848
      %v2409 = vadd.f32 %v2407, %v1857
      %v2410 = vadd.f32 %v2408, %v1857
      %v2411 = vmax.f32 %v2409, 0.0
      %v2412 = vmax.f32 %v2410, 0.0
      %v2413 = vmax.f32 %v2322, %v2411
      %v2414 = vmax.f32 %v2323, %v2412
      %2415 = vrot.lane.b32.xlu0 %v1245, 64
      %v2416 = vpop.permute.xlu0 %2415
      %2417 = vrot.lane.b32.xlu0 %v1249, 64
      %v2418 = vpop.permute.xlu0 %2417
      %v2419 = vsel %vm481, %v2416, 0
      %v2421 = vsel %vm481, %v2418, 0
      %2423 = vmatprep.subr.mxu0 0.0
      %2424 = vmatpush1.msra.mxu0 0.0
      %2425 = vmatprep.subr.mxu0 0.0
      %2426 = vmatpush1.msra.mxu0 0.0
      %2427 = vmatprep.subr.mxu0 0.0
      %2428 = vmatpush1.msra.mxu0 0.0
      %2429 = vmatprep.subr.mxu0 0.0
      %2430 = vmatpush1.msra.mxu0 0.0
      %2431 = vmatprep.subr.mxu0 0.0
      %2432 = vmatpush1.msra.mxu0 0.0
      %2433 = vmatprep.subr.mxu0 0.0
      %2434 = vmatpush1.msra.mxu0 0.0
      %2435 = vmatprep.subr.mxu0 0.0
      %2436 = vmatpush1.msra.mxu0 0.0
      %2437 = vmatprep.subr.mxu0 0.0
      %2438 = vmatpush1.msra.mxu0 0.0
      %2439 = vmatprep.subr.mxu0 0.0
      %2440 = vmatpush1.msra.mxu0 %v1298
      %2441 = vmatprep.subr.mxu0 0.0
      %2442 = vmatpush1.msra.mxu0 %v1297
      %2443 = vmatprep.subr.mxu0 0.0
      %2444 = vmatpush1.msra.mxu0 %v1296
      %2445 = vmatprep.subr.mxu0 0.0
      %2446 = vmatpush1.msra.mxu0 %v1295
      %2447 = vmatprep.subr.mxu0 0.0
      %2448 = vmatpush1.msra.mxu0 %v1294
      %2449 = vmatprep.subr.mxu0 0.0
      %2450 = vmatpush1.msra.mxu0 %v1293
      %2451 = vmatprep.subr.mxu0 0.0
      %2452 = vmatpush1.msra.mxu0 %v1292
      %2453 = vmatprep.subr.mxu0 0.0
      %2454 = vmatpush1.msra.mxu0 %v1291
      %2455 = vmatprep.subr.mxu0 0.0
      %2456 = vmatpush2.msra.mxu0 0.0
      %2457 = vmatprep.subr.mxu0 0.0
      %2458 = vmatpush2.msra.mxu0 0.0
      %2459 = vmatprep.subr.mxu0 0.0
      %2460 = vmatpush2.msra.mxu0 0.0
      %2461 = vmatprep.subr.mxu0 0.0
      %2462 = vmatpush2.msra.mxu0 0.0
      %2463 = vmatprep.subr.mxu0 0.0
      %2464 = vmatpush2.msra.mxu0 0.0
      %2465 = vmatprep.subr.mxu0 0.0
      %2466 = vmatpush2.msra.mxu0 0.0
      %2467 = vmatprep.subr.mxu0 0.0
      %2468 = vmatpush2.msra.mxu0 0.0
      %2469 = vmatprep.subr.mxu0 0.0
      %2470 = vmatpush2.msra.mxu0 0.0
      %2471 = vmatprep.subr.mxu0 0.0
      %2472 = vmatpush2.msra.mxu0 0.0
      %2473 = vmatprep.subr.mxu0 0.0
      %2474 = vmatpush2.msra.mxu0 0.0
      %2475 = vmatprep.subr.mxu0 0.0
      %2476 = vmatpush2.msra.mxu0 0.0
      %2477 = vmatprep.subr.mxu0 0.0
      %2478 = vmatpush2.msra.mxu0 0.0
      %2479 = vmatprep.subr.mxu0 0.0
      %2480 = vmatpush2.msra.mxu0 0.0
      %2481 = vmatprep.subr.mxu0 0.0
      %2482 = vmatpush2.msra.mxu0 0.0
      %2483 = vmatprep.subr.mxu0 0.0
      %2484 = vmatpush2.msra.mxu0 0.0
      %2485 = vmatprep.subr.mxu0 0.0
      %2486 = vmatpush2.msra.mxu0 0.0
      %2487 = vmatprep.mubr.f32.mxu0 0.0
      %2488 = vmatmul.mubr.f32.gmra.mxu0 %v2419
      %v2489 = vpop.f32.mrf.mxu0
      %v2490 = vadd.f32 %v1380, %v2489
      %v2491 = vpop.f32.mrf.mxu0
      %2492 = vmatprep.mubr.f32.mxu0 0.0
      %2493 = vmatmul.mubr.f32.gmra.mxu0 %v2421
      %v2494 = vpop.f32.mrf.mxu0
      %v2495 = vadd.f32 %v1385, %v2494
      %v2496 = vpop.f32.mrf.mxu0
      %2497 = vdwg.mxu0
      %v2498 = vmul.f32 %v2490, %v1752
      %v2499 = vmul.f32 %v2495, %v1758
      %v2500 = vmul.f32 %v2498, %v1848
      %v2501 = vmul.f32 %v2499, %v1848
      %v2502 = vadd.f32 %v2500, %v1857
      %v2503 = vadd.f32 %v2501, %v1857
      %v2504 = vmax.f32 %v2502, 0.0
      %v2505 = vmax.f32 %v2503, 0.0
      %v2506 = vmax.f32 %v2413, %v2504
      %v2507 = vmax.f32 %v2414, %v2505
      %2508 = vst [vmem:[%s469] sm:$0xff] %v2506
      %2509 = vst [vmem:[%s469 + $0x8] sm:$0xff] %v2507
      %s2510 = smul.u32 2, %s25
      %p2511 = scmp.lt.s32.totalorder %s2510, 7
      %s2512 = scalar_select %p2511, %s2510, 7
      %s2513 = smul.addr %s2512, 8
      %s2514 = scalar_lea.vmem %s14, %s2513
      // Predicated region
      $region77: #{svfe_forward.7} parent=75 // pred_check
        %p2515 = pneg %p342
      $region78: #{svfe_forward.7} parent=75 // pred_check_branch
        %2517 = sbr.rel (%p2515) target = $region80
      $region79: #{svfe_forward.7} parent=75 // pred_region
        %s2518 = smul.u32 2, %s25
      $region80: #{svfe_forward.7} parent=75 // pred_fallthru
        _
    $region76: #{svfe_forward.7} parent=5 // pred_fallthru
      _
    %p2519 = scmp.le.s32.totalorder 2, %s20
    // Predicated region
    $region81: #{svfe_forward.7} parent=5 // pred_check
      %p2520 = pneg %p2519
    $region82: #{svfe_forward.7} parent=5 // pred_check_branch
      %2522 = sbr.rel (%p2520) target = $region84
    $region83: #{svfe_forward.7} parent=5 // pred_region
      %s2523 = ssub.s32 %s20, 2
      // Predicated region
      $region85: #{svfe_forward.7} parent=83 // pred_check
        %p2524 = pneg %p348
      $region86: #{svfe_forward.7} parent=83 // pred_check_branch
        %2526 = sbr.rel (%p2524) target = $region88
      $region87: #{svfe_forward.7} parent=83 // pred_region
        %s2527 = smul.u32 2, %s26
        %p2528 = scmp.lt.s32.totalorder %s2527, 7
        %s2529 = scalar_select %p2528, %s2527, 7
        %s2530 = smul.addr %s2529, 8
        %s2531 = scalar_lea.vmem %s14, %s2530
      $region88: #{svfe_forward.7} parent=83 // pred_fallthru
        _
    $region84: #{svfe_forward.7} parent=5 // pred_fallthru
      _
  $region6: #{svfe_forward.7} parent=0 // loop_footer
    %s24 = sadd.s32 1, %s20
  $region7: #{svfe_forward.7} parent=0 // loop_footer_branch
    %19 = sbr.rel target = $region3
  $region8: #{svfe_forward.7} parent=0 // loop_exit
    _

</llo_original>
